<compile_context>
chip_gen: v7x
topology: tpu7x:2x2x1
jax: 0.10.0
libtpu: 0.0.40
codegen_flags: <defaults>
</compile_context>

<pallas_src>
import numpy as np
import jax
import jax.numpy as jnp
from jax import lax
from jax.experimental import pallas as pl
from jax.experimental.pallas import tpu as pltpu


# ----------------------------------------------------------------------------
# Fused Inception kernel (one grid step == one image)
# ----------------------------------------------------------------------------

def make_inception_kernel(H, W, Cin, c1, c2_0, c2_1, c3_0, c3_1, c4):
    M = H * W
    bf16 = jnp.bfloat16

    def kernel(x_ref, wstem_ref, bstem_ref,
               w3_ref, b3_ref, w5_ref, b5_ref,
               w4_ref, b4_ref, o_ref,
               pad2_ref, pad5_ref, padx_ref):
        x3 = x_ref[...]                                # (H, W, Cin) f32
        x2d = x3.reshape(M, Cin)

        # ---- fused 1x1 stem: p1_1 | p2_1 | p3_1 as one bf16 MXU matmul ----
        stem = jnp.dot(x2d.astype(bf16), wstem_ref[...],
                       preferred_element_type=jnp.float32)
        stem = jnp.maximum(stem + bstem_ref[...], 0.0)      # bias+ReLU in f32
        p1 = stem[:, :c1]
        p2a = stem[:, c1:c1 + c2_0]
        p3a = stem[:, c1 + c2_0:]

        # ---- branch 2: 3x3 'same' conv via im2col -> ONE (M,36) matmul ----
        # halo written once (top/bottom rows + interior band with zero cols)
        zr2 = jnp.zeros((1, W + 2, c2_0), jnp.float32)
        zc2 = jnp.zeros((H, 1, c2_0), jnp.float32)
        pad2_ref[0:1, :, :] = zr2
        pad2_ref[H + 1:H + 2, :, :] = zr2
        pad2_ref[1:H + 1, :, :] = jnp.concatenate(
            [zc2, p2a.reshape(H, W, c2_0), zc2], axis=1)
        cols3 = jnp.concatenate(
            [pad2_ref[dy:dy + H, dx:dx + W, :].reshape(M, c2_0)
             for dy in range(3) for dx in range(3)], axis=-1)     # (M, 9*c2_0)
        p2 = jnp.dot(cols3.astype(bf16), w3_ref[...],
                     preferred_element_type=jnp.float32)
        p2 = jnp.maximum(p2 + b3_ref[...], 0.0)

        # ---- branch 3: 5x5 'same' conv via im2col -> ONE (M,100) matmul ----
        zr5 = jnp.zeros((2, W + 4, c3_0), jnp.float32)
        zc5 = jnp.zeros((H, 2, c3_0), jnp.float32)
        pad5_ref[0:2, :, :] = zr5
        pad5_ref[H + 2:H + 4, :, :] = zr5
        pad5_ref[2:H + 2, :, :] = jnp.concatenate(
            [zc5, p3a.reshape(H, W, c3_0), zc5], axis=1)
        cols5 = jnp.concatenate(
            [pad5_ref[dy:dy + H, dx:dx + W, :].reshape(M, c3_0)
             for dy in range(5) for dx in range(5)], axis=-1)     # (M, 25*c3_0)
        p3 = jnp.dot(cols5.astype(bf16), w5_ref[...],
                     preferred_element_type=jnp.float32)
        p3 = jnp.maximum(p3 + b5_ref[...], 0.0)

        # ---- branch 4: separable 3x3/s1 max-pool (-inf halo) + 1x1 conv ----
        nr = jnp.full((1, W + 2, Cin), -jnp.inf, jnp.float32)
        nc = jnp.full((H, 1, Cin), -jnp.inf, jnp.float32)
        padx_ref[0:1, :, :] = nr
        padx_ref[H + 1:H + 2, :, :] = nr
        padx_ref[1:H + 1, :, :] = jnp.concatenate([nc, x3, nc], axis=1)
        rowmax = jnp.maximum(jnp.maximum(padx_ref[0:H, :, :],
                                         padx_ref[1:H + 1, :, :]),
                             padx_ref[2:H + 2, :, :])             # (H, W+2, Cin)
        pooled = jnp.maximum(jnp.maximum(rowmax[:, 0:W, :],
                                         rowmax[:, 1:W + 1, :]),
                             rowmax[:, 2:W + 2, :])               # (H, W, Cin)
        p4 = jnp.dot(pooled.reshape(M, Cin).astype(bf16), w4_ref[...],
                     preferred_element_type=jnp.float32)
        p4 = jnp.maximum(p4 + b4_ref[...], 0.0)

        # ---- channel concat via direct slice stores (no lane-concat) ----
        o_ref[:, 0:c1] = p1.astype(o_ref.dtype)
        o_ref[:, c1:c1 + c2_1] = p2.astype(o_ref.dtype)
        o_ref[:, c1 + c2_1:c1 + c2_1 + c3_1] = p3.astype(o_ref.dtype)
        o_ref[:, c1 + c2_1 + c3_1:] = p4.astype(o_ref.dtype)

    return kernel


# ----------------------------------------------------------------------------
# Parameter preprocessing (layout + dtype folding, done once off the hot path)
# ----------------------------------------------------------------------------

def prepare_params(P):
    """Fold PyTorch OIHW weights into kernel-friendly bf16 layouts once."""
    bf16 = jnp.bfloat16

    def w1x1(w):                       # (Cout,Cin,1,1) -> (Cin,Cout) bf16
        return jnp.transpose(w[:, :, 0, 0], (1, 0)).astype(bf16)

    def wcol(w):                       # (Cout,Cin,K,K) -> (K*K*Cin, Cout) bf16
        Cout, Cin, K, _ = w.shape      # rows ordered (dy*K+dx)-major, cin-minor
        return jnp.transpose(w, (2, 3, 1, 0)).reshape(K * K * Cin, Cout).astype(bf16)

    return {
        'w_stem': jnp.concatenate(
            [w1x1(P['p1_w']), w1x1(P['p2_1_w']), w1x1(P['p3_1_w'])], axis=1),
        'b_stem': jnp.concatenate(
            [P['p1_b'], P['p2_1_b'], P['p3_1_b']]).astype(jnp.float32)[None, :],
        'w3': wcol(P['p2_2_w']), 'b3': P['p2_2_b'].astype(jnp.float32)[None, :],
        'w5': wcol(P['p3_2_w']), 'b5': P['p3_2_b'].astype(jnp.float32)[None, :],
        'w4': w1x1(P['p4_w']),   'b4': P['p4_b'].astype(jnp.float32)[None, :],
    }


# ----------------------------------------------------------------------------
# Forward (NHWC-native hot path; NCHW wrapper for module-equivalent API)
# ----------------------------------------------------------------------------

def inception_forward_nhwc(x_nhwc, R):
    N, H, W, Cin = x_nhwc.shape
    C_stem = R['w_stem'].shape[1]
    c2_1 = R['w3'].shape[1]
    c3_1 = R['w5'].shape[1]
    c4 = R['w4'].shape[1]
    c2_0 = R['w3'].shape[0] // 9
    c3_0 = R['w5'].shape[0] // 25
    c1 = C_stem - c2_0 - c3_0
    C_total = c1 + c2_1 + c3_1 + c4
    M = H * W

    kernel = make_inception_kernel(H, W, Cin, c1, c2_0, c2_1, c3_0, c3_1, c4)

    flops = 2 * N * M * (Cin * C_stem + 9 * c2_0 * c2_1
                         + 25 * c3_0 * c3_1 + Cin * c4)
    bytes_accessed = (N * M * Cin * 4 + N * M * C_total * 4
                      + 2 * sum(int(R[k].size) for k in ('w_stem', 'w3', 'w5', 'w4'))
                      + 4 * sum(int(R[k].size) for k in ('b_stem', 'b3', 'b5', 'b4')))

    out2d = pl.pallas_call(
        kernel,
        out_shape=jax.ShapeDtypeStruct((N, M, C_total), x_nhwc.dtype),
        grid=(N,),
        in_specs=[
            pl.BlockSpec((None, H, W, Cin), lambda i: (i, 0, 0, 0)),
            pl.BlockSpec((Cin, C_stem), lambda i: (0, 0)),
            pl.BlockSpec((1, C_stem), lambda i: (0, 0)),
            pl.BlockSpec((9 * c2_0, c2_1), lambda i: (0, 0)),
            pl.BlockSpec((1, c2_1), lambda i: (0, 0)),
            pl.BlockSpec((25 * c3_0, c3_1), lambda i: (0, 0)),
            pl.BlockSpec((1, c3_1), lambda i: (0, 0)),
            pl.BlockSpec((Cin, c4), lambda i: (0, 0)),
            pl.BlockSpec((1, c4), lambda i: (0, 0)),
        ],
        out_specs=pl.BlockSpec((None, M, C_total), lambda i: (i, 0, 0)),
        scratch_shapes=[
            pltpu.VMEM((H + 2, W + 2, c2_0), jnp.float32),   # 3x3 halo pad
            pltpu.VMEM((H + 4, W + 4, c3_0), jnp.float32),   # 5x5 halo pad
            pltpu.VMEM((H + 2, W + 2, Cin), jnp.float32),    # -inf pool pad
        ],
        compiler_params=pltpu.CompilerParams(
            dimension_semantics=("parallel",),
            vmem_limit_bytes=32 * 1024 * 1024),
        cost_estimate=pl.CostEstimate(flops=flops, transcendentals=0,
                                      bytes_accessed=bytes_accessed),
    )(x_nhwc, R['w_stem'], R['b_stem'], R['w3'], R['b3'],
      R['w5'], R['b5'], R['w4'], R['b4'])

    return out2d.reshape(N, H, W, C_total)     # free (contiguous) view


def inception_forward(x_nchw, R):
    """Drop-in NCHW interface matching the PyTorch module.

    The two transposes here are the only extra HBM passes; keep the
    surrounding model NHWC and call inception_forward_nhwc to avoid them.
    """
    x_nhwc = jnp.transpose(x_nchw, (0, 2, 3, 1))
    out = inception_forward_nhwc(x_nhwc, R)
    return jnp.transpose(out, (0, 3, 1, 2))


# ----------------------------------------------------------------------------
# Pure-JAX reference (correctness check only)
# ----------------------------------------------------------------------------

def _conv_ref(x, w, b, pad):
    out = lax.conv_general_dilated(
        x, w, window_strides=(1, 1), padding=((pad, pad), (pad, pad)),
        dimension_numbers=('NCHW', 'OIHW', 'NCHW'))
    return out + b[None, :, None, None]


def inception_ref(x, P):
    relu = lambda a: jnp.maximum(a, 0.0)
    p1 = relu(_conv_ref(x, P['p1_w'], P['p1_b'], 0))
    p2 = relu(_conv_ref(relu(_conv_ref(x, P['p2_1_w'], P['p2_1_b'], 0)),
                        P['p2_2_w'], P['p2_2_b'], 1))
    p3 = relu(_conv_ref(relu(_conv_ref(x, P['p3_1_w'], P['p3_1_b'], 0)),
                        P['p3_2_w'], P['p3_2_b'], 2))
    pool = lax.reduce_window(x, -jnp.inf, lax.max,
                             (1, 1, 3, 3), (1, 1, 1, 1),
                             ((0, 0), (0, 0), (1, 1), (1, 1)))
    p4 = relu(_conv_ref(pool, P['p4_w'], P['p4_b'], 0))
    return jnp.concatenate([p1, p2, p3, p4], axis=1)


# ----------------------------------------------------------------------------

if __name__ == "__main__":
    key = jax.random.PRNGKey(0)
    N, Cin, H, W = 2, 4, 16, 16
    c1, c2, c3, c4 = 8, (4, 8), (4, 8), 8

    keys = jax.random.split(key, 13)
    winit = lambda k, s: jax.random.normal(k, s, jnp.float32) * 0.1

    P = {
        'p1_w':   winit(keys[0], (c1, Cin, 1, 1)),      'p1_b':   winit(keys[1], (c1,)),
        'p2_1_w': winit(keys[2], (c2[0], Cin, 1, 1)),   'p2_1_b': winit(keys[3], (c2[0],)),
        'p2_2_w': winit(keys[4], (c2[1], c2[0], 3, 3)), 'p2_2_b': winit(keys[5], (c2[1],)),
        'p3_1_w': winit(keys[6], (c3[0], Cin, 1, 1)),   'p3_1_b': winit(keys[7], (c3[0],)),
        'p3_2_w': winit(keys[8], (c3[1], c3[0], 5, 5)), 'p3_2_b': winit(keys[9], (c3[1],)),
        'p4_w':   winit(keys[10], (c4, Cin, 1, 1)),     'p4_b':   winit(keys[11], (c4,)),
    }
    x = jax.random.normal(keys[12], (N, Cin, H, W), jnp.float32)

    R = prepare_params(P)                            # weight layout/dtype hoist
    x_nhwc = jnp.transpose(x, (0, 2, 3, 1))          # layout conv once, test-side

    fwd = jax.jit(inception_forward_nhwc)
    out_nhwc = jax.block_until_ready(fwd(x_nhwc, R))

    C_total = c1 + c2[1] + c3[1] + c4
    assert out_nhwc.shape == (N, H, W, C_total), out_nhwc.shape

    ref = inception_ref(x, P)                        # NCHW reference
    np.testing.assert_allclose(
        np.transpose(np.asarray(out_nhwc), (0, 3, 1, 2)), np.asarray(ref),
        rtol=1e-2, atol=1e-2)                        # bf16 MXU operands

    print("KERNEL_OK")
</pallas_src>

<mosaic_0001>
module attributes {stable_mosaic.version = 11 : i64} {
  func.func @kernel(%arg0: i32, %arg1: memref<1x16x16x4xf32, #tpu.memory_space<vmem>>, %arg2: memref<4x16xbf16, #tpu.memory_space<vmem>>, %arg3: memref<1x16xf32, #tpu.memory_space<vmem>>, %arg4: memref<36x8xbf16, #tpu.memory_space<vmem>>, %arg5: memref<1x8xf32, #tpu.memory_space<vmem>>, %arg6: memref<100x8xbf16, #tpu.memory_space<vmem>>, %arg7: memref<1x8xf32, #tpu.memory_space<vmem>>, %arg8: memref<4x8xbf16, #tpu.memory_space<vmem>>, %arg9: memref<1x8xf32, #tpu.memory_space<vmem>>, %arg10: memref<1x256x32xf32, #tpu.memory_space<vmem>>, %arg11: memref<18x18x4xf32, #tpu.memory_space<vmem>>, %arg12: memref<20x20x4xf32, #tpu.memory_space<vmem>>, %arg13: memref<18x18x4xf32, #tpu.memory_space<vmem>>) attributes {dimension_semantics = [#tpu.dimension_semantics<parallel>], iteration_bounds = array<i64: 2>, scalar_prefetch = 0 : i64, scratch_operands = 3 : i64, tpu.core_type = #tpu.core_type<tc>, window_params = [{transform_indices = @transform_0, window_bounds = array<i64: 1, 16, 16, 4>}, {pipeline_mode = #tpu.pipeline_mode<synchronous>, transform_indices = @transform_1, window_bounds = array<i64: 4, 16>}, {pipeline_mode = #tpu.pipeline_mode<synchronous>, transform_indices = @transform_2, window_bounds = array<i64: 1, 16>}, {pipeline_mode = #tpu.pipeline_mode<synchronous>, transform_indices = @transform_3, window_bounds = array<i64: 36, 8>}, {pipeline_mode = #tpu.pipeline_mode<synchronous>, transform_indices = @transform_4, window_bounds = array<i64: 1, 8>}, {pipeline_mode = #tpu.pipeline_mode<synchronous>, transform_indices = @transform_5, window_bounds = array<i64: 100, 8>}, {pipeline_mode = #tpu.pipeline_mode<synchronous>, transform_indices = @transform_6, window_bounds = array<i64: 1, 8>}, {pipeline_mode = #tpu.pipeline_mode<synchronous>, transform_indices = @transform_7, window_bounds = array<i64: 4, 8>}, {pipeline_mode = #tpu.pipeline_mode<synchronous>, transform_indices = @transform_8, window_bounds = array<i64: 1, 8>}, {transform_indices = @transform_9, window_bounds = array<i64: 1, 256, 32>}]} {
    %c0 = arith.constant 0 : index
    %c0_0 = arith.constant 0 : index
    %c0_1 = arith.constant 0 : index
    %c0_2 = arith.constant 0 : index
    %0 = vector.load %arg1[%c0, %c0_0, %c0_1, %c0_2] : memref<1x16x16x4xf32, #tpu.memory_space<vmem>>, vector<1x16x16x4xf32>
    %1 = vector.shape_cast %0 : vector<1x16x16x4xf32> to vector<16x16x4xf32>
    %2 = vector.shape_cast %1 : vector<16x16x4xf32> to vector<256x4xf32>
    %3 = arith.truncf %2 : vector<256x4xf32> to vector<256x4xbf16>
    %c0_3 = arith.constant 0 : index
    %c0_4 = arith.constant 0 : index
    %4 = vector.load %arg2[%c0_3, %c0_4] : memref<4x16xbf16, #tpu.memory_space<vmem>>, vector<4x16xbf16>
    %cst = arith.constant dense<0.000000e+00> : vector<256x16xf32>
    %5 = tpu.matmul %3, %4, %cst {dimension_numbers = #tpu.dot_dimension_numbers<[1], [0], [0], [1], [0, 0, 1, 1], [], []>} : vector<256x4xbf16>, vector<4x16xbf16>, vector<256x16xf32> -> vector<256x16xf32>
    %c0_5 = arith.constant 0 : index
    %c0_6 = arith.constant 0 : index
    %6 = vector.load %arg3[%c0_5, %c0_6] : memref<1x16xf32, #tpu.memory_space<vmem>>, vector<1x16xf32>
    %7 = vector.broadcast %6 : vector<1x16xf32> to vector<256x16xf32>
    %8 = arith.addf %5, %7 : vector<256x16xf32>
    %cst_7 = arith.constant 0.000000e+00 : f32
    %9 = vector.broadcast %cst_7 : f32 to vector<256x16xf32>
    %10 = arith.maximumf %8, %9 : vector<256x16xf32>
    %11 = vector.extract_strided_slice %10 {offsets = [0, 0], sizes = [256, 8], strides = [1, 1]} : vector<256x16xf32> to vector<256x8xf32>
    %12 = vector.extract_strided_slice %10 {offsets = [0, 8], sizes = [256, 4], strides = [1, 1]} : vector<256x16xf32> to vector<256x4xf32>
    %13 = vector.extract_strided_slice %10 {offsets = [0, 12], sizes = [256, 4], strides = [1, 1]} : vector<256x16xf32> to vector<256x4xf32>
    %cst_8 = arith.constant 0.000000e+00 : f32
    %14 = vector.broadcast %cst_8 : f32 to vector<1x18x4xf32>
    %cst_9 = arith.constant 0.000000e+00 : f32
    %15 = vector.broadcast %cst_9 : f32 to vector<16x1x4xf32>
    %c0_10 = arith.constant 0 : index
    %c0_11 = arith.constant 0 : index
    %c0_12 = arith.constant 0 : index
    %16 = vector.load %arg11[%c0_10, %c0_11, %c0_12] : memref<18x18x4xf32, #tpu.memory_space<vmem>>, vector<1x18x4xf32>
    tpu.vector_store %arg11[%c0_10, %c0_11, %c0_12], %14 {strides = array<i32>} : memref<18x18x4xf32, #tpu.memory_space<vmem>>, vector<1x18x4xf32>,
    %c17 = arith.constant 17 : index
    %c0_13 = arith.constant 0 : index
    %c0_14 = arith.constant 0 : index
    %17 = vector.load %arg11[%c17, %c0_13, %c0_14] : memref<18x18x4xf32, #tpu.memory_space<vmem>>, vector<1x18x4xf32>
    tpu.vector_store %arg11[%c17, %c0_13, %c0_14], %14 {strides = array<i32>} : memref<18x18x4xf32, #tpu.memory_space<vmem>>, vector<1x18x4xf32>,
    %18 = vector.shape_cast %12 : vector<256x4xf32> to vector<16x16x4xf32>
    %19 = tpu.concatenate %15, %18, %15 in 1 : vector<16x1x4xf32>, vector<16x16x4xf32>, vector<16x1x4xf32> -> vector<16x18x4xf32>
    %c1 = arith.constant 1 : index
    %c0_15 = arith.constant 0 : index
    %c0_16 = arith.constant 0 : index
    %20 = vector.load %arg11[%c1, %c0_15, %c0_16] : memref<18x18x4xf32, #tpu.memory_space<vmem>>, vector<16x18x4xf32>
    tpu.vector_store %arg11[%c1, %c0_15, %c0_16], %19 {strides = array<i32>} : memref<18x18x4xf32, #tpu.memory_space<vmem>>, vector<16x18x4xf32>,
    %c0_17 = arith.constant 0 : index
    %c0_18 = arith.constant 0 : index
    %c0_19 = arith.constant 0 : index
    %21 = vector.load %arg11[%c0_17, %c0_18, %c0_19] : memref<18x18x4xf32, #tpu.memory_space<vmem>>, vector<16x16x4xf32>
    %22 = vector.shape_cast %21 : vector<16x16x4xf32> to vector<256x4xf32>
    %c0_20 = arith.constant 0 : index
    %c1_21 = arith.constant 1 : index
    %c0_22 = arith.constant 0 : index
    %23 = vector.load %arg11[%c0_20, %c1_21, %c0_22] : memref<18x18x4xf32, #tpu.memory_space<vmem>>, vector<16x16x4xf32>
    %24 = vector.shape_cast %23 : vector<16x16x4xf32> to vector<256x4xf32>
    %c0_23 = arith.constant 0 : index
    %c2 = arith.constant 2 : index
    %c0_24 = arith.constant 0 : index
    %25 = vector.load %arg11[%c0_23, %c2, %c0_24] : memref<18x18x4xf32, #tpu.memory_space<vmem>>, vector<16x16x4xf32>
    %26 = vector.shape_cast %25 : vector<16x16x4xf32> to vector<256x4xf32>
    %c1_25 = arith.constant 1 : index
    %c0_26 = arith.constant 0 : index
    %c0_27 = arith.constant 0 : index
    %27 = vector.load %arg11[%c1_25, %c0_26, %c0_27] : memref<18x18x4xf32, #tpu.memory_space<vmem>>, vector<16x16x4xf32>
    %28 = vector.shape_cast %27 : vector<16x16x4xf32> to vector<256x4xf32>
    %c1_28 = arith.constant 1 : index
    %c1_29 = arith.constant 1 : index
    %c0_30 = arith.constant 0 : index
    %29 = vector.load %arg11[%c1_28, %c1_29, %c0_30] : memref<18x18x4xf32, #tpu.memory_space<vmem>>, vector<16x16x4xf32>
    %30 = vector.shape_cast %29 : vector<16x16x4xf32> to vector<256x4xf32>
    %c1_31 = arith.constant 1 : index
    %c2_32 = arith.constant 2 : index
    %c0_33 = arith.constant 0 : index
    %31 = vector.load %arg11[%c1_31, %c2_32, %c0_33] : memref<18x18x4xf32, #tpu.memory_space<vmem>>, vector<16x16x4xf32>
    %32 = vector.shape_cast %31 : vector<16x16x4xf32> to vector<256x4xf32>
    %c2_34 = arith.constant 2 : index
    %c0_35 = arith.constant 0 : index
    %c0_36 = arith.constant 0 : index
    %33 = vector.load %arg11[%c2_34, %c0_35, %c0_36] : memref<18x18x4xf32, #tpu.memory_space<vmem>>, vector<16x16x4xf32>
    %34 = vector.shape_cast %33 : vector<16x16x4xf32> to vector<256x4xf32>
    %c2_37 = arith.constant 2 : index
    %c1_38 = arith.constant 1 : index
    %c0_39 = arith.constant 0 : index
    %35 = vector.load %arg11[%c2_37, %c1_38, %c0_39] : memref<18x18x4xf32, #tpu.memory_space<vmem>>, vector<16x16x4xf32>
    %36 = vector.shape_cast %35 : vector<16x16x4xf32> to vector<256x4xf32>
    %c2_40 = arith.constant 2 : index
    %c2_41 = arith.constant 2 : index
    %c0_42 = arith.constant 0 : index
    %37 = vector.load %arg11[%c2_40, %c2_41, %c0_42] : memref<18x18x4xf32, #tpu.memory_space<vmem>>, vector<16x16x4xf32>
    %38 = vector.shape_cast %37 : vector<16x16x4xf32> to vector<256x4xf32>
    %39 = tpu.concatenate %22, %24, %26, %28, %30, %32, %34, %36, %38 in 1 : vector<256x4xf32>, vector<256x4xf32>, vector<256x4xf32>, vector<256x4xf32>, vector<256x4xf32>, vector<256x4xf32>, vector<256x4xf32>, vector<256x4xf32>, vector<256x4xf32> -> vector<256x36xf32>
    %40 = arith.truncf %39 : vector<256x36xf32> to vector<256x36xbf16>
    %c0_43 = arith.constant 0 : index
    %c0_44 = arith.constant 0 : index
    %41 = vector.load %arg4[%c0_43, %c0_44] : memref<36x8xbf16, #tpu.memory_space<vmem>>, vector<36x8xbf16>
    %cst_45 = arith.constant dense<0.000000e+00> : vector<256x8xf32>
    %42 = tpu.matmul %40, %41, %cst_45 {dimension_numbers = #tpu.dot_dimension_numbers<[1], [0], [0], [1], [0, 0, 1, 1], [], []>} : vector<256x36xbf16>, vector<36x8xbf16>, vector<256x8xf32> -> vector<256x8xf32>
    %c0_46 = arith.constant 0 : index
    %c0_47 = arith.constant 0 : index
    %43 = vector.load %arg5[%c0_46, %c0_47] : memref<1x8xf32, #tpu.memory_space<vmem>>, vector<1x8xf32>
    %44 = vector.broadcast %43 : vector<1x8xf32> to vector<256x8xf32>
    %45 = arith.addf %42, %44 : vector<256x8xf32>
    %cst_48 = arith.constant 0.000000e+00 : f32
    %46 = vector.broadcast %cst_48 : f32 to vector<256x8xf32>
    %47 = arith.maximumf %45, %46 : vector<256x8xf32>
    %cst_49 = arith.constant 0.000000e+00 : f32
    %48 = vector.broadcast %cst_49 : f32 to vector<2x20x4xf32>
    %cst_50 = arith.constant 0.000000e+00 : f32
    %49 = vector.broadcast %cst_50 : f32 to vector<16x2x4xf32>
    %c0_51 = arith.constant 0 : index
    %c0_52 = arith.constant 0 : index
    %c0_53 = arith.constant 0 : index
    %50 = vector.load %arg12[%c0_51, %c0_52, %c0_53] : memref<20x20x4xf32, #tpu.memory_space<vmem>>, vector<2x20x4xf32>
    tpu.vector_store %arg12[%c0_51, %c0_52, %c0_53], %48 {strides = array<i32>} : memref<20x20x4xf32, #tpu.memory_space<vmem>>, vector<2x20x4xf32>,
    %c18 = arith.constant 18 : index
    %c0_54 = arith.constant 0 : index
    %c0_55 = arith.constant 0 : index
    %51 = vector.load %arg12[%c18, %c0_54, %c0_55] : memref<20x20x4xf32, #tpu.memory_space<vmem>>, vector<2x20x4xf32>
    tpu.vector_store %arg12[%c18, %c0_54, %c0_55], %48 {strides = array<i32>} : memref<20x20x4xf32, #tpu.memory_space<vmem>>, vector<2x20x4xf32>,
    %52 = vector.shape_cast %13 : vector<256x4xf32> to vector<16x16x4xf32>
    %53 = tpu.concatenate %49, %52, %49 in 1 : vector<16x2x4xf32>, vector<16x16x4xf32>, vector<16x2x4xf32> -> vector<16x20x4xf32>
    %c2_56 = arith.constant 2 : index
    %c0_57 = arith.constant 0 : index
    %c0_58 = arith.constant 0 : index
    %54 = vector.load %arg12[%c2_56, %c0_57, %c0_58] : memref<20x20x4xf32, #tpu.memory_space<vmem>>, vector<16x20x4xf32>
    tpu.vector_store %arg12[%c2_56, %c0_57, %c0_58], %53 {strides = array<i32>} : memref<20x20x4xf32, #tpu.memory_space<vmem>>, vector<16x20x4xf32>,
    %c0_59 = arith.constant 0 : index
    %c0_60 = arith.constant 0 : index
    %c0_61 = arith.constant 0 : index
    %55 = vector.load %arg12[%c0_59, %c0_60, %c0_61] : memref<20x20x4xf32, #tpu.memory_space<vmem>>, vector<16x16x4xf32>
    %56 = vector.shape_cast %55 : vector<16x16x4xf32> to vector<256x4xf32>
    %c0_62 = arith.constant 0 : index
    %c1_63 = arith.constant 1 : index
    %c0_64 = arith.constant 0 : index
    %57 = vector.load %arg12[%c0_62, %c1_63, %c0_64] : memref<20x20x4xf32, #tpu.memory_space<vmem>>, vector<16x16x4xf32>
    %58 = vector.shape_cast %57 : vector<16x16x4xf32> to vector<256x4xf32>
    %c0_65 = arith.constant 0 : index
    %c2_66 = arith.constant 2 : index
    %c0_67 = arith.constant 0 : index
    %59 = vector.load %arg12[%c0_65, %c2_66, %c0_67] : memref<20x20x4xf32, #tpu.memory_space<vmem>>, vector<16x16x4xf32>
    %60 = vector.shape_cast %59 : vector<16x16x4xf32> to vector<256x4xf32>
    %c0_68 = arith.constant 0 : index
    %c3 = arith.constant 3 : index
    %c0_69 = arith.constant 0 : index
    %61 = vector.load %arg12[%c0_68, %c3, %c0_69] : memref<20x20x4xf32, #tpu.memory_space<vmem>>, vector<16x16x4xf32>
    %62 = vector.shape_cast %61 : vector<16x16x4xf32> to vector<256x4xf32>
    %c0_70 = arith.constant 0 : index
    %c4 = arith.constant 4 : index
    %c0_71 = arith.constant 0 : index
    %63 = vector.load %arg12[%c0_70, %c4, %c0_71] : memref<20x20x4xf32, #tpu.memory_space<vmem>>, vector<16x16x4xf32>
    %64 = vector.shape_cast %63 : vector<16x16x4xf32> to vector<256x4xf32>
    %c1_72 = arith.constant 1 : index
    %c0_73 = arith.constant 0 : index
    %c0_74 = arith.constant 0 : index
    %65 = vector.load %arg12[%c1_72, %c0_73, %c0_74] : memref<20x20x4xf32, #tpu.memory_space<vmem>>, vector<16x16x4xf32>
    %66 = vector.shape_cast %65 : vector<16x16x4xf32> to vector<256x4xf32>
    %c1_75 = arith.constant 1 : index
    %c1_76 = arith.constant 1 : index
    %c0_77 = arith.constant 0 : index
    %67 = vector.load %arg12[%c1_75, %c1_76, %c0_77] : memref<20x20x4xf32, #tpu.memory_space<vmem>>, vector<16x16x4xf32>
    %68 = vector.shape_cast %67 : vector<16x16x4xf32> to vector<256x4xf32>
    %c1_78 = arith.constant 1 : index
    %c2_79 = arith.constant 2 : index
    %c0_80 = arith.constant 0 : index
    %69 = vector.load %arg12[%c1_78, %c2_79, %c0_80] : memref<20x20x4xf32, #tpu.memory_space<vmem>>, vector<16x16x4xf32>
    %70 = vector.shape_cast %69 : vector<16x16x4xf32> to vector<256x4xf32>
    %c1_81 = arith.constant 1 : index
    %c3_82 = arith.constant 3 : index
    %c0_83 = arith.constant 0 : index
    %71 = vector.load %arg12[%c1_81, %c3_82, %c0_83] : memref<20x20x4xf32, #tpu.memory_space<vmem>>, vector<16x16x4xf32>
    %72 = vector.shape_cast %71 : vector<16x16x4xf32> to vector<256x4xf32>
    %c1_84 = arith.constant 1 : index
    %c4_85 = arith.constant 4 : index
    %c0_86 = arith.constant 0 : index
    %73 = vector.load %arg12[%c1_84, %c4_85, %c0_86] : memref<20x20x4xf32, #tpu.memory_space<vmem>>, vector<16x16x4xf32>
    %74 = vector.shape_cast %73 : vector<16x16x4xf32> to vector<256x4xf32>
    %c2_87 = arith.constant 2 : index
    %c0_88 = arith.constant 0 : index
    %c0_89 = arith.constant 0 : index
    %75 = vector.load %arg12[%c2_87, %c0_88, %c0_89] : memref<20x20x4xf32, #tpu.memory_space<vmem>>, vector<16x16x4xf32>
    %76 = vector.shape_cast %75 : vector<16x16x4xf32> to vector<256x4xf32>
    %c2_90 = arith.constant 2 : index
    %c1_91 = arith.constant 1 : index
    %c0_92 = arith.constant 0 : index
    %77 = vector.load %arg12[%c2_90, %c1_91, %c0_92] : memref<20x20x4xf32, #tpu.memory_space<vmem>>, vector<16x16x4xf32>
    %78 = vector.shape_cast %77 : vector<16x16x4xf32> to vector<256x4xf32>
    %c2_93 = arith.constant 2 : index
    %c2_94 = arith.constant 2 : index
    %c0_95 = arith.constant 0 : index
    %79 = vector.load %arg12[%c2_93, %c2_94, %c0_95] : memref<20x20x4xf32, #tpu.memory_space<vmem>>, vector<16x16x4xf32>
    %80 = vector.shape_cast %79 : vector<16x16x4xf32> to vector<256x4xf32>
    %c2_96 = arith.constant 2 : index
    %c3_97 = arith.constant 3 : index
    %c0_98 = arith.constant 0 : index
    %81 = vector.load %arg12[%c2_96, %c3_97, %c0_98] : memref<20x20x4xf32, #tpu.memory_space<vmem>>, vector<16x16x4xf32>
    %82 = vector.shape_cast %81 : vector<16x16x4xf32> to vector<256x4xf32>
    %c2_99 = arith.constant 2 : index
    %c4_100 = arith.constant 4 : index
    %c0_101 = arith.constant 0 : index
    %83 = vector.load %arg12[%c2_99, %c4_100, %c0_101] : memref<20x20x4xf32, #tpu.memory_space<vmem>>, vector<16x16x4xf32>
    %84 = vector.shape_cast %83 : vector<16x16x4xf32> to vector<256x4xf32>
    %c3_102 = arith.constant 3 : index
    %c0_103 = arith.constant 0 : index
    %c0_104 = arith.constant 0 : index
    %85 = vector.load %arg12[%c3_102, %c0_103, %c0_104] : memref<20x20x4xf32, #tpu.memory_space<vmem>>, vector<16x16x4xf32>
    %86 = vector.shape_cast %85 : vector<16x16x4xf32> to vector<256x4xf32>
    %c3_105 = arith.constant 3 : index
    %c1_106 = arith.constant 1 : index
    %c0_107 = arith.constant 0 : index
    %87 = vector.load %arg12[%c3_105, %c1_106, %c0_107] : memref<20x20x4xf32, #tpu.memory_space<vmem>>, vector<16x16x4xf32>
    %88 = vector.shape_cast %87 : vector<16x16x4xf32> to vector<256x4xf32>
    %c3_108 = arith.constant 3 : index
    %c2_109 = arith.constant 2 : index
    %c0_110 = arith.constant 0 : index
    %89 = vector.load %arg12[%c3_108, %c2_109, %c0_110] : memref<20x20x4xf32, #tpu.memory_space<vmem>>, vector<16x16x4xf32>
    %90 = vector.shape_cast %89 : vector<16x16x4xf32> to vector<256x4xf32>
    %c3_111 = arith.constant 3 : index
    %c3_112 = arith.constant 3 : index
    %c0_113 = arith.constant 0 : index
    %91 = vector.load %arg12[%c3_111, %c3_112, %c0_113] : memref<20x20x4xf32, #tpu.memory_space<vmem>>, vector<16x16x4xf32>
    %92 = vector.shape_cast %91 : vector<16x16x4xf32> to vector<256x4xf32>
    %c3_114 = arith.constant 3 : index
    %c4_115 = arith.constant 4 : index
    %c0_116 = arith.constant 0 : index
    %93 = vector.load %arg12[%c3_114, %c4_115, %c0_116] : memref<20x20x4xf32, #tpu.memory_space<vmem>>, vector<16x16x4xf32>
    %94 = vector.shape_cast %93 : vector<16x16x4xf32> to vector<256x4xf32>
    %c4_117 = arith.constant 4 : index
    %c0_118 = arith.constant 0 : index
    %c0_119 = arith.constant 0 : index
    %95 = vector.load %arg12[%c4_117, %c0_118, %c0_119] : memref<20x20x4xf32, #tpu.memory_space<vmem>>, vector<16x16x4xf32>
    %96 = vector.shape_cast %95 : vector<16x16x4xf32> to vector<256x4xf32>
    %c4_120 = arith.constant 4 : index
    %c1_121 = arith.constant 1 : index
    %c0_122 = arith.constant 0 : index
    %97 = vector.load %arg12[%c4_120, %c1_121, %c0_122] : memref<20x20x4xf32, #tpu.memory_space<vmem>>, vector<16x16x4xf32>
    %98 = vector.shape_cast %97 : vector<16x16x4xf32> to vector<256x4xf32>
    %c4_123 = arith.constant 4 : index
    %c2_124 = arith.constant 2 : index
    %c0_125 = arith.constant 0 : index
    %99 = vector.load %arg12[%c4_123, %c2_124, %c0_125] : memref<20x20x4xf32, #tpu.memory_space<vmem>>, vector<16x16x4xf32>
    %100 = vector.shape_cast %99 : vector<16x16x4xf32> to vector<256x4xf32>
    %c4_126 = arith.constant 4 : index
    %c3_127 = arith.constant 3 : index
    %c0_128 = arith.constant 0 : index
    %101 = vector.load %arg12[%c4_126, %c3_127, %c0_128] : memref<20x20x4xf32, #tpu.memory_space<vmem>>, vector<16x16x4xf32>
    %102 = vector.shape_cast %101 : vector<16x16x4xf32> to vector<256x4xf32>
    %c4_129 = arith.constant 4 : index
    %c4_130 = arith.constant 4 : index
    %c0_131 = arith.constant 0 : index
    %103 = vector.load %arg12[%c4_129, %c4_130, %c0_131] : memref<20x20x4xf32, #tpu.memory_space<vmem>>, vector<16x16x4xf32>
    %104 = vector.shape_cast %103 : vector<16x16x4xf32> to vector<256x4xf32>
    %105 = tpu.concatenate %56, %58, %60, %62, %64, %66, %68, %70, %72, %74, %76, %78, %80, %82, %84, %86 in 1 : vector<256x4xf32>, vector<256x4xf32>, vector<256x4xf32>, vector<256x4xf32>, vector<256x4xf32>, vector<256x4xf32>, vector<256x4xf32>, vector<256x4xf32>, vector<256x4xf32>, vector<256x4xf32>, vector<256x4xf32>, vector<256x4xf32>, vector<256x4xf32>, vector<256x4xf32>, vector<256x4xf32>, vector<256x4xf32> -> vector<256x64xf32>
    %106 = tpu.concatenate %88, %90, %92, %94, %96, %98, %100, %102, %104 in 1 : vector<256x4xf32>, vector<256x4xf32>, vector<256x4xf32>, vector<256x4xf32>, vector<256x4xf32>, vector<256x4xf32>, vector<256x4xf32>, vector<256x4xf32>, vector<256x4xf32> -> vector<256x36xf32>
    %107 = tpu.concatenate %105, %106 in 1 : vector<256x64xf32>, vector<256x36xf32> -> vector<256x100xf32>
    %108 = arith.truncf %107 : vector<256x100xf32> to vector<256x100xbf16>
    %c0_132 = arith.constant 0 : index
    %c0_133 = arith.constant 0 : index
    %109 = vector.load %arg6[%c0_132, %c0_133] : memref<100x8xbf16, #tpu.memory_space<vmem>>, vector<100x8xbf16>
    %cst_134 = arith.constant dense<0.000000e+00> : vector<256x8xf32>
    %110 = tpu.matmul %108, %109, %cst_134 {dimension_numbers = #tpu.dot_dimension_numbers<[1], [0], [0], [1], [0, 0, 1, 1], [], []>} : vector<256x100xbf16>, vector<100x8xbf16>, vector<256x8xf32> -> vector<256x8xf32>
    %c0_135 = arith.constant 0 : index
    %c0_136 = arith.constant 0 : index
    %111 = vector.load %arg7[%c0_135, %c0_136] : memref<1x8xf32, #tpu.memory_space<vmem>>, vector<1x8xf32>
    %112 = vector.broadcast %111 : vector<1x8xf32> to vector<256x8xf32>
    %113 = arith.addf %110, %112 : vector<256x8xf32>
    %cst_137 = arith.constant 0.000000e+00 : f32
    %114 = vector.broadcast %cst_137 : f32 to vector<256x8xf32>
    %115 = arith.maximumf %113, %114 : vector<256x8xf32>
    %cst_138 = arith.constant 0xFF800000 : f32
    %116 = vector.broadcast %cst_138 : f32 to vector<1x18x4xf32>
    %cst_139 = arith.constant 0xFF800000 : f32
    %117 = vector.broadcast %cst_139 : f32 to vector<16x1x4xf32>
    %c0_140 = arith.constant 0 : index
    %c0_141 = arith.constant 0 : index
    %c0_142 = arith.constant 0 : index
    %118 = vector.load %arg13[%c0_140, %c0_141, %c0_142] : memref<18x18x4xf32, #tpu.memory_space<vmem>>, vector<1x18x4xf32>
    tpu.vector_store %arg13[%c0_140, %c0_141, %c0_142], %116 {strides = array<i32>} : memref<18x18x4xf32, #tpu.memory_space<vmem>>, vector<1x18x4xf32>,
    %c17_143 = arith.constant 17 : index
    %c0_144 = arith.constant 0 : index
    %c0_145 = arith.constant 0 : index
    %119 = vector.load %arg13[%c17_143, %c0_144, %c0_145] : memref<18x18x4xf32, #tpu.memory_space<vmem>>, vector<1x18x4xf32>
    tpu.vector_store %arg13[%c17_143, %c0_144, %c0_145], %116 {strides = array<i32>} : memref<18x18x4xf32, #tpu.memory_space<vmem>>, vector<1x18x4xf32>,
    %120 = tpu.concatenate %117, %1, %117 in 1 : vector<16x1x4xf32>, vector<16x16x4xf32>, vector<16x1x4xf32> -> vector<16x18x4xf32>
    %c1_146 = arith.constant 1 : index
    %c0_147 = arith.constant 0 : index
    %c0_148 = arith.constant 0 : index
    %121 = vector.load %arg13[%c1_146, %c0_147, %c0_148] : memref<18x18x4xf32, #tpu.memory_space<vmem>>, vector<16x18x4xf32>
    tpu.vector_store %arg13[%c1_146, %c0_147, %c0_148], %120 {strides = array<i32>} : memref<18x18x4xf32, #tpu.memory_space<vmem>>, vector<16x18x4xf32>,
    %c0_149 = arith.constant 0 : index
    %c0_150 = arith.constant 0 : index
    %c0_151 = arith.constant 0 : index
    %122 = vector.load %arg13[%c0_149, %c0_150, %c0_151] : memref<18x18x4xf32, #tpu.memory_space<vmem>>, vector<16x18x4xf32>
    %c1_152 = arith.constant 1 : index
    %c0_153 = arith.constant 0 : index
    %c0_154 = arith.constant 0 : index
    %123 = vector.load %arg13[%c1_152, %c0_153, %c0_154] : memref<18x18x4xf32, #tpu.memory_space<vmem>>, vector<16x18x4xf32>
    %124 = arith.maximumf %122, %123 : vector<16x18x4xf32>
    %c2_155 = arith.constant 2 : index
    %c0_156 = arith.constant 0 : index
    %c0_157 = arith.constant 0 : index
    %125 = vector.load %arg13[%c2_155, %c0_156, %c0_157] : memref<18x18x4xf32, #tpu.memory_space<vmem>>, vector<16x18x4xf32>
    %126 = arith.maximumf %124, %125 : vector<16x18x4xf32>
    %127 = vector.extract_strided_slice %126 {offsets = [0, 0, 0], sizes = [16, 16, 4], strides = [1, 1, 1]} : vector<16x18x4xf32> to vector<16x16x4xf32>
    %128 = vector.extract_strided_slice %126 {offsets = [0, 1, 0], sizes = [16, 16, 4], strides = [1, 1, 1]} : vector<16x18x4xf32> to vector<16x16x4xf32>
    %129 = arith.maximumf %127, %128 : vector<16x16x4xf32>
    %130 = vector.extract_strided_slice %126 {offsets = [0, 2, 0], sizes = [16, 16, 4], strides = [1, 1, 1]} : vector<16x18x4xf32> to vector<16x16x4xf32>
    %131 = arith.maximumf %129, %130 : vector<16x16x4xf32>
    %132 = vector.shape_cast %131 : vector<16x16x4xf32> to vector<256x4xf32>
    %133 = arith.truncf %132 : vector<256x4xf32> to vector<256x4xbf16>
    %c0_158 = arith.constant 0 : index
    %c0_159 = arith.constant 0 : index
    %134 = vector.load %arg8[%c0_158, %c0_159] : memref<4x8xbf16, #tpu.memory_space<vmem>>, vector<4x8xbf16>
    %cst_160 = arith.constant dense<0.000000e+00> : vector<256x8xf32>
    %135 = tpu.matmul %133, %134, %cst_160 {dimension_numbers = #tpu.dot_dimension_numbers<[1], [0], [0], [1], [0, 0, 1, 1], [], []>} : vector<256x4xbf16>, vector<4x8xbf16>, vector<256x8xf32> -> vector<256x8xf32>
    %c0_161 = arith.constant 0 : index
    %c0_162 = arith.constant 0 : index
    %136 = vector.load %arg9[%c0_161, %c0_162] : memref<1x8xf32, #tpu.memory_space<vmem>>, vector<1x8xf32>
    %137 = vector.broadcast %136 : vector<1x8xf32> to vector<256x8xf32>
    %138 = arith.addf %135, %137 : vector<256x8xf32>
    %cst_163 = arith.constant 0.000000e+00 : f32
    %139 = vector.broadcast %cst_163 : f32 to vector<256x8xf32>
    %140 = arith.maximumf %138, %139 : vector<256x8xf32>
    %c0_164 = arith.constant 0 : index
    %c0_165 = arith.constant 0 : index
    %c0_166 = arith.constant 0 : index
    %141 = vector.load %arg10[%c0_164, %c0_165, %c0_166] : memref<1x256x32xf32, #tpu.memory_space<vmem>>, vector<1x256x8xf32>
    %142 = vector.shape_cast %141 : vector<1x256x8xf32> to vector<256x8xf32>
    %143 = vector.shape_cast %11 : vector<256x8xf32> to vector<1x256x8xf32>
    tpu.vector_store %arg10[%c0_164, %c0_165, %c0_166], %143 {strides = array<i32>} : memref<1x256x32xf32, #tpu.memory_space<vmem>>, vector<1x256x8xf32>,
    %c0_167 = arith.constant 0 : index
    %c0_168 = arith.constant 0 : index
    %c8 = arith.constant 8 : index
    %144 = vector.load %arg10[%c0_167, %c0_168, %c8] : memref<1x256x32xf32, #tpu.memory_space<vmem>>, vector<1x256x8xf32>
    %145 = vector.shape_cast %144 : vector<1x256x8xf32> to vector<256x8xf32>
    %146 = vector.shape_cast %47 : vector<256x8xf32> to vector<1x256x8xf32>
    tpu.vector_store %arg10[%c0_167, %c0_168, %c8], %146 {strides = array<i32>} : memref<1x256x32xf32, #tpu.memory_space<vmem>>, vector<1x256x8xf32>,
    %c0_169 = arith.constant 0 : index
    %c0_170 = arith.constant 0 : index
    %c16 = arith.constant 16 : index
    %147 = vector.load %arg10[%c0_169, %c0_170, %c16] : memref<1x256x32xf32, #tpu.memory_space<vmem>>, vector<1x256x8xf32>
    %148 = vector.shape_cast %147 : vector<1x256x8xf32> to vector<256x8xf32>
    %149 = vector.shape_cast %115 : vector<256x8xf32> to vector<1x256x8xf32>
    tpu.vector_store %arg10[%c0_169, %c0_170, %c16], %149 {strides = array<i32>} : memref<1x256x32xf32, #tpu.memory_space<vmem>>, vector<1x256x8xf32>,
    %c0_171 = arith.constant 0 : index
    %c0_172 = arith.constant 0 : index
    %c24 = arith.constant 24 : index
    %150 = vector.load %arg10[%c0_171, %c0_172, %c24] : memref<1x256x32xf32, #tpu.memory_space<vmem>>, vector<1x256x8xf32>
    %151 = vector.shape_cast %150 : vector<1x256x8xf32> to vector<256x8xf32>
    %152 = vector.shape_cast %140 : vector<256x8xf32> to vector<1x256x8xf32>
    tpu.vector_store %arg10[%c0_171, %c0_172, %c24], %152 {strides = array<i32>} : memref<1x256x32xf32, #tpu.memory_space<vmem>>, vector<1x256x8xf32>,
    return
  }
  func.func @transform_0(%arg0: i32) -> (i32, i32, i32, i32) {
    %c0_i32 = arith.constant 0 : i32
    %c0_i32_0 = arith.constant 0 : i32
    %c0_i32_1 = arith.constant 0 : i32
    %c0_i32_2 = arith.constant 0 : i32
    return %arg0, %c0_i32, %c0_i32_0, %c0_i32_1 : i32, i32, i32, i32
  }
  func.func @transform_1(%arg0: i32) -> (i32, i32) {
    %c0_i32 = arith.constant 0 : i32
    %c0_i32_0 = arith.constant 0 : i32
    %c0_i32_1 = arith.constant 0 : i32
    return %c0_i32, %c0_i32_0 : i32, i32
  }
  func.func @transform_2(%arg0: i32) -> (i32, i32) {
    %c0_i32 = arith.constant 0 : i32
    %c0_i32_0 = arith.constant 0 : i32
    %c0_i32_1 = arith.constant 0 : i32
    return %c0_i32, %c0_i32_0 : i32, i32
  }
  func.func @transform_3(%arg0: i32) -> (i32, i32) {
    %c0_i32 = arith.constant 0 : i32
    %c0_i32_0 = arith.constant 0 : i32
    %c0_i32_1 = arith.constant 0 : i32
    return %c0_i32, %c0_i32_0 : i32, i32
  }
  func.func @transform_4(%arg0: i32) -> (i32, i32) {
    %c0_i32 = arith.constant 0 : i32
    %c0_i32_0 = arith.constant 0 : i32
    %c0_i32_1 = arith.constant 0 : i32
    return %c0_i32, %c0_i32_0 : i32, i32
  }
  func.func @transform_5(%arg0: i32) -> (i32, i32) {
    %c0_i32 = arith.constant 0 : i32
    %c0_i32_0 = arith.constant 0 : i32
    %c0_i32_1 = arith.constant 0 : i32
    return %c0_i32, %c0_i32_0 : i32, i32
  }
  func.func @transform_6(%arg0: i32) -> (i32, i32) {
    %c0_i32 = arith.constant 0 : i32
    %c0_i32_0 = arith.constant 0 : i32
    %c0_i32_1 = arith.constant 0 : i32
    return %c0_i32, %c0_i32_0 : i32, i32
  }
  func.func @transform_7(%arg0: i32) -> (i32, i32) {
    %c0_i32 = arith.constant 0 : i32
    %c0_i32_0 = arith.constant 0 : i32
    %c0_i32_1 = arith.constant 0 : i32
    return %c0_i32, %c0_i32_0 : i32, i32
  }
  func.func @transform_8(%arg0: i32) -> (i32, i32) {
    %c0_i32 = arith.constant 0 : i32
    %c0_i32_0 = arith.constant 0 : i32
    %c0_i32_1 = arith.constant 0 : i32
    return %c0_i32, %c0_i32_0 : i32, i32
  }
  func.func @transform_9(%arg0: i32) -> (i32, i32, i32) {
    %c0_i32 = arith.constant 0 : i32
    %c0_i32_0 = arith.constant 0 : i32
    %c0_i32_1 = arith.constant 0 : i32
    return %arg0, %c0_i32, %c0_i32_0 : i32, i32, i32
  }
}

</mosaic_0001>

<llo_original>
// kernel: inception_forward_nhwc.1
$region0: #{inception_forward_nhwc.1}
  #allocation0 [shape = 'u32[]', space=smem, size = 0x4, offset = 0x4, fixed_abs, tag = 'smem constant byte address 0x4 - core index']
  #allocation1 [shape = 'u32[144,128]{1,0:T(1,128)}', space=vmem, size = 0x12000, scoped, tag = 'internal scratch']
  #allocation2 [shape = 'f32[18,18,4]{2,1,0:T(8,128)}', space=vmem, size = 0x36000, scoped, tag = 'scratch operand']
  #allocation3 [shape = 'f32[20,20,4]{2,1,0:T(8,128)}', space=vmem, size = 0x3c000, scoped, tag = 'scratch operand']
  #allocation4 [shape = 'f32[18,18,4]{2,1,0:T(8,128)}', space=vmem, size = 0x36000, scoped, tag = 'scratch operand']
  %s0 = inlined_call_operand.vmem [shape: f32[2,16,16,4], index: 0, kind: input, shape index: {}]
  %s1 = inlined_call_operand.vmem [shape: bf16[4,16], index: 1, kind: input, shape index: {}]
  %s2 = inlined_call_operand.vmem [shape: f32[1,16], index: 2, kind: input, shape index: {}]
  %s3 = inlined_call_operand.vmem [shape: bf16[36,8], index: 3, kind: input, shape index: {}]
  %s4 = inlined_call_operand.vmem [shape: f32[1,8], index: 4, kind: input, shape index: {}]
  %s5 = inlined_call_operand.vmem [shape: bf16[100,8], index: 5, kind: input, shape index: {}]
  %s6 = inlined_call_operand.vmem [shape: f32[1,8], index: 6, kind: input, shape index: {}]
  %s7 = inlined_call_operand.vmem [shape: bf16[4,8], index: 7, kind: input, shape index: {}]
  %s8 = inlined_call_operand.vmem [shape: f32[1,8], index: 8, kind: input, shape index: {}]
  %s9 = inlined_call_operand.hbm [shape: f32[2,256,32], index: 9, kind: output, shape index: {}]
  %s10 = sld [smem:[#allocation0]]
  $region69: #{inception_forward_nhwc.1} parent=0
    _
  %s12 = ssub.s32 1, %s10
  %s13 = scalar_select 0, %s12, %s10
  $region1: #{inception_forward_nhwc.1} parent=0
    #allocation5 [shape = 'u8[262144]{0}', space=vmem, size = 0x40000, scoped, tag = 'output window, operand 0']
    #allocation6 [shape = 's32[2]{0}', space=sflag, size = 0x8, scoped, tag = 'scoped memory for inception_forward_nhwc.1']
    %14 = vsyncpa [#allocation6], 0
    %s15 = scalar_lea.sflag [#allocation6], 1
    %16 = vsyncpa %s15, 0
    loop: start=0, step=1, limit=4
    $region2: #{inception_forward_nhwc.1} parent=1 // loop_pre_header
      _
    $region3: #{inception_forward_nhwc.1} parent=1 // loop_header
      %s18 = sphi 0, %s22
      %p19 = scmp.ge.s32.totalorder %s18, 4
      %s28 = sphi 0, %s30
      %s31 = sphi 0, %s28
      %s32 = sphi 0, %s31
      %s48 = sphi 0, %s32
      %s52 = sphi 0, %s52
      %s54 = sphi 0, %s52
      %s55 = sphi 0, %s54
      %s69 = sphi 0, %s55
      %s73 = sphi 0, %s73
      %s75 = sphi 0, %s73
      %s76 = sphi 0, %s75
      %s90 = sphi 0, %s76
      %s94 = sphi 0, %s94
      %s96 = sphi 0, %s94
      %s97 = sphi 0, %s96
      %s111 = sphi 0, %s97
      %s115 = sphi 0, %s115
      %s117 = sphi 0, %s115
      %s118 = sphi 0, %s117
      %s132 = sphi 0, %s118
      %s136 = sphi 0, %s136
      %s138 = sphi 0, %s136
      %s139 = sphi 0, %s138
      %s153 = sphi 0, %s139
      %s157 = sphi 0, %s157
      %s159 = sphi 0, %s157
      %s160 = sphi 0, %s159
      %s174 = sphi 0, %s160
      %s178 = sphi 0, %s178
      %s180 = sphi 0, %s178
      %s181 = sphi 0, %s180
      %s195 = sphi 0, %s181
      %s199 = sphi 0, %s199
      %s201 = sphi 0, %s199
      %s202 = sphi 0, %s201
      %s216 = sphi 0, %s202
      %s222 = sphi 0, %s224
      %s225 = sphi 0, %s222
      %s226 = sphi 0, %s225
      %s242 = sphi 0, %s226
    $region4: #{inception_forward_nhwc.1} parent=1 // loop_header_branch
      %21 = sbr.rel (%p19) target = $region8
    $region5: #{inception_forward_nhwc.1} parent=1 // loop_body
      %s23 = ssub.s32 %s18, 1
      %s24 = ssub.s32 %s18, 2
      %s25 = sadd.s32 %s18, 1
      %s26 = ssub.s32 %s18, %s25
      %p27 = scmp.eq.s32.totalorder %s26, 0
      %s29 = sadd.s32 %s28, 1
      %s30 = scalar_select %p27, %s28, %s29
      %p33 = pneg %p27
      %p34 = scmp.eq.s32.totalorder %s18, 1
      %p35 = por %p33, %p34
      %p36 = scmp.ne.s32.totalorder %s28, %s31
      %p37 = scmp.eq.s32.totalorder %s18, 0
      %p38 = por %p36, %p37
      %p39 = scmp.ne.s32.totalorder %s28, %s31
      %p40 = scmp.eq.s32.totalorder %s23, 1
      %p41 = por %p39, %p40
      %p42 = scmp.ne.s32.totalorder %s31, %s32
      %p43 = scmp.eq.s32.totalorder %s23, 0
      %p44 = por %p42, %p43
      %p45 = scmp.ne.s32.totalorder %s31, %s32
      %p46 = scmp.eq.s32.totalorder %s24, 1
      %p47 = por %p45, %p46
      %p49 = scmp.ne.s32.totalorder %s32, %s48
      %p50 = scmp.eq.s32.totalorder %s24, 0
      %p51 = por %p49, %p50
      %s53 = sadd.s32 %s52, 1
      %p56 = scmp.eq.s32.totalorder %s18, 1
      %p57 = scmp.ne.s32.totalorder %s52, %s54
      %p58 = scmp.eq.s32.totalorder %s18, 0
      %p59 = por %p57, %p58
      %p60 = scmp.ne.s32.totalorder %s52, %s54
      %p61 = scmp.eq.s32.totalorder %s23, 1
      %p62 = por %p60, %p61
      %p63 = scmp.ne.s32.totalorder %s54, %s55
      %p64 = scmp.eq.s32.totalorder %s23, 0
      %p65 = por %p63, %p64
      %p66 = scmp.ne.s32.totalorder %s54, %s55
      %p67 = scmp.eq.s32.totalorder %s24, 1
      %p68 = por %p66, %p67
      %p70 = scmp.ne.s32.totalorder %s55, %s69
      %p71 = scmp.eq.s32.totalorder %s24, 0
      %p72 = por %p70, %p71
      %s74 = sadd.s32 %s73, 1
      %p77 = scmp.eq.s32.totalorder %s18, 1
      %p78 = scmp.ne.s32.totalorder %s73, %s75
      %p79 = scmp.eq.s32.totalorder %s18, 0
      %p80 = por %p78, %p79
      %p81 = scmp.ne.s32.totalorder %s73, %s75
      %p82 = scmp.eq.s32.totalorder %s23, 1
      %p83 = por %p81, %p82
      %p84 = scmp.ne.s32.totalorder %s75, %s76
      %p85 = scmp.eq.s32.totalorder %s23, 0
      %p86 = por %p84, %p85
      %p87 = scmp.ne.s32.totalorder %s75, %s76
      %p88 = scmp.eq.s32.totalorder %s24, 1
      %p89 = por %p87, %p88
      %p91 = scmp.ne.s32.totalorder %s76, %s90
      %p92 = scmp.eq.s32.totalorder %s24, 0
      %p93 = por %p91, %p92
      %s95 = sadd.s32 %s94, 1
      %p98 = scmp.eq.s32.totalorder %s18, 1
      %p99 = scmp.ne.s32.totalorder %s94, %s96
      %p100 = scmp.eq.s32.totalorder %s18, 0
      %p101 = por %p99, %p100
      %p102 = scmp.ne.s32.totalorder %s94, %s96
      %p103 = scmp.eq.s32.totalorder %s23, 1
      %p104 = por %p102, %p103
      %p105 = scmp.ne.s32.totalorder %s96, %s97
      %p106 = scmp.eq.s32.totalorder %s23, 0
      %p107 = por %p105, %p106
      %p108 = scmp.ne.s32.totalorder %s96, %s97
      %p109 = scmp.eq.s32.totalorder %s24, 1
      %p110 = por %p108, %p109
      %p112 = scmp.ne.s32.totalorder %s97, %s111
      %p113 = scmp.eq.s32.totalorder %s24, 0
      %p114 = por %p112, %p113
      %s116 = sadd.s32 %s115, 1
      %p119 = scmp.eq.s32.totalorder %s18, 1
      %p120 = scmp.ne.s32.totalorder %s115, %s117
      %p121 = scmp.eq.s32.totalorder %s18, 0
      %p122 = por %p120, %p121
      %p123 = scmp.ne.s32.totalorder %s115, %s117
      %p124 = scmp.eq.s32.totalorder %s23, 1
      %p125 = por %p123, %p124
      %p126 = scmp.ne.s32.totalorder %s117, %s118
      %p127 = scmp.eq.s32.totalorder %s23, 0
      %p128 = por %p126, %p127
      %p129 = scmp.ne.s32.totalorder %s117, %s118
      %p130 = scmp.eq.s32.totalorder %s24, 1
      %p131 = por %p129, %p130
      %p133 = scmp.ne.s32.totalorder %s118, %s132
      %p134 = scmp.eq.s32.totalorder %s24, 0
      %p135 = por %p133, %p134
      %s137 = sadd.s32 %s136, 1
      %p140 = scmp.eq.s32.totalorder %s18, 1
      %p141 = scmp.ne.s32.totalorder %s136, %s138
      %p142 = scmp.eq.s32.totalorder %s18, 0
      %p143 = por %p141, %p142
      %p144 = scmp.ne.s32.totalorder %s136, %s138
      %p145 = scmp.eq.s32.totalorder %s23, 1
      %p146 = por %p144, %p145
      %p147 = scmp.ne.s32.totalorder %s138, %s139
      %p148 = scmp.eq.s32.totalorder %s23, 0
      %p149 = por %p147, %p148
      %p150 = scmp.ne.s32.totalorder %s138, %s139
      %p151 = scmp.eq.s32.totalorder %s24, 1
      %p152 = por %p150, %p151
      %p154 = scmp.ne.s32.totalorder %s139, %s153
      %p155 = scmp.eq.s32.totalorder %s24, 0
      %p156 = por %p154, %p155
      %s158 = sadd.s32 %s157, 1
      %p161 = scmp.eq.s32.totalorder %s18, 1
      %p162 = scmp.ne.s32.totalorder %s157, %s159
      %p163 = scmp.eq.s32.totalorder %s18, 0
      %p164 = por %p162, %p163
      %p165 = scmp.ne.s32.totalorder %s157, %s159
      %p166 = scmp.eq.s32.totalorder %s23, 1
      %p167 = por %p165, %p166
      %p168 = scmp.ne.s32.totalorder %s159, %s160
      %p169 = scmp.eq.s32.totalorder %s23, 0
      %p170 = por %p168, %p169
      %p171 = scmp.ne.s32.totalorder %s159, %s160
      %p172 = scmp.eq.s32.totalorder %s24, 1
      %p173 = por %p171, %p172
      %p175 = scmp.ne.s32.totalorder %s160, %s174
      %p176 = scmp.eq.s32.totalorder %s24, 0
      %p177 = por %p175, %p176
      %s179 = sadd.s32 %s178, 1
      %p182 = scmp.eq.s32.totalorder %s18, 1
      %p183 = scmp.ne.s32.totalorder %s178, %s180
      %p184 = scmp.eq.s32.totalorder %s18, 0
      %p185 = por %p183, %p184
      %p186 = scmp.ne.s32.totalorder %s178, %s180
      %p187 = scmp.eq.s32.totalorder %s23, 1
      %p188 = por %p186, %p187
      %p189 = scmp.ne.s32.totalorder %s180, %s181
      %p190 = scmp.eq.s32.totalorder %s23, 0
      %p191 = por %p189, %p190
      %p192 = scmp.ne.s32.totalorder %s180, %s181
      %p193 = scmp.eq.s32.totalorder %s24, 1
      %p194 = por %p192, %p193
      %p196 = scmp.ne.s32.totalorder %s181, %s195
      %p197 = scmp.eq.s32.totalorder %s24, 0
      %p198 = por %p196, %p197
      %s200 = sadd.s32 %s199, 1
      %p203 = scmp.eq.s32.totalorder %s18, 1
      %p204 = scmp.ne.s32.totalorder %s199, %s201
      %p205 = scmp.eq.s32.totalorder %s18, 0
      %p206 = por %p204, %p205
      %p207 = scmp.ne.s32.totalorder %s199, %s201
      %p208 = scmp.eq.s32.totalorder %s23, 1
      %p209 = por %p207, %p208
      %p210 = scmp.ne.s32.totalorder %s201, %s202
      %p211 = scmp.eq.s32.totalorder %s23, 0
      %p212 = por %p210, %p211
      %p213 = scmp.ne.s32.totalorder %s201, %s202
      %p214 = scmp.eq.s32.totalorder %s24, 1
      %p215 = por %p213, %p214
      %p217 = scmp.ne.s32.totalorder %s202, %s216
      %p218 = scmp.eq.s32.totalorder %s24, 0
      %p219 = por %p217, %p218
      %s220 = ssub.s32 %s18, %s25
      %p221 = scmp.eq.s32.totalorder %s220, 0
      %s223 = sadd.s32 %s222, 1
      %s224 = scalar_select %p221, %s222, %s223
      %p227 = pneg %p221
      %p228 = scmp.eq.s32.totalorder %s18, 1
      %p229 = por %p227, %p228
      %p230 = scmp.ne.s32.totalorder %s222, %s225
      %p231 = scmp.eq.s32.totalorder %s18, 0
      %p232 = por %p230, %p231
      %p233 = scmp.ne.s32.totalorder %s222, %s225
      %p234 = scmp.eq.s32.totalorder %s23, 1
      %p235 = por %p233, %p234
      %p236 = scmp.ne.s32.totalorder %s225, %s226
      %p237 = scmp.eq.s32.totalorder %s23, 0
      %p238 = por %p236, %p237
      %p239 = scmp.ne.s32.totalorder %s225, %s226
      %p240 = scmp.eq.s32.totalorder %s24, 1
      %p241 = por %p239, %p240
      %p243 = scmp.ne.s32.totalorder %s226, %s242
      %p244 = scmp.eq.s32.totalorder %s24, 0
      %p245 = por %p243, %p244
      %p246 = scmp.le.s32.totalorder 1, %s18
      %p247 = scmp.lt.s32.totalorder %s18, 3
      %p248 = pnand %p246, %p247
      %p249 = pneg %p248
      // Predicated region
      $region9: #{inception_forward_nhwc.1} parent=5 // pred_check
        _
      $region10: #{inception_forward_nhwc.1} parent=5 // pred_check_branch
        %251 = sbr.rel (%p248) target = $region12
      $region11: #{inception_forward_nhwc.1} parent=5 // pred_region
        %s252 = ssub.s32 %s18, 1
        // Predicated region
        $region13: #{inception_forward_nhwc.1} parent=11 // pred_check
          %p253 = pneg %p65
        $region14: #{inception_forward_nhwc.1} parent=11 // pred_check_branch
          %255 = sbr.rel (%p253) target = $region16
        $region15: #{inception_forward_nhwc.1} parent=11 // pred_region
          _
        $region16: #{inception_forward_nhwc.1} parent=11 // pred_fallthru
          _
        // Predicated region
        $region17: #{inception_forward_nhwc.1} parent=11 // pred_check
          %p256 = pneg %p86
        $region18: #{inception_forward_nhwc.1} parent=11 // pred_check_branch
          %258 = sbr.rel (%p256) target = $region20
        $region19: #{inception_forward_nhwc.1} parent=11 // pred_region
          _
        $region20: #{inception_forward_nhwc.1} parent=11 // pred_fallthru
          _
        // Predicated region
        $region21: #{inception_forward_nhwc.1} parent=11 // pred_check
          %p259 = pneg %p107
        $region22: #{inception_forward_nhwc.1} parent=11 // pred_check_branch
          %261 = sbr.rel (%p259) target = $region24
        $region23: #{inception_forward_nhwc.1} parent=11 // pred_region
          _
        $region24: #{inception_forward_nhwc.1} parent=11 // pred_fallthru
          _
        // Predicated region
        $region25: #{inception_forward_nhwc.1} parent=11 // pred_check
          %p262 = pneg %p128
        $region26: #{inception_forward_nhwc.1} parent=11 // pred_check_branch
          %264 = sbr.rel (%p262) target = $region28
        $region27: #{inception_forward_nhwc.1} parent=11 // pred_region
          _
        $region28: #{inception_forward_nhwc.1} parent=11 // pred_fallthru
          _
        // Predicated region
        $region29: #{inception_forward_nhwc.1} parent=11 // pred_check
          %p265 = pneg %p149
        $region30: #{inception_forward_nhwc.1} parent=11 // pred_check_branch
          %267 = sbr.rel (%p265) target = $region32
        $region31: #{inception_forward_nhwc.1} parent=11 // pred_region
          _
        $region32: #{inception_forward_nhwc.1} parent=11 // pred_fallthru
          _
        // Predicated region
        $region33: #{inception_forward_nhwc.1} parent=11 // pred_check
          %p268 = pneg %p170
        $region34: #{inception_forward_nhwc.1} parent=11 // pred_check_branch
          %270 = sbr.rel (%p268) target = $region36
        $region35: #{inception_forward_nhwc.1} parent=11 // pred_region
          _
        $region36: #{inception_forward_nhwc.1} parent=11 // pred_fallthru
          _
        // Predicated region
        $region37: #{inception_forward_nhwc.1} parent=11 // pred_check
          %p271 = pneg %p191
        $region38: #{inception_forward_nhwc.1} parent=11 // pred_check_branch
          %273 = sbr.rel (%p271) target = $region40
        $region39: #{inception_forward_nhwc.1} parent=11 // pred_region
          _
        $region40: #{inception_forward_nhwc.1} parent=11 // pred_fallthru
          _
        // Predicated region
        $region41: #{inception_forward_nhwc.1} parent=11 // pred_check
          %p274 = pneg %p212
        $region42: #{inception_forward_nhwc.1} parent=11 // pred_check_branch
          %276 = sbr.rel (%p274) target = $region44
        $region43: #{inception_forward_nhwc.1} parent=11 // pred_region
          _
        $region44: #{inception_forward_nhwc.1} parent=11 // pred_fallthru
          _
      $region12: #{inception_forward_nhwc.1} parent=5 // pred_fallthru
        _
      %p277 = scmp.lt.s32.totalorder %s18, 2
      // Predicated region
      $region45: #{inception_forward_nhwc.1} parent=5 // pred_check
        %p278 = pneg %p277
      $region46: #{inception_forward_nhwc.1} parent=5 // pred_check_branch
        %280 = sbr.rel (%p278) target = $region48
      $region47: #{inception_forward_nhwc.1} parent=5 // pred_region
        // Predicated region
        $region49: #{inception_forward_nhwc.1} parent=47 // pred_check
          %p281 = pneg %p38
        $region50: #{inception_forward_nhwc.1} parent=47 // pred_check_branch
          %283 = sbr.rel (%p281) target = $region52
        $region51: #{inception_forward_nhwc.1} parent=47 // pred_region
          %p284 = scmp.lt.s32.totalorder %s18, 1
          %s285 = scalar_select %p284, %s18, 1
          %s286 = smul.addr %s285, 32
          %s287 = smul.addr %s286, 8
          %s288 = scalar_lea.vmem %s0, %s287
        $region52: #{inception_forward_nhwc.1} parent=47 // pred_fallthru
          _
      $region48: #{inception_forward_nhwc.1} parent=5 // pred_fallthru
        _
      %p289 = scmp.le.s32.totalorder 1, %s18
      %p290 = scmp.lt.s32.totalorder %s18, 3
      %p291 = pnand %p289, %p290
      %p292 = pneg %p291
      // Predicated region
      $region53: #{inception_forward_nhwc.1} parent=5 // pred_check
        _
      $region54: #{inception_forward_nhwc.1} parent=5 // pred_check_branch
        %294 = sbr.rel (%p291) target = $region56
      $region55: #{inception_forward_nhwc.1} parent=5 // pred_region
        %s295 = ssub.s32 %s18, 1
        %p296 = scmp.lt.s32.totalorder %s23, 1
        %s297 = scalar_select %p296, %s23, 1
        %s298 = smul.addr %s297, 32
        %s299 = smul.addr %s298, 8
        %s300 = scalar_lea.vmem %s0, %s299
        %p301 = pneg %p44
        %p302 = pneg %p41
        %p303 = pneg %p65
        %p304 = pneg %p62
        %p305 = pneg %p86
        %p306 = pneg %p83
        %p307 = pneg %p107
        %p308 = pneg %p104
        %p309 = pneg %p128
        %p310 = pneg %p125
        %p311 = pneg %p149
        %p312 = pneg %p146
        %p313 = pneg %p170
        %p314 = pneg %p167
        %p315 = pneg %p191
        %p316 = pneg %p188
        %p317 = pneg %p212
        %p318 = pneg %p209
        %p319 = pneg %p238
        %p320 = pneg %p235
        %s321 = sand.u32 %s225, 1
        %s322 = scalar_lea.sflag [#allocation6], %s321
        %s323 = sand.u32 %s225, 1
        %s324 = smul.addr %s323, 256
        %s325 = scalar_lea.vmem [#allocation5], %s324
        %p326 = scmp.lt.s32.totalorder %s23, 1
        %s327 = scalar_select %p326, %s23, 1
        %s328 = smul.addr %s327, 32
        %s329 = smul.addr %s328, 8
        %s330 = scalar_lea.vmem %s0, %s329
        %v332 = vld [vmem:[%s330] sm:$0xff]
        %v333 = vld [vmem:[%s330 + $0x8] sm:$0xff]
        %v334 = vld [vmem:[%s330 + $0x10] sm:$0xff]
        %v335 = vld [vmem:[%s330 + $0x18] sm:$0xff]
        %v336 = vld [vmem:[%s330 + $0x20] sm:$0xff]
        %v337 = vld [vmem:[%s330 + $0x28] sm:$0xff]
        %v338 = vld [vmem:[%s330 + $0x30] sm:$0xff]
        %v339 = vld [vmem:[%s330 + $0x38] sm:$0xff]
        %v340 = vld [vmem:[%s330 + $0x40] sm:$0xff]
        %v341 = vld [vmem:[%s330 + $0x48] sm:$0xff]
        %v342 = vld [vmem:[%s330 + $0x50] sm:$0xff]
        %v343 = vld [vmem:[%s330 + $0x58] sm:$0xff]
        %v344 = vld [vmem:[%s330 + $0x60] sm:$0xff]
        %v345 = vld [vmem:[%s330 + $0x68] sm:$0xff]
        %v346 = vld [vmem:[%s330 + $0x70] sm:$0xff]
        %v347 = vld [vmem:[%s330 + $0x78] sm:$0xff]
        %v348 = vld [vmem:[%s330 + $0x80] sm:$0xff]
        %v349 = vld [vmem:[%s330 + $0x88] sm:$0xff]
        %v350 = vld [vmem:[%s330 + $0x90] sm:$0xff]
        %v351 = vld [vmem:[%s330 + $0x98] sm:$0xff]
        %v352 = vld [vmem:[%s330 + $0xa0] sm:$0xff]
        %v353 = vld [vmem:[%s330 + $0xa8] sm:$0xff]
        %v354 = vld [vmem:[%s330 + $0xb0] sm:$0xff]
        %v355 = vld [vmem:[%s330 + $0xb8] sm:$0xff]
        %v356 = vld [vmem:[%s330 + $0xc0] sm:$0xff]
        %v357 = vld [vmem:[%s330 + $0xc8] sm:$0xff]
        %v358 = vld [vmem:[%s330 + $0xd0] sm:$0xff]
        %v359 = vld [vmem:[%s330 + $0xd8] sm:$0xff]
        %v360 = vld [vmem:[%s330 + $0xe0] sm:$0xff]
        %v361 = vld [vmem:[%s330 + $0xe8] sm:$0xff]
        %v362 = vld [vmem:[%s330 + $0xf0] sm:$0xff]
        %v363 = vld [vmem:[%s330 + $0xf8] sm:$0xff]
        %v364 = vpack.c.bf16 %v333, %v332
        %v365 = vpack.c.bf16 %v335, %v334
        %v366 = vpack.c.bf16 %v337, %v336
        %v367 = vpack.c.bf16 %v339, %v338
        %v368 = vpack.c.bf16 %v341, %v340
        %v369 = vpack.c.bf16 %v343, %v342
        %v370 = vpack.c.bf16 %v345, %v344
        %v371 = vpack.c.bf16 %v347, %v346
        %v372 = vpack.c.bf16 %v349, %v348
        %v373 = vpack.c.bf16 %v351, %v350
        %v374 = vpack.c.bf16 %v353, %v352
        %v375 = vpack.c.bf16 %v355, %v354
        %v376 = vpack.c.bf16 %v357, %v356
        %v377 = vpack.c.bf16 %v359, %v358
        %v378 = vpack.c.bf16 %v361, %v360
        %v379 = vpack.c.bf16 %v363, %v362
        %v380 = vld [vmem:[%s1] sm:$0x3]
        %v381 = vld [vmem:[%s2] sm:$0x1]
        %v383 = vlaneseq
        %v384 = vshrl.u32 %v383, 7
        %v385 = vsub.s32 0, %v384
        %v386 = vrot.slane %v381, %v385
        %vm388 = vcmask 31744
        %v390 = vsel %vm388, %v364, 0
        %v393 = vsel %vm388, %v365, 0
        %v396 = vsel %vm388, %v366, 0
        %v399 = vsel %vm388, %v367, 0
        %v402 = vsel %vm388, %v368, 0
        %v405 = vsel %vm388, %v369, 0
        %v408 = vsel %vm388, %v370, 0
        %v411 = vsel %vm388, %v371, 0
        %v414 = vsel %vm388, %v372, 0
        %v417 = vsel %vm388, %v373, 0
        %v420 = vsel %vm388, %v374, 0
        %v423 = vsel %vm388, %v375, 0
        %v426 = vsel %vm388, %v376, 0
        %v429 = vsel %vm388, %v377, 0
        %v432 = vsel %vm388, %v378, 0
        %v435 = vsel %vm388, %v379, 0
        %vm437 = vcmask 1041408
        %v439 = vsel %vm437, %v380, 0
        %441 = vmatprep.subr.bf16.mxu0 0
        %442 = vmatpush1.bf16.msra.mxu0 %v439
        %443 = vmatprep.subr.bf16.mxu0 0
        %444 = vmatpush1.bf16.msra.mxu0 0
        %445 = vmatprep.subr.bf16.mxu0 0
        %446 = vmatpush1.bf16.msra.mxu0 0
        %447 = vmatprep.subr.bf16.mxu0 0
        %448 = vmatpush1.bf16.msra.mxu0 0
        %449 = vmatprep.subr.bf16.mxu0 0
        %450 = vmatpush1.bf16.msra.mxu0 0
        %451 = vmatprep.subr.bf16.mxu0 0
        %452 = vmatpush1.bf16.msra.mxu0 0
        %453 = vmatprep.subr.bf16.mxu0 0
        %454 = vmatpush1.bf16.msra.mxu0 0
        %455 = vmatprep.subr.bf16.mxu0 0
        %456 = vmatpush1.bf16.msra.mxu0 0
        %457 = vmatprep.subr.bf16.mxu0 0
        %458 = vmatpush1.bf16.msra.mxu0 0
        %459 = vmatprep.subr.bf16.mxu0 0
        %460 = vmatpush1.bf16.msra.mxu0 0
        %461 = vmatprep.subr.bf16.mxu0 0
        %462 = vmatpush1.bf16.msra.mxu0 0
        %463 = vmatprep.subr.bf16.mxu0 0
        %464 = vmatpush1.bf16.msra.mxu0 0
        %465 = vmatprep.subr.bf16.mxu0 0
        %466 = vmatpush1.bf16.msra.mxu0 0
        %467 = vmatprep.subr.bf16.mxu0 0
        %468 = vmatpush1.bf16.msra.mxu0 0
        %469 = vmatprep.subr.bf16.mxu0 0
        %470 = vmatpush1.bf16.msra.mxu0 0
        %471 = vmatprep.subr.bf16.mxu0 0
        %472 = vmatpush1.bf16.msra.mxu0 0
        %473 = vmatprep.mubr.bf16.mxu0 0
        %474 = vmatmul.mubr.bf16.gmra.mrb[0].mxu0 %v390
        %v475 = vpop.f32.mrb[0].mxu0
        %v476 = vadd.f32 %v386, %v475
        %v477 = vpop.f32.mrb[0].mxu0
        %v478 = vpop.f32.mrb[0].mxu0
        %v479 = vadd.f32 %v386, %v478
        %v480 = vpop.f32.mrb[0].mxu0
        %481 = vmatprep.mubr.bf16.mxu0 0
        %482 = vmatmul.mubr.bf16.gmra.mrb[0].mxu0 %v393
        %v483 = vpop.f32.mrb[0].mxu0
        %v484 = vadd.f32 %v386, %v483
        %v485 = vpop.f32.mrb[0].mxu0
        %v486 = vpop.f32.mrb[0].mxu0
        %v487 = vadd.f32 %v386, %v486
        %v488 = vpop.f32.mrb[0].mxu0
        %489 = vmatprep.mubr.bf16.mxu0 0
        %490 = vmatmul.mubr.bf16.gmra.mrb[0].mxu0 %v396
        %v491 = vpop.f32.mrb[0].mxu0
        %v492 = vadd.f32 %v386, %v491
        %v493 = vpop.f32.mrb[0].mxu0
        %v494 = vpop.f32.mrb[0].mxu0
        %v495 = vadd.f32 %v386, %v494
        %v496 = vpop.f32.mrb[0].mxu0
        %497 = vmatprep.mubr.bf16.mxu0 0
        %498 = vmatmul.mubr.bf16.gmra.mrb[0].mxu0 %v399
        %v499 = vpop.f32.mrb[0].mxu0
        %v500 = vadd.f32 %v386, %v499
        %v501 = vpop.f32.mrb[0].mxu0
        %v502 = vpop.f32.mrb[0].mxu0
        %v503 = vadd.f32 %v386, %v502
        %v504 = vpop.f32.mrb[0].mxu0
        %505 = vmatprep.mubr.bf16.mxu0 0
        %506 = vmatmul.mubr.bf16.gmra.mrb[0].mxu0 %v402
        %v507 = vpop.f32.mrb[0].mxu0
        %v508 = vadd.f32 %v386, %v507
        %v509 = vpop.f32.mrb[0].mxu0
        %v510 = vpop.f32.mrb[0].mxu0
        %v511 = vadd.f32 %v386, %v510
        %v512 = vpop.f32.mrb[0].mxu0
        %513 = vmatprep.mubr.bf16.mxu0 0
        %514 = vmatmul.mubr.bf16.gmra.mrb[0].mxu0 %v405
        %v515 = vpop.f32.mrb[0].mxu0
        %v516 = vadd.f32 %v386, %v515
        %v517 = vpop.f32.mrb[0].mxu0
        %v518 = vpop.f32.mrb[0].mxu0
        %v519 = vadd.f32 %v386, %v518
        %v520 = vpop.f32.mrb[0].mxu0
        %521 = vmatprep.mubr.bf16.mxu0 0
        %522 = vmatmul.mubr.bf16.gmra.mrb[0].mxu0 %v408
        %v523 = vpop.f32.mrb[0].mxu0
        %v524 = vadd.f32 %v386, %v523
        %v525 = vpop.f32.mrb[0].mxu0
        %v526 = vpop.f32.mrb[0].mxu0
        %v527 = vadd.f32 %v386, %v526
        %v528 = vpop.f32.mrb[0].mxu0
        %529 = vmatprep.mubr.bf16.mxu0 0
        %530 = vmatmul.mubr.bf16.gmra.mrb[0].mxu0 %v411
        %v531 = vpop.f32.mrb[0].mxu0
        %v532 = vadd.f32 %v386, %v531
        %v533 = vpop.f32.mrb[0].mxu0
        %v534 = vpop.f32.mrb[0].mxu0
        %v535 = vadd.f32 %v386, %v534
        %v536 = vpop.f32.mrb[0].mxu0
        %537 = vmatprep.mubr.bf16.mxu0 0
        %538 = vmatmul.mubr.bf16.gmra.mrb[0].mxu0 %v414
        %v539 = vpop.f32.mrb[0].mxu0
        %v540 = vadd.f32 %v386, %v539
        %v541 = vpop.f32.mrb[0].mxu0
        %v542 = vpop.f32.mrb[0].mxu0
        %v543 = vadd.f32 %v386, %v542
        %v544 = vpop.f32.mrb[0].mxu0
        %545 = vmatprep.mubr.bf16.mxu0 0
        %546 = vmatmul.mubr.bf16.gmra.mrb[0].mxu0 %v417
        %v547 = vpop.f32.mrb[0].mxu0
        %v548 = vadd.f32 %v386, %v547
        %v549 = vpop.f32.mrb[0].mxu0
        %v550 = vpop.f32.mrb[0].mxu0
        %v551 = vadd.f32 %v386, %v550
        %v552 = vpop.f32.mrb[0].mxu0
        %553 = vmatprep.mubr.bf16.mxu0 0
        %554 = vmatmul.mubr.bf16.gmra.mrb[0].mxu0 %v420
        %v555 = vpop.f32.mrb[0].mxu0
        %v556 = vadd.f32 %v386, %v555
        %v557 = vpop.f32.mrb[0].mxu0
        %v558 = vpop.f32.mrb[0].mxu0
        %v559 = vadd.f32 %v386, %v558
        %v560 = vpop.f32.mrb[0].mxu0
        %561 = vmatprep.mubr.bf16.mxu0 0
        %562 = vmatmul.mubr.bf16.gmra.mrb[0].mxu0 %v423
        %v563 = vpop.f32.mrb[0].mxu0
        %v564 = vadd.f32 %v386, %v563
        %v565 = vpop.f32.mrb[0].mxu0
        %v566 = vpop.f32.mrb[0].mxu0
        %v567 = vadd.f32 %v386, %v566
        %v568 = vpop.f32.mrb[0].mxu0
        %569 = vmatprep.mubr.bf16.mxu0 0
        %570 = vmatmul.mubr.bf16.gmra.mrb[0].mxu0 %v426
        %v571 = vpop.f32.mrb[0].mxu0
        %v572 = vadd.f32 %v386, %v571
        %v573 = vpop.f32.mrb[0].mxu0
        %v574 = vpop.f32.mrb[0].mxu0
        %v575 = vadd.f32 %v386, %v574
        %v576 = vpop.f32.mrb[0].mxu0
        %577 = vmatprep.mubr.bf16.mxu0 0
        %578 = vmatmul.mubr.bf16.gmra.mrb[0].mxu0 %v429
        %v579 = vpop.f32.mrb[0].mxu0
        %v580 = vadd.f32 %v386, %v579
        %v581 = vpop.f32.mrb[0].mxu0
        %v582 = vpop.f32.mrb[0].mxu0
        %v583 = vadd.f32 %v386, %v582
        %v584 = vpop.f32.mrb[0].mxu0
        %585 = vmatprep.mubr.bf16.mxu0 0
        %586 = vmatmul.mubr.bf16.gmra.mrb[0].mxu0 %v432
        %v587 = vpop.f32.mrb[0].mxu0
        %v588 = vadd.f32 %v386, %v587
        %v589 = vpop.f32.mrb[0].mxu0
        %v590 = vpop.f32.mrb[0].mxu0
        %v591 = vadd.f32 %v386, %v590
        %v592 = vpop.f32.mrb[0].mxu0
        %593 = vmatprep.mubr.bf16.mxu0 0
        %594 = vmatmul.mubr.bf16.gmra.mrb[0].mxu0 %v435
        %v595 = vpop.f32.mrb[0].mxu0
        %v596 = vadd.f32 %v386, %v595
        %v597 = vpop.f32.mrb[0].mxu0
        %v598 = vpop.f32.mrb[0].mxu0
        %v599 = vadd.f32 %v386, %v598
        %v600 = vpop.f32.mrb[0].mxu0
        %601 = vdwg.mxu0
        %v602 = vmax.f32 %v476, 0.0
        %v603 = vmax.f32 %v479, 0.0
        %v604 = vmax.f32 %v484, 0.0
        %v605 = vmax.f32 %v487, 0.0
        %v606 = vmax.f32 %v492, 0.0
        %v607 = vmax.f32 %v495, 0.0
        %v608 = vmax.f32 %v500, 0.0
        %v609 = vmax.f32 %v503, 0.0
        %v610 = vmax.f32 %v508, 0.0
        %v611 = vmax.f32 %v511, 0.0
        %v612 = vmax.f32 %v516, 0.0
        %v613 = vmax.f32 %v519, 0.0
        %v614 = vmax.f32 %v524, 0.0
        %v615 = vmax.f32 %v527, 0.0
        %v616 = vmax.f32 %v532, 0.0
        %v617 = vmax.f32 %v535, 0.0
        %v618 = vmax.f32 %v540, 0.0
        %v619 = vmax.f32 %v543, 0.0
        %v620 = vmax.f32 %v548, 0.0
        %v621 = vmax.f32 %v551, 0.0
        %v622 = vmax.f32 %v556, 0.0
        %v623 = vmax.f32 %v559, 0.0
        %v624 = vmax.f32 %v564, 0.0
        %v625 = vmax.f32 %v567, 0.0
        %v626 = vmax.f32 %v572, 0.0
        %v627 = vmax.f32 %v575, 0.0
        %v628 = vmax.f32 %v580, 0.0
        %v629 = vmax.f32 %v583, 0.0
        %v630 = vmax.f32 %v588, 0.0
        %v631 = vmax.f32 %v591, 0.0
        %v632 = vmax.f32 %v596, 0.0
        %v633 = vmax.f32 %v599, 0.0
        %634 = vst.msk [vmem:[#allocation2] sm:$0xff] %vm388, 0.0
        %635 = vst.msk [vmem:[#allocation2 + $0x8] sm:$0xff] %vm388, 0.0
        %vm636 = vcmask 25600
        %637 = vst.msk [vmem:[#allocation2 + $0x10] sm:$0x3] %vm636, 0.0
        %s638 = scalar_lea.vmem [#allocation2], 408
        %639 = vst.msk [vmem:[%s638] sm:$0xff] %vm388, 0.0
        %640 = vst.msk [vmem:[%s638 + $0x8] sm:$0xff] %vm388, 0.0
        %641 = vst.msk [vmem:[%s638 + $0x10] sm:$0x3] %vm636, 0.0
        %vm674 = vcmask 1040384
        %v675 = vrot.slane %v602, 7
        %v676 = vrot.slane %v603, 7
        %v677 = vsel %vm674, %v675, %v676
        %v678 = vrot.slane %v604, 7
        %v679 = vrot.slane %v605, 7
        %v680 = vsel %vm674, %v678, %v679
        %v681 = vrot.slane %v606, 7
        %v682 = vrot.slane %v607, 7
        %v683 = vsel %vm674, %v681, %v682
        %v684 = vrot.slane %v608, 7
        %v685 = vrot.slane %v609, 7
        %v686 = vsel %vm674, %v684, %v685
        %v687 = vrot.slane %v610, 7
        %v688 = vrot.slane %v611, 7
        %v689 = vsel %vm674, %v687, %v688
        %v690 = vrot.slane %v612, 7
        %v691 = vrot.slane %v613, 7
        %v692 = vsel %vm674, %v690, %v691
        %v693 = vrot.slane %v614, 7
        %v694 = vrot.slane %v615, 7
        %v695 = vsel %vm674, %v693, %v694
        %v696 = vrot.slane %v616, 7
        %v697 = vrot.slane %v617, 7
        %v698 = vsel %vm674, %v696, %v697
        %v699 = vrot.slane %v618, 7
        %v700 = vrot.slane %v619, 7
        %v701 = vsel %vm674, %v699, %v700
        %v702 = vrot.slane %v620, 7
        %v703 = vrot.slane %v621, 7
        %v704 = vsel %vm674, %v702, %v703
        %v705 = vrot.slane %v622, 7
        %v706 = vrot.slane %v623, 7
        %v707 = vsel %vm674, %v705, %v706
        %v708 = vrot.slane %v624, 7
        %v709 = vrot.slane %v625, 7
        %v710 = vsel %vm674, %v708, %v709
        %v711 = vrot.slane %v626, 7
        %v712 = vrot.slane %v627, 7
        %v713 = vsel %vm674, %v711, %v712
        %v714 = vrot.slane %v628, 7
        %v715 = vrot.slane %v629, 7
        %v716 = vsel %vm674, %v714, %v715
        %v717 = vrot.slane %v630, 7
        %v718 = vrot.slane %v631, 7
        %v719 = vsel %vm674, %v717, %v718
        %v720 = vrot.slane %v632, 7
        %v721 = vrot.slane %v633, 7
        %v722 = vsel %vm674, %v720, %v721
        %723 = vrot.lane.b32.xlu0 %v675, 120
        %v724 = vpop.permute.xlu0 %723
        %725 = vrot.lane.b32.xlu0 %v677, 120
        %v726 = vpop.permute.xlu0 %725
        %727 = vrot.lane.b32.xlu0 %v676, 120
        %v728 = vpop.permute.xlu0 %727
        %729 = vrot.lane.b32.xlu0 %v678, 120
        %v730 = vpop.permute.xlu0 %729
        %731 = vrot.lane.b32.xlu0 %v680, 120
        %v732 = vpop.permute.xlu0 %731
        %733 = vrot.lane.b32.xlu0 %v679, 120
        %v734 = vpop.permute.xlu0 %733
        %735 = vrot.lane.b32.xlu0 %v681, 120
        %v736 = vpop.permute.xlu0 %735
        %737 = vrot.lane.b32.xlu0 %v683, 120
        %v738 = vpop.permute.xlu0 %737
        %739 = vrot.lane.b32.xlu0 %v682, 120
        %v740 = vpop.permute.xlu0 %739
        %741 = vrot.lane.b32.xlu0 %v684, 120
        %v742 = vpop.permute.xlu0 %741
        %743 = vrot.lane.b32.xlu0 %v686, 120
        %v744 = vpop.permute.xlu0 %743
        %745 = vrot.lane.b32.xlu0 %v685, 120
        %v746 = vpop.permute.xlu0 %745
        %747 = vrot.lane.b32.xlu0 %v687, 120
        %v748 = vpop.permute.xlu0 %747
        %749 = vrot.lane.b32.xlu0 %v689, 120
        %v750 = vpop.permute.xlu0 %749
        %751 = vrot.lane.b32.xlu0 %v688, 120
        %v752 = vpop.permute.xlu0 %751
        %753 = vrot.lane.b32.xlu0 %v690, 120
        %v754 = vpop.permute.xlu0 %753
        %755 = vrot.lane.b32.xlu0 %v692, 120
        %v756 = vpop.permute.xlu0 %755
        %757 = vrot.lane.b32.xlu0 %v691, 120
        %v758 = vpop.permute.xlu0 %757
        %759 = vrot.lane.b32.xlu0 %v693, 120
        %v760 = vpop.permute.xlu0 %759
        %761 = vrot.lane.b32.xlu0 %v695, 120
        %v762 = vpop.permute.xlu0 %761
        %763 = vrot.lane.b32.xlu0 %v694, 120
        %v764 = vpop.permute.xlu0 %763
        %765 = vrot.lane.b32.xlu0 %v696, 120
        %v766 = vpop.permute.xlu0 %765
        %767 = vrot.lane.b32.xlu0 %v698, 120
        %v768 = vpop.permute.xlu0 %767
        %769 = vrot.lane.b32.xlu0 %v697, 120
        %v770 = vpop.permute.xlu0 %769
        %771 = vrot.lane.b32.xlu0 %v699, 120
        %v772 = vpop.permute.xlu0 %771
        %773 = vrot.lane.b32.xlu0 %v701, 120
        %v774 = vpop.permute.xlu0 %773
        %775 = vrot.lane.b32.xlu0 %v700, 120
        %v776 = vpop.permute.xlu0 %775
        %777 = vrot.lane.b32.xlu0 %v702, 120
        %v778 = vpop.permute.xlu0 %777
        %779 = vrot.lane.b32.xlu0 %v704, 120
        %v780 = vpop.permute.xlu0 %779
        %781 = vrot.lane.b32.xlu0 %v703, 120
        %v782 = vpop.permute.xlu0 %781
        %783 = vrot.lane.b32.xlu0 %v705, 120
        %v784 = vpop.permute.xlu0 %783
        %785 = vrot.lane.b32.xlu0 %v707, 120
        %v786 = vpop.permute.xlu0 %785
        %787 = vrot.lane.b32.xlu0 %v706, 120
        %v788 = vpop.permute.xlu0 %787
        %789 = vrot.lane.b32.xlu0 %v708, 120
        %v790 = vpop.permute.xlu0 %789
        %791 = vrot.lane.b32.xlu0 %v710, 120
        %v792 = vpop.permute.xlu0 %791
        %793 = vrot.lane.b32.xlu0 %v709, 120
        %v794 = vpop.permute.xlu0 %793
        %795 = vrot.lane.b32.xlu0 %v711, 120
        %v796 = vpop.permute.xlu0 %795
        %797 = vrot.lane.b32.xlu0 %v713, 120
        %v798 = vpop.permute.xlu0 %797
        %799 = vrot.lane.b32.xlu0 %v712, 120
        %v800 = vpop.permute.xlu0 %799
        %801 = vrot.lane.b32.xlu0 %v714, 120
        %v802 = vpop.permute.xlu0 %801
        %803 = vrot.lane.b32.xlu0 %v716, 120
        %v804 = vpop.permute.xlu0 %803
        %805 = vrot.lane.b32.xlu0 %v715, 120
        %v806 = vpop.permute.xlu0 %805
        %807 = vrot.lane.b32.xlu0 %v717, 120
        %v808 = vpop.permute.xlu0 %807
        %809 = vrot.lane.b32.xlu0 %v719, 120
        %v810 = vpop.permute.xlu0 %809
        %811 = vrot.lane.b32.xlu0 %v718, 120
        %v812 = vpop.permute.xlu0 %811
        %813 = vrot.lane.b32.xlu0 %v720, 120
        %v814 = vpop.permute.xlu0 %813
        %815 = vrot.lane.b32.xlu0 %v722, 120
        %v816 = vpop.permute.xlu0 %815
        %817 = vrot.lane.b32.xlu0 %v721, 120
        %v818 = vpop.permute.xlu0 %817
        %v867 = vsel %vm674, 0.0, %v724
        %v868 = vsel %vm674, 0.0, %v730
        %v869 = vsel %vm674, 0.0, %v736
        %v870 = vsel %vm674, 0.0, %v742
        %v871 = vsel %vm674, 0.0, %v748
        %v872 = vsel %vm674, 0.0, %v754
        %v873 = vsel %vm674, 0.0, %v760
        %v874 = vsel %vm674, 0.0, %v766
        %v875 = vsel %vm674, 0.0, %v772
        %v876 = vsel %vm674, 0.0, %v778
        %v877 = vsel %vm674, 0.0, %v784
        %v878 = vsel %vm674, 0.0, %v790
        %v879 = vsel %vm674, 0.0, %v796
        %v880 = vsel %vm674, 0.0, %v802
        %v881 = vsel %vm674, 0.0, %v808
        %v882 = vsel %vm674, 0.0, %v814
        %v883 = vsel %vm674, %v728, 0.0
        %v884 = vsel %vm674, %v734, 0.0
        %v885 = vsel %vm674, %v740, 0.0
        %v886 = vsel %vm674, %v746, 0.0
        %v887 = vsel %vm674, %v752, 0.0
        %v888 = vsel %vm674, %v758, 0.0
        %v889 = vsel %vm674, %v764, 0.0
        %v890 = vsel %vm674, %v770, 0.0
        %v891 = vsel %vm674, %v776, 0.0
        %v892 = vsel %vm674, %v782, 0.0
        %v893 = vsel %vm674, %v788, 0.0
        %v894 = vsel %vm674, %v794, 0.0
        %v895 = vsel %vm674, %v800, 0.0
        %v896 = vsel %vm674, %v806, 0.0
        %v897 = vsel %vm674, %v812, 0.0
        %v898 = vsel %vm674, %v818, 0.0
        %s899 = scalar_lea.vmem [#allocation2], 24
        %900 = vst.msk [vmem:[%s899] sm:$0xff] %vm388, %v867
        %901 = vst.msk [vmem:[%s899 + $0x8] sm:$0xff] %vm388, %v726
        %902 = vst.msk [vmem:[%s899 + $0x10] sm:$0x3] %vm636, %v883
        %903 = vst.msk [vmem:[%s899 + $0x18] sm:$0xff] %vm388, %v868
        %904 = vst.msk [vmem:[%s899 + $0x20] sm:$0xff] %vm388, %v732
        %905 = vst.msk [vmem:[%s899 + $0x28] sm:$0x3] %vm636, %v884
        %906 = vst.msk [vmem:[%s899 + $0x30] sm:$0xff] %vm388, %v869
        %907 = vst.msk [vmem:[%s899 + $0x38] sm:$0xff] %vm388, %v738
        %908 = vst.msk [vmem:[%s899 + $0x40] sm:$0x3] %vm636, %v885
        %909 = vst.msk [vmem:[%s899 + $0x48] sm:$0xff] %vm388, %v870
        %910 = vst.msk [vmem:[%s899 + $0x50] sm:$0xff] %vm388, %v744
        %911 = vst.msk [vmem:[%s899 + $0x58] sm:$0x3] %vm636, %v886
        %912 = vst.msk [vmem:[%s899 + $0x60] sm:$0xff] %vm388, %v871
        %913 = vst.msk [vmem:[%s899 + $0x68] sm:$0xff] %vm388, %v750
        %914 = vst.msk [vmem:[%s899 + $0x70] sm:$0x3] %vm636, %v887
        %915 = vst.msk [vmem:[%s899 + $0x78] sm:$0xff] %vm388, %v872
        %916 = vst.msk [vmem:[%s899 + $0x80] sm:$0xff] %vm388, %v756
        %917 = vst.msk [vmem:[%s899 + $0x88] sm:$0x3] %vm636, %v888
        %918 = vst.msk [vmem:[%s899 + $0x90] sm:$0xff] %vm388, %v873
        %919 = vst.msk [vmem:[%s899 + $0x98] sm:$0xff] %vm388, %v762
        %920 = vst.msk [vmem:[%s899 + $0xa0] sm:$0x3] %vm636, %v889
        %921 = vst.msk [vmem:[%s899 + $0xa8] sm:$0xff] %vm388, %v874
        %922 = vst.msk [vmem:[%s899 + $0xb0] sm:$0xff] %vm388, %v768
        %923 = vst.msk [vmem:[%s899 + $0xb8] sm:$0x3] %vm636, %v890
        %924 = vst.msk [vmem:[%s899 + $0xc0] sm:$0xff] %vm388, %v875
        %925 = vst.msk [vmem:[%s899 + $0xc8] sm:$0xff] %vm388, %v774
        %926 = vst.msk [vmem:[%s899 + $0xd0] sm:$0x3] %vm636, %v891
        %927 = vst.msk [vmem:[%s899 + $0xd8] sm:$0xff] %vm388, %v876
        %928 = vst.msk [vmem:[%s899 + $0xe0] sm:$0xff] %vm388, %v780
        %929 = vst.msk [vmem:[%s899 + $0xe8] sm:$0x3] %vm636, %v892
        %930 = vst.msk [vmem:[%s899 + $0xf0] sm:$0xff] %vm388, %v877
        %931 = vst.msk [vmem:[%s899 + $0xf8] sm:$0xff] %vm388, %v786
        %932 = vst.msk [vmem:[%s899 + $0x100] sm:$0x3] %vm636, %v893
        %933 = vst.msk [vmem:[%s899 + $0x108] sm:$0xff] %vm388, %v878
        %934 = vst.msk [vmem:[%s899 + $0x110] sm:$0xff] %vm388, %v792
        %935 = vst.msk [vmem:[%s899 + $0x118] sm:$0x3] %vm636, %v894
        %936 = vst.msk [vmem:[%s899 + $0x120] sm:$0xff] %vm388, %v879
        %937 = vst.msk [vmem:[%s899 + $0x128] sm:$0xff] %vm388, %v798
        %938 = vst.msk [vmem:[%s899 + $0x130] sm:$0x3] %vm636, %v895
        %939 = vst.msk [vmem:[%s899 + $0x138] sm:$0xff] %vm388, %v880
        %940 = vst.msk [vmem:[%s899 + $0x140] sm:$0xff] %vm388, %v804
        %941 = vst.msk [vmem:[%s899 + $0x148] sm:$0x3] %vm636, %v896
        %942 = vst.msk [vmem:[%s899 + $0x150] sm:$0xff] %vm388, %v881
        %943 = vst.msk [vmem:[%s899 + $0x158] sm:$0xff] %vm388, %v810
        %944 = vst.msk [vmem:[%s899 + $0x160] sm:$0x3] %vm636, %v897
        %945 = vst.msk [vmem:[%s899 + $0x168] sm:$0xff] %vm388, %v882
        %946 = vst.msk [vmem:[%s899 + $0x170] sm:$0xff] %vm388, %v816
        %947 = vst.msk [vmem:[%s899 + $0x178] sm:$0x3] %vm636, %v898
        %v948 = vld [vmem:[#allocation2] sm:$0xff]
        %v949 = vld [vmem:[#allocation2 + $0x8] sm:$0xff]
        %v950 = vld [vmem:[#allocation2 + $0x18] sm:$0xff]
        %v951 = vld [vmem:[#allocation2 + $0x20] sm:$0xff]
        %v952 = vld [vmem:[#allocation2 + $0x30] sm:$0xff]
        %v953 = vld [vmem:[#allocation2 + $0x38] sm:$0xff]
        %v954 = vld [vmem:[#allocation2 + $0x48] sm:$0xff]
        %v955 = vld [vmem:[#allocation2 + $0x50] sm:$0xff]
        %v956 = vld [vmem:[#allocation2 + $0x60] sm:$0xff]
        %v957 = vld [vmem:[#allocation2 + $0x68] sm:$0xff]
        %v958 = vld [vmem:[#allocation2 + $0x78] sm:$0xff]
        %v959 = vld [vmem:[#allocation2 + $0x80] sm:$0xff]
        %v960 = vld [vmem:[#allocation2 + $0x90] sm:$0xff]
        %v961 = vld [vmem:[#allocation2 + $0x98] sm:$0xff]
        %v962 = vld [vmem:[#allocation2 + $0xa8] sm:$0xff]
        %v963 = vld [vmem:[#allocation2 + $0xb0] sm:$0xff]
        %v964 = vld [vmem:[#allocation2 + $0xc0] sm:$0xff]
        %v965 = vld [vmem:[#allocation2 + $0xc8] sm:$0xff]
        %v966 = vld [vmem:[#allocation2 + $0xd8] sm:$0xff]
        %v967 = vld [vmem:[#allocation2 + $0xe0] sm:$0xff]
        %v968 = vld [vmem:[#allocation2 + $0xf0] sm:$0xff]
        %v969 = vld [vmem:[#allocation2 + $0xf8] sm:$0xff]
        %v970 = vld [vmem:[#allocation2 + $0x108] sm:$0xff]
        %v971 = vld [vmem:[#allocation2 + $0x110] sm:$0xff]
        %v972 = vld [vmem:[#allocation2 + $0x120] sm:$0xff]
        %v973 = vld [vmem:[#allocation2 + $0x128] sm:$0xff]
        %v974 = vld [vmem:[#allocation2 + $0x138] sm:$0xff]
        %v975 = vld [vmem:[#allocation2 + $0x140] sm:$0xff]
        %v976 = vld [vmem:[#allocation2 + $0x150] sm:$0xff]
        %v977 = vld [vmem:[#allocation2 + $0x158] sm:$0xff]
        %v978 = vld [vmem:[#allocation2 + $0x168] sm:$0xff]
        %v979 = vld [vmem:[#allocation2 + $0x170] sm:$0xff]
        %v980 = vld [vmem:[#allocation2 + $0x1] sm:$0xff]
        %v981 = vld [vmem:[#allocation2 + $0x9] sm:$0xff]
        %v982 = vld [vmem:[#allocation2 + $0x19] sm:$0xff]
        %v983 = vld [vmem:[#allocation2 + $0x21] sm:$0xff]
        %v984 = vld [vmem:[#allocation2 + $0x31] sm:$0xff]
        %v985 = vld [vmem:[#allocation2 + $0x39] sm:$0xff]
        %v986 = vld [vmem:[#allocation2 + $0x49] sm:$0xff]
        %v987 = vld [vmem:[#allocation2 + $0x51] sm:$0xff]
        %v988 = vld [vmem:[#allocation2 + $0x61] sm:$0xff]
        %v989 = vld [vmem:[#allocation2 + $0x69] sm:$0xff]
        %v990 = vld [vmem:[#allocation2 + $0x79] sm:$0xff]
        %v991 = vld [vmem:[#allocation2 + $0x81] sm:$0xff]
        %v992 = vld [vmem:[#allocation2 + $0x91] sm:$0xff]
        %v993 = vld [vmem:[#allocation2 + $0x99] sm:$0xff]
        %v994 = vld [vmem:[#allocation2 + $0xa9] sm:$0xff]
        %v995 = vld [vmem:[#allocation2 + $0xb1] sm:$0xff]
        %v996 = vld [vmem:[#allocation2 + $0xc1] sm:$0xff]
        %v997 = vld [vmem:[#allocation2 + $0xc9] sm:$0xff]
        %v998 = vld [vmem:[#allocation2 + $0xd9] sm:$0xff]
        %v999 = vld [vmem:[#allocation2 + $0xe1] sm:$0xff]
        %v1000 = vld [vmem:[#allocation2 + $0xf1] sm:$0xff]
        %v1001 = vld [vmem:[#allocation2 + $0xf9] sm:$0xff]
        %v1002 = vld [vmem:[#allocation2 + $0x109] sm:$0xff]
        %v1003 = vld [vmem:[#allocation2 + $0x111] sm:$0xff]
        %v1004 = vld [vmem:[#allocation2 + $0x121] sm:$0xff]
        %v1005 = vld [vmem:[#allocation2 + $0x129] sm:$0xff]
        %v1006 = vld [vmem:[#allocation2 + $0x139] sm:$0xff]
        %v1007 = vld [vmem:[#allocation2 + $0x141] sm:$0xff]
        %v1008 = vld [vmem:[#allocation2 + $0x151] sm:$0xff]
        %v1009 = vld [vmem:[#allocation2 + $0x159] sm:$0xff]
        %v1010 = vld [vmem:[#allocation2 + $0x169] sm:$0xff]
        %v1011 = vld [vmem:[#allocation2 + $0x171] sm:$0xff]
        %v1012 = vld [vmem:[#allocation2 + $0x2] sm:$0xff]
        %v1013 = vld [vmem:[#allocation2 + $0xa] sm:$0xff]
        %v1014 = vld [vmem:[#allocation2 + $0x1a] sm:$0xff]
        %v1015 = vld [vmem:[#allocation2 + $0x22] sm:$0xff]
        %v1016 = vld [vmem:[#allocation2 + $0x32] sm:$0xff]
        %v1017 = vld [vmem:[#allocation2 + $0x3a] sm:$0xff]
        %v1018 = vld [vmem:[#allocation2 + $0x4a] sm:$0xff]
        %v1019 = vld [vmem:[#allocation2 + $0x52] sm:$0xff]
        %v1020 = vld [vmem:[#allocation2 + $0x62] sm:$0xff]
        %v1021 = vld [vmem:[#allocation2 + $0x6a] sm:$0xff]
        %v1022 = vld [vmem:[#allocation2 + $0x7a] sm:$0xff]
        %v1023 = vld [vmem:[#allocation2 + $0x82] sm:$0xff]
        %v1024 = vld [vmem:[#allocation2 + $0x92] sm:$0xff]
        %v1025 = vld [vmem:[#allocation2 + $0x9a] sm:$0xff]
        %v1026 = vld [vmem:[#allocation2 + $0xaa] sm:$0xff]
        %v1027 = vld [vmem:[#allocation2 + $0xb2] sm:$0xff]
        %v1028 = vld [vmem:[#allocation2 + $0xc2] sm:$0xff]
        %v1029 = vld [vmem:[#allocation2 + $0xca] sm:$0xff]
        %v1030 = vld [vmem:[#allocation2 + $0xda] sm:$0xff]
        %v1031 = vld [vmem:[#allocation2 + $0xe2] sm:$0xff]
        %v1032 = vld [vmem:[#allocation2 + $0xf2] sm:$0xff]
        %v1033 = vld [vmem:[#allocation2 + $0xfa] sm:$0xff]
        %v1034 = vld [vmem:[#allocation2 + $0x10a] sm:$0xff]
        %v1035 = vld [vmem:[#allocation2 + $0x112] sm:$0xff]
        %v1036 = vld [vmem:[#allocation2 + $0x122] sm:$0xff]
        %v1037 = vld [vmem:[#allocation2 + $0x12a] sm:$0xff]
        %v1038 = vld [vmem:[#allocation2 + $0x13a] sm:$0xff]
        %v1039 = vld [vmem:[#allocation2 + $0x142] sm:$0xff]
        %v1040 = vld [vmem:[#allocation2 + $0x152] sm:$0xff]
        %v1041 = vld [vmem:[#allocation2 + $0x15a] sm:$0xff]
        %v1042 = vld [vmem:[#allocation2 + $0x16a] sm:$0xff]
        %v1043 = vld [vmem:[#allocation2 + $0x172] sm:$0xff]
        %v1044 = vld [vmem:[%s899] sm:$0xff]
        %v1045 = vld [vmem:[%s899 + $0x8] sm:$0xff]
        %v1046 = vld [vmem:[%s899 + $0x18] sm:$0xff]
        %v1047 = vld [vmem:[%s899 + $0x20] sm:$0xff]
        %v1048 = vld [vmem:[%s899 + $0x30] sm:$0xff]
        %v1049 = vld [vmem:[%s899 + $0x38] sm:$0xff]
        %v1050 = vld [vmem:[%s899 + $0x48] sm:$0xff]
        %v1051 = vld [vmem:[%s899 + $0x50] sm:$0xff]
        %v1052 = vld [vmem:[%s899 + $0x60] sm:$0xff]
        %v1053 = vld [vmem:[%s899 + $0x68] sm:$0xff]
        %v1054 = vld [vmem:[%s899 + $0x78] sm:$0xff]
        %v1055 = vld [vmem:[%s899 + $0x80] sm:$0xff]
        %v1056 = vld [vmem:[%s899 + $0x90] sm:$0xff]
        %v1057 = vld [vmem:[%s899 + $0x98] sm:$0xff]
        %v1058 = vld [vmem:[%s899 + $0xa8] sm:$0xff]
        %v1059 = vld [vmem:[%s899 + $0xb0] sm:$0xff]
        %v1060 = vld [vmem:[%s899 + $0xc0] sm:$0xff]
        %v1061 = vld [vmem:[%s899 + $0xc8] sm:$0xff]
        %v1062 = vld [vmem:[%s899 + $0xd8] sm:$0xff]
        %v1063 = vld [vmem:[%s899 + $0xe0] sm:$0xff]
        %v1064 = vld [vmem:[%s899 + $0xf0] sm:$0xff]
        %v1065 = vld [vmem:[%s899 + $0xf8] sm:$0xff]
        %v1066 = vld [vmem:[%s899 + $0x108] sm:$0xff]
        %v1067 = vld [vmem:[%s899 + $0x110] sm:$0xff]
        %v1068 = vld [vmem:[%s899 + $0x120] sm:$0xff]
        %v1069 = vld [vmem:[%s899 + $0x128] sm:$0xff]
        %v1070 = vld [vmem:[%s899 + $0x138] sm:$0xff]
        %v1071 = vld [vmem:[%s899 + $0x140] sm:$0xff]
        %v1072 = vld [vmem:[%s899 + $0x150] sm:$0xff]
        %v1073 = vld [vmem:[%s899 + $0x158] sm:$0xff]
        %v1074 = vld [vmem:[%s899 + $0x168] sm:$0xff]
        %v1075 = vld [vmem:[%s899 + $0x170] sm:$0xff]
        %v1076 = vld [vmem:[%s899 + $0x1] sm:$0xff]
        %v1077 = vld [vmem:[%s899 + $0x9] sm:$0xff]
        %v1078 = vld [vmem:[%s899 + $0x19] sm:$0xff]
        %v1079 = vld [vmem:[%s899 + $0x21] sm:$0xff]
        %v1080 = vld [vmem:[%s899 + $0x31] sm:$0xff]
        %v1081 = vld [vmem:[%s899 + $0x39] sm:$0xff]
        %v1082 = vld [vmem:[%s899 + $0x49] sm:$0xff]
        %v1083 = vld [vmem:[%s899 + $0x51] sm:$0xff]
        %v1084 = vld [vmem:[%s899 + $0x61] sm:$0xff]
        %v1085 = vld [vmem:[%s899 + $0x69] sm:$0xff]
        %v1086 = vld [vmem:[%s899 + $0x79] sm:$0xff]
        %v1087 = vld [vmem:[%s899 + $0x81] sm:$0xff]
        %v1088 = vld [vmem:[%s899 + $0x91] sm:$0xff]
        %v1089 = vld [vmem:[%s899 + $0x99] sm:$0xff]
        %v1090 = vld [vmem:[%s899 + $0xa9] sm:$0xff]
        %v1091 = vld [vmem:[%s899 + $0xb1] sm:$0xff]
        %v1092 = vld [vmem:[%s899 + $0xc1] sm:$0xff]
        %v1093 = vld [vmem:[%s899 + $0xc9] sm:$0xff]
        %v1094 = vld [vmem:[%s899 + $0xd9] sm:$0xff]
        %v1095 = vld [vmem:[%s899 + $0xe1] sm:$0xff]
        %v1096 = vld [vmem:[%s899 + $0xf1] sm:$0xff]
        %v1097 = vld [vmem:[%s899 + $0xf9] sm:$0xff]
        %v1098 = vld [vmem:[%s899 + $0x109] sm:$0xff]
        %v1099 = vld [vmem:[%s899 + $0x111] sm:$0xff]
        %v1100 = vld [vmem:[%s899 + $0x121] sm:$0xff]
        %v1101 = vld [vmem:[%s899 + $0x129] sm:$0xff]
        %v1102 = vld [vmem:[%s899 + $0x139] sm:$0xff]
        %v1103 = vld [vmem:[%s899 + $0x141] sm:$0xff]
        %v1104 = vld [vmem:[%s899 + $0x151] sm:$0xff]
        %v1105 = vld [vmem:[%s899 + $0x159] sm:$0xff]
        %v1106 = vld [vmem:[%s899 + $0x169] sm:$0xff]
        %v1107 = vld [vmem:[%s899 + $0x171] sm:$0xff]
        %v1108 = vld [vmem:[%s899 + $0x2] sm:$0xff]
        %v1109 = vld [vmem:[%s899 + $0xa] sm:$0xff]
        %v1110 = vld [vmem:[%s899 + $0x1a] sm:$0xff]
        %v1111 = vld [vmem:[%s899 + $0x22] sm:$0xff]
        %v1112 = vld [vmem:[%s899 + $0x32] sm:$0xff]
        %v1113 = vld [vmem:[%s899 + $0x3a] sm:$0xff]
        %v1114 = vld [vmem:[%s899 + $0x4a] sm:$0xff]
        %v1115 = vld [vmem:[%s899 + $0x52] sm:$0xff]
        %v1116 = vld [vmem:[%s899 + $0x62] sm:$0xff]
        %v1117 = vld [vmem:[%s899 + $0x6a] sm:$0xff]
        %v1118 = vld [vmem:[%s899 + $0x7a] sm:$0xff]
        %v1119 = vld [vmem:[%s899 + $0x82] sm:$0xff]
        %v1120 = vld [vmem:[%s899 + $0x92] sm:$0xff]
        %v1121 = vld [vmem:[%s899 + $0x9a] sm:$0xff]
        %v1122 = vld [vmem:[%s899 + $0xaa] sm:$0xff]
        %v1123 = vld [vmem:[%s899 + $0xb2] sm:$0xff]
        %v1124 = vld [vmem:[%s899 + $0xc2] sm:$0xff]
        %v1125 = vld [vmem:[%s899 + $0xca] sm:$0xff]
        %v1126 = vld [vmem:[%s899 + $0xda] sm:$0xff]
        %v1127 = vld [vmem:[%s899 + $0xe2] sm:$0xff]
        %v1128 = vld [vmem:[%s899 + $0xf2] sm:$0xff]
        %v1129 = vld [vmem:[%s899 + $0xfa] sm:$0xff]
        %v1130 = vld [vmem:[%s899 + $0x10a] sm:$0xff]
        %v1131 = vld [vmem:[%s899 + $0x112] sm:$0xff]
        %v1132 = vld [vmem:[%s899 + $0x122] sm:$0xff]
        %v1133 = vld [vmem:[%s899 + $0x12a] sm:$0xff]
        %v1134 = vld [vmem:[%s899 + $0x13a] sm:$0xff]
        %v1135 = vld [vmem:[%s899 + $0x142] sm:$0xff]
        %v1136 = vld [vmem:[%s899 + $0x152] sm:$0xff]
        %v1137 = vld [vmem:[%s899 + $0x15a] sm:$0xff]
        %v1138 = vld [vmem:[%s899 + $0x16a] sm:$0xff]
        %v1139 = vld [vmem:[%s899 + $0x172] sm:$0xff]
        %s1140 = scalar_lea.vmem [#allocation2], 48
        %v1141 = vld [vmem:[%s1140] sm:$0xff]
        %v1142 = vld [vmem:[%s1140 + $0x8] sm:$0xff]
        %v1143 = vld [vmem:[%s1140 + $0x18] sm:$0xff]
        %v1144 = vld [vmem:[%s1140 + $0x20] sm:$0xff]
        %v1145 = vld [vmem:[%s1140 + $0x30] sm:$0xff]
        %v1146 = vld [vmem:[%s1140 + $0x38] sm:$0xff]
        %v1147 = vld [vmem:[%s1140 + $0x48] sm:$0xff]
        %v1148 = vld [vmem:[%s1140 + $0x50] sm:$0xff]
        %v1149 = vld [vmem:[%s1140 + $0x60] sm:$0xff]
        %v1150 = vld [vmem:[%s1140 + $0x68] sm:$0xff]
        %v1151 = vld [vmem:[%s1140 + $0x78] sm:$0xff]
        %v1152 = vld [vmem:[%s1140 + $0x80] sm:$0xff]
        %v1153 = vld [vmem:[%s1140 + $0x90] sm:$0xff]
        %v1154 = vld [vmem:[%s1140 + $0x98] sm:$0xff]
        %v1155 = vld [vmem:[%s1140 + $0xa8] sm:$0xff]
        %v1156 = vld [vmem:[%s1140 + $0xb0] sm:$0xff]
        %v1157 = vld [vmem:[%s1140 + $0xc0] sm:$0xff]
        %v1158 = vld [vmem:[%s1140 + $0xc8] sm:$0xff]
        %v1159 = vld [vmem:[%s1140 + $0xd8] sm:$0xff]
        %v1160 = vld [vmem:[%s1140 + $0xe0] sm:$0xff]
        %v1161 = vld [vmem:[%s1140 + $0xf0] sm:$0xff]
        %v1162 = vld [vmem:[%s1140 + $0xf8] sm:$0xff]
        %v1163 = vld [vmem:[%s1140 + $0x108] sm:$0xff]
        %v1164 = vld [vmem:[%s1140 + $0x110] sm:$0xff]
        %v1165 = vld [vmem:[%s1140 + $0x120] sm:$0xff]
        %v1166 = vld [vmem:[%s1140 + $0x128] sm:$0xff]
        %v1167 = vld [vmem:[%s1140 + $0x138] sm:$0xff]
        %v1168 = vld [vmem:[%s1140 + $0x140] sm:$0xff]
        %v1169 = vld [vmem:[%s1140 + $0x150] sm:$0xff]
        %v1170 = vld [vmem:[%s1140 + $0x158] sm:$0xff]
        %v1171 = vld [vmem:[%s1140 + $0x168] sm:$0xff]
        %v1172 = vld [vmem:[%s1140 + $0x170] sm:$0xff]
        %v1173 = vld [vmem:[%s1140 + $0x1] sm:$0xff]
        %v1174 = vld [vmem:[%s1140 + $0x9] sm:$0xff]
        %v1175 = vld [vmem:[%s1140 + $0x19] sm:$0xff]
        %v1176 = vld [vmem:[%s1140 + $0x21] sm:$0xff]
        %v1177 = vld [vmem:[%s1140 + $0x31] sm:$0xff]
        %v1178 = vld [vmem:[%s1140 + $0x39] sm:$0xff]
        %v1179 = vld [vmem:[%s1140 + $0x49] sm:$0xff]
        %v1180 = vld [vmem:[%s1140 + $0x51] sm:$0xff]
        %v1181 = vld [vmem:[%s1140 + $0x61] sm:$0xff]
        %v1182 = vld [vmem:[%s1140 + $0x69] sm:$0xff]
        %v1183 = vld [vmem:[%s1140 + $0x79] sm:$0xff]
        %v1184 = vld [vmem:[%s1140 + $0x81] sm:$0xff]
        %v1185 = vld [vmem:[%s1140 + $0x91] sm:$0xff]
        %v1186 = vld [vmem:[%s1140 + $0x99] sm:$0xff]
        %v1187 = vld [vmem:[%s1140 + $0xa9] sm:$0xff]
        %v1188 = vld [vmem:[%s1140 + $0xb1] sm:$0xff]
        %v1189 = vld [vmem:[%s1140 + $0xc1] sm:$0xff]
        %v1190 = vld [vmem:[%s1140 + $0xc9] sm:$0xff]
        %v1191 = vld [vmem:[%s1140 + $0xd9] sm:$0xff]
        %v1192 = vld [vmem:[%s1140 + $0xe1] sm:$0xff]
        %v1193 = vld [vmem:[%s1140 + $0xf1] sm:$0xff]
        %v1194 = vld [vmem:[%s1140 + $0xf9] sm:$0xff]
        %v1195 = vld [vmem:[%s1140 + $0x109] sm:$0xff]
        %v1196 = vld [vmem:[%s1140 + $0x111] sm:$0xff]
        %v1197 = vld [vmem:[%s1140 + $0x121] sm:$0xff]
        %v1198 = vld [vmem:[%s1140 + $0x129] sm:$0xff]
        %v1199 = vld [vmem:[%s1140 + $0x139] sm:$0xff]
        %v1200 = vld [vmem:[%s1140 + $0x141] sm:$0xff]
        %v1201 = vld [vmem:[%s1140 + $0x151] sm:$0xff]
        %v1202 = vld [vmem:[%s1140 + $0x159] sm:$0xff]
        %v1203 = vld [vmem:[%s1140 + $0x169] sm:$0xff]
        %v1204 = vld [vmem:[%s1140 + $0x171] sm:$0xff]
        %v1205 = vld [vmem:[%s1140 + $0x2] sm:$0xff]
        %v1206 = vld [vmem:[%s1140 + $0xa] sm:$0xff]
        %v1207 = vld [vmem:[%s1140 + $0x1a] sm:$0xff]
        %v1208 = vld [vmem:[%s1140 + $0x22] sm:$0xff]
        %v1209 = vld [vmem:[%s1140 + $0x32] sm:$0xff]
        %v1210 = vld [vmem:[%s1140 + $0x3a] sm:$0xff]
        %v1211 = vld [vmem:[%s1140 + $0x4a] sm:$0xff]
        %v1212 = vld [vmem:[%s1140 + $0x52] sm:$0xff]
        %v1213 = vld [vmem:[%s1140 + $0x62] sm:$0xff]
        %v1214 = vld [vmem:[%s1140 + $0x6a] sm:$0xff]
        %v1215 = vld [vmem:[%s1140 + $0x7a] sm:$0xff]
        %v1216 = vld [vmem:[%s1140 + $0x82] sm:$0xff]
        %v1217 = vld [vmem:[%s1140 + $0x92] sm:$0xff]
        %v1218 = vld [vmem:[%s1140 + $0x9a] sm:$0xff]
        %v1219 = vld [vmem:[%s1140 + $0xaa] sm:$0xff]
        %v1220 = vld [vmem:[%s1140 + $0xb2] sm:$0xff]
        %v1221 = vld [vmem:[%s1140 + $0xc2] sm:$0xff]
        %v1222 = vld [vmem:[%s1140 + $0xca] sm:$0xff]
        %v1223 = vld [vmem:[%s1140 + $0xda] sm:$0xff]
        %v1224 = vld [vmem:[%s1140 + $0xe2] sm:$0xff]
        %v1225 = vld [vmem:[%s1140 + $0xf2] sm:$0xff]
        %v1226 = vld [vmem:[%s1140 + $0xfa] sm:$0xff]
        %v1227 = vld [vmem:[%s1140 + $0x10a] sm:$0xff]
        %v1228 = vld [vmem:[%s1140 + $0x112] sm:$0xff]
        %v1229 = vld [vmem:[%s1140 + $0x122] sm:$0xff]
        %v1230 = vld [vmem:[%s1140 + $0x12a] sm:$0xff]
        %v1231 = vld [vmem:[%s1140 + $0x13a] sm:$0xff]
        %v1232 = vld [vmem:[%s1140 + $0x142] sm:$0xff]
        %v1233 = vld [vmem:[%s1140 + $0x152] sm:$0xff]
        %v1234 = vld [vmem:[%s1140 + $0x15a] sm:$0xff]
        %v1235 = vld [vmem:[%s1140 + $0x16a] sm:$0xff]
        %v1236 = vld [vmem:[%s1140 + $0x172] sm:$0xff]
        %1269 = vrot.lane.b32.xlu0 %v980, 4
        %v1270 = vpop.permute.xlu0 %1269
        %1271 = vrot.lane.b32.xlu0 %v981, 4
        %v1272 = vpop.permute.xlu0 %1271
        %1273 = vrot.lane.b32.xlu0 %v982, 4
        %v1274 = vpop.permute.xlu0 %1273
        %1275 = vrot.lane.b32.xlu0 %v983, 4
        %v1276 = vpop.permute.xlu0 %1275
        %1277 = vrot.lane.b32.xlu0 %v984, 4
        %v1278 = vpop.permute.xlu0 %1277
        %1279 = vrot.lane.b32.xlu0 %v985, 4
        %v1280 = vpop.permute.xlu0 %1279
        %1281 = vrot.lane.b32.xlu0 %v986, 4
        %v1282 = vpop.permute.xlu0 %1281
        %1283 = vrot.lane.b32.xlu0 %v987, 4
        %v1284 = vpop.permute.xlu0 %1283
        %1285 = vrot.lane.b32.xlu0 %v988, 4
        %v1286 = vpop.permute.xlu0 %1285
        %1287 = vrot.lane.b32.xlu0 %v989, 4
        %v1288 = vpop.permute.xlu0 %1287
        %1289 = vrot.lane.b32.xlu0 %v990, 4
        %v1290 = vpop.permute.xlu0 %1289
        %1291 = vrot.lane.b32.xlu0 %v991, 4
        %v1292 = vpop.permute.xlu0 %1291
        %1293 = vrot.lane.b32.xlu0 %v992, 4
        %v1294 = vpop.permute.xlu0 %1293
        %1295 = vrot.lane.b32.xlu0 %v993, 4
        %v1296 = vpop.permute.xlu0 %1295
        %1297 = vrot.lane.b32.xlu0 %v994, 4
        %v1298 = vpop.permute.xlu0 %1297
        %1299 = vrot.lane.b32.xlu0 %v995, 4
        %v1300 = vpop.permute.xlu0 %1299
        %1301 = vrot.lane.b32.xlu0 %v996, 4
        %v1302 = vpop.permute.xlu0 %1301
        %1303 = vrot.lane.b32.xlu0 %v997, 4
        %v1304 = vpop.permute.xlu0 %1303
        %1305 = vrot.lane.b32.xlu0 %v998, 4
        %v1306 = vpop.permute.xlu0 %1305
        %1307 = vrot.lane.b32.xlu0 %v999, 4
        %v1308 = vpop.permute.xlu0 %1307
        %1309 = vrot.lane.b32.xlu0 %v1000, 4
        %v1310 = vpop.permute.xlu0 %1309
        %1311 = vrot.lane.b32.xlu0 %v1001, 4
        %v1312 = vpop.permute.xlu0 %1311
        %1313 = vrot.lane.b32.xlu0 %v1002, 4
        %v1314 = vpop.permute.xlu0 %1313
        %1315 = vrot.lane.b32.xlu0 %v1003, 4
        %v1316 = vpop.permute.xlu0 %1315
        %1317 = vrot.lane.b32.xlu0 %v1004, 4
        %v1318 = vpop.permute.xlu0 %1317
        %1319 = vrot.lane.b32.xlu0 %v1005, 4
        %v1320 = vpop.permute.xlu0 %1319
        %1321 = vrot.lane.b32.xlu0 %v1006, 4
        %v1322 = vpop.permute.xlu0 %1321
        %1323 = vrot.lane.b32.xlu0 %v1007, 4
        %v1324 = vpop.permute.xlu0 %1323
        %1325 = vrot.lane.b32.xlu0 %v1008, 4
        %v1326 = vpop.permute.xlu0 %1325
        %1327 = vrot.lane.b32.xlu0 %v1009, 4
        %v1328 = vpop.permute.xlu0 %1327
        %1329 = vrot.lane.b32.xlu0 %v1010, 4
        %v1330 = vpop.permute.xlu0 %1329
        %1331 = vrot.lane.b32.xlu0 %v1011, 4
        %v1332 = vpop.permute.xlu0 %1331
        %1397 = vrot.lane.b32.xlu0 %v1012, 8
        %v1398 = vpop.permute.xlu0 %1397
        %1399 = vrot.lane.b32.xlu0 %v1013, 8
        %v1400 = vpop.permute.xlu0 %1399
        %1401 = vrot.lane.b32.xlu0 %v1014, 8
        %v1402 = vpop.permute.xlu0 %1401
        %1403 = vrot.lane.b32.xlu0 %v1015, 8
        %v1404 = vpop.permute.xlu0 %1403
        %1405 = vrot.lane.b32.xlu0 %v1016, 8
        %v1406 = vpop.permute.xlu0 %1405
        %1407 = vrot.lane.b32.xlu0 %v1017, 8
        %v1408 = vpop.permute.xlu0 %1407
        %1409 = vrot.lane.b32.xlu0 %v1018, 8
        %v1410 = vpop.permute.xlu0 %1409
        %1411 = vrot.lane.b32.xlu0 %v1019, 8
        %v1412 = vpop.permute.xlu0 %1411
        %1413 = vrot.lane.b32.xlu0 %v1020, 8
        %v1414 = vpop.permute.xlu0 %1413
        %1415 = vrot.lane.b32.xlu0 %v1021, 8
        %v1416 = vpop.permute.xlu0 %1415
        %1417 = vrot.lane.b32.xlu0 %v1022, 8
        %v1418 = vpop.permute.xlu0 %1417
        %1419 = vrot.lane.b32.xlu0 %v1023, 8
        %v1420 = vpop.permute.xlu0 %1419
        %1421 = vrot.lane.b32.xlu0 %v1024, 8
        %v1422 = vpop.permute.xlu0 %1421
        %1423 = vrot.lane.b32.xlu0 %v1025, 8
        %v1424 = vpop.permute.xlu0 %1423
        %1425 = vrot.lane.b32.xlu0 %v1026, 8
        %v1426 = vpop.permute.xlu0 %1425
        %1427 = vrot.lane.b32.xlu0 %v1027, 8
        %v1428 = vpop.permute.xlu0 %1427
        %1429 = vrot.lane.b32.xlu0 %v1028, 8
        %v1430 = vpop.permute.xlu0 %1429
        %1431 = vrot.lane.b32.xlu0 %v1029, 8
        %v1432 = vpop.permute.xlu0 %1431
        %1433 = vrot.lane.b32.xlu0 %v1030, 8
        %v1434 = vpop.permute.xlu0 %1433
        %1435 = vrot.lane.b32.xlu0 %v1031, 8
        %v1436 = vpop.permute.xlu0 %1435
        %1437 = vrot.lane.b32.xlu0 %v1032, 8
        %v1438 = vpop.permute.xlu0 %1437
        %1439 = vrot.lane.b32.xlu0 %v1033, 8
        %v1440 = vpop.permute.xlu0 %1439
        %1441 = vrot.lane.b32.xlu0 %v1034, 8
        %v1442 = vpop.permute.xlu0 %1441
        %1443 = vrot.lane.b32.xlu0 %v1035, 8
        %v1444 = vpop.permute.xlu0 %1443
        %1445 = vrot.lane.b32.xlu0 %v1036, 8
        %v1446 = vpop.permute.xlu0 %1445
        %1447 = vrot.lane.b32.xlu0 %v1037, 8
        %v1448 = vpop.permute.xlu0 %1447
        %1449 = vrot.lane.b32.xlu0 %v1038, 8
        %v1450 = vpop.permute.xlu0 %1449
        %1451 = vrot.lane.b32.xlu0 %v1039, 8
        %v1452 = vpop.permute.xlu0 %1451
        %1453 = vrot.lane.b32.xlu0 %v1040, 8
        %v1454 = vpop.permute.xlu0 %1453
        %1455 = vrot.lane.b32.xlu0 %v1041, 8
        %v1456 = vpop.permute.xlu0 %1455
        %1457 = vrot.lane.b32.xlu0 %v1042, 8
        %v1458 = vpop.permute.xlu0 %1457
        %1459 = vrot.lane.b32.xlu0 %v1043, 8
        %v1460 = vpop.permute.xlu0 %1459
        %1525 = vrot.lane.b32.xlu0 %v1044, 12
        %v1526 = vpop.permute.xlu0 %1525
        %1527 = vrot.lane.b32.xlu0 %v1045, 12
        %v1528 = vpop.permute.xlu0 %1527
        %1529 = vrot.lane.b32.xlu0 %v1046, 12
        %v1530 = vpop.permute.xlu0 %1529
        %1531 = vrot.lane.b32.xlu0 %v1047, 12
        %v1532 = vpop.permute.xlu0 %1531
        %1533 = vrot.lane.b32.xlu0 %v1048, 12
        %v1534 = vpop.permute.xlu0 %1533
        %1535 = vrot.lane.b32.xlu0 %v1049, 12
        %v1536 = vpop.permute.xlu0 %1535
        %1537 = vrot.lane.b32.xlu0 %v1050, 12
        %v1538 = vpop.permute.xlu0 %1537
        %1539 = vrot.lane.b32.xlu0 %v1051, 12
        %v1540 = vpop.permute.xlu0 %1539
        %1541 = vrot.lane.b32.xlu0 %v1052, 12
        %v1542 = vpop.permute.xlu0 %1541
        %1543 = vrot.lane.b32.xlu0 %v1053, 12
        %v1544 = vpop.permute.xlu0 %1543
        %1545 = vrot.lane.b32.xlu0 %v1054, 12
        %v1546 = vpop.permute.xlu0 %1545
        %1547 = vrot.lane.b32.xlu0 %v1055, 12
        %v1548 = vpop.permute.xlu0 %1547
        %1549 = vrot.lane.b32.xlu0 %v1056, 12
        %v1550 = vpop.permute.xlu0 %1549
        %1551 = vrot.lane.b32.xlu0 %v1057, 12
        %v1552 = vpop.permute.xlu0 %1551
        %1553 = vrot.lane.b32.xlu0 %v1058, 12
        %v1554 = vpop.permute.xlu0 %1553
        %1555 = vrot.lane.b32.xlu0 %v1059, 12
        %v1556 = vpop.permute.xlu0 %1555
        %1557 = vrot.lane.b32.xlu0 %v1060, 12
        %v1558 = vpop.permute.xlu0 %1557
        %1559 = vrot.lane.b32.xlu0 %v1061, 12
        %v1560 = vpop.permute.xlu0 %1559
        %1561 = vrot.lane.b32.xlu0 %v1062, 12
        %v1562 = vpop.permute.xlu0 %1561
        %1563 = vrot.lane.b32.xlu0 %v1063, 12
        %v1564 = vpop.permute.xlu0 %1563
        %1565 = vrot.lane.b32.xlu0 %v1064, 12
        %v1566 = vpop.permute.xlu0 %1565
        %1567 = vrot.lane.b32.xlu0 %v1065, 12
        %v1568 = vpop.permute.xlu0 %1567
        %1569 = vrot.lane.b32.xlu0 %v1066, 12
        %v1570 = vpop.permute.xlu0 %1569
        %1571 = vrot.lane.b32.xlu0 %v1067, 12
        %v1572 = vpop.permute.xlu0 %1571
        %1573 = vrot.lane.b32.xlu0 %v1068, 12
        %v1574 = vpop.permute.xlu0 %1573
        %1575 = vrot.lane.b32.xlu0 %v1069, 12
        %v1576 = vpop.permute.xlu0 %1575
        %1577 = vrot.lane.b32.xlu0 %v1070, 12
        %v1578 = vpop.permute.xlu0 %1577
        %1579 = vrot.lane.b32.xlu0 %v1071, 12
        %v1580 = vpop.permute.xlu0 %1579
        %1581 = vrot.lane.b32.xlu0 %v1072, 12
        %v1582 = vpop.permute.xlu0 %1581
        %1583 = vrot.lane.b32.xlu0 %v1073, 12
        %v1584 = vpop.permute.xlu0 %1583
        %1585 = vrot.lane.b32.xlu0 %v1074, 12
        %v1586 = vpop.permute.xlu0 %1585
        %1587 = vrot.lane.b32.xlu0 %v1075, 12
        %v1588 = vpop.permute.xlu0 %1587
        %1653 = vrot.lane.b32.xlu0 %v1076, 16
        %v1654 = vpop.permute.xlu0 %1653
        %1655 = vrot.lane.b32.xlu0 %v1077, 16
        %v1656 = vpop.permute.xlu0 %1655
        %1657 = vrot.lane.b32.xlu0 %v1078, 16
        %v1658 = vpop.permute.xlu0 %1657
        %1659 = vrot.lane.b32.xlu0 %v1079, 16
        %v1660 = vpop.permute.xlu0 %1659
        %1661 = vrot.lane.b32.xlu0 %v1080, 16
        %v1662 = vpop.permute.xlu0 %1661
        %1663 = vrot.lane.b32.xlu0 %v1081, 16
        %v1664 = vpop.permute.xlu0 %1663
        %1665 = vrot.lane.b32.xlu0 %v1082, 16
        %v1666 = vpop.permute.xlu0 %1665
        %1667 = vrot.lane.b32.xlu0 %v1083, 16
        %v1668 = vpop.permute.xlu0 %1667
        %1669 = vrot.lane.b32.xlu0 %v1084, 16
        %v1670 = vpop.permute.xlu0 %1669
        %1671 = vrot.lane.b32.xlu0 %v1085, 16
        %v1672 = vpop.permute.xlu0 %1671
        %1673 = vrot.lane.b32.xlu0 %v1086, 16
        %v1674 = vpop.permute.xlu0 %1673
        %1675 = vrot.lane.b32.xlu0 %v1087, 16
        %v1676 = vpop.permute.xlu0 %1675
        %1677 = vrot.lane.b32.xlu0 %v1088, 16
        %v1678 = vpop.permute.xlu0 %1677
        %1679 = vrot.lane.b32.xlu0 %v1089, 16
        %v1680 = vpop.permute.xlu0 %1679
        %1681 = vrot.lane.b32.xlu0 %v1090, 16
        %v1682 = vpop.permute.xlu0 %1681
        %1683 = vrot.lane.b32.xlu0 %v1091, 16
        %v1684 = vpop.permute.xlu0 %1683
        %1685 = vrot.lane.b32.xlu0 %v1092, 16
        %v1686 = vpop.permute.xlu0 %1685
        %1687 = vrot.lane.b32.xlu0 %v1093, 16
        %v1688 = vpop.permute.xlu0 %1687
        %1689 = vrot.lane.b32.xlu0 %v1094, 16
        %v1690 = vpop.permute.xlu0 %1689
        %1691 = vrot.lane.b32.xlu0 %v1095, 16
        %v1692 = vpop.permute.xlu0 %1691
        %1693 = vrot.lane.b32.xlu0 %v1096, 16
        %v1694 = vpop.permute.xlu0 %1693
        %1695 = vrot.lane.b32.xlu0 %v1097, 16
        %v1696 = vpop.permute.xlu0 %1695
        %1697 = vrot.lane.b32.xlu0 %v1098, 16
        %v1698 = vpop.permute.xlu0 %1697
        %1699 = vrot.lane.b32.xlu0 %v1099, 16
        %v1700 = vpop.permute.xlu0 %1699
        %1701 = vrot.lane.b32.xlu0 %v1100, 16
        %v1702 = vpop.permute.xlu0 %1701
        %1703 = vrot.lane.b32.xlu0 %v1101, 16
        %v1704 = vpop.permute.xlu0 %1703
        %1705 = vrot.lane.b32.xlu0 %v1102, 16
        %v1706 = vpop.permute.xlu0 %1705
        %1707 = vrot.lane.b32.xlu0 %v1103, 16
        %v1708 = vpop.permute.xlu0 %1707
        %1709 = vrot.lane.b32.xlu0 %v1104, 16
        %v1710 = vpop.permute.xlu0 %1709
        %1711 = vrot.lane.b32.xlu0 %v1105, 16
        %v1712 = vpop.permute.xlu0 %1711
        %1713 = vrot.lane.b32.xlu0 %v1106, 16
        %v1714 = vpop.permute.xlu0 %1713
        %1715 = vrot.lane.b32.xlu0 %v1107, 16
        %v1716 = vpop.permute.xlu0 %1715
        %1781 = vrot.lane.b32.xlu0 %v1108, 20
        %v1782 = vpop.permute.xlu0 %1781
        %1783 = vrot.lane.b32.xlu0 %v1109, 20
        %v1784 = vpop.permute.xlu0 %1783
        %1785 = vrot.lane.b32.xlu0 %v1110, 20
        %v1786 = vpop.permute.xlu0 %1785
        %1787 = vrot.lane.b32.xlu0 %v1111, 20
        %v1788 = vpop.permute.xlu0 %1787
        %1789 = vrot.lane.b32.xlu0 %v1112, 20
        %v1790 = vpop.permute.xlu0 %1789
        %1791 = vrot.lane.b32.xlu0 %v1113, 20
        %v1792 = vpop.permute.xlu0 %1791
        %1793 = vrot.lane.b32.xlu0 %v1114, 20
        %v1794 = vpop.permute.xlu0 %1793
        %1795 = vrot.lane.b32.xlu0 %v1115, 20
        %v1796 = vpop.permute.xlu0 %1795
        %1797 = vrot.lane.b32.xlu0 %v1116, 20
        %v1798 = vpop.permute.xlu0 %1797
        %1799 = vrot.lane.b32.xlu0 %v1117, 20
        %v1800 = vpop.permute.xlu0 %1799
        %1801 = vrot.lane.b32.xlu0 %v1118, 20
        %v1802 = vpop.permute.xlu0 %1801
        %1803 = vrot.lane.b32.xlu0 %v1119, 20
        %v1804 = vpop.permute.xlu0 %1803
        %1805 = vrot.lane.b32.xlu0 %v1120, 20
        %v1806 = vpop.permute.xlu0 %1805
        %1807 = vrot.lane.b32.xlu0 %v1121, 20
        %v1808 = vpop.permute.xlu0 %1807
        %1809 = vrot.lane.b32.xlu0 %v1122, 20
        %v1810 = vpop.permute.xlu0 %1809
        %1811 = vrot.lane.b32.xlu0 %v1123, 20
        %v1812 = vpop.permute.xlu0 %1811
        %1813 = vrot.lane.b32.xlu0 %v1124, 20
        %v1814 = vpop.permute.xlu0 %1813
        %1815 = vrot.lane.b32.xlu0 %v1125, 20
        %v1816 = vpop.permute.xlu0 %1815
        %1817 = vrot.lane.b32.xlu0 %v1126, 20
        %v1818 = vpop.permute.xlu0 %1817
        %1819 = vrot.lane.b32.xlu0 %v1127, 20
        %v1820 = vpop.permute.xlu0 %1819
        %1821 = vrot.lane.b32.xlu0 %v1128, 20
        %v1822 = vpop.permute.xlu0 %1821
        %1823 = vrot.lane.b32.xlu0 %v1129, 20
        %v1824 = vpop.permute.xlu0 %1823
        %1825 = vrot.lane.b32.xlu0 %v1130, 20
        %v1826 = vpop.permute.xlu0 %1825
        %1827 = vrot.lane.b32.xlu0 %v1131, 20
        %v1828 = vpop.permute.xlu0 %1827
        %1829 = vrot.lane.b32.xlu0 %v1132, 20
        %v1830 = vpop.permute.xlu0 %1829
        %1831 = vrot.lane.b32.xlu0 %v1133, 20
        %v1832 = vpop.permute.xlu0 %1831
        %1833 = vrot.lane.b32.xlu0 %v1134, 20
        %v1834 = vpop.permute.xlu0 %1833
        %1835 = vrot.lane.b32.xlu0 %v1135, 20
        %v1836 = vpop.permute.xlu0 %1835
        %1837 = vrot.lane.b32.xlu0 %v1136, 20
        %v1838 = vpop.permute.xlu0 %1837
        %1839 = vrot.lane.b32.xlu0 %v1137, 20
        %v1840 = vpop.permute.xlu0 %1839
        %1841 = vrot.lane.b32.xlu0 %v1138, 20
        %v1842 = vpop.permute.xlu0 %1841
        %1843 = vrot.lane.b32.xlu0 %v1139, 20
        %v1844 = vpop.permute.xlu0 %1843
        %1909 = vrot.lane.b32.xlu0 %v1141, 24
        %v1910 = vpop.permute.xlu0 %1909
        %1911 = vrot.lane.b32.xlu0 %v1142, 24
        %v1912 = vpop.permute.xlu0 %1911
        %1913 = vrot.lane.b32.xlu0 %v1143, 24
        %v1914 = vpop.permute.xlu0 %1913
        %1915 = vrot.lane.b32.xlu0 %v1144, 24
        %v1916 = vpop.permute.xlu0 %1915
        %1917 = vrot.lane.b32.xlu0 %v1145, 24
        %v1918 = vpop.permute.xlu0 %1917
        %1919 = vrot.lane.b32.xlu0 %v1146, 24
        %v1920 = vpop.permute.xlu0 %1919
        %1921 = vrot.lane.b32.xlu0 %v1147, 24
        %v1922 = vpop.permute.xlu0 %1921
        %1923 = vrot.lane.b32.xlu0 %v1148, 24
        %v1924 = vpop.permute.xlu0 %1923
        %1925 = vrot.lane.b32.xlu0 %v1149, 24
        %v1926 = vpop.permute.xlu0 %1925
        %1927 = vrot.lane.b32.xlu0 %v1150, 24
        %v1928 = vpop.permute.xlu0 %1927
        %1929 = vrot.lane.b32.xlu0 %v1151, 24
        %v1930 = vpop.permute.xlu0 %1929
        %1931 = vrot.lane.b32.xlu0 %v1152, 24
        %v1932 = vpop.permute.xlu0 %1931
        %1933 = vrot.lane.b32.xlu0 %v1153, 24
        %v1934 = vpop.permute.xlu0 %1933
        %1935 = vrot.lane.b32.xlu0 %v1154, 24
        %v1936 = vpop.permute.xlu0 %1935
        %1937 = vrot.lane.b32.xlu0 %v1155, 24
        %v1938 = vpop.permute.xlu0 %1937
        %1939 = vrot.lane.b32.xlu0 %v1156, 24
        %v1940 = vpop.permute.xlu0 %1939
        %1941 = vrot.lane.b32.xlu0 %v1157, 24
        %v1942 = vpop.permute.xlu0 %1941
        %1943 = vrot.lane.b32.xlu0 %v1158, 24
        %v1944 = vpop.permute.xlu0 %1943
        %1945 = vrot.lane.b32.xlu0 %v1159, 24
        %v1946 = vpop.permute.xlu0 %1945
        %1947 = vrot.lane.b32.xlu0 %v1160, 24
        %v1948 = vpop.permute.xlu0 %1947
        %1949 = vrot.lane.b32.xlu0 %v1161, 24
        %v1950 = vpop.permute.xlu0 %1949
        %1951 = vrot.lane.b32.xlu0 %v1162, 24
        %v1952 = vpop.permute.xlu0 %1951
        %1953 = vrot.lane.b32.xlu0 %v1163, 24
        %v1954 = vpop.permute.xlu0 %1953
        %1955 = vrot.lane.b32.xlu0 %v1164, 24
        %v1956 = vpop.permute.xlu0 %1955
        %1957 = vrot.lane.b32.xlu0 %v1165, 24
        %v1958 = vpop.permute.xlu0 %1957
        %1959 = vrot.lane.b32.xlu0 %v1166, 24
        %v1960 = vpop.permute.xlu0 %1959
        %1961 = vrot.lane.b32.xlu0 %v1167, 24
        %v1962 = vpop.permute.xlu0 %1961
        %1963 = vrot.lane.b32.xlu0 %v1168, 24
        %v1964 = vpop.permute.xlu0 %1963
        %1965 = vrot.lane.b32.xlu0 %v1169, 24
        %v1966 = vpop.permute.xlu0 %1965
        %1967 = vrot.lane.b32.xlu0 %v1170, 24
        %v1968 = vpop.permute.xlu0 %1967
        %1969 = vrot.lane.b32.xlu0 %v1171, 24
        %v1970 = vpop.permute.xlu0 %1969
        %1971 = vrot.lane.b32.xlu0 %v1172, 24
        %v1972 = vpop.permute.xlu0 %1971
        %2037 = vrot.lane.b32.xlu0 %v1173, 28
        %v2038 = vpop.permute.xlu0 %2037
        %2039 = vrot.lane.b32.xlu0 %v1174, 28
        %v2040 = vpop.permute.xlu0 %2039
        %2041 = vrot.lane.b32.xlu0 %v1175, 28
        %v2042 = vpop.permute.xlu0 %2041
        %2043 = vrot.lane.b32.xlu0 %v1176, 28
        %v2044 = vpop.permute.xlu0 %2043
        %2045 = vrot.lane.b32.xlu0 %v1177, 28
        %v2046 = vpop.permute.xlu0 %2045
        %2047 = vrot.lane.b32.xlu0 %v1178, 28
        %v2048 = vpop.permute.xlu0 %2047
        %2049 = vrot.lane.b32.xlu0 %v1179, 28
        %v2050 = vpop.permute.xlu0 %2049
        %2051 = vrot.lane.b32.xlu0 %v1180, 28
        %v2052 = vpop.permute.xlu0 %2051
        %2053 = vrot.lane.b32.xlu0 %v1181, 28
        %v2054 = vpop.permute.xlu0 %2053
        %2055 = vrot.lane.b32.xlu0 %v1182, 28
        %v2056 = vpop.permute.xlu0 %2055
        %2057 = vrot.lane.b32.xlu0 %v1183, 28
        %v2058 = vpop.permute.xlu0 %2057
        %2059 = vrot.lane.b32.xlu0 %v1184, 28
        %v2060 = vpop.permute.xlu0 %2059
        %2061 = vrot.lane.b32.xlu0 %v1185, 28
        %v2062 = vpop.permute.xlu0 %2061
        %2063 = vrot.lane.b32.xlu0 %v1186, 28
        %v2064 = vpop.permute.xlu0 %2063
        %2065 = vrot.lane.b32.xlu0 %v1187, 28
        %v2066 = vpop.permute.xlu0 %2065
        %2067 = vrot.lane.b32.xlu0 %v1188, 28
        %v2068 = vpop.permute.xlu0 %2067
        %2069 = vrot.lane.b32.xlu0 %v1189, 28
        %v2070 = vpop.permute.xlu0 %2069
        %2071 = vrot.lane.b32.xlu0 %v1190, 28
        %v2072 = vpop.permute.xlu0 %2071
        %2073 = vrot.lane.b32.xlu0 %v1191, 28
        %v2074 = vpop.permute.xlu0 %2073
        %2075 = vrot.lane.b32.xlu0 %v1192, 28
        %v2076 = vpop.permute.xlu0 %2075
        %2077 = vrot.lane.b32.xlu0 %v1193, 28
        %v2078 = vpop.permute.xlu0 %2077
        %2079 = vrot.lane.b32.xlu0 %v1194, 28
        %v2080 = vpop.permute.xlu0 %2079
        %2081 = vrot.lane.b32.xlu0 %v1195, 28
        %v2082 = vpop.permute.xlu0 %2081
        %2083 = vrot.lane.b32.xlu0 %v1196, 28
        %v2084 = vpop.permute.xlu0 %2083
        %2085 = vrot.lane.b32.xlu0 %v1197, 28
        %v2086 = vpop.permute.xlu0 %2085
        %2087 = vrot.lane.b32.xlu0 %v1198, 28
        %v2088 = vpop.permute.xlu0 %2087
        %2089 = vrot.lane.b32.xlu0 %v1199, 28
        %v2090 = vpop.permute.xlu0 %2089
        %2091 = vrot.lane.b32.xlu0 %v1200, 28
        %v2092 = vpop.permute.xlu0 %2091
        %2093 = vrot.lane.b32.xlu0 %v1201, 28
        %v2094 = vpop.permute.xlu0 %2093
        %2095 = vrot.lane.b32.xlu0 %v1202, 28
        %v2096 = vpop.permute.xlu0 %2095
        %2097 = vrot.lane.b32.xlu0 %v1203, 28
        %v2098 = vpop.permute.xlu0 %2097
        %2099 = vrot.lane.b32.xlu0 %v1204, 28
        %v2100 = vpop.permute.xlu0 %2099
        %2165 = vrot.lane.b32.xlu0 %v1205, 32
        %v2166 = vpop.permute.xlu0 %2165
        %2167 = vrot.lane.b32.xlu0 %v1206, 32
        %v2168 = vpop.permute.xlu0 %2167
        %2169 = vrot.lane.b32.xlu0 %v1207, 32
        %v2170 = vpop.permute.xlu0 %2169
        %2171 = vrot.lane.b32.xlu0 %v1208, 32
        %v2172 = vpop.permute.xlu0 %2171
        %2173 = vrot.lane.b32.xlu0 %v1209, 32
        %v2174 = vpop.permute.xlu0 %2173
        %2175 = vrot.lane.b32.xlu0 %v1210, 32
        %v2176 = vpop.permute.xlu0 %2175
        %2177 = vrot.lane.b32.xlu0 %v1211, 32
        %v2178 = vpop.permute.xlu0 %2177
        %2179 = vrot.lane.b32.xlu0 %v1212, 32
        %v2180 = vpop.permute.xlu0 %2179
        %2181 = vrot.lane.b32.xlu0 %v1213, 32
        %v2182 = vpop.permute.xlu0 %2181
        %2183 = vrot.lane.b32.xlu0 %v1214, 32
        %v2184 = vpop.permute.xlu0 %2183
        %2185 = vrot.lane.b32.xlu0 %v1215, 32
        %v2186 = vpop.permute.xlu0 %2185
        %2187 = vrot.lane.b32.xlu0 %v1216, 32
        %v2188 = vpop.permute.xlu0 %2187
        %2189 = vrot.lane.b32.xlu0 %v1217, 32
        %v2190 = vpop.permute.xlu0 %2189
        %2191 = vrot.lane.b32.xlu0 %v1218, 32
        %v2192 = vpop.permute.xlu0 %2191
        %2193 = vrot.lane.b32.xlu0 %v1219, 32
        %v2194 = vpop.permute.xlu0 %2193
        %2195 = vrot.lane.b32.xlu0 %v1220, 32
        %v2196 = vpop.permute.xlu0 %2195
        %2197 = vrot.lane.b32.xlu0 %v1221, 32
        %v2198 = vpop.permute.xlu0 %2197
        %2199 = vrot.lane.b32.xlu0 %v1222, 32
        %v2200 = vpop.permute.xlu0 %2199
        %2201 = vrot.lane.b32.xlu0 %v1223, 32
        %v2202 = vpop.permute.xlu0 %2201
        %2203 = vrot.lane.b32.xlu0 %v1224, 32
        %v2204 = vpop.permute.xlu0 %2203
        %2205 = vrot.lane.b32.xlu0 %v1225, 32
        %v2206 = vpop.permute.xlu0 %2205
        %2207 = vrot.lane.b32.xlu0 %v1226, 32
        %v2208 = vpop.permute.xlu0 %2207
        %2209 = vrot.lane.b32.xlu0 %v1227, 32
        %v2210 = vpop.permute.xlu0 %2209
        %2211 = vrot.lane.b32.xlu0 %v1228, 32
        %v2212 = vpop.permute.xlu0 %2211
        %2213 = vrot.lane.b32.xlu0 %v1229, 32
        %v2214 = vpop.permute.xlu0 %2213
        %2215 = vrot.lane.b32.xlu0 %v1230, 32
        %v2216 = vpop.permute.xlu0 %2215
        %2217 = vrot.lane.b32.xlu0 %v1231, 32
        %v2218 = vpop.permute.xlu0 %2217
        %2219 = vrot.lane.b32.xlu0 %v1232, 32
        %v2220 = vpop.permute.xlu0 %2219
        %2221 = vrot.lane.b32.xlu0 %v1233, 32
        %v2222 = vpop.permute.xlu0 %2221
        %2223 = vrot.lane.b32.xlu0 %v1234, 32
        %v2224 = vpop.permute.xlu0 %2223
        %2225 = vrot.lane.b32.xlu0 %v1235, 32
        %v2226 = vpop.permute.xlu0 %2225
        %2227 = vrot.lane.b32.xlu0 %v1236, 32
        %v2228 = vpop.permute.xlu0 %2227
        %v2261 = vsel %vm388, %v948, %v1270
        %v2262 = vsel %vm388, %v949, %v1272
        %v2263 = vsel %vm388, %v950, %v1274
        %v2264 = vsel %vm388, %v951, %v1276
        %v2265 = vsel %vm388, %v952, %v1278
        %v2266 = vsel %vm388, %v953, %v1280
        %v2267 = vsel %vm388, %v954, %v1282
        %v2268 = vsel %vm388, %v955, %v1284
        %v2269 = vsel %vm388, %v956, %v1286
        %v2270 = vsel %vm388, %v957, %v1288
        %v2271 = vsel %vm388, %v958, %v1290
        %v2272 = vsel %vm388, %v959, %v1292
        %v2273 = vsel %vm388, %v960, %v1294
        %v2274 = vsel %vm388, %v961, %v1296
        %v2275 = vsel %vm388, %v962, %v1298
        %v2276 = vsel %vm388, %v963, %v1300
        %v2277 = vsel %vm388, %v964, %v1302
        %v2278 = vsel %vm388, %v965, %v1304
        %v2279 = vsel %vm388, %v966, %v1306
        %v2280 = vsel %vm388, %v967, %v1308
        %v2281 = vsel %vm388, %v968, %v1310
        %v2282 = vsel %vm388, %v969, %v1312
        %v2283 = vsel %vm388, %v970, %v1314
        %v2284 = vsel %vm388, %v971, %v1316
        %v2285 = vsel %vm388, %v972, %v1318
        %v2286 = vsel %vm388, %v973, %v1320
        %v2287 = vsel %vm388, %v974, %v1322
        %v2288 = vsel %vm388, %v975, %v1324
        %v2289 = vsel %vm388, %v976, %v1326
        %v2290 = vsel %vm388, %v977, %v1328
        %v2291 = vsel %vm388, %v978, %v1330
        %v2292 = vsel %vm388, %v979, %v1332
        %vm2293 = vcmask 64512
        %v2294 = vsel %vm2293, %v2261, %v1398
        %v2295 = vsel %vm2293, %v2262, %v1400
        %v2296 = vsel %vm2293, %v2263, %v1402
        %v2297 = vsel %vm2293, %v2264, %v1404
        %v2298 = vsel %vm2293, %v2265, %v1406
        %v2299 = vsel %vm2293, %v2266, %v1408
        %v2300 = vsel %vm2293, %v2267, %v1410
        %v2301 = vsel %vm2293, %v2268, %v1412
        %v2302 = vsel %vm2293, %v2269, %v1414
        %v2303 = vsel %vm2293, %v2270, %v1416
        %v2304 = vsel %vm2293, %v2271, %v1418
        %v2305 = vsel %vm2293, %v2272, %v1420
        %v2306 = vsel %vm2293, %v2273, %v1422
        %v2307 = vsel %vm2293, %v2274, %v1424
        %v2308 = vsel %vm2293, %v2275, %v1426
        %v2309 = vsel %vm2293, %v2276, %v1428
        %v2310 = vsel %vm2293, %v2277, %v1430
        %v2311 = vsel %vm2293, %v2278, %v1432
        %v2312 = vsel %vm2293, %v2279, %v1434
        %v2313 = vsel %vm2293, %v2280, %v1436
        %v2314 = vsel %vm2293, %v2281, %v1438
        %v2315 = vsel %vm2293, %v2282, %v1440
        %v2316 = vsel %vm2293, %v2283, %v1442
        %v2317 = vsel %vm2293, %v2284, %v1444
        %v2318 = vsel %vm2293, %v2285, %v1446
        %v2319 = vsel %vm2293, %v2286, %v1448
        %v2320 = vsel %vm2293, %v2287, %v1450
        %v2321 = vsel %vm2293, %v2288, %v1452
        %v2322 = vsel %vm2293, %v2289, %v1454
        %v2323 = vsel %vm2293, %v2290, %v1456
        %v2324 = vsel %vm2293, %v2291, %v1458
        %v2325 = vsel %vm2293, %v2292, %v1460
        %vm2326 = vcmask 97280
        %v2327 = vsel %vm2326, %v2294, %v1526
        %v2328 = vsel %vm2326, %v2295, %v1528
        %v2329 = vsel %vm2326, %v2296, %v1530
        %v2330 = vsel %vm2326, %v2297, %v1532
        %v2331 = vsel %vm2326, %v2298, %v1534
        %v2332 = vsel %vm2326, %v2299, %v1536
        %v2333 = vsel %vm2326, %v2300, %v1538
        %v2334 = vsel %vm2326, %v2301, %v1540
        %v2335 = vsel %vm2326, %v2302, %v1542
        %v2336 = vsel %vm2326, %v2303, %v1544
        %v2337 = vsel %vm2326, %v2304, %v1546
        %v2338 = vsel %vm2326, %v2305, %v1548
        %v2339 = vsel %vm2326, %v2306, %v1550
        %v2340 = vsel %vm2326, %v2307, %v1552
        %v2341 = vsel %vm2326, %v2308, %v1554
        %v2342 = vsel %vm2326, %v2309, %v1556
        %v2343 = vsel %vm2326, %v2310, %v1558
        %v2344 = vsel %vm2326, %v2311, %v1560
        %v2345 = vsel %vm2326, %v2312, %v1562
        %v2346 = vsel %vm2326, %v2313, %v1564
        %v2347 = vsel %vm2326, %v2314, %v1566
        %v2348 = vsel %vm2326, %v2315, %v1568
        %v2349 = vsel %vm2326, %v2316, %v1570
        %v2350 = vsel %vm2326, %v2317, %v1572
        %v2351 = vsel %vm2326, %v2318, %v1574
        %v2352 = vsel %vm2326, %v2319, %v1576
        %v2353 = vsel %vm2326, %v2320, %v1578
        %v2354 = vsel %vm2326, %v2321, %v1580
        %v2355 = vsel %vm2326, %v2322, %v1582
        %v2356 = vsel %vm2326, %v2323, %v1584
        %v2357 = vsel %vm2326, %v2324, %v1586
        %v2358 = vsel %vm2326, %v2325, %v1588
        %vm2359 = vcmask 130048
        %v2360 = vsel %vm2359, %v2327, %v1654
        %v2361 = vsel %vm2359, %v2328, %v1656
        %v2362 = vsel %vm2359, %v2329, %v1658
        %v2363 = vsel %vm2359, %v2330, %v1660
        %v2364 = vsel %vm2359, %v2331, %v1662
        %v2365 = vsel %vm2359, %v2332, %v1664
        %v2366 = vsel %vm2359, %v2333, %v1666
        %v2367 = vsel %vm2359, %v2334, %v1668
        %v2368 = vsel %vm2359, %v2335, %v1670
        %v2369 = vsel %vm2359, %v2336, %v1672
        %v2370 = vsel %vm2359, %v2337, %v1674
        %v2371 = vsel %vm2359, %v2338, %v1676
        %v2372 = vsel %vm2359, %v2339, %v1678
        %v2373 = vsel %vm2359, %v2340, %v1680
        %v2374 = vsel %vm2359, %v2341, %v1682
        %v2375 = vsel %vm2359, %v2342, %v1684
        %v2376 = vsel %vm2359, %v2343, %v1686
        %v2377 = vsel %vm2359, %v2344, %v1688
        %v2378 = vsel %vm2359, %v2345, %v1690
        %v2379 = vsel %vm2359, %v2346, %v1692
        %v2380 = vsel %vm2359, %v2347, %v1694
        %v2381 = vsel %vm2359, %v2348, %v1696
        %v2382 = vsel %vm2359, %v2349, %v1698
        %v2383 = vsel %vm2359, %v2350, %v1700
        %v2384 = vsel %vm2359, %v2351, %v1702
        %v2385 = vsel %vm2359, %v2352, %v1704
        %v2386 = vsel %vm2359, %v2353, %v1706
        %v2387 = vsel %vm2359, %v2354, %v1708
        %v2388 = vsel %vm2359, %v2355, %v1710
        %v2389 = vsel %vm2359, %v2356, %v1712
        %v2390 = vsel %vm2359, %v2357, %v1714
        %v2391 = vsel %vm2359, %v2358, %v1716
        %vm2392 = vcmask 162816
        %v2393 = vsel %vm2392, %v2360, %v1782
        %v2394 = vsel %vm2392, %v2361, %v1784
        %v2395 = vsel %vm2392, %v2362, %v1786
        %v2396 = vsel %vm2392, %v2363, %v1788
        %v2397 = vsel %vm2392, %v2364, %v1790
        %v2398 = vsel %vm2392, %v2365, %v1792
        %v2399 = vsel %vm2392, %v2366, %v1794
        %v2400 = vsel %vm2392, %v2367, %v1796
        %v2401 = vsel %vm2392, %v2368, %v1798
        %v2402 = vsel %vm2392, %v2369, %v1800
        %v2403 = vsel %vm2392, %v2370, %v1802
        %v2404 = vsel %vm2392, %v2371, %v1804
        %v2405 = vsel %vm2392, %v2372, %v1806
        %v2406 = vsel %vm2392, %v2373, %v1808
        %v2407 = vsel %vm2392, %v2374, %v1810
        %v2408 = vsel %vm2392, %v2375, %v1812
        %v2409 = vsel %vm2392, %v2376, %v1814
        %v2410 = vsel %vm2392, %v2377, %v1816
        %v2411 = vsel %vm2392, %v2378, %v1818
        %v2412 = vsel %vm2392, %v2379, %v1820
        %v2413 = vsel %vm2392, %v2380, %v1822
        %v2414 = vsel %vm2392, %v2381, %v1824
        %v2415 = vsel %vm2392, %v2382, %v1826
        %v2416 = vsel %vm2392, %v2383, %v1828
        %v2417 = vsel %vm2392, %v2384, %v1830
        %v2418 = vsel %vm2392, %v2385, %v1832
        %v2419 = vsel %vm2392, %v2386, %v1834
        %v2420 = vsel %vm2392, %v2387, %v1836
        %v2421 = vsel %vm2392, %v2388, %v1838
        %v2422 = vsel %vm2392, %v2389, %v1840
        %v2423 = vsel %vm2392, %v2390, %v1842
        %v2424 = vsel %vm2392, %v2391, %v1844
        %vm2425 = vcmask 195584
        %v2426 = vsel %vm2425, %v2393, %v1910
        %v2427 = vsel %vm2425, %v2394, %v1912
        %v2428 = vsel %vm2425, %v2395, %v1914
        %v2429 = vsel %vm2425, %v2396, %v1916
        %v2430 = vsel %vm2425, %v2397, %v1918
        %v2431 = vsel %vm2425, %v2398, %v1920
        %v2432 = vsel %vm2425, %v2399, %v1922
        %v2433 = vsel %vm2425, %v2400, %v1924
        %v2434 = vsel %vm2425, %v2401, %v1926
        %v2435 = vsel %vm2425, %v2402, %v1928
        %v2436 = vsel %vm2425, %v2403, %v1930
        %v2437 = vsel %vm2425, %v2404, %v1932
        %v2438 = vsel %vm2425, %v2405, %v1934
        %v2439 = vsel %vm2425, %v2406, %v1936
        %v2440 = vsel %vm2425, %v2407, %v1938
        %v2441 = vsel %vm2425, %v2408, %v1940
        %v2442 = vsel %vm2425, %v2409, %v1942
        %v2443 = vsel %vm2425, %v2410, %v1944
        %v2444 = vsel %vm2425, %v2411, %v1946
        %v2445 = vsel %vm2425, %v2412, %v1948
        %v2446 = vsel %vm2425, %v2413, %v1950
        %v2447 = vsel %vm2425, %v2414, %v1952
        %v2448 = vsel %vm2425, %v2415, %v1954
        %v2449 = vsel %vm2425, %v2416, %v1956
        %v2450 = vsel %vm2425, %v2417, %v1958
        %v2451 = vsel %vm2425, %v2418, %v1960
        %v2452 = vsel %vm2425, %v2419, %v1962
        %v2453 = vsel %vm2425, %v2420, %v1964
        %v2454 = vsel %vm2425, %v2421, %v1966
        %v2455 = vsel %vm2425, %v2422, %v1968
        %v2456 = vsel %vm2425, %v2423, %v1970
        %v2457 = vsel %vm2425, %v2424, %v1972
        %vm2458 = vcmask 228352
        %v2459 = vsel %vm2458, %v2426, %v2038
        %v2460 = vsel %vm2458, %v2427, %v2040
        %v2461 = vsel %vm2458, %v2428, %v2042
        %v2462 = vsel %vm2458, %v2429, %v2044
        %v2463 = vsel %vm2458, %v2430, %v2046
        %v2464 = vsel %vm2458, %v2431, %v2048
        %v2465 = vsel %vm2458, %v2432, %v2050
        %v2466 = vsel %vm2458, %v2433, %v2052
        %v2467 = vsel %vm2458, %v2434, %v2054
        %v2468 = vsel %vm2458, %v2435, %v2056
        %v2469 = vsel %vm2458, %v2436, %v2058
        %v2470 = vsel %vm2458, %v2437, %v2060
        %v2471 = vsel %vm2458, %v2438, %v2062
        %v2472 = vsel %vm2458, %v2439, %v2064
        %v2473 = vsel %vm2458, %v2440, %v2066
        %v2474 = vsel %vm2458, %v2441, %v2068
        %v2475 = vsel %vm2458, %v2442, %v2070
        %v2476 = vsel %vm2458, %v2443, %v2072
        %v2477 = vsel %vm2458, %v2444, %v2074
        %v2478 = vsel %vm2458, %v2445, %v2076
        %v2479 = vsel %vm2458, %v2446, %v2078
        %v2480 = vsel %vm2458, %v2447, %v2080
        %v2481 = vsel %vm2458, %v2448, %v2082
        %v2482 = vsel %vm2458, %v2449, %v2084
        %v2483 = vsel %vm2458, %v2450, %v2086
        %v2484 = vsel %vm2458, %v2451, %v2088
        %v2485 = vsel %vm2458, %v2452, %v2090
        %v2486 = vsel %vm2458, %v2453, %v2092
        %v2487 = vsel %vm2458, %v2454, %v2094
        %v2488 = vsel %vm2458, %v2455, %v2096
        %v2489 = vsel %vm2458, %v2456, %v2098
        %v2490 = vsel %vm2458, %v2457, %v2100
        %vm2491 = vcmask 261120
        %v2492 = vsel %vm2491, %v2459, %v2166
        %v2493 = vsel %vm2491, %v2460, %v2168
        %v2494 = vsel %vm2491, %v2461, %v2170
        %v2495 = vsel %vm2491, %v2462, %v2172
        %v2496 = vsel %vm2491, %v2463, %v2174
        %v2497 = vsel %vm2491, %v2464, %v2176
        %v2498 = vsel %vm2491, %v2465, %v2178
        %v2499 = vsel %vm2491, %v2466, %v2180
        %v2500 = vsel %vm2491, %v2467, %v2182
        %v2501 = vsel %vm2491, %v2468, %v2184
        %v2502 = vsel %vm2491, %v2469, %v2186
        %v2503 = vsel %vm2491, %v2470, %v2188
        %v2504 = vsel %vm2491, %v2471, %v2190
        %v2505 = vsel %vm2491, %v2472, %v2192
        %v2506 = vsel %vm2491, %v2473, %v2194
        %v2507 = vsel %vm2491, %v2474, %v2196
        %v2508 = vsel %vm2491, %v2475, %v2198
        %v2509 = vsel %vm2491, %v2476, %v2200
        %v2510 = vsel %vm2491, %v2477, %v2202
        %v2511 = vsel %vm2491, %v2478, %v2204
        %v2512 = vsel %vm2491, %v2479, %v2206
        %v2513 = vsel %vm2491, %v2480, %v2208
        %v2514 = vsel %vm2491, %v2481, %v2210
        %v2515 = vsel %vm2491, %v2482, %v2212
        %v2516 = vsel %vm2491, %v2483, %v2214
        %v2517 = vsel %vm2491, %v2484, %v2216
        %v2518 = vsel %vm2491, %v2485, %v2218
        %v2519 = vsel %vm2491, %v2486, %v2220
        %v2520 = vsel %vm2491, %v2487, %v2222
        %v2521 = vsel %vm2491, %v2488, %v2224
        %v2522 = vsel %vm2491, %v2489, %v2226
        %v2523 = vsel %vm2491, %v2490, %v2228
        %v2524 = vpack.c.bf16 %v2493, %v2492
        %v2525 = vpack.c.bf16 %v2495, %v2494
        %v2526 = vpack.c.bf16 %v2497, %v2496
        %v2527 = vpack.c.bf16 %v2499, %v2498
        %v2528 = vpack.c.bf16 %v2501, %v2500
        %v2529 = vpack.c.bf16 %v2503, %v2502
        %v2530 = vpack.c.bf16 %v2505, %v2504
        %v2531 = vpack.c.bf16 %v2507, %v2506
        %v2532 = vpack.c.bf16 %v2509, %v2508
        %v2533 = vpack.c.bf16 %v2511, %v2510
        %v2534 = vpack.c.bf16 %v2513, %v2512
        %v2535 = vpack.c.bf16 %v2515, %v2514
        %v2536 = vpack.c.bf16 %v2517, %v2516
        %v2537 = vpack.c.bf16 %v2519, %v2518
        %v2538 = vpack.c.bf16 %v2521, %v2520
        %v2539 = vpack.c.bf16 %v2523, %v2522
        %v2540 = vld [vmem:[%s3] sm:$0xf]
        %v2541 = vld [vmem:[%s3 + $0x4] sm:$0xf]
        %v2542 = vld [vmem:[%s3 + $0x8] sm:$0xf]
        %v2543 = vld [vmem:[%s3 + $0xc] sm:$0xf]
        %v2544 = vld [vmem:[%s3 + $0x10] sm:$0x3]
        %v2545 = vld [vmem:[%s4] sm:$0x1]
        %v2547 = vlaneseq
        %v2548 = vshrl.u32 %v2547, 7
        %v2549 = vsub.s32 0, %v2548
        %v2550 = vrot.slane %v2545, %v2549
        %v2557 = vunpack.c.l.b16 %v2540
        %v2558 = vunpack.c.l.b16 %v2541
        %v2559 = vunpack.c.l.b16 %v2542
        %v2560 = vunpack.c.l.b16 %v2543
        %v2561 = vunpack.c.l.b16 %v2544
        %v2562 = vpack.c.b16 %v2558, %v2557
        %v2563 = vpack.c.b16 %v2560, %v2559
        %v2564 = vpack.c.b16 %v2561, %v2561
        %vm2567 = vcmask 293888
        %v2569 = vsel %vm2567, %v2524, 0
        %v2572 = vsel %vm2567, %v2525, 0
        %v2575 = vsel %vm2567, %v2526, 0
        %v2578 = vsel %vm2567, %v2527, 0
        %v2581 = vsel %vm2567, %v2528, 0
        %v2584 = vsel %vm2567, %v2529, 0
        %v2587 = vsel %vm2567, %v2530, 0
        %v2590 = vsel %vm2567, %v2531, 0
        %v2593 = vsel %vm2567, %v2532, 0
        %v2596 = vsel %vm2567, %v2533, 0
        %v2599 = vsel %vm2567, %v2534, 0
        %v2602 = vsel %vm2567, %v2535, 0
        %v2605 = vsel %vm2567, %v2536, 0
        %v2608 = vsel %vm2567, %v2537, 0
        %v2611 = vsel %vm2567, %v2538, 0
        %v2614 = vsel %vm2567, %v2539, 0
        %v2617 = vsel %vm437, %v2564, 0
        %2619 = vmatprep.subr.bf16.mxu0 0
        %2620 = vmatpush1.bf16.msra.mxu0 %v2562
        %2621 = vmatprep.subr.bf16.mxu0 0
        %2622 = vmatpush1.bf16.msra.mxu0 %v2563
        %2623 = vmatprep.subr.bf16.mxu0 0
        %2624 = vmatpush1.bf16.msra.mxu0 %v2617
        %2625 = vmatprep.subr.bf16.mxu0 0
        %2626 = vmatpush1.bf16.msra.mxu0 0
        %2627 = vmatprep.subr.bf16.mxu0 0
        %2628 = vmatpush1.bf16.msra.mxu0 0
        %2629 = vmatprep.subr.bf16.mxu0 0
        %2630 = vmatpush1.bf16.msra.mxu0 0
        %2631 = vmatprep.subr.bf16.mxu0 0
        %2632 = vmatpush1.bf16.msra.mxu0 0
        %2633 = vmatprep.subr.bf16.mxu0 0
        %2634 = vmatpush1.bf16.msra.mxu0 0
        %2635 = vmatprep.subr.bf16.mxu0 0
        %2636 = vmatpush1.bf16.msra.mxu0 0
        %2637 = vmatprep.subr.bf16.mxu0 0
        %2638 = vmatpush1.bf16.msra.mxu0 0
        %2639 = vmatprep.subr.bf16.mxu0 0
        %2640 = vmatpush1.bf16.msra.mxu0 0
        %2641 = vmatprep.subr.bf16.mxu0 0
        %2642 = vmatpush1.bf16.msra.mxu0 0
        %2643 = vmatprep.subr.bf16.mxu0 0
        %2644 = vmatpush1.bf16.msra.mxu0 0
        %2645 = vmatprep.subr.bf16.mxu0 0
        %2646 = vmatpush1.bf16.msra.mxu0 0
        %2647 = vmatprep.subr.bf16.mxu0 0
        %2648 = vmatpush1.bf16.msra.mxu0 0
        %2649 = vmatprep.subr.bf16.mxu0 0
        %2650 = vmatpush1.bf16.msra.mxu0 0
        %2651 = vmatprep.mubr.bf16.mxu0 0
        %2652 = vmatmul.mubr.bf16.gmra.mrb[0].mxu0 %v2569
        %v2653 = vpop.f32.mrb[0].mxu0
        %v2654 = vadd.f32 %v2550, %v2653
        %v2655 = vpop.f32.mrb[0].mxu0
        %v2656 = vpop.f32.mrb[0].mxu0
        %v2657 = vadd.f32 %v2550, %v2656
        %v2658 = vpop.f32.mrb[0].mxu0
        %2659 = vmatprep.mubr.bf16.mxu0 0
        %2660 = vmatmul.mubr.bf16.gmra.mrb[0].mxu0 %v2572
        %v2661 = vpop.f32.mrb[0].mxu0
        %v2662 = vadd.f32 %v2550, %v2661
        %v2663 = vpop.f32.mrb[0].mxu0
        %v2664 = vpop.f32.mrb[0].mxu0
        %v2665 = vadd.f32 %v2550, %v2664
        %v2666 = vpop.f32.mrb[0].mxu0
        %2667 = vmatprep.mubr.bf16.mxu0 0
        %2668 = vmatmul.mubr.bf16.gmra.mrb[0].mxu0 %v2575
        %v2669 = vpop.f32.mrb[0].mxu0
        %v2670 = vadd.f32 %v2550, %v2669
        %v2671 = vpop.f32.mrb[0].mxu0
        %v2672 = vpop.f32.mrb[0].mxu0
        %v2673 = vadd.f32 %v2550, %v2672
        %v2674 = vpop.f32.mrb[0].mxu0
        %2675 = vmatprep.mubr.bf16.mxu0 0
        %2676 = vmatmul.mubr.bf16.gmra.mrb[0].mxu0 %v2578
        %v2677 = vpop.f32.mrb[0].mxu0
        %v2678 = vadd.f32 %v2550, %v2677
        %v2679 = vpop.f32.mrb[0].mxu0
        %v2680 = vpop.f32.mrb[0].mxu0
        %v2681 = vadd.f32 %v2550, %v2680
        %v2682 = vpop.f32.mrb[0].mxu0
        %2683 = vmatprep.mubr.bf16.mxu0 0
        %2684 = vmatmul.mubr.bf16.gmra.mrb[0].mxu0 %v2581
        %v2685 = vpop.f32.mrb[0].mxu0
        %v2686 = vadd.f32 %v2550, %v2685
        %v2687 = vpop.f32.mrb[0].mxu0
        %v2688 = vpop.f32.mrb[0].mxu0
        %v2689 = vadd.f32 %v2550, %v2688
        %v2690 = vpop.f32.mrb[0].mxu0
        %2691 = vmatprep.mubr.bf16.mxu0 0
        %2692 = vmatmul.mubr.bf16.gmra.mrb[0].mxu0 %v2584
        %v2693 = vpop.f32.mrb[0].mxu0
        %v2694 = vadd.f32 %v2550, %v2693
        %v2695 = vpop.f32.mrb[0].mxu0
        %v2696 = vpop.f32.mrb[0].mxu0
        %v2697 = vadd.f32 %v2550, %v2696
        %v2698 = vpop.f32.mrb[0].mxu0
        %2699 = vmatprep.mubr.bf16.mxu0 0
        %2700 = vmatmul.mubr.bf16.gmra.mrb[0].mxu0 %v2587
        %v2701 = vpop.f32.mrb[0].mxu0
        %v2702 = vadd.f32 %v2550, %v2701
        %v2703 = vpop.f32.mrb[0].mxu0
        %v2704 = vpop.f32.mrb[0].mxu0
        %v2705 = vadd.f32 %v2550, %v2704
        %v2706 = vpop.f32.mrb[0].mxu0
        %2707 = vmatprep.mubr.bf16.mxu0 0
        %2708 = vmatmul.mubr.bf16.gmra.mrb[0].mxu0 %v2590
        %v2709 = vpop.f32.mrb[0].mxu0
        %v2710 = vadd.f32 %v2550, %v2709
        %v2711 = vpop.f32.mrb[0].mxu0
        %v2712 = vpop.f32.mrb[0].mxu0
        %v2713 = vadd.f32 %v2550, %v2712
        %v2714 = vpop.f32.mrb[0].mxu0
        %2715 = vmatprep.mubr.bf16.mxu0 0
        %2716 = vmatmul.mubr.bf16.gmra.mrb[0].mxu0 %v2593
        %v2717 = vpop.f32.mrb[0].mxu0
        %v2718 = vadd.f32 %v2550, %v2717
        %v2719 = vpop.f32.mrb[0].mxu0
        %v2720 = vpop.f32.mrb[0].mxu0
        %v2721 = vadd.f32 %v2550, %v2720
        %v2722 = vpop.f32.mrb[0].mxu0
        %2723 = vmatprep.mubr.bf16.mxu0 0
        %2724 = vmatmul.mubr.bf16.gmra.mrb[0].mxu0 %v2596
        %v2725 = vpop.f32.mrb[0].mxu0
        %v2726 = vadd.f32 %v2550, %v2725
        %v2727 = vpop.f32.mrb[0].mxu0
        %v2728 = vpop.f32.mrb[0].mxu0
        %v2729 = vadd.f32 %v2550, %v2728
        %v2730 = vpop.f32.mrb[0].mxu0
        %2731 = vmatprep.mubr.bf16.mxu0 0
        %2732 = vmatmul.mubr.bf16.gmra.mrb[0].mxu0 %v2599
        %v2733 = vpop.f32.mrb[0].mxu0
        %v2734 = vadd.f32 %v2550, %v2733
        %v2735 = vpop.f32.mrb[0].mxu0
        %v2736 = vpop.f32.mrb[0].mxu0
        %v2737 = vadd.f32 %v2550, %v2736
        %v2738 = vpop.f32.mrb[0].mxu0
        %2739 = vmatprep.mubr.bf16.mxu0 0
        %2740 = vmatmul.mubr.bf16.gmra.mrb[0].mxu0 %v2602
        %v2741 = vpop.f32.mrb[0].mxu0
        %v2742 = vadd.f32 %v2550, %v2741
        %v2743 = vpop.f32.mrb[0].mxu0
        %v2744 = vpop.f32.mrb[0].mxu0
        %v2745 = vadd.f32 %v2550, %v2744
        %v2746 = vpop.f32.mrb[0].mxu0
        %2747 = vmatprep.mubr.bf16.mxu0 0
        %2748 = vmatmul.mubr.bf16.gmra.mrb[0].mxu0 %v2605
        %v2749 = vpop.f32.mrb[0].mxu0
        %v2750 = vadd.f32 %v2550, %v2749
        %v2751 = vpop.f32.mrb[0].mxu0
        %v2752 = vpop.f32.mrb[0].mxu0
        %v2753 = vadd.f32 %v2550, %v2752
        %v2754 = vpop.f32.mrb[0].mxu0
        %2755 = vmatprep.mubr.bf16.mxu0 0
        %2756 = vmatmul.mubr.bf16.gmra.mrb[0].mxu0 %v2608
        %v2757 = vpop.f32.mrb[0].mxu0
        %v2758 = vadd.f32 %v2550, %v2757
        %v2759 = vpop.f32.mrb[0].mxu0
        %v2760 = vpop.f32.mrb[0].mxu0
        %v2761 = vadd.f32 %v2550, %v2760
        %v2762 = vpop.f32.mrb[0].mxu0
        %2763 = vmatprep.mubr.bf16.mxu0 0
        %2764 = vmatmul.mubr.bf16.gmra.mrb[0].mxu0 %v2611
        %v2765 = vpop.f32.mrb[0].mxu0
        %v2766 = vadd.f32 %v2550, %v2765
        %v2767 = vpop.f32.mrb[0].mxu0
        %v2768 = vpop.f32.mrb[0].mxu0
        %v2769 = vadd.f32 %v2550, %v2768
        %v2770 = vpop.f32.mrb[0].mxu0
        %2771 = vmatprep.mubr.bf16.mxu0 0
        %2772 = vmatmul.mubr.bf16.gmra.mrb[0].mxu0 %v2614
        %v2773 = vpop.f32.mrb[0].mxu0
        %v2774 = vadd.f32 %v2550, %v2773
        %v2775 = vpop.f32.mrb[0].mxu0
        %v2776 = vpop.f32.mrb[0].mxu0
        %v2777 = vadd.f32 %v2550, %v2776
        %v2778 = vpop.f32.mrb[0].mxu0
        %2779 = vdwg.mxu0
        %v2780 = vmax.f32 %v2654, 0.0
        %v2781 = vmax.f32 %v2657, 0.0
        %v2782 = vmax.f32 %v2662, 0.0
        %v2783 = vmax.f32 %v2665, 0.0
        %v2784 = vmax.f32 %v2670, 0.0
        %v2785 = vmax.f32 %v2673, 0.0
        %v2786 = vmax.f32 %v2678, 0.0
        %v2787 = vmax.f32 %v2681, 0.0
        %v2788 = vmax.f32 %v2686, 0.0
        %v2789 = vmax.f32 %v2689, 0.0
        %v2790 = vmax.f32 %v2694, 0.0
        %v2791 = vmax.f32 %v2697, 0.0
        %v2792 = vmax.f32 %v2702, 0.0
        %v2793 = vmax.f32 %v2705, 0.0
        %v2794 = vmax.f32 %v2710, 0.0
        %v2795 = vmax.f32 %v2713, 0.0
        %v2796 = vmax.f32 %v2718, 0.0
        %v2797 = vmax.f32 %v2721, 0.0
        %v2798 = vmax.f32 %v2726, 0.0
        %v2799 = vmax.f32 %v2729, 0.0
        %v2800 = vmax.f32 %v2734, 0.0
        %v2801 = vmax.f32 %v2737, 0.0
        %v2802 = vmax.f32 %v2742, 0.0
        %v2803 = vmax.f32 %v2745, 0.0
        %v2804 = vmax.f32 %v2750, 0.0
        %v2805 = vmax.f32 %v2753, 0.0
        %v2806 = vmax.f32 %v2758, 0.0
        %v2807 = vmax.f32 %v2761, 0.0
        %v2808 = vmax.f32 %v2766, 0.0
        %v2809 = vmax.f32 %v2769, 0.0
        %v2810 = vmax.f32 %v2774, 0.0
        %v2811 = vmax.f32 %v2777, 0.0
        %2812 = vst.msk [vmem:[#allocation3] sm:$0xff] %vm388, 0.0
        %2813 = vst.msk [vmem:[#allocation3 + $0x8] sm:$0xff] %vm388, 0.0
        %vm2814 = vcmask 27648
        %2815 = vst.msk [vmem:[#allocation3 + $0x10] sm:$0xf] %vm2814, 0.0
        %2816 = vst.msk [vmem:[#allocation3 + $0x18] sm:$0xff] %vm388, 0.0
        %2817 = vst.msk [vmem:[#allocation3 + $0x20] sm:$0xff] %vm388, 0.0
        %2818 = vst.msk [vmem:[#allocation3 + $0x28] sm:$0xf] %vm2814, 0.0
        %s2819 = scalar_lea.vmem [#allocation3], 432
        %2820 = vst.msk [vmem:[%s2819] sm:$0xff] %vm388, 0.0
        %2821 = vst.msk [vmem:[%s2819 + $0x8] sm:$0xff] %vm388, 0.0
        %2822 = vst.msk [vmem:[%s2819 + $0x10] sm:$0xf] %vm2814, 0.0
        %2823 = vst.msk [vmem:[%s2819 + $0x18] sm:$0xff] %vm388, 0.0
        %2824 = vst.msk [vmem:[%s2819 + $0x20] sm:$0xff] %vm388, 0.0
        %2825 = vst.msk [vmem:[%s2819 + $0x28] sm:$0xf] %vm2814, 0.0
        %v2826 = vrot.slane %v602, 6
        %v2827 = vrot.slane %v603, 6
        %v2828 = vsel %vm437, %v2826, %v2827
        %v2829 = vrot.slane %v604, 6
        %v2830 = vrot.slane %v605, 6
        %v2831 = vsel %vm437, %v2829, %v2830
        %v2832 = vrot.slane %v606, 6
        %v2833 = vrot.slane %v607, 6
        %v2834 = vsel %vm437, %v2832, %v2833
        %v2835 = vrot.slane %v608, 6
        %v2836 = vrot.slane %v609, 6
        %v2837 = vsel %vm437, %v2835, %v2836
        %v2838 = vrot.slane %v610, 6
        %v2839 = vrot.slane %v611, 6
        %v2840 = vsel %vm437, %v2838, %v2839
        %v2841 = vrot.slane %v612, 6
        %v2842 = vrot.slane %v613, 6
        %v2843 = vsel %vm437, %v2841, %v2842
        %v2844 = vrot.slane %v614, 6
        %v2845 = vrot.slane %v615, 6
        %v2846 = vsel %vm437, %v2844, %v2845
        %v2847 = vrot.slane %v616, 6
        %v2848 = vrot.slane %v617, 6
        %v2849 = vsel %vm437, %v2847, %v2848
        %v2850 = vrot.slane %v618, 6
        %v2851 = vrot.slane %v619, 6
        %v2852 = vsel %vm437, %v2850, %v2851
        %v2853 = vrot.slane %v620, 6
        %v2854 = vrot.slane %v621, 6
        %v2855 = vsel %vm437, %v2853, %v2854
        %v2856 = vrot.slane %v622, 6
        %v2857 = vrot.slane %v623, 6
        %v2858 = vsel %vm437, %v2856, %v2857
        %v2859 = vrot.slane %v624, 6
        %v2860 = vrot.slane %v625, 6
        %v2861 = vsel %vm437, %v2859, %v2860
        %v2862 = vrot.slane %v626, 6
        %v2863 = vrot.slane %v627, 6
        %v2864 = vsel %vm437, %v2862, %v2863
        %v2865 = vrot.slane %v628, 6
        %v2866 = vrot.slane %v629, 6
        %v2867 = vsel %vm437, %v2865, %v2866
        %v2868 = vrot.slane %v630, 6
        %v2869 = vrot.slane %v631, 6
        %v2870 = vsel %vm437, %v2868, %v2869
        %v2871 = vrot.slane %v632, 6
        %v2872 = vrot.slane %v633, 6
        %v2873 = vsel %vm437, %v2871, %v2872
        %2874 = vrot.lane.b32.xlu0 %v2826, 116
        %v2875 = vpop.permute.xlu0 %2874
        %2876 = vrot.lane.b32.xlu0 %v2828, 116
        %v2877 = vpop.permute.xlu0 %2876
        %2878 = vrot.lane.b32.xlu0 %v2827, 116
        %v2879 = vpop.permute.xlu0 %2878
        %2880 = vrot.lane.b32.xlu0 %v2829, 116
        %v2881 = vpop.permute.xlu0 %2880
        %2882 = vrot.lane.b32.xlu0 %v2831, 116
        %v2883 = vpop.permute.xlu0 %2882
        %2884 = vrot.lane.b32.xlu0 %v2830, 116
        %v2885 = vpop.permute.xlu0 %2884
        %2886 = vrot.lane.b32.xlu0 %v2832, 116
        %v2887 = vpop.permute.xlu0 %2886
        %2888 = vrot.lane.b32.xlu0 %v2834, 116
        %v2889 = vpop.permute.xlu0 %2888
        %2890 = vrot.lane.b32.xlu0 %v2833, 116
        %v2891 = vpop.permute.xlu0 %2890
        %2892 = vrot.lane.b32.xlu0 %v2835, 116
        %v2893 = vpop.permute.xlu0 %2892
        %2894 = vrot.lane.b32.xlu0 %v2837, 116
        %v2895 = vpop.permute.xlu0 %2894
        %2896 = vrot.lane.b32.xlu0 %v2836, 116
        %v2897 = vpop.permute.xlu0 %2896
        %2898 = vrot.lane.b32.xlu0 %v2838, 116
        %v2899 = vpop.permute.xlu0 %2898
        %2900 = vrot.lane.b32.xlu0 %v2840, 116
        %v2901 = vpop.permute.xlu0 %2900
        %2902 = vrot.lane.b32.xlu0 %v2839, 116
        %v2903 = vpop.permute.xlu0 %2902
        %2904 = vrot.lane.b32.xlu0 %v2841, 116
        %v2905 = vpop.permute.xlu0 %2904
        %2906 = vrot.lane.b32.xlu0 %v2843, 116
        %v2907 = vpop.permute.xlu0 %2906
        %2908 = vrot.lane.b32.xlu0 %v2842, 116
        %v2909 = vpop.permute.xlu0 %2908
        %2910 = vrot.lane.b32.xlu0 %v2844, 116
        %v2911 = vpop.permute.xlu0 %2910
        %2912 = vrot.lane.b32.xlu0 %v2846, 116
        %v2913 = vpop.permute.xlu0 %2912
        %2914 = vrot.lane.b32.xlu0 %v2845, 116
        %v2915 = vpop.permute.xlu0 %2914
        %2916 = vrot.lane.b32.xlu0 %v2847, 116
        %v2917 = vpop.permute.xlu0 %2916
        %2918 = vrot.lane.b32.xlu0 %v2849, 116
        %v2919 = vpop.permute.xlu0 %2918
        %2920 = vrot.lane.b32.xlu0 %v2848, 116
        %v2921 = vpop.permute.xlu0 %2920
        %2922 = vrot.lane.b32.xlu0 %v2850, 116
        %v2923 = vpop.permute.xlu0 %2922
        %2924 = vrot.lane.b32.xlu0 %v2852, 116
        %v2925 = vpop.permute.xlu0 %2924
        %2926 = vrot.lane.b32.xlu0 %v2851, 116
        %v2927 = vpop.permute.xlu0 %2926
        %2928 = vrot.lane.b32.xlu0 %v2853, 116
        %v2929 = vpop.permute.xlu0 %2928
        %2930 = vrot.lane.b32.xlu0 %v2855, 116
        %v2931 = vpop.permute.xlu0 %2930
        %2932 = vrot.lane.b32.xlu0 %v2854, 116
        %v2933 = vpop.permute.xlu0 %2932
        %2934 = vrot.lane.b32.xlu0 %v2856, 116
        %v2935 = vpop.permute.xlu0 %2934
        %2936 = vrot.lane.b32.xlu0 %v2858, 116
        %v2937 = vpop.permute.xlu0 %2936
        %2938 = vrot.lane.b32.xlu0 %v2857, 116
        %v2939 = vpop.permute.xlu0 %2938
        %2940 = vrot.lane.b32.xlu0 %v2859, 116
        %v2941 = vpop.permute.xlu0 %2940
        %2942 = vrot.lane.b32.xlu0 %v2861, 116
        %v2943 = vpop.permute.xlu0 %2942
        %2944 = vrot.lane.b32.xlu0 %v2860, 116
        %v2945 = vpop.permute.xlu0 %2944
        %2946 = vrot.lane.b32.xlu0 %v2862, 116
        %v2947 = vpop.permute.xlu0 %2946
        %2948 = vrot.lane.b32.xlu0 %v2864, 116
        %v2949 = vpop.permute.xlu0 %2948
        %2950 = vrot.lane.b32.xlu0 %v2863, 116
        %v2951 = vpop.permute.xlu0 %2950
        %2952 = vrot.lane.b32.xlu0 %v2865, 116
        %v2953 = vpop.permute.xlu0 %2952
        %2954 = vrot.lane.b32.xlu0 %v2867, 116
        %v2955 = vpop.permute.xlu0 %2954
        %2956 = vrot.lane.b32.xlu0 %v2866, 116
        %v2957 = vpop.permute.xlu0 %2956
        %2958 = vrot.lane.b32.xlu0 %v2868, 116
        %v2959 = vpop.permute.xlu0 %2958
        %2960 = vrot.lane.b32.xlu0 %v2870, 116
        %v2961 = vpop.permute.xlu0 %2960
        %2962 = vrot.lane.b32.xlu0 %v2869, 116
        %v2963 = vpop.permute.xlu0 %2962
        %2964 = vrot.lane.b32.xlu0 %v2871, 116
        %v2965 = vpop.permute.xlu0 %2964
        %2966 = vrot.lane.b32.xlu0 %v2873, 116
        %v2967 = vpop.permute.xlu0 %2966
        %2968 = vrot.lane.b32.xlu0 %v2872, 116
        %v2969 = vpop.permute.xlu0 %2968
        %v3018 = vsel %vm437, 0.0, %v2875
        %v3019 = vsel %vm437, 0.0, %v2881
        %v3020 = vsel %vm437, 0.0, %v2887
        %v3021 = vsel %vm437, 0.0, %v2893
        %v3022 = vsel %vm437, 0.0, %v2899
        %v3023 = vsel %vm437, 0.0, %v2905
        %v3024 = vsel %vm437, 0.0, %v2911
        %v3025 = vsel %vm437, 0.0, %v2917
        %v3026 = vsel %vm437, 0.0, %v2923
        %v3027 = vsel %vm437, 0.0, %v2929
        %v3028 = vsel %vm437, 0.0, %v2935
        %v3029 = vsel %vm437, 0.0, %v2941
        %v3030 = vsel %vm437, 0.0, %v2947
        %v3031 = vsel %vm437, 0.0, %v2953
        %v3032 = vsel %vm437, 0.0, %v2959
        %v3033 = vsel %vm437, 0.0, %v2965
        %v3034 = vsel %vm437, %v2879, 0.0
        %v3035 = vsel %vm437, %v2885, 0.0
        %v3036 = vsel %vm437, %v2891, 0.0
        %v3037 = vsel %vm437, %v2897, 0.0
        %v3038 = vsel %vm437, %v2903, 0.0
        %v3039 = vsel %vm437, %v2909, 0.0
        %v3040 = vsel %vm437, %v2915, 0.0
        %v3041 = vsel %vm437, %v2921, 0.0
        %v3042 = vsel %vm437, %v2927, 0.0
        %v3043 = vsel %vm437, %v2933, 0.0
        %v3044 = vsel %vm437, %v2939, 0.0
        %v3045 = vsel %vm437, %v2945, 0.0
        %v3046 = vsel %vm437, %v2951, 0.0
        %v3047 = vsel %vm437, %v2957, 0.0
        %v3048 = vsel %vm437, %v2963, 0.0
        %v3049 = vsel %vm437, %v2969, 0.0
        %s3050 = scalar_lea.vmem [#allocation3], 48
        %3051 = vst.msk [vmem:[%s3050] sm:$0xff] %vm388, %v3018
        %3052 = vst.msk [vmem:[%s3050 + $0x8] sm:$0xff] %vm388, %v2877
        %3053 = vst.msk [vmem:[%s3050 + $0x10] sm:$0xf] %vm2814, %v3034
        %3054 = vst.msk [vmem:[%s3050 + $0x18] sm:$0xff] %vm388, %v3019
        %3055 = vst.msk [vmem:[%s3050 + $0x20] sm:$0xff] %vm388, %v2883
        %3056 = vst.msk [vmem:[%s3050 + $0x28] sm:$0xf] %vm2814, %v3035
        %3057 = vst.msk [vmem:[%s3050 + $0x30] sm:$0xff] %vm388, %v3020
        %3058 = vst.msk [vmem:[%s3050 + $0x38] sm:$0xff] %vm388, %v2889
        %3059 = vst.msk [vmem:[%s3050 + $0x40] sm:$0xf] %vm2814, %v3036
        %3060 = vst.msk [vmem:[%s3050 + $0x48] sm:$0xff] %vm388, %v3021
        %3061 = vst.msk [vmem:[%s3050 + $0x50] sm:$0xff] %vm388, %v2895
        %3062 = vst.msk [vmem:[%s3050 + $0x58] sm:$0xf] %vm2814, %v3037
        %3063 = vst.msk [vmem:[%s3050 + $0x60] sm:$0xff] %vm388, %v3022
        %3064 = vst.msk [vmem:[%s3050 + $0x68] sm:$0xff] %vm388, %v2901
        %3065 = vst.msk [vmem:[%s3050 + $0x70] sm:$0xf] %vm2814, %v3038
        %3066 = vst.msk [vmem:[%s3050 + $0x78] sm:$0xff] %vm388, %v3023
        %3067 = vst.msk [vmem:[%s3050 + $0x80] sm:$0xff] %vm388, %v2907
        %3068 = vst.msk [vmem:[%s3050 + $0x88] sm:$0xf] %vm2814, %v3039
        %3069 = vst.msk [vmem:[%s3050 + $0x90] sm:$0xff] %vm388, %v3024
        %3070 = vst.msk [vmem:[%s3050 + $0x98] sm:$0xff] %vm388, %v2913
        %3071 = vst.msk [vmem:[%s3050 + $0xa0] sm:$0xf] %vm2814, %v3040
        %3072 = vst.msk [vmem:[%s3050 + $0xa8] sm:$0xff] %vm388, %v3025
        %3073 = vst.msk [vmem:[%s3050 + $0xb0] sm:$0xff] %vm388, %v2919
        %3074 = vst.msk [vmem:[%s3050 + $0xb8] sm:$0xf] %vm2814, %v3041
        %3075 = vst.msk [vmem:[%s3050 + $0xc0] sm:$0xff] %vm388, %v3026
        %3076 = vst.msk [vmem:[%s3050 + $0xc8] sm:$0xff] %vm388, %v2925
        %3077 = vst.msk [vmem:[%s3050 + $0xd0] sm:$0xf] %vm2814, %v3042
        %3078 = vst.msk [vmem:[%s3050 + $0xd8] sm:$0xff] %vm388, %v3027
        %3079 = vst.msk [vmem:[%s3050 + $0xe0] sm:$0xff] %vm388, %v2931
        %3080 = vst.msk [vmem:[%s3050 + $0xe8] sm:$0xf] %vm2814, %v3043
        %3081 = vst.msk [vmem:[%s3050 + $0xf0] sm:$0xff] %vm388, %v3028
        %3082 = vst.msk [vmem:[%s3050 + $0xf8] sm:$0xff] %vm388, %v2937
        %3083 = vst.msk [vmem:[%s3050 + $0x100] sm:$0xf] %vm2814, %v3044
        %3084 = vst.msk [vmem:[%s3050 + $0x108] sm:$0xff] %vm388, %v3029
        %3085 = vst.msk [vmem:[%s3050 + $0x110] sm:$0xff] %vm388, %v2943
        %3086 = vst.msk [vmem:[%s3050 + $0x118] sm:$0xf] %vm2814, %v3045
        %3087 = vst.msk [vmem:[%s3050 + $0x120] sm:$0xff] %vm388, %v3030
        %3088 = vst.msk [vmem:[%s3050 + $0x128] sm:$0xff] %vm388, %v2949
        %3089 = vst.msk [vmem:[%s3050 + $0x130] sm:$0xf] %vm2814, %v3046
        %3090 = vst.msk [vmem:[%s3050 + $0x138] sm:$0xff] %vm388, %v3031
        %3091 = vst.msk [vmem:[%s3050 + $0x140] sm:$0xff] %vm388, %v2955
        %3092 = vst.msk [vmem:[%s3050 + $0x148] sm:$0xf] %vm2814, %v3047
        %3093 = vst.msk [vmem:[%s3050 + $0x150] sm:$0xff] %vm388, %v3032
        %3094 = vst.msk [vmem:[%s3050 + $0x158] sm:$0xff] %vm388, %v2961
        %3095 = vst.msk [vmem:[%s3050 + $0x160] sm:$0xf] %vm2814, %v3048
        %3096 = vst.msk [vmem:[%s3050 + $0x168] sm:$0xff] %vm388, %v3033
        %3097 = vst.msk [vmem:[%s3050 + $0x170] sm:$0xff] %vm388, %v2967
        %3098 = vst.msk [vmem:[%s3050 + $0x178] sm:$0xf] %vm2814, %v3049
        %v3099 = vld [vmem:[#allocation3] sm:$0xff]
        %v3100 = vld [vmem:[#allocation3 + $0x8] sm:$0xff]
        %v3101 = vld [vmem:[#allocation3 + $0x18] sm:$0xff]
        %v3102 = vld [vmem:[#allocation3 + $0x20] sm:$0xff]
        %v3103 = vld [vmem:[#allocation3 + $0x30] sm:$0xff]
        %v3104 = vld [vmem:[#allocation3 + $0x38] sm:$0xff]
        %v3105 = vld [vmem:[#allocation3 + $0x48] sm:$0xff]
        %v3106 = vld [vmem:[#allocation3 + $0x50] sm:$0xff]
        %v3107 = vld [vmem:[#allocation3 + $0x60] sm:$0xff]
        %v3108 = vld [vmem:[#allocation3 + $0x68] sm:$0xff]
        %v3109 = vld [vmem:[#allocation3 + $0x78] sm:$0xff]
        %v3110 = vld [vmem:[#allocation3 + $0x80] sm:$0xff]
        %v3111 = vld [vmem:[#allocation3 + $0x90] sm:$0xff]
        %v3112 = vld [vmem:[#allocation3 + $0x98] sm:$0xff]
        %v3113 = vld [vmem:[#allocation3 + $0xa8] sm:$0xff]
        %v3114 = vld [vmem:[#allocation3 + $0xb0] sm:$0xff]
        %v3115 = vld [vmem:[#allocation3 + $0xc0] sm:$0xff]
        %v3116 = vld [vmem:[#allocation3 + $0xc8] sm:$0xff]
        %v3117 = vld [vmem:[#allocation3 + $0xd8] sm:$0xff]
        %v3118 = vld [vmem:[#allocation3 + $0xe0] sm:$0xff]
        %v3119 = vld [vmem:[#allocation3 + $0xf0] sm:$0xff]
        %v3120 = vld [vmem:[#allocation3 + $0xf8] sm:$0xff]
        %v3121 = vld [vmem:[#allocation3 + $0x108] sm:$0xff]
        %v3122 = vld [vmem:[#allocation3 + $0x110] sm:$0xff]
        %v3123 = vld [vmem:[#allocation3 + $0x120] sm:$0xff]
        %v3124 = vld [vmem:[#allocation3 + $0x128] sm:$0xff]
        %v3125 = vld [vmem:[#allocation3 + $0x138] sm:$0xff]
        %v3126 = vld [vmem:[#allocation3 + $0x140] sm:$0xff]
        %v3127 = vld [vmem:[#allocation3 + $0x150] sm:$0xff]
        %v3128 = vld [vmem:[#allocation3 + $0x158] sm:$0xff]
        %v3129 = vld [vmem:[#allocation3 + $0x168] sm:$0xff]
        %v3130 = vld [vmem:[#allocation3 + $0x170] sm:$0xff]
        %v3131 = vld [vmem:[#allocation3 + $0x1] sm:$0xff]
        %v3132 = vld [vmem:[#allocation3 + $0x9] sm:$0xff]
        %v3133 = vld [vmem:[#allocation3 + $0x19] sm:$0xff]
        %v3134 = vld [vmem:[#allocation3 + $0x21] sm:$0xff]
        %v3135 = vld [vmem:[#allocation3 + $0x31] sm:$0xff]
        %v3136 = vld [vmem:[#allocation3 + $0x39] sm:$0xff]
        %v3137 = vld [vmem:[#allocation3 + $0x49] sm:$0xff]
        %v3138 = vld [vmem:[#allocation3 + $0x51] sm:$0xff]
        %v3139 = vld [vmem:[#allocation3 + $0x61] sm:$0xff]
        %v3140 = vld [vmem:[#allocation3 + $0x69] sm:$0xff]
        %v3141 = vld [vmem:[#allocation3 + $0x79] sm:$0xff]
        %v3142 = vld [vmem:[#allocation3 + $0x81] sm:$0xff]
        %v3143 = vld [vmem:[#allocation3 + $0x91] sm:$0xff]
        %v3144 = vld [vmem:[#allocation3 + $0x99] sm:$0xff]
        %v3145 = vld [vmem:[#allocation3 + $0xa9] sm:$0xff]
        %v3146 = vld [vmem:[#allocation3 + $0xb1] sm:$0xff]
        %v3147 = vld [vmem:[#allocation3 + $0xc1] sm:$0xff]
        %v3148 = vld [vmem:[#allocation3 + $0xc9] sm:$0xff]
        %v3149 = vld [vmem:[#allocation3 + $0xd9] sm:$0xff]
        %v3150 = vld [vmem:[#allocation3 + $0xe1] sm:$0xff]
        %v3151 = vld [vmem:[#allocation3 + $0xf1] sm:$0xff]
        %v3152 = vld [vmem:[#allocation3 + $0xf9] sm:$0xff]
        %v3153 = vld [vmem:[#allocation3 + $0x109] sm:$0xff]
        %v3154 = vld [vmem:[#allocation3 + $0x111] sm:$0xff]
        %v3155 = vld [vmem:[#allocation3 + $0x121] sm:$0xff]
        %v3156 = vld [vmem:[#allocation3 + $0x129] sm:$0xff]
        %v3157 = vld [vmem:[#allocation3 + $0x139] sm:$0xff]
        %v3158 = vld [vmem:[#allocation3 + $0x141] sm:$0xff]
        %v3159 = vld [vmem:[#allocation3 + $0x151] sm:$0xff]
        %v3160 = vld [vmem:[#allocation3 + $0x159] sm:$0xff]
        %v3161 = vld [vmem:[#allocation3 + $0x169] sm:$0xff]
        %v3162 = vld [vmem:[#allocation3 + $0x171] sm:$0xff]
        %v3163 = vld [vmem:[#allocation3 + $0x2] sm:$0xff]
        %v3164 = vld [vmem:[#allocation3 + $0xa] sm:$0xff]
        %v3165 = vld [vmem:[#allocation3 + $0x1a] sm:$0xff]
        %v3166 = vld [vmem:[#allocation3 + $0x22] sm:$0xff]
        %v3167 = vld [vmem:[#allocation3 + $0x32] sm:$0xff]
        %v3168 = vld [vmem:[#allocation3 + $0x3a] sm:$0xff]
        %v3169 = vld [vmem:[#allocation3 + $0x4a] sm:$0xff]
        %v3170 = vld [vmem:[#allocation3 + $0x52] sm:$0xff]
        %v3171 = vld [vmem:[#allocation3 + $0x62] sm:$0xff]
        %v3172 = vld [vmem:[#allocation3 + $0x6a] sm:$0xff]
        %v3173 = vld [vmem:[#allocation3 + $0x7a] sm:$0xff]
        %v3174 = vld [vmem:[#allocation3 + $0x82] sm:$0xff]
        %v3175 = vld [vmem:[#allocation3 + $0x92] sm:$0xff]
        %v3176 = vld [vmem:[#allocation3 + $0x9a] sm:$0xff]
        %v3177 = vld [vmem:[#allocation3 + $0xaa] sm:$0xff]
        %v3178 = vld [vmem:[#allocation3 + $0xb2] sm:$0xff]
        %v3179 = vld [vmem:[#allocation3 + $0xc2] sm:$0xff]
        %v3180 = vld [vmem:[#allocation3 + $0xca] sm:$0xff]
        %v3181 = vld [vmem:[#allocation3 + $0xda] sm:$0xff]
        %v3182 = vld [vmem:[#allocation3 + $0xe2] sm:$0xff]
        %v3183 = vld [vmem:[#allocation3 + $0xf2] sm:$0xff]
        %v3184 = vld [vmem:[#allocation3 + $0xfa] sm:$0xff]
        %v3185 = vld [vmem:[#allocation3 + $0x10a] sm:$0xff]
        %v3186 = vld [vmem:[#allocation3 + $0x112] sm:$0xff]
        %v3187 = vld [vmem:[#allocation3 + $0x122] sm:$0xff]
        %v3188 = vld [vmem:[#allocation3 + $0x12a] sm:$0xff]
        %v3189 = vld [vmem:[#allocation3 + $0x13a] sm:$0xff]
        %v3190 = vld [vmem:[#allocation3 + $0x142] sm:$0xff]
        %v3191 = vld [vmem:[#allocation3 + $0x152] sm:$0xff]
        %v3192 = vld [vmem:[#allocation3 + $0x15a] sm:$0xff]
        %v3193 = vld [vmem:[#allocation3 + $0x16a] sm:$0xff]
        %v3194 = vld [vmem:[#allocation3 + $0x172] sm:$0xff]
        %v3195 = vld [vmem:[#allocation3 + $0x3] sm:$0xff]
        %v3196 = vld [vmem:[#allocation3 + $0xb] sm:$0xff]
        %v3197 = vld [vmem:[#allocation3 + $0x1b] sm:$0xff]
        %v3198 = vld [vmem:[#allocation3 + $0x23] sm:$0xff]
        %v3199 = vld [vmem:[#allocation3 + $0x33] sm:$0xff]
        %v3200 = vld [vmem:[#allocation3 + $0x3b] sm:$0xff]
        %v3201 = vld [vmem:[#allocation3 + $0x4b] sm:$0xff]
        %v3202 = vld [vmem:[#allocation3 + $0x53] sm:$0xff]
        %v3203 = vld [vmem:[#allocation3 + $0x63] sm:$0xff]
        %v3204 = vld [vmem:[#allocation3 + $0x6b] sm:$0xff]
        %v3205 = vld [vmem:[#allocation3 + $0x7b] sm:$0xff]
        %v3206 = vld [vmem:[#allocation3 + $0x83] sm:$0xff]
        %v3207 = vld [vmem:[#allocation3 + $0x93] sm:$0xff]
        %v3208 = vld [vmem:[#allocation3 + $0x9b] sm:$0xff]
        %v3209 = vld [vmem:[#allocation3 + $0xab] sm:$0xff]
        %v3210 = vld [vmem:[#allocation3 + $0xb3] sm:$0xff]
        %v3211 = vld [vmem:[#allocation3 + $0xc3] sm:$0xff]
        %v3212 = vld [vmem:[#allocation3 + $0xcb] sm:$0xff]
        %v3213 = vld [vmem:[#allocation3 + $0xdb] sm:$0xff]
        %v3214 = vld [vmem:[#allocation3 + $0xe3] sm:$0xff]
        %v3215 = vld [vmem:[#allocation3 + $0xf3] sm:$0xff]
        %v3216 = vld [vmem:[#allocation3 + $0xfb] sm:$0xff]
        %v3217 = vld [vmem:[#allocation3 + $0x10b] sm:$0xff]
        %v3218 = vld [vmem:[#allocation3 + $0x113] sm:$0xff]
        %v3219 = vld [vmem:[#allocation3 + $0x123] sm:$0xff]
        %v3220 = vld [vmem:[#allocation3 + $0x12b] sm:$0xff]
        %v3221 = vld [vmem:[#allocation3 + $0x13b] sm:$0xff]
        %v3222 = vld [vmem:[#allocation3 + $0x143] sm:$0xff]
        %v3223 = vld [vmem:[#allocation3 + $0x153] sm:$0xff]
        %v3224 = vld [vmem:[#allocation3 + $0x15b] sm:$0xff]
        %v3225 = vld [vmem:[#allocation3 + $0x16b] sm:$0xff]
        %v3226 = vld [vmem:[#allocation3 + $0x173] sm:$0xff]
        %v3227 = vld [vmem:[#allocation3 + $0x4] sm:$0xff]
        %v3228 = vld [vmem:[#allocation3 + $0xc] sm:$0xff]
        %v3229 = vld [vmem:[#allocation3 + $0x1c] sm:$0xff]
        %v3230 = vld [vmem:[#allocation3 + $0x24] sm:$0xff]
        %v3231 = vld [vmem:[#allocation3 + $0x34] sm:$0xff]
        %v3232 = vld [vmem:[#allocation3 + $0x3c] sm:$0xff]
        %v3233 = vld [vmem:[#allocation3 + $0x4c] sm:$0xff]
        %v3234 = vld [vmem:[#allocation3 + $0x54] sm:$0xff]
        %v3235 = vld [vmem:[#allocation3 + $0x64] sm:$0xff]
        %v3236 = vld [vmem:[#allocation3 + $0x6c] sm:$0xff]
        %v3237 = vld [vmem:[#allocation3 + $0x7c] sm:$0xff]
        %v3238 = vld [vmem:[#allocation3 + $0x84] sm:$0xff]
        %v3239 = vld [vmem:[#allocation3 + $0x94] sm:$0xff]
        %v3240 = vld [vmem:[#allocation3 + $0x9c] sm:$0xff]
        %v3241 = vld [vmem:[#allocation3 + $0xac] sm:$0xff]
        %v3242 = vld [vmem:[#allocation3 + $0xb4] sm:$0xff]
        %v3243 = vld [vmem:[#allocation3 + $0xc4] sm:$0xff]
        %v3244 = vld [vmem:[#allocation3 + $0xcc] sm:$0xff]
        %v3245 = vld [vmem:[#allocation3 + $0xdc] sm:$0xff]
        %v3246 = vld [vmem:[#allocation3 + $0xe4] sm:$0xff]
        %v3247 = vld [vmem:[#allocation3 + $0xf4] sm:$0xff]
        %v3248 = vld [vmem:[#allocation3 + $0xfc] sm:$0xff]
        %v3249 = vld [vmem:[#allocation3 + $0x10c] sm:$0xff]
        %v3250 = vld [vmem:[#allocation3 + $0x114] sm:$0xff]
        %v3251 = vld [vmem:[#allocation3 + $0x124] sm:$0xff]
        %v3252 = vld [vmem:[#allocation3 + $0x12c] sm:$0xff]
        %v3253 = vld [vmem:[#allocation3 + $0x13c] sm:$0xff]
        %v3254 = vld [vmem:[#allocation3 + $0x144] sm:$0xff]
        %v3255 = vld [vmem:[#allocation3 + $0x154] sm:$0xff]
        %v3256 = vld [vmem:[#allocation3 + $0x15c] sm:$0xff]
        %v3257 = vld [vmem:[#allocation3 + $0x16c] sm:$0xff]
        %v3258 = vld [vmem:[#allocation3 + $0x174] sm:$0xff]
        %s3259 = scalar_lea.vmem [#allocation3], 24
        %v3260 = vld [vmem:[%s3259] sm:$0xff]
        %v3261 = vld [vmem:[%s3259 + $0x8] sm:$0xff]
        %v3262 = vld [vmem:[%s3259 + $0x18] sm:$0xff]
        %v3263 = vld [vmem:[%s3259 + $0x20] sm:$0xff]
        %v3264 = vld [vmem:[%s3259 + $0x30] sm:$0xff]
        %v3265 = vld [vmem:[%s3259 + $0x38] sm:$0xff]
        %v3266 = vld [vmem:[%s3259 + $0x48] sm:$0xff]
        %v3267 = vld [vmem:[%s3259 + $0x50] sm:$0xff]
        %v3268 = vld [vmem:[%s3259 + $0x60] sm:$0xff]
        %v3269 = vld [vmem:[%s3259 + $0x68] sm:$0xff]
        %v3270 = vld [vmem:[%s3259 + $0x78] sm:$0xff]
        %v3271 = vld [vmem:[%s3259 + $0x80] sm:$0xff]
        %v3272 = vld [vmem:[%s3259 + $0x90] sm:$0xff]
        %v3273 = vld [vmem:[%s3259 + $0x98] sm:$0xff]
        %v3274 = vld [vmem:[%s3259 + $0xa8] sm:$0xff]
        %v3275 = vld [vmem:[%s3259 + $0xb0] sm:$0xff]
        %v3276 = vld [vmem:[%s3259 + $0xc0] sm:$0xff]
        %v3277 = vld [vmem:[%s3259 + $0xc8] sm:$0xff]
        %v3278 = vld [vmem:[%s3259 + $0xd8] sm:$0xff]
        %v3279 = vld [vmem:[%s3259 + $0xe0] sm:$0xff]
        %v3280 = vld [vmem:[%s3259 + $0xf0] sm:$0xff]
        %v3281 = vld [vmem:[%s3259 + $0xf8] sm:$0xff]
        %v3282 = vld [vmem:[%s3259 + $0x108] sm:$0xff]
        %v3283 = vld [vmem:[%s3259 + $0x110] sm:$0xff]
        %v3284 = vld [vmem:[%s3259 + $0x120] sm:$0xff]
        %v3285 = vld [vmem:[%s3259 + $0x128] sm:$0xff]
        %v3286 = vld [vmem:[%s3259 + $0x138] sm:$0xff]
        %v3287 = vld [vmem:[%s3259 + $0x140] sm:$0xff]
        %v3288 = vld [vmem:[%s3259 + $0x150] sm:$0xff]
        %v3289 = vld [vmem:[%s3259 + $0x158] sm:$0xff]
        %v3290 = vld [vmem:[%s3259 + $0x168] sm:$0xff]
        %v3291 = vld [vmem:[%s3259 + $0x170] sm:$0xff]
        %v3292 = vld [vmem:[%s3259 + $0x1] sm:$0xff]
        %v3293 = vld [vmem:[%s3259 + $0x9] sm:$0xff]
        %v3294 = vld [vmem:[%s3259 + $0x19] sm:$0xff]
        %v3295 = vld [vmem:[%s3259 + $0x21] sm:$0xff]
        %v3296 = vld [vmem:[%s3259 + $0x31] sm:$0xff]
        %v3297 = vld [vmem:[%s3259 + $0x39] sm:$0xff]
        %v3298 = vld [vmem:[%s3259 + $0x49] sm:$0xff]
        %v3299 = vld [vmem:[%s3259 + $0x51] sm:$0xff]
        %v3300 = vld [vmem:[%s3259 + $0x61] sm:$0xff]
        %v3301 = vld [vmem:[%s3259 + $0x69] sm:$0xff]
        %v3302 = vld [vmem:[%s3259 + $0x79] sm:$0xff]
        %v3303 = vld [vmem:[%s3259 + $0x81] sm:$0xff]
        %v3304 = vld [vmem:[%s3259 + $0x91] sm:$0xff]
        %v3305 = vld [vmem:[%s3259 + $0x99] sm:$0xff]
        %v3306 = vld [vmem:[%s3259 + $0xa9] sm:$0xff]
        %v3307 = vld [vmem:[%s3259 + $0xb1] sm:$0xff]
        %v3308 = vld [vmem:[%s3259 + $0xc1] sm:$0xff]
        %v3309 = vld [vmem:[%s3259 + $0xc9] sm:$0xff]
        %v3310 = vld [vmem:[%s3259 + $0xd9] sm:$0xff]
        %v3311 = vld [vmem:[%s3259 + $0xe1] sm:$0xff]
        %v3312 = vld [vmem:[%s3259 + $0xf1] sm:$0xff]
        %v3313 = vld [vmem:[%s3259 + $0xf9] sm:$0xff]
        %v3314 = vld [vmem:[%s3259 + $0x109] sm:$0xff]
        %v3315 = vld [vmem:[%s3259 + $0x111] sm:$0xff]
        %v3316 = vld [vmem:[%s3259 + $0x121] sm:$0xff]
        %v3317 = vld [vmem:[%s3259 + $0x129] sm:$0xff]
        %v3318 = vld [vmem:[%s3259 + $0x139] sm:$0xff]
        %v3319 = vld [vmem:[%s3259 + $0x141] sm:$0xff]
        %v3320 = vld [vmem:[%s3259 + $0x151] sm:$0xff]
        %v3321 = vld [vmem:[%s3259 + $0x159] sm:$0xff]
        %v3322 = vld [vmem:[%s3259 + $0x169] sm:$0xff]
        %v3323 = vld [vmem:[%s3259 + $0x171] sm:$0xff]
        %v3324 = vld [vmem:[%s3259 + $0x2] sm:$0xff]
        %v3325 = vld [vmem:[%s3259 + $0xa] sm:$0xff]
        %v3326 = vld [vmem:[%s3259 + $0x1a] sm:$0xff]
        %v3327 = vld [vmem:[%s3259 + $0x22] sm:$0xff]
        %v3328 = vld [vmem:[%s3259 + $0x32] sm:$0xff]
        %v3329 = vld [vmem:[%s3259 + $0x3a] sm:$0xff]
        %v3330 = vld [vmem:[%s3259 + $0x4a] sm:$0xff]
        %v3331 = vld [vmem:[%s3259 + $0x52] sm:$0xff]
        %v3332 = vld [vmem:[%s3259 + $0x62] sm:$0xff]
        %v3333 = vld [vmem:[%s3259 + $0x6a] sm:$0xff]
        %v3334 = vld [vmem:[%s3259 + $0x7a] sm:$0xff]
        %v3335 = vld [vmem:[%s3259 + $0x82] sm:$0xff]
        %v3336 = vld [vmem:[%s3259 + $0x92] sm:$0xff]
        %v3337 = vld [vmem:[%s3259 + $0x9a] sm:$0xff]
        %v3338 = vld [vmem:[%s3259 + $0xaa] sm:$0xff]
        %v3339 = vld [vmem:[%s3259 + $0xb2] sm:$0xff]
        %v3340 = vld [vmem:[%s3259 + $0xc2] sm:$0xff]
        %v3341 = vld [vmem:[%s3259 + $0xca] sm:$0xff]
        %v3342 = vld [vmem:[%s3259 + $0xda] sm:$0xff]
        %v3343 = vld [vmem:[%s3259 + $0xe2] sm:$0xff]
        %v3344 = vld [vmem:[%s3259 + $0xf2] sm:$0xff]
        %v3345 = vld [vmem:[%s3259 + $0xfa] sm:$0xff]
        %v3346 = vld [vmem:[%s3259 + $0x10a] sm:$0xff]
        %v3347 = vld [vmem:[%s3259 + $0x112] sm:$0xff]
        %v3348 = vld [vmem:[%s3259 + $0x122] sm:$0xff]
        %v3349 = vld [vmem:[%s3259 + $0x12a] sm:$0xff]
        %v3350 = vld [vmem:[%s3259 + $0x13a] sm:$0xff]
        %v3351 = vld [vmem:[%s3259 + $0x142] sm:$0xff]
        %v3352 = vld [vmem:[%s3259 + $0x152] sm:$0xff]
        %v3353 = vld [vmem:[%s3259 + $0x15a] sm:$0xff]
        %v3354 = vld [vmem:[%s3259 + $0x16a] sm:$0xff]
        %v3355 = vld [vmem:[%s3259 + $0x172] sm:$0xff]
        %v3356 = vld [vmem:[%s3259 + $0x3] sm:$0xff]
        %v3357 = vld [vmem:[%s3259 + $0xb] sm:$0xff]
        %v3358 = vld [vmem:[%s3259 + $0x1b] sm:$0xff]
        %v3359 = vld [vmem:[%s3259 + $0x23] sm:$0xff]
        %v3360 = vld [vmem:[%s3259 + $0x33] sm:$0xff]
        %v3361 = vld [vmem:[%s3259 + $0x3b] sm:$0xff]
        %v3362 = vld [vmem:[%s3259 + $0x4b] sm:$0xff]
        %v3363 = vld [vmem:[%s3259 + $0x53] sm:$0xff]
        %v3364 = vld [vmem:[%s3259 + $0x63] sm:$0xff]
        %v3365 = vld [vmem:[%s3259 + $0x6b] sm:$0xff]
        %v3366 = vld [vmem:[%s3259 + $0x7b] sm:$0xff]
        %v3367 = vld [vmem:[%s3259 + $0x83] sm:$0xff]
        %v3368 = vld [vmem:[%s3259 + $0x93] sm:$0xff]
        %v3369 = vld [vmem:[%s3259 + $0x9b] sm:$0xff]
        %v3370 = vld [vmem:[%s3259 + $0xab] sm:$0xff]
        %v3371 = vld [vmem:[%s3259 + $0xb3] sm:$0xff]
        %v3372 = vld [vmem:[%s3259 + $0xc3] sm:$0xff]
        %v3373 = vld [vmem:[%s3259 + $0xcb] sm:$0xff]
        %v3374 = vld [vmem:[%s3259 + $0xdb] sm:$0xff]
        %v3375 = vld [vmem:[%s3259 + $0xe3] sm:$0xff]
        %v3376 = vld [vmem:[%s3259 + $0xf3] sm:$0xff]
        %v3377 = vld [vmem:[%s3259 + $0xfb] sm:$0xff]
        %v3378 = vld [vmem:[%s3259 + $0x10b] sm:$0xff]
        %v3379 = vld [vmem:[%s3259 + $0x113] sm:$0xff]
        %v3380 = vld [vmem:[%s3259 + $0x123] sm:$0xff]
        %v3381 = vld [vmem:[%s3259 + $0x12b] sm:$0xff]
        %v3382 = vld [vmem:[%s3259 + $0x13b] sm:$0xff]
        %v3383 = vld [vmem:[%s3259 + $0x143] sm:$0xff]
        %v3384 = vld [vmem:[%s3259 + $0x153] sm:$0xff]
        %v3385 = vld [vmem:[%s3259 + $0x15b] sm:$0xff]
        %v3386 = vld [vmem:[%s3259 + $0x16b] sm:$0xff]
        %v3387 = vld [vmem:[%s3259 + $0x173] sm:$0xff]
        %v3388 = vld [vmem:[%s3259 + $0x4] sm:$0xff]
        %v3389 = vld [vmem:[%s3259 + $0xc] sm:$0xff]
        %v3390 = vld [vmem:[%s3259 + $0x1c] sm:$0xff]
        %v3391 = vld [vmem:[%s3259 + $0x24] sm:$0xff]
        %v3392 = vld [vmem:[%s3259 + $0x34] sm:$0xff]
        %v3393 = vld [vmem:[%s3259 + $0x3c] sm:$0xff]
        %v3394 = vld [vmem:[%s3259 + $0x4c] sm:$0xff]
        %v3395 = vld [vmem:[%s3259 + $0x54] sm:$0xff]
        %v3396 = vld [vmem:[%s3259 + $0x64] sm:$0xff]
        %v3397 = vld [vmem:[%s3259 + $0x6c] sm:$0xff]
        %v3398 = vld [vmem:[%s3259 + $0x7c] sm:$0xff]
        %v3399 = vld [vmem:[%s3259 + $0x84] sm:$0xff]
        %v3400 = vld [vmem:[%s3259 + $0x94] sm:$0xff]
        %v3401 = vld [vmem:[%s3259 + $0x9c] sm:$0xff]
        %v3402 = vld [vmem:[%s3259 + $0xac] sm:$0xff]
        %v3403 = vld [vmem:[%s3259 + $0xb4] sm:$0xff]
        %v3404 = vld [vmem:[%s3259 + $0xc4] sm:$0xff]
        %v3405 = vld [vmem:[%s3259 + $0xcc] sm:$0xff]
        %v3406 = vld [vmem:[%s3259 + $0xdc] sm:$0xff]
        %v3407 = vld [vmem:[%s3259 + $0xe4] sm:$0xff]
        %v3408 = vld [vmem:[%s3259 + $0xf4] sm:$0xff]
        %v3409 = vld [vmem:[%s3259 + $0xfc] sm:$0xff]
        %v3410 = vld [vmem:[%s3259 + $0x10c] sm:$0xff]
        %v3411 = vld [vmem:[%s3259 + $0x114] sm:$0xff]
        %v3412 = vld [vmem:[%s3259 + $0x124] sm:$0xff]
        %v3413 = vld [vmem:[%s3259 + $0x12c] sm:$0xff]
        %v3414 = vld [vmem:[%s3259 + $0x13c] sm:$0xff]
        %v3415 = vld [vmem:[%s3259 + $0x144] sm:$0xff]
        %v3416 = vld [vmem:[%s3259 + $0x154] sm:$0xff]
        %v3417 = vld [vmem:[%s3259 + $0x15c] sm:$0xff]
        %v3418 = vld [vmem:[%s3259 + $0x16c] sm:$0xff]
        %v3419 = vld [vmem:[%s3259 + $0x174] sm:$0xff]
        %v3420 = vld [vmem:[%s3050] sm:$0xff]
        %v3421 = vld [vmem:[%s3050 + $0x8] sm:$0xff]
        %v3422 = vld [vmem:[%s3050 + $0x18] sm:$0xff]
        %v3423 = vld [vmem:[%s3050 + $0x20] sm:$0xff]
        %v3424 = vld [vmem:[%s3050 + $0x30] sm:$0xff]
        %v3425 = vld [vmem:[%s3050 + $0x38] sm:$0xff]
        %v3426 = vld [vmem:[%s3050 + $0x48] sm:$0xff]
        %v3427 = vld [vmem:[%s3050 + $0x50] sm:$0xff]
        %v3428 = vld [vmem:[%s3050 + $0x60] sm:$0xff]
        %v3429 = vld [vmem:[%s3050 + $0x68] sm:$0xff]
        %v3430 = vld [vmem:[%s3050 + $0x78] sm:$0xff]
        %v3431 = vld [vmem:[%s3050 + $0x80] sm:$0xff]
        %v3432 = vld [vmem:[%s3050 + $0x90] sm:$0xff]
        %v3433 = vld [vmem:[%s3050 + $0x98] sm:$0xff]
        %v3434 = vld [vmem:[%s3050 + $0xa8] sm:$0xff]
        %v3435 = vld [vmem:[%s3050 + $0xb0] sm:$0xff]
        %v3436 = vld [vmem:[%s3050 + $0xc0] sm:$0xff]
        %v3437 = vld [vmem:[%s3050 + $0xc8] sm:$0xff]
        %v3438 = vld [vmem:[%s3050 + $0xd8] sm:$0xff]
        %v3439 = vld [vmem:[%s3050 + $0xe0] sm:$0xff]
        %v3440 = vld [vmem:[%s3050 + $0xf0] sm:$0xff]
        %v3441 = vld [vmem:[%s3050 + $0xf8] sm:$0xff]
        %v3442 = vld [vmem:[%s3050 + $0x108] sm:$0xff]
        %v3443 = vld [vmem:[%s3050 + $0x110] sm:$0xff]
        %v3444 = vld [vmem:[%s3050 + $0x120] sm:$0xff]
        %v3445 = vld [vmem:[%s3050 + $0x128] sm:$0xff]
        %v3446 = vld [vmem:[%s3050 + $0x138] sm:$0xff]
        %v3447 = vld [vmem:[%s3050 + $0x140] sm:$0xff]
        %v3448 = vld [vmem:[%s3050 + $0x150] sm:$0xff]
        %v3449 = vld [vmem:[%s3050 + $0x158] sm:$0xff]
        %v3450 = vld [vmem:[%s3050 + $0x168] sm:$0xff]
        %v3451 = vld [vmem:[%s3050 + $0x170] sm:$0xff]
        %v3452 = vld [vmem:[%s3050 + $0x1] sm:$0xff]
        %v3453 = vld [vmem:[%s3050 + $0x9] sm:$0xff]
        %v3454 = vld [vmem:[%s3050 + $0x19] sm:$0xff]
        %v3455 = vld [vmem:[%s3050 + $0x21] sm:$0xff]
        %v3456 = vld [vmem:[%s3050 + $0x31] sm:$0xff]
        %v3457 = vld [vmem:[%s3050 + $0x39] sm:$0xff]
        %v3458 = vld [vmem:[%s3050 + $0x49] sm:$0xff]
        %v3459 = vld [vmem:[%s3050 + $0x51] sm:$0xff]
        %v3460 = vld [vmem:[%s3050 + $0x61] sm:$0xff]
        %v3461 = vld [vmem:[%s3050 + $0x69] sm:$0xff]
        %v3462 = vld [vmem:[%s3050 + $0x79] sm:$0xff]
        %v3463 = vld [vmem:[%s3050 + $0x81] sm:$0xff]
        %v3464 = vld [vmem:[%s3050 + $0x91] sm:$0xff]
        %v3465 = vld [vmem:[%s3050 + $0x99] sm:$0xff]
        %v3466 = vld [vmem:[%s3050 + $0xa9] sm:$0xff]
        %v3467 = vld [vmem:[%s3050 + $0xb1] sm:$0xff]
        %v3468 = vld [vmem:[%s3050 + $0xc1] sm:$0xff]
        %v3469 = vld [vmem:[%s3050 + $0xc9] sm:$0xff]
        %v3470 = vld [vmem:[%s3050 + $0xd9] sm:$0xff]
        %v3471 = vld [vmem:[%s3050 + $0xe1] sm:$0xff]
        %v3472 = vld [vmem:[%s3050 + $0xf1] sm:$0xff]
        %v3473 = vld [vmem:[%s3050 + $0xf9] sm:$0xff]
        %v3474 = vld [vmem:[%s3050 + $0x109] sm:$0xff]
        %v3475 = vld [vmem:[%s3050 + $0x111] sm:$0xff]
        %v3476 = vld [vmem:[%s3050 + $0x121] sm:$0xff]
        %v3477 = vld [vmem:[%s3050 + $0x129] sm:$0xff]
        %v3478 = vld [vmem:[%s3050 + $0x139] sm:$0xff]
        %v3479 = vld [vmem:[%s3050 + $0x141] sm:$0xff]
        %v3480 = vld [vmem:[%s3050 + $0x151] sm:$0xff]
        %v3481 = vld [vmem:[%s3050 + $0x159] sm:$0xff]
        %v3482 = vld [vmem:[%s3050 + $0x169] sm:$0xff]
        %v3483 = vld [vmem:[%s3050 + $0x171] sm:$0xff]
        %v3484 = vld [vmem:[%s3050 + $0x2] sm:$0xff]
        %v3485 = vld [vmem:[%s3050 + $0xa] sm:$0xff]
        %v3486 = vld [vmem:[%s3050 + $0x1a] sm:$0xff]
        %v3487 = vld [vmem:[%s3050 + $0x22] sm:$0xff]
        %v3488 = vld [vmem:[%s3050 + $0x32] sm:$0xff]
        %v3489 = vld [vmem:[%s3050 + $0x3a] sm:$0xff]
        %v3490 = vld [vmem:[%s3050 + $0x4a] sm:$0xff]
        %v3491 = vld [vmem:[%s3050 + $0x52] sm:$0xff]
        %v3492 = vld [vmem:[%s3050 + $0x62] sm:$0xff]
        %v3493 = vld [vmem:[%s3050 + $0x6a] sm:$0xff]
        %v3494 = vld [vmem:[%s3050 + $0x7a] sm:$0xff]
        %v3495 = vld [vmem:[%s3050 + $0x82] sm:$0xff]
        %v3496 = vld [vmem:[%s3050 + $0x92] sm:$0xff]
        %v3497 = vld [vmem:[%s3050 + $0x9a] sm:$0xff]
        %v3498 = vld [vmem:[%s3050 + $0xaa] sm:$0xff]
        %v3499 = vld [vmem:[%s3050 + $0xb2] sm:$0xff]
        %v3500 = vld [vmem:[%s3050 + $0xc2] sm:$0xff]
        %v3501 = vld [vmem:[%s3050 + $0xca] sm:$0xff]
        %v3502 = vld [vmem:[%s3050 + $0xda] sm:$0xff]
        %v3503 = vld [vmem:[%s3050 + $0xe2] sm:$0xff]
        %v3504 = vld [vmem:[%s3050 + $0xf2] sm:$0xff]
        %v3505 = vld [vmem:[%s3050 + $0xfa] sm:$0xff]
        %v3506 = vld [vmem:[%s3050 + $0x10a] sm:$0xff]
        %v3507 = vld [vmem:[%s3050 + $0x112] sm:$0xff]
        %v3508 = vld [vmem:[%s3050 + $0x122] sm:$0xff]
        %v3509 = vld [vmem:[%s3050 + $0x12a] sm:$0xff]
        %v3510 = vld [vmem:[%s3050 + $0x13a] sm:$0xff]
        %v3511 = vld [vmem:[%s3050 + $0x142] sm:$0xff]
        %v3512 = vld [vmem:[%s3050 + $0x152] sm:$0xff]
        %v3513 = vld [vmem:[%s3050 + $0x15a] sm:$0xff]
        %v3514 = vld [vmem:[%s3050 + $0x16a] sm:$0xff]
        %v3515 = vld [vmem:[%s3050 + $0x172] sm:$0xff]
        %v3516 = vld [vmem:[%s3050 + $0x3] sm:$0xff]
        %v3517 = vld [vmem:[%s3050 + $0xb] sm:$0xff]
        %v3518 = vld [vmem:[%s3050 + $0x1b] sm:$0xff]
        %v3519 = vld [vmem:[%s3050 + $0x23] sm:$0xff]
        %v3520 = vld [vmem:[%s3050 + $0x33] sm:$0xff]
        %v3521 = vld [vmem:[%s3050 + $0x3b] sm:$0xff]
        %v3522 = vld [vmem:[%s3050 + $0x4b] sm:$0xff]
        %v3523 = vld [vmem:[%s3050 + $0x53] sm:$0xff]
        %v3524 = vld [vmem:[%s3050 + $0x63] sm:$0xff]
        %v3525 = vld [vmem:[%s3050 + $0x6b] sm:$0xff]
        %v3526 = vld [vmem:[%s3050 + $0x7b] sm:$0xff]
        %v3527 = vld [vmem:[%s3050 + $0x83] sm:$0xff]
        %v3528 = vld [vmem:[%s3050 + $0x93] sm:$0xff]
        %v3529 = vld [vmem:[%s3050 + $0x9b] sm:$0xff]
        %v3530 = vld [vmem:[%s3050 + $0xab] sm:$0xff]
        %v3531 = vld [vmem:[%s3050 + $0xb3] sm:$0xff]
        %v3532 = vld [vmem:[%s3050 + $0xc3] sm:$0xff]
        %v3533 = vld [vmem:[%s3050 + $0xcb] sm:$0xff]
        %v3534 = vld [vmem:[%s3050 + $0xdb] sm:$0xff]
        %v3535 = vld [vmem:[%s3050 + $0xe3] sm:$0xff]
        %v3536 = vld [vmem:[%s3050 + $0xf3] sm:$0xff]
        %v3537 = vld [vmem:[%s3050 + $0xfb] sm:$0xff]
        %v3538 = vld [vmem:[%s3050 + $0x10b] sm:$0xff]
        %v3539 = vld [vmem:[%s3050 + $0x113] sm:$0xff]
        %v3540 = vld [vmem:[%s3050 + $0x123] sm:$0xff]
        %v3541 = vld [vmem:[%s3050 + $0x12b] sm:$0xff]
        %v3542 = vld [vmem:[%s3050 + $0x13b] sm:$0xff]
        %v3543 = vld [vmem:[%s3050 + $0x143] sm:$0xff]
        %v3544 = vld [vmem:[%s3050 + $0x153] sm:$0xff]
        %v3545 = vld [vmem:[%s3050 + $0x15b] sm:$0xff]
        %v3546 = vld [vmem:[%s3050 + $0x16b] sm:$0xff]
        %v3547 = vld [vmem:[%s3050 + $0x173] sm:$0xff]
        %v3548 = vld [vmem:[%s3050 + $0x4] sm:$0xff]
        %v3549 = vld [vmem:[%s3050 + $0xc] sm:$0xff]
        %v3550 = vld [vmem:[%s3050 + $0x1c] sm:$0xff]
        %v3551 = vld [vmem:[%s3050 + $0x24] sm:$0xff]
        %v3552 = vld [vmem:[%s3050 + $0x34] sm:$0xff]
        %v3553 = vld [vmem:[%s3050 + $0x3c] sm:$0xff]
        %v3554 = vld [vmem:[%s3050 + $0x4c] sm:$0xff]
        %v3555 = vld [vmem:[%s3050 + $0x54] sm:$0xff]
        %v3556 = vld [vmem:[%s3050 + $0x64] sm:$0xff]
        %v3557 = vld [vmem:[%s3050 + $0x6c] sm:$0xff]
        %v3558 = vld [vmem:[%s3050 + $0x7c] sm:$0xff]
        %v3559 = vld [vmem:[%s3050 + $0x84] sm:$0xff]
        %v3560 = vld [vmem:[%s3050 + $0x94] sm:$0xff]
        %v3561 = vld [vmem:[%s3050 + $0x9c] sm:$0xff]
        %v3562 = vld [vmem:[%s3050 + $0xac] sm:$0xff]
        %v3563 = vld [vmem:[%s3050 + $0xb4] sm:$0xff]
        %v3564 = vld [vmem:[%s3050 + $0xc4] sm:$0xff]
        %v3565 = vld [vmem:[%s3050 + $0xcc] sm:$0xff]
        %v3566 = vld [vmem:[%s3050 + $0xdc] sm:$0xff]
        %v3567 = vld [vmem:[%s3050 + $0xe4] sm:$0xff]
        %v3568 = vld [vmem:[%s3050 + $0xf4] sm:$0xff]
        %v3569 = vld [vmem:[%s3050 + $0xfc] sm:$0xff]
        %v3570 = vld [vmem:[%s3050 + $0x10c] sm:$0xff]
        %v3571 = vld [vmem:[%s3050 + $0x114] sm:$0xff]
        %v3572 = vld [vmem:[%s3050 + $0x124] sm:$0xff]
        %v3573 = vld [vmem:[%s3050 + $0x12c] sm:$0xff]
        %v3574 = vld [vmem:[%s3050 + $0x13c] sm:$0xff]
        %v3575 = vld [vmem:[%s3050 + $0x144] sm:$0xff]
        %v3576 = vld [vmem:[%s3050 + $0x154] sm:$0xff]
        %v3577 = vld [vmem:[%s3050 + $0x15c] sm:$0xff]
        %v3578 = vld [vmem:[%s3050 + $0x16c] sm:$0xff]
        %v3579 = vld [vmem:[%s3050 + $0x174] sm:$0xff]
        %s3580 = scalar_lea.vmem [#allocation3], 72
        %v3581 = vld [vmem:[%s3580] sm:$0xff]
        %v3582 = vld [vmem:[%s3580 + $0x8] sm:$0xff]
        %v3583 = vld [vmem:[%s3580 + $0x18] sm:$0xff]
        %v3584 = vld [vmem:[%s3580 + $0x20] sm:$0xff]
        %v3585 = vld [vmem:[%s3580 + $0x30] sm:$0xff]
        %v3586 = vld [vmem:[%s3580 + $0x38] sm:$0xff]
        %v3587 = vld [vmem:[%s3580 + $0x48] sm:$0xff]
        %v3588 = vld [vmem:[%s3580 + $0x50] sm:$0xff]
        %v3589 = vld [vmem:[%s3580 + $0x60] sm:$0xff]
        %v3590 = vld [vmem:[%s3580 + $0x68] sm:$0xff]
        %v3591 = vld [vmem:[%s3580 + $0x78] sm:$0xff]
        %v3592 = vld [vmem:[%s3580 + $0x80] sm:$0xff]
        %v3593 = vld [vmem:[%s3580 + $0x90] sm:$0xff]
        %v3594 = vld [vmem:[%s3580 + $0x98] sm:$0xff]
        %v3595 = vld [vmem:[%s3580 + $0xa8] sm:$0xff]
        %v3596 = vld [vmem:[%s3580 + $0xb0] sm:$0xff]
        %v3597 = vld [vmem:[%s3580 + $0xc0] sm:$0xff]
        %v3598 = vld [vmem:[%s3580 + $0xc8] sm:$0xff]
        %v3599 = vld [vmem:[%s3580 + $0xd8] sm:$0xff]
        %v3600 = vld [vmem:[%s3580 + $0xe0] sm:$0xff]
        %v3601 = vld [vmem:[%s3580 + $0xf0] sm:$0xff]
        %v3602 = vld [vmem:[%s3580 + $0xf8] sm:$0xff]
        %v3603 = vld [vmem:[%s3580 + $0x108] sm:$0xff]
        %v3604 = vld [vmem:[%s3580 + $0x110] sm:$0xff]
        %v3605 = vld [vmem:[%s3580 + $0x120] sm:$0xff]
        %v3606 = vld [vmem:[%s3580 + $0x128] sm:$0xff]
        %v3607 = vld [vmem:[%s3580 + $0x138] sm:$0xff]
        %v3608 = vld [vmem:[%s3580 + $0x140] sm:$0xff]
        %v3609 = vld [vmem:[%s3580 + $0x150] sm:$0xff]
        %v3610 = vld [vmem:[%s3580 + $0x158] sm:$0xff]
        %v3611 = vld [vmem:[%s3580 + $0x168] sm:$0xff]
        %v3612 = vld [vmem:[%s3580 + $0x170] sm:$0xff]
        %v3613 = vld [vmem:[%s3580 + $0x1] sm:$0xff]
        %v3614 = vld [vmem:[%s3580 + $0x9] sm:$0xff]
        %v3615 = vld [vmem:[%s3580 + $0x19] sm:$0xff]
        %v3616 = vld [vmem:[%s3580 + $0x21] sm:$0xff]
        %v3617 = vld [vmem:[%s3580 + $0x31] sm:$0xff]
        %v3618 = vld [vmem:[%s3580 + $0x39] sm:$0xff]
        %v3619 = vld [vmem:[%s3580 + $0x49] sm:$0xff]
        %v3620 = vld [vmem:[%s3580 + $0x51] sm:$0xff]
        %v3621 = vld [vmem:[%s3580 + $0x61] sm:$0xff]
        %v3622 = vld [vmem:[%s3580 + $0x69] sm:$0xff]
        %v3623 = vld [vmem:[%s3580 + $0x79] sm:$0xff]
        %v3624 = vld [vmem:[%s3580 + $0x81] sm:$0xff]
        %v3625 = vld [vmem:[%s3580 + $0x91] sm:$0xff]
        %v3626 = vld [vmem:[%s3580 + $0x99] sm:$0xff]
        %v3627 = vld [vmem:[%s3580 + $0xa9] sm:$0xff]
        %v3628 = vld [vmem:[%s3580 + $0xb1] sm:$0xff]
        %v3629 = vld [vmem:[%s3580 + $0xc1] sm:$0xff]
        %v3630 = vld [vmem:[%s3580 + $0xc9] sm:$0xff]
        %v3631 = vld [vmem:[%s3580 + $0xd9] sm:$0xff]
        %v3632 = vld [vmem:[%s3580 + $0xe1] sm:$0xff]
        %v3633 = vld [vmem:[%s3580 + $0xf1] sm:$0xff]
        %v3634 = vld [vmem:[%s3580 + $0xf9] sm:$0xff]
        %v3635 = vld [vmem:[%s3580 + $0x109] sm:$0xff]
        %v3636 = vld [vmem:[%s3580 + $0x111] sm:$0xff]
        %v3637 = vld [vmem:[%s3580 + $0x121] sm:$0xff]
        %v3638 = vld [vmem:[%s3580 + $0x129] sm:$0xff]
        %v3639 = vld [vmem:[%s3580 + $0x139] sm:$0xff]
        %v3640 = vld [vmem:[%s3580 + $0x141] sm:$0xff]
        %v3641 = vld [vmem:[%s3580 + $0x151] sm:$0xff]
        %v3642 = vld [vmem:[%s3580 + $0x159] sm:$0xff]
        %v3643 = vld [vmem:[%s3580 + $0x169] sm:$0xff]
        %v3644 = vld [vmem:[%s3580 + $0x171] sm:$0xff]
        %v3645 = vld [vmem:[%s3580 + $0x2] sm:$0xff]
        %v3646 = vld [vmem:[%s3580 + $0xa] sm:$0xff]
        %v3647 = vld [vmem:[%s3580 + $0x1a] sm:$0xff]
        %v3648 = vld [vmem:[%s3580 + $0x22] sm:$0xff]
        %v3649 = vld [vmem:[%s3580 + $0x32] sm:$0xff]
        %v3650 = vld [vmem:[%s3580 + $0x3a] sm:$0xff]
        %v3651 = vld [vmem:[%s3580 + $0x4a] sm:$0xff]
        %v3652 = vld [vmem:[%s3580 + $0x52] sm:$0xff]
        %v3653 = vld [vmem:[%s3580 + $0x62] sm:$0xff]
        %v3654 = vld [vmem:[%s3580 + $0x6a] sm:$0xff]
        %v3655 = vld [vmem:[%s3580 + $0x7a] sm:$0xff]
        %v3656 = vld [vmem:[%s3580 + $0x82] sm:$0xff]
        %v3657 = vld [vmem:[%s3580 + $0x92] sm:$0xff]
        %v3658 = vld [vmem:[%s3580 + $0x9a] sm:$0xff]
        %v3659 = vld [vmem:[%s3580 + $0xaa] sm:$0xff]
        %v3660 = vld [vmem:[%s3580 + $0xb2] sm:$0xff]
        %v3661 = vld [vmem:[%s3580 + $0xc2] sm:$0xff]
        %v3662 = vld [vmem:[%s3580 + $0xca] sm:$0xff]
        %v3663 = vld [vmem:[%s3580 + $0xda] sm:$0xff]
        %v3664 = vld [vmem:[%s3580 + $0xe2] sm:$0xff]
        %v3665 = vld [vmem:[%s3580 + $0xf2] sm:$0xff]
        %v3666 = vld [vmem:[%s3580 + $0xfa] sm:$0xff]
        %v3667 = vld [vmem:[%s3580 + $0x10a] sm:$0xff]
        %v3668 = vld [vmem:[%s3580 + $0x112] sm:$0xff]
        %v3669 = vld [vmem:[%s3580 + $0x122] sm:$0xff]
        %v3670 = vld [vmem:[%s3580 + $0x12a] sm:$0xff]
        %v3671 = vld [vmem:[%s3580 + $0x13a] sm:$0xff]
        %v3672 = vld [vmem:[%s3580 + $0x142] sm:$0xff]
        %v3673 = vld [vmem:[%s3580 + $0x152] sm:$0xff]
        %v3674 = vld [vmem:[%s3580 + $0x15a] sm:$0xff]
        %v3675 = vld [vmem:[%s3580 + $0x16a] sm:$0xff]
        %v3676 = vld [vmem:[%s3580 + $0x172] sm:$0xff]
        %v3677 = vld [vmem:[%s3580 + $0x3] sm:$0xff]
        %v3678 = vld [vmem:[%s3580 + $0xb] sm:$0xff]
        %v3679 = vld [vmem:[%s3580 + $0x1b] sm:$0xff]
        %v3680 = vld [vmem:[%s3580 + $0x23] sm:$0xff]
        %v3681 = vld [vmem:[%s3580 + $0x33] sm:$0xff]
        %v3682 = vld [vmem:[%s3580 + $0x3b] sm:$0xff]
        %v3683 = vld [vmem:[%s3580 + $0x4b] sm:$0xff]
        %v3684 = vld [vmem:[%s3580 + $0x53] sm:$0xff]
        %v3685 = vld [vmem:[%s3580 + $0x63] sm:$0xff]
        %v3686 = vld [vmem:[%s3580 + $0x6b] sm:$0xff]
        %v3687 = vld [vmem:[%s3580 + $0x7b] sm:$0xff]
        %v3688 = vld [vmem:[%s3580 + $0x83] sm:$0xff]
        %v3689 = vld [vmem:[%s3580 + $0x93] sm:$0xff]
        %v3690 = vld [vmem:[%s3580 + $0x9b] sm:$0xff]
        %v3691 = vld [vmem:[%s3580 + $0xab] sm:$0xff]
        %v3692 = vld [vmem:[%s3580 + $0xb3] sm:$0xff]
        %v3693 = vld [vmem:[%s3580 + $0xc3] sm:$0xff]
        %v3694 = vld [vmem:[%s3580 + $0xcb] sm:$0xff]
        %v3695 = vld [vmem:[%s3580 + $0xdb] sm:$0xff]
        %v3696 = vld [vmem:[%s3580 + $0xe3] sm:$0xff]
        %v3697 = vld [vmem:[%s3580 + $0xf3] sm:$0xff]
        %v3698 = vld [vmem:[%s3580 + $0xfb] sm:$0xff]
        %v3699 = vld [vmem:[%s3580 + $0x10b] sm:$0xff]
        %v3700 = vld [vmem:[%s3580 + $0x113] sm:$0xff]
        %v3701 = vld [vmem:[%s3580 + $0x123] sm:$0xff]
        %v3702 = vld [vmem:[%s3580 + $0x12b] sm:$0xff]
        %v3703 = vld [vmem:[%s3580 + $0x13b] sm:$0xff]
        %v3704 = vld [vmem:[%s3580 + $0x143] sm:$0xff]
        %v3705 = vld [vmem:[%s3580 + $0x153] sm:$0xff]
        %v3706 = vld [vmem:[%s3580 + $0x15b] sm:$0xff]
        %v3707 = vld [vmem:[%s3580 + $0x16b] sm:$0xff]
        %v3708 = vld [vmem:[%s3580 + $0x173] sm:$0xff]
        %v3709 = vld [vmem:[%s3580 + $0x4] sm:$0xff]
        %v3710 = vld [vmem:[%s3580 + $0xc] sm:$0xff]
        %v3711 = vld [vmem:[%s3580 + $0x1c] sm:$0xff]
        %v3712 = vld [vmem:[%s3580 + $0x24] sm:$0xff]
        %v3713 = vld [vmem:[%s3580 + $0x34] sm:$0xff]
        %v3714 = vld [vmem:[%s3580 + $0x3c] sm:$0xff]
        %v3715 = vld [vmem:[%s3580 + $0x4c] sm:$0xff]
        %v3716 = vld [vmem:[%s3580 + $0x54] sm:$0xff]
        %v3717 = vld [vmem:[%s3580 + $0x64] sm:$0xff]
        %v3718 = vld [vmem:[%s3580 + $0x6c] sm:$0xff]
        %v3719 = vld [vmem:[%s3580 + $0x7c] sm:$0xff]
        %v3720 = vld [vmem:[%s3580 + $0x84] sm:$0xff]
        %v3721 = vld [vmem:[%s3580 + $0x94] sm:$0xff]
        %v3722 = vld [vmem:[%s3580 + $0x9c] sm:$0xff]
        %v3723 = vld [vmem:[%s3580 + $0xac] sm:$0xff]
        %v3724 = vld [vmem:[%s3580 + $0xb4] sm:$0xff]
        %v3725 = vld [vmem:[%s3580 + $0xc4] sm:$0xff]
        %v3726 = vld [vmem:[%s3580 + $0xcc] sm:$0xff]
        %v3727 = vld [vmem:[%s3580 + $0xdc] sm:$0xff]
        %v3728 = vld [vmem:[%s3580 + $0xe4] sm:$0xff]
        %v3729 = vld [vmem:[%s3580 + $0xf4] sm:$0xff]
        %v3730 = vld [vmem:[%s3580 + $0xfc] sm:$0xff]
        %v3731 = vld [vmem:[%s3580 + $0x10c] sm:$0xff]
        %v3732 = vld [vmem:[%s3580 + $0x114] sm:$0xff]
        %v3733 = vld [vmem:[%s3580 + $0x124] sm:$0xff]
        %v3734 = vld [vmem:[%s3580 + $0x12c] sm:$0xff]
        %v3735 = vld [vmem:[%s3580 + $0x13c] sm:$0xff]
        %v3736 = vld [vmem:[%s3580 + $0x144] sm:$0xff]
        %v3737 = vld [vmem:[%s3580 + $0x154] sm:$0xff]
        %v3738 = vld [vmem:[%s3580 + $0x15c] sm:$0xff]
        %v3739 = vld [vmem:[%s3580 + $0x16c] sm:$0xff]
        %v3740 = vld [vmem:[%s3580 + $0x174] sm:$0xff]
        %s3741 = scalar_lea.vmem [#allocation3], 96
        %v3742 = vld [vmem:[%s3741] sm:$0xff]
        %v3743 = vld [vmem:[%s3741 + $0x8] sm:$0xff]
        %v3744 = vld [vmem:[%s3741 + $0x18] sm:$0xff]
        %v3745 = vld [vmem:[%s3741 + $0x20] sm:$0xff]
        %v3746 = vld [vmem:[%s3741 + $0x30] sm:$0xff]
        %v3747 = vld [vmem:[%s3741 + $0x38] sm:$0xff]
        %v3748 = vld [vmem:[%s3741 + $0x48] sm:$0xff]
        %v3749 = vld [vmem:[%s3741 + $0x50] sm:$0xff]
        %v3750 = vld [vmem:[%s3741 + $0x60] sm:$0xff]
        %v3751 = vld [vmem:[%s3741 + $0x68] sm:$0xff]
        %v3752 = vld [vmem:[%s3741 + $0x78] sm:$0xff]
        %v3753 = vld [vmem:[%s3741 + $0x80] sm:$0xff]
        %v3754 = vld [vmem:[%s3741 + $0x90] sm:$0xff]
        %v3755 = vld [vmem:[%s3741 + $0x98] sm:$0xff]
        %v3756 = vld [vmem:[%s3741 + $0xa8] sm:$0xff]
        %v3757 = vld [vmem:[%s3741 + $0xb0] sm:$0xff]
        %v3758 = vld [vmem:[%s3741 + $0xc0] sm:$0xff]
        %v3759 = vld [vmem:[%s3741 + $0xc8] sm:$0xff]
        %v3760 = vld [vmem:[%s3741 + $0xd8] sm:$0xff]
        %v3761 = vld [vmem:[%s3741 + $0xe0] sm:$0xff]
        %v3762 = vld [vmem:[%s3741 + $0xf0] sm:$0xff]
        %v3763 = vld [vmem:[%s3741 + $0xf8] sm:$0xff]
        %v3764 = vld [vmem:[%s3741 + $0x108] sm:$0xff]
        %v3765 = vld [vmem:[%s3741 + $0x110] sm:$0xff]
        %v3766 = vld [vmem:[%s3741 + $0x120] sm:$0xff]
        %v3767 = vld [vmem:[%s3741 + $0x128] sm:$0xff]
        %v3768 = vld [vmem:[%s3741 + $0x138] sm:$0xff]
        %v3769 = vld [vmem:[%s3741 + $0x140] sm:$0xff]
        %v3770 = vld [vmem:[%s3741 + $0x150] sm:$0xff]
        %v3771 = vld [vmem:[%s3741 + $0x158] sm:$0xff]
        %v3772 = vld [vmem:[%s3741 + $0x168] sm:$0xff]
        %v3773 = vld [vmem:[%s3741 + $0x170] sm:$0xff]
        %v3774 = vld [vmem:[%s3741 + $0x1] sm:$0xff]
        %v3775 = vld [vmem:[%s3741 + $0x9] sm:$0xff]
        %v3776 = vld [vmem:[%s3741 + $0x19] sm:$0xff]
        %v3777 = vld [vmem:[%s3741 + $0x21] sm:$0xff]
        %v3778 = vld [vmem:[%s3741 + $0x31] sm:$0xff]
        %v3779 = vld [vmem:[%s3741 + $0x39] sm:$0xff]
        %v3780 = vld [vmem:[%s3741 + $0x49] sm:$0xff]
        %v3781 = vld [vmem:[%s3741 + $0x51] sm:$0xff]
        %v3782 = vld [vmem:[%s3741 + $0x61] sm:$0xff]
        %v3783 = vld [vmem:[%s3741 + $0x69] sm:$0xff]
        %v3784 = vld [vmem:[%s3741 + $0x79] sm:$0xff]
        %v3785 = vld [vmem:[%s3741 + $0x81] sm:$0xff]
        %v3786 = vld [vmem:[%s3741 + $0x91] sm:$0xff]
        %v3787 = vld [vmem:[%s3741 + $0x99] sm:$0xff]
        %v3788 = vld [vmem:[%s3741 + $0xa9] sm:$0xff]
        %v3789 = vld [vmem:[%s3741 + $0xb1] sm:$0xff]
        %v3790 = vld [vmem:[%s3741 + $0xc1] sm:$0xff]
        %v3791 = vld [vmem:[%s3741 + $0xc9] sm:$0xff]
        %v3792 = vld [vmem:[%s3741 + $0xd9] sm:$0xff]
        %v3793 = vld [vmem:[%s3741 + $0xe1] sm:$0xff]
        %v3794 = vld [vmem:[%s3741 + $0xf1] sm:$0xff]
        %v3795 = vld [vmem:[%s3741 + $0xf9] sm:$0xff]
        %v3796 = vld [vmem:[%s3741 + $0x109] sm:$0xff]
        %v3797 = vld [vmem:[%s3741 + $0x111] sm:$0xff]
        %v3798 = vld [vmem:[%s3741 + $0x121] sm:$0xff]
        %v3799 = vld [vmem:[%s3741 + $0x129] sm:$0xff]
        %v3800 = vld [vmem:[%s3741 + $0x139] sm:$0xff]
        %v3801 = vld [vmem:[%s3741 + $0x141] sm:$0xff]
        %v3802 = vld [vmem:[%s3741 + $0x151] sm:$0xff]
        %v3803 = vld [vmem:[%s3741 + $0x159] sm:$0xff]
        %v3804 = vld [vmem:[%s3741 + $0x169] sm:$0xff]
        %v3805 = vld [vmem:[%s3741 + $0x171] sm:$0xff]
        %v3806 = vld [vmem:[%s3741 + $0x2] sm:$0xff]
        %v3807 = vld [vmem:[%s3741 + $0xa] sm:$0xff]
        %v3808 = vld [vmem:[%s3741 + $0x1a] sm:$0xff]
        %v3809 = vld [vmem:[%s3741 + $0x22] sm:$0xff]
        %v3810 = vld [vmem:[%s3741 + $0x32] sm:$0xff]
        %v3811 = vld [vmem:[%s3741 + $0x3a] sm:$0xff]
        %v3812 = vld [vmem:[%s3741 + $0x4a] sm:$0xff]
        %v3813 = vld [vmem:[%s3741 + $0x52] sm:$0xff]
        %v3814 = vld [vmem:[%s3741 + $0x62] sm:$0xff]
        %v3815 = vld [vmem:[%s3741 + $0x6a] sm:$0xff]
        %v3816 = vld [vmem:[%s3741 + $0x7a] sm:$0xff]
        %v3817 = vld [vmem:[%s3741 + $0x82] sm:$0xff]
        %v3818 = vld [vmem:[%s3741 + $0x92] sm:$0xff]
        %v3819 = vld [vmem:[%s3741 + $0x9a] sm:$0xff]
        %v3820 = vld [vmem:[%s3741 + $0xaa] sm:$0xff]
        %v3821 = vld [vmem:[%s3741 + $0xb2] sm:$0xff]
        %v3822 = vld [vmem:[%s3741 + $0xc2] sm:$0xff]
        %v3823 = vld [vmem:[%s3741 + $0xca] sm:$0xff]
        %v3824 = vld [vmem:[%s3741 + $0xda] sm:$0xff]
        %v3825 = vld [vmem:[%s3741 + $0xe2] sm:$0xff]
        %v3826 = vld [vmem:[%s3741 + $0xf2] sm:$0xff]
        %v3827 = vld [vmem:[%s3741 + $0xfa] sm:$0xff]
        %v3828 = vld [vmem:[%s3741 + $0x10a] sm:$0xff]
        %v3829 = vld [vmem:[%s3741 + $0x112] sm:$0xff]
        %v3830 = vld [vmem:[%s3741 + $0x122] sm:$0xff]
        %v3831 = vld [vmem:[%s3741 + $0x12a] sm:$0xff]
        %v3832 = vld [vmem:[%s3741 + $0x13a] sm:$0xff]
        %v3833 = vld [vmem:[%s3741 + $0x142] sm:$0xff]
        %v3834 = vld [vmem:[%s3741 + $0x152] sm:$0xff]
        %v3835 = vld [vmem:[%s3741 + $0x15a] sm:$0xff]
        %v3836 = vld [vmem:[%s3741 + $0x16a] sm:$0xff]
        %v3837 = vld [vmem:[%s3741 + $0x172] sm:$0xff]
        %v3838 = vld [vmem:[%s3741 + $0x3] sm:$0xff]
        %v3839 = vld [vmem:[%s3741 + $0xb] sm:$0xff]
        %v3840 = vld [vmem:[%s3741 + $0x1b] sm:$0xff]
        %v3841 = vld [vmem:[%s3741 + $0x23] sm:$0xff]
        %v3842 = vld [vmem:[%s3741 + $0x33] sm:$0xff]
        %v3843 = vld [vmem:[%s3741 + $0x3b] sm:$0xff]
        %v3844 = vld [vmem:[%s3741 + $0x4b] sm:$0xff]
        %v3845 = vld [vmem:[%s3741 + $0x53] sm:$0xff]
        %v3846 = vld [vmem:[%s3741 + $0x63] sm:$0xff]
        %v3847 = vld [vmem:[%s3741 + $0x6b] sm:$0xff]
        %v3848 = vld [vmem:[%s3741 + $0x7b] sm:$0xff]
        %v3849 = vld [vmem:[%s3741 + $0x83] sm:$0xff]
        %v3850 = vld [vmem:[%s3741 + $0x93] sm:$0xff]
        %v3851 = vld [vmem:[%s3741 + $0x9b] sm:$0xff]
        %v3852 = vld [vmem:[%s3741 + $0xab] sm:$0xff]
        %v3853 = vld [vmem:[%s3741 + $0xb3] sm:$0xff]
        %v3854 = vld [vmem:[%s3741 + $0xc3] sm:$0xff]
        %v3855 = vld [vmem:[%s3741 + $0xcb] sm:$0xff]
        %v3856 = vld [vmem:[%s3741 + $0xdb] sm:$0xff]
        %v3857 = vld [vmem:[%s3741 + $0xe3] sm:$0xff]
        %v3858 = vld [vmem:[%s3741 + $0xf3] sm:$0xff]
        %v3859 = vld [vmem:[%s3741 + $0xfb] sm:$0xff]
        %v3860 = vld [vmem:[%s3741 + $0x10b] sm:$0xff]
        %v3861 = vld [vmem:[%s3741 + $0x113] sm:$0xff]
        %v3862 = vld [vmem:[%s3741 + $0x123] sm:$0xff]
        %v3863 = vld [vmem:[%s3741 + $0x12b] sm:$0xff]
        %v3864 = vld [vmem:[%s3741 + $0x13b] sm:$0xff]
        %v3865 = vld [vmem:[%s3741 + $0x143] sm:$0xff]
        %v3866 = vld [vmem:[%s3741 + $0x153] sm:$0xff]
        %v3867 = vld [vmem:[%s3741 + $0x15b] sm:$0xff]
        %v3868 = vld [vmem:[%s3741 + $0x16b] sm:$0xff]
        %v3869 = vld [vmem:[%s3741 + $0x173] sm:$0xff]
        %v3870 = vld [vmem:[%s3741 + $0x4] sm:$0xff]
        %v3871 = vld [vmem:[%s3741 + $0xc] sm:$0xff]
        %v3872 = vld [vmem:[%s3741 + $0x1c] sm:$0xff]
        %v3873 = vld [vmem:[%s3741 + $0x24] sm:$0xff]
        %v3874 = vld [vmem:[%s3741 + $0x34] sm:$0xff]
        %v3875 = vld [vmem:[%s3741 + $0x3c] sm:$0xff]
        %v3876 = vld [vmem:[%s3741 + $0x4c] sm:$0xff]
        %v3877 = vld [vmem:[%s3741 + $0x54] sm:$0xff]
        %v3878 = vld [vmem:[%s3741 + $0x64] sm:$0xff]
        %v3879 = vld [vmem:[%s3741 + $0x6c] sm:$0xff]
        %v3880 = vld [vmem:[%s3741 + $0x7c] sm:$0xff]
        %v3881 = vld [vmem:[%s3741 + $0x84] sm:$0xff]
        %v3882 = vld [vmem:[%s3741 + $0x94] sm:$0xff]
        %v3883 = vld [vmem:[%s3741 + $0x9c] sm:$0xff]
        %v3884 = vld [vmem:[%s3741 + $0xac] sm:$0xff]
        %v3885 = vld [vmem:[%s3741 + $0xb4] sm:$0xff]
        %v3886 = vld [vmem:[%s3741 + $0xc4] sm:$0xff]
        %v3887 = vld [vmem:[%s3741 + $0xcc] sm:$0xff]
        %v3888 = vld [vmem:[%s3741 + $0xdc] sm:$0xff]
        %v3889 = vld [vmem:[%s3741 + $0xe4] sm:$0xff]
        %v3890 = vld [vmem:[%s3741 + $0xf4] sm:$0xff]
        %v3891 = vld [vmem:[%s3741 + $0xfc] sm:$0xff]
        %v3892 = vld [vmem:[%s3741 + $0x10c] sm:$0xff]
        %v3893 = vld [vmem:[%s3741 + $0x114] sm:$0xff]
        %v3894 = vld [vmem:[%s3741 + $0x124] sm:$0xff]
        %v3895 = vld [vmem:[%s3741 + $0x12c] sm:$0xff]
        %v3896 = vld [vmem:[%s3741 + $0x13c] sm:$0xff]
        %v3897 = vld [vmem:[%s3741 + $0x144] sm:$0xff]
        %v3898 = vld [vmem:[%s3741 + $0x154] sm:$0xff]
        %v3899 = vld [vmem:[%s3741 + $0x15c] sm:$0xff]
        %v3900 = vld [vmem:[%s3741 + $0x16c] sm:$0xff]
        %v3901 = vld [vmem:[%s3741 + $0x174] sm:$0xff]
        %3934 = vrot.lane.b32.xlu0 %v3131, 4
        %v3935 = vpop.permute.xlu0 %3934
        %3936 = vrot.lane.b32.xlu0 %v3132, 4
        %v3937 = vpop.permute.xlu0 %3936
        %3938 = vrot.lane.b32.xlu0 %v3133, 4
        %v3939 = vpop.permute.xlu0 %3938
        %3940 = vrot.lane.b32.xlu0 %v3134, 4
        %v3941 = vpop.permute.xlu0 %3940
        %3942 = vrot.lane.b32.xlu0 %v3135, 4
        %v3943 = vpop.permute.xlu0 %3942
        %3944 = vrot.lane.b32.xlu0 %v3136, 4
        %v3945 = vpop.permute.xlu0 %3944
        %3946 = vrot.lane.b32.xlu0 %v3137, 4
        %v3947 = vpop.permute.xlu0 %3946
        %3948 = vrot.lane.b32.xlu0 %v3138, 4
        %v3949 = vpop.permute.xlu0 %3948
        %3950 = vrot.lane.b32.xlu0 %v3139, 4
        %v3951 = vpop.permute.xlu0 %3950
        %3952 = vrot.lane.b32.xlu0 %v3140, 4
        %v3953 = vpop.permute.xlu0 %3952
        %3954 = vrot.lane.b32.xlu0 %v3141, 4
        %v3955 = vpop.permute.xlu0 %3954
        %3956 = vrot.lane.b32.xlu0 %v3142, 4
        %v3957 = vpop.permute.xlu0 %3956
        %3958 = vrot.lane.b32.xlu0 %v3143, 4
        %v3959 = vpop.permute.xlu0 %3958
        %3960 = vrot.lane.b32.xlu0 %v3144, 4
        %v3961 = vpop.permute.xlu0 %3960
        %3962 = vrot.lane.b32.xlu0 %v3145, 4
        %v3963 = vpop.permute.xlu0 %3962
        %3964 = vrot.lane.b32.xlu0 %v3146, 4
        %v3965 = vpop.permute.xlu0 %3964
        %3966 = vrot.lane.b32.xlu0 %v3147, 4
        %v3967 = vpop.permute.xlu0 %3966
        %3968 = vrot.lane.b32.xlu0 %v3148, 4
        %v3969 = vpop.permute.xlu0 %3968
        %3970 = vrot.lane.b32.xlu0 %v3149, 4
        %v3971 = vpop.permute.xlu0 %3970
        %3972 = vrot.lane.b32.xlu0 %v3150, 4
        %v3973 = vpop.permute.xlu0 %3972
        %3974 = vrot.lane.b32.xlu0 %v3151, 4
        %v3975 = vpop.permute.xlu0 %3974
        %3976 = vrot.lane.b32.xlu0 %v3152, 4
        %v3977 = vpop.permute.xlu0 %3976
        %3978 = vrot.lane.b32.xlu0 %v3153, 4
        %v3979 = vpop.permute.xlu0 %3978
        %3980 = vrot.lane.b32.xlu0 %v3154, 4
        %v3981 = vpop.permute.xlu0 %3980
        %3982 = vrot.lane.b32.xlu0 %v3155, 4
        %v3983 = vpop.permute.xlu0 %3982
        %3984 = vrot.lane.b32.xlu0 %v3156, 4
        %v3985 = vpop.permute.xlu0 %3984
        %3986 = vrot.lane.b32.xlu0 %v3157, 4
        %v3987 = vpop.permute.xlu0 %3986
        %3988 = vrot.lane.b32.xlu0 %v3158, 4
        %v3989 = vpop.permute.xlu0 %3988
        %3990 = vrot.lane.b32.xlu0 %v3159, 4
        %v3991 = vpop.permute.xlu0 %3990
        %3992 = vrot.lane.b32.xlu0 %v3160, 4
        %v3993 = vpop.permute.xlu0 %3992
        %3994 = vrot.lane.b32.xlu0 %v3161, 4
        %v3995 = vpop.permute.xlu0 %3994
        %3996 = vrot.lane.b32.xlu0 %v3162, 4
        %v3997 = vpop.permute.xlu0 %3996
        %4062 = vrot.lane.b32.xlu0 %v3163, 8
        %v4063 = vpop.permute.xlu0 %4062
        %4064 = vrot.lane.b32.xlu0 %v3164, 8
        %v4065 = vpop.permute.xlu0 %4064
        %4066 = vrot.lane.b32.xlu0 %v3165, 8
        %v4067 = vpop.permute.xlu0 %4066
        %4068 = vrot.lane.b32.xlu0 %v3166, 8
        %v4069 = vpop.permute.xlu0 %4068
        %4070 = vrot.lane.b32.xlu0 %v3167, 8
        %v4071 = vpop.permute.xlu0 %4070
        %4072 = vrot.lane.b32.xlu0 %v3168, 8
        %v4073 = vpop.permute.xlu0 %4072
        %4074 = vrot.lane.b32.xlu0 %v3169, 8
        %v4075 = vpop.permute.xlu0 %4074
        %4076 = vrot.lane.b32.xlu0 %v3170, 8
        %v4077 = vpop.permute.xlu0 %4076
        %4078 = vrot.lane.b32.xlu0 %v3171, 8
        %v4079 = vpop.permute.xlu0 %4078
        %4080 = vrot.lane.b32.xlu0 %v3172, 8
        %v4081 = vpop.permute.xlu0 %4080
        %4082 = vrot.lane.b32.xlu0 %v3173, 8
        %v4083 = vpop.permute.xlu0 %4082
        %4084 = vrot.lane.b32.xlu0 %v3174, 8
        %v4085 = vpop.permute.xlu0 %4084
        %4086 = vrot.lane.b32.xlu0 %v3175, 8
        %v4087 = vpop.permute.xlu0 %4086
        %4088 = vrot.lane.b32.xlu0 %v3176, 8
        %v4089 = vpop.permute.xlu0 %4088
        %4090 = vrot.lane.b32.xlu0 %v3177, 8
        %v4091 = vpop.permute.xlu0 %4090
        %4092 = vrot.lane.b32.xlu0 %v3178, 8
        %v4093 = vpop.permute.xlu0 %4092
        %4094 = vrot.lane.b32.xlu0 %v3179, 8
        %v4095 = vpop.permute.xlu0 %4094
        %4096 = vrot.lane.b32.xlu0 %v3180, 8
        %v4097 = vpop.permute.xlu0 %4096
        %4098 = vrot.lane.b32.xlu0 %v3181, 8
        %v4099 = vpop.permute.xlu0 %4098
        %4100 = vrot.lane.b32.xlu0 %v3182, 8
        %v4101 = vpop.permute.xlu0 %4100
        %4102 = vrot.lane.b32.xlu0 %v3183, 8
        %v4103 = vpop.permute.xlu0 %4102
        %4104 = vrot.lane.b32.xlu0 %v3184, 8
        %v4105 = vpop.permute.xlu0 %4104
        %4106 = vrot.lane.b32.xlu0 %v3185, 8
        %v4107 = vpop.permute.xlu0 %4106
        %4108 = vrot.lane.b32.xlu0 %v3186, 8
        %v4109 = vpop.permute.xlu0 %4108
        %4110 = vrot.lane.b32.xlu0 %v3187, 8
        %v4111 = vpop.permute.xlu0 %4110
        %4112 = vrot.lane.b32.xlu0 %v3188, 8
        %v4113 = vpop.permute.xlu0 %4112
        %4114 = vrot.lane.b32.xlu0 %v3189, 8
        %v4115 = vpop.permute.xlu0 %4114
        %4116 = vrot.lane.b32.xlu0 %v3190, 8
        %v4117 = vpop.permute.xlu0 %4116
        %4118 = vrot.lane.b32.xlu0 %v3191, 8
        %v4119 = vpop.permute.xlu0 %4118
        %4120 = vrot.lane.b32.xlu0 %v3192, 8
        %v4121 = vpop.permute.xlu0 %4120
        %4122 = vrot.lane.b32.xlu0 %v3193, 8
        %v4123 = vpop.permute.xlu0 %4122
        %4124 = vrot.lane.b32.xlu0 %v3194, 8
        %v4125 = vpop.permute.xlu0 %4124
        %4190 = vrot.lane.b32.xlu0 %v3195, 12
        %v4191 = vpop.permute.xlu0 %4190
        %4192 = vrot.lane.b32.xlu0 %v3196, 12
        %v4193 = vpop.permute.xlu0 %4192
        %4194 = vrot.lane.b32.xlu0 %v3197, 12
        %v4195 = vpop.permute.xlu0 %4194
        %4196 = vrot.lane.b32.xlu0 %v3198, 12
        %v4197 = vpop.permute.xlu0 %4196
        %4198 = vrot.lane.b32.xlu0 %v3199, 12
        %v4199 = vpop.permute.xlu0 %4198
        %4200 = vrot.lane.b32.xlu0 %v3200, 12
        %v4201 = vpop.permute.xlu0 %4200
        %4202 = vrot.lane.b32.xlu0 %v3201, 12
        %v4203 = vpop.permute.xlu0 %4202
        %4204 = vrot.lane.b32.xlu0 %v3202, 12
        %v4205 = vpop.permute.xlu0 %4204
        %4206 = vrot.lane.b32.xlu0 %v3203, 12
        %v4207 = vpop.permute.xlu0 %4206
        %4208 = vrot.lane.b32.xlu0 %v3204, 12
        %v4209 = vpop.permute.xlu0 %4208
        %4210 = vrot.lane.b32.xlu0 %v3205, 12
        %v4211 = vpop.permute.xlu0 %4210
        %4212 = vrot.lane.b32.xlu0 %v3206, 12
        %v4213 = vpop.permute.xlu0 %4212
        %4214 = vrot.lane.b32.xlu0 %v3207, 12
        %v4215 = vpop.permute.xlu0 %4214
        %4216 = vrot.lane.b32.xlu0 %v3208, 12
        %v4217 = vpop.permute.xlu0 %4216
        %4218 = vrot.lane.b32.xlu0 %v3209, 12
        %v4219 = vpop.permute.xlu0 %4218
        %4220 = vrot.lane.b32.xlu0 %v3210, 12
        %v4221 = vpop.permute.xlu0 %4220
        %4222 = vrot.lane.b32.xlu0 %v3211, 12
        %v4223 = vpop.permute.xlu0 %4222
        %4224 = vrot.lane.b32.xlu0 %v3212, 12
        %v4225 = vpop.permute.xlu0 %4224
        %4226 = vrot.lane.b32.xlu0 %v3213, 12
        %v4227 = vpop.permute.xlu0 %4226
        %4228 = vrot.lane.b32.xlu0 %v3214, 12
        %v4229 = vpop.permute.xlu0 %4228
        %4230 = vrot.lane.b32.xlu0 %v3215, 12
        %v4231 = vpop.permute.xlu0 %4230
        %4232 = vrot.lane.b32.xlu0 %v3216, 12
        %v4233 = vpop.permute.xlu0 %4232
        %4234 = vrot.lane.b32.xlu0 %v3217, 12
        %v4235 = vpop.permute.xlu0 %4234
        %4236 = vrot.lane.b32.xlu0 %v3218, 12
        %v4237 = vpop.permute.xlu0 %4236
        %4238 = vrot.lane.b32.xlu0 %v3219, 12
        %v4239 = vpop.permute.xlu0 %4238
        %4240 = vrot.lane.b32.xlu0 %v3220, 12
        %v4241 = vpop.permute.xlu0 %4240
        %4242 = vrot.lane.b32.xlu0 %v3221, 12
        %v4243 = vpop.permute.xlu0 %4242
        %4244 = vrot.lane.b32.xlu0 %v3222, 12
        %v4245 = vpop.permute.xlu0 %4244
        %4246 = vrot.lane.b32.xlu0 %v3223, 12
        %v4247 = vpop.permute.xlu0 %4246
        %4248 = vrot.lane.b32.xlu0 %v3224, 12
        %v4249 = vpop.permute.xlu0 %4248
        %4250 = vrot.lane.b32.xlu0 %v3225, 12
        %v4251 = vpop.permute.xlu0 %4250
        %4252 = vrot.lane.b32.xlu0 %v3226, 12
        %v4253 = vpop.permute.xlu0 %4252
        %4318 = vrot.lane.b32.xlu0 %v3227, 16
        %v4319 = vpop.permute.xlu0 %4318
        %4320 = vrot.lane.b32.xlu0 %v3228, 16
        %v4321 = vpop.permute.xlu0 %4320
        %4322 = vrot.lane.b32.xlu0 %v3229, 16
        %v4323 = vpop.permute.xlu0 %4322
        %4324 = vrot.lane.b32.xlu0 %v3230, 16
        %v4325 = vpop.permute.xlu0 %4324
        %4326 = vrot.lane.b32.xlu0 %v3231, 16
        %v4327 = vpop.permute.xlu0 %4326
        %4328 = vrot.lane.b32.xlu0 %v3232, 16
        %v4329 = vpop.permute.xlu0 %4328
        %4330 = vrot.lane.b32.xlu0 %v3233, 16
        %v4331 = vpop.permute.xlu0 %4330
        %4332 = vrot.lane.b32.xlu0 %v3234, 16
        %v4333 = vpop.permute.xlu0 %4332
        %4334 = vrot.lane.b32.xlu0 %v3235, 16
        %v4335 = vpop.permute.xlu0 %4334
        %4336 = vrot.lane.b32.xlu0 %v3236, 16
        %v4337 = vpop.permute.xlu0 %4336
        %4338 = vrot.lane.b32.xlu0 %v3237, 16
        %v4339 = vpop.permute.xlu0 %4338
        %4340 = vrot.lane.b32.xlu0 %v3238, 16
        %v4341 = vpop.permute.xlu0 %4340
        %4342 = vrot.lane.b32.xlu0 %v3239, 16
        %v4343 = vpop.permute.xlu0 %4342
        %4344 = vrot.lane.b32.xlu0 %v3240, 16
        %v4345 = vpop.permute.xlu0 %4344
        %4346 = vrot.lane.b32.xlu0 %v3241, 16
        %v4347 = vpop.permute.xlu0 %4346
        %4348 = vrot.lane.b32.xlu0 %v3242, 16
        %v4349 = vpop.permute.xlu0 %4348
        %4350 = vrot.lane.b32.xlu0 %v3243, 16
        %v4351 = vpop.permute.xlu0 %4350
        %4352 = vrot.lane.b32.xlu0 %v3244, 16
        %v4353 = vpop.permute.xlu0 %4352
        %4354 = vrot.lane.b32.xlu0 %v3245, 16
        %v4355 = vpop.permute.xlu0 %4354
        %4356 = vrot.lane.b32.xlu0 %v3246, 16
        %v4357 = vpop.permute.xlu0 %4356
        %4358 = vrot.lane.b32.xlu0 %v3247, 16
        %v4359 = vpop.permute.xlu0 %4358
        %4360 = vrot.lane.b32.xlu0 %v3248, 16
        %v4361 = vpop.permute.xlu0 %4360
        %4362 = vrot.lane.b32.xlu0 %v3249, 16
        %v4363 = vpop.permute.xlu0 %4362
        %4364 = vrot.lane.b32.xlu0 %v3250, 16
        %v4365 = vpop.permute.xlu0 %4364
        %4366 = vrot.lane.b32.xlu0 %v3251, 16
        %v4367 = vpop.permute.xlu0 %4366
        %4368 = vrot.lane.b32.xlu0 %v3252, 16
        %v4369 = vpop.permute.xlu0 %4368
        %4370 = vrot.lane.b32.xlu0 %v3253, 16
        %v4371 = vpop.permute.xlu0 %4370
        %4372 = vrot.lane.b32.xlu0 %v3254, 16
        %v4373 = vpop.permute.xlu0 %4372
        %4374 = vrot.lane.b32.xlu0 %v3255, 16
        %v4375 = vpop.permute.xlu0 %4374
        %4376 = vrot.lane.b32.xlu0 %v3256, 16
        %v4377 = vpop.permute.xlu0 %4376
        %4378 = vrot.lane.b32.xlu0 %v3257, 16
        %v4379 = vpop.permute.xlu0 %4378
        %4380 = vrot.lane.b32.xlu0 %v3258, 16
        %v4381 = vpop.permute.xlu0 %4380
        %4446 = vrot.lane.b32.xlu0 %v3260, 20
        %v4447 = vpop.permute.xlu0 %4446
        %4448 = vrot.lane.b32.xlu0 %v3261, 20
        %v4449 = vpop.permute.xlu0 %4448
        %4450 = vrot.lane.b32.xlu0 %v3262, 20
        %v4451 = vpop.permute.xlu0 %4450
        %4452 = vrot.lane.b32.xlu0 %v3263, 20
        %v4453 = vpop.permute.xlu0 %4452
        %4454 = vrot.lane.b32.xlu0 %v3264, 20
        %v4455 = vpop.permute.xlu0 %4454
        %4456 = vrot.lane.b32.xlu0 %v3265, 20
        %v4457 = vpop.permute.xlu0 %4456
        %4458 = vrot.lane.b32.xlu0 %v3266, 20
        %v4459 = vpop.permute.xlu0 %4458
        %4460 = vrot.lane.b32.xlu0 %v3267, 20
        %v4461 = vpop.permute.xlu0 %4460
        %4462 = vrot.lane.b32.xlu0 %v3268, 20
        %v4463 = vpop.permute.xlu0 %4462
        %4464 = vrot.lane.b32.xlu0 %v3269, 20
        %v4465 = vpop.permute.xlu0 %4464
        %4466 = vrot.lane.b32.xlu0 %v3270, 20
        %v4467 = vpop.permute.xlu0 %4466
        %4468 = vrot.lane.b32.xlu0 %v3271, 20
        %v4469 = vpop.permute.xlu0 %4468
        %4470 = vrot.lane.b32.xlu0 %v3272, 20
        %v4471 = vpop.permute.xlu0 %4470
        %4472 = vrot.lane.b32.xlu0 %v3273, 20
        %v4473 = vpop.permute.xlu0 %4472
        %4474 = vrot.lane.b32.xlu0 %v3274, 20
        %v4475 = vpop.permute.xlu0 %4474
        %4476 = vrot.lane.b32.xlu0 %v3275, 20
        %v4477 = vpop.permute.xlu0 %4476
        %4478 = vrot.lane.b32.xlu0 %v3276, 20
        %v4479 = vpop.permute.xlu0 %4478
        %4480 = vrot.lane.b32.xlu0 %v3277, 20
        %v4481 = vpop.permute.xlu0 %4480
        %4482 = vrot.lane.b32.xlu0 %v3278, 20
        %v4483 = vpop.permute.xlu0 %4482
        %4484 = vrot.lane.b32.xlu0 %v3279, 20
        %v4485 = vpop.permute.xlu0 %4484
        %4486 = vrot.lane.b32.xlu0 %v3280, 20
        %v4487 = vpop.permute.xlu0 %4486
        %4488 = vrot.lane.b32.xlu0 %v3281, 20
        %v4489 = vpop.permute.xlu0 %4488
        %4490 = vrot.lane.b32.xlu0 %v3282, 20
        %v4491 = vpop.permute.xlu0 %4490
        %4492 = vrot.lane.b32.xlu0 %v3283, 20
        %v4493 = vpop.permute.xlu0 %4492
        %4494 = vrot.lane.b32.xlu0 %v3284, 20
        %v4495 = vpop.permute.xlu0 %4494
        %4496 = vrot.lane.b32.xlu0 %v3285, 20
        %v4497 = vpop.permute.xlu0 %4496
        %4498 = vrot.lane.b32.xlu0 %v3286, 20
        %v4499 = vpop.permute.xlu0 %4498
        %4500 = vrot.lane.b32.xlu0 %v3287, 20
        %v4501 = vpop.permute.xlu0 %4500
        %4502 = vrot.lane.b32.xlu0 %v3288, 20
        %v4503 = vpop.permute.xlu0 %4502
        %4504 = vrot.lane.b32.xlu0 %v3289, 20
        %v4505 = vpop.permute.xlu0 %4504
        %4506 = vrot.lane.b32.xlu0 %v3290, 20
        %v4507 = vpop.permute.xlu0 %4506
        %4508 = vrot.lane.b32.xlu0 %v3291, 20
        %v4509 = vpop.permute.xlu0 %4508
        %4574 = vrot.lane.b32.xlu0 %v3292, 24
        %v4575 = vpop.permute.xlu0 %4574
        %4576 = vrot.lane.b32.xlu0 %v3293, 24
        %v4577 = vpop.permute.xlu0 %4576
        %4578 = vrot.lane.b32.xlu0 %v3294, 24
        %v4579 = vpop.permute.xlu0 %4578
        %4580 = vrot.lane.b32.xlu0 %v3295, 24
        %v4581 = vpop.permute.xlu0 %4580
        %4582 = vrot.lane.b32.xlu0 %v3296, 24
        %v4583 = vpop.permute.xlu0 %4582
        %4584 = vrot.lane.b32.xlu0 %v3297, 24
        %v4585 = vpop.permute.xlu0 %4584
        %4586 = vrot.lane.b32.xlu0 %v3298, 24
        %v4587 = vpop.permute.xlu0 %4586
        %4588 = vrot.lane.b32.xlu0 %v3299, 24
        %v4589 = vpop.permute.xlu0 %4588
        %4590 = vrot.lane.b32.xlu0 %v3300, 24
        %v4591 = vpop.permute.xlu0 %4590
        %4592 = vrot.lane.b32.xlu0 %v3301, 24
        %v4593 = vpop.permute.xlu0 %4592
        %4594 = vrot.lane.b32.xlu0 %v3302, 24
        %v4595 = vpop.permute.xlu0 %4594
        %4596 = vrot.lane.b32.xlu0 %v3303, 24
        %v4597 = vpop.permute.xlu0 %4596
        %4598 = vrot.lane.b32.xlu0 %v3304, 24
        %v4599 = vpop.permute.xlu0 %4598
        %4600 = vrot.lane.b32.xlu0 %v3305, 24
        %v4601 = vpop.permute.xlu0 %4600
        %4602 = vrot.lane.b32.xlu0 %v3306, 24
        %v4603 = vpop.permute.xlu0 %4602
        %4604 = vrot.lane.b32.xlu0 %v3307, 24
        %v4605 = vpop.permute.xlu0 %4604
        %4606 = vrot.lane.b32.xlu0 %v3308, 24
        %v4607 = vpop.permute.xlu0 %4606
        %4608 = vrot.lane.b32.xlu0 %v3309, 24
        %v4609 = vpop.permute.xlu0 %4608
        %4610 = vrot.lane.b32.xlu0 %v3310, 24
        %v4611 = vpop.permute.xlu0 %4610
        %4612 = vrot.lane.b32.xlu0 %v3311, 24
        %v4613 = vpop.permute.xlu0 %4612
        %4614 = vrot.lane.b32.xlu0 %v3312, 24
        %v4615 = vpop.permute.xlu0 %4614
        %4616 = vrot.lane.b32.xlu0 %v3313, 24
        %v4617 = vpop.permute.xlu0 %4616
        %4618 = vrot.lane.b32.xlu0 %v3314, 24
        %v4619 = vpop.permute.xlu0 %4618
        %4620 = vrot.lane.b32.xlu0 %v3315, 24
        %v4621 = vpop.permute.xlu0 %4620
        %4622 = vrot.lane.b32.xlu0 %v3316, 24
        %v4623 = vpop.permute.xlu0 %4622
        %4624 = vrot.lane.b32.xlu0 %v3317, 24
        %v4625 = vpop.permute.xlu0 %4624
        %4626 = vrot.lane.b32.xlu0 %v3318, 24
        %v4627 = vpop.permute.xlu0 %4626
        %4628 = vrot.lane.b32.xlu0 %v3319, 24
        %v4629 = vpop.permute.xlu0 %4628
        %4630 = vrot.lane.b32.xlu0 %v3320, 24
        %v4631 = vpop.permute.xlu0 %4630
        %4632 = vrot.lane.b32.xlu0 %v3321, 24
        %v4633 = vpop.permute.xlu0 %4632
        %4634 = vrot.lane.b32.xlu0 %v3322, 24
        %v4635 = vpop.permute.xlu0 %4634
        %4636 = vrot.lane.b32.xlu0 %v3323, 24
        %v4637 = vpop.permute.xlu0 %4636
        %4702 = vrot.lane.b32.xlu0 %v3324, 28
        %v4703 = vpop.permute.xlu0 %4702
        %4704 = vrot.lane.b32.xlu0 %v3325, 28
        %v4705 = vpop.permute.xlu0 %4704
        %4706 = vrot.lane.b32.xlu0 %v3326, 28
        %v4707 = vpop.permute.xlu0 %4706
        %4708 = vrot.lane.b32.xlu0 %v3327, 28
        %v4709 = vpop.permute.xlu0 %4708
        %4710 = vrot.lane.b32.xlu0 %v3328, 28
        %v4711 = vpop.permute.xlu0 %4710
        %4712 = vrot.lane.b32.xlu0 %v3329, 28
        %v4713 = vpop.permute.xlu0 %4712
        %4714 = vrot.lane.b32.xlu0 %v3330, 28
        %v4715 = vpop.permute.xlu0 %4714
        %4716 = vrot.lane.b32.xlu0 %v3331, 28
        %v4717 = vpop.permute.xlu0 %4716
        %4718 = vrot.lane.b32.xlu0 %v3332, 28
        %v4719 = vpop.permute.xlu0 %4718
        %4720 = vrot.lane.b32.xlu0 %v3333, 28
        %v4721 = vpop.permute.xlu0 %4720
        %4722 = vrot.lane.b32.xlu0 %v3334, 28
        %v4723 = vpop.permute.xlu0 %4722
        %4724 = vrot.lane.b32.xlu0 %v3335, 28
        %v4725 = vpop.permute.xlu0 %4724
        %4726 = vrot.lane.b32.xlu0 %v3336, 28
        %v4727 = vpop.permute.xlu0 %4726
        %4728 = vrot.lane.b32.xlu0 %v3337, 28
        %v4729 = vpop.permute.xlu0 %4728
        %4730 = vrot.lane.b32.xlu0 %v3338, 28
        %v4731 = vpop.permute.xlu0 %4730
        %4732 = vrot.lane.b32.xlu0 %v3339, 28
        %v4733 = vpop.permute.xlu0 %4732
        %4734 = vrot.lane.b32.xlu0 %v3340, 28
        %v4735 = vpop.permute.xlu0 %4734
        %4736 = vrot.lane.b32.xlu0 %v3341, 28
        %v4737 = vpop.permute.xlu0 %4736
        %4738 = vrot.lane.b32.xlu0 %v3342, 28
        %v4739 = vpop.permute.xlu0 %4738
        %4740 = vrot.lane.b32.xlu0 %v3343, 28
        %v4741 = vpop.permute.xlu0 %4740
        %4742 = vrot.lane.b32.xlu0 %v3344, 28
        %v4743 = vpop.permute.xlu0 %4742
        %4744 = vrot.lane.b32.xlu0 %v3345, 28
        %v4745 = vpop.permute.xlu0 %4744
        %4746 = vrot.lane.b32.xlu0 %v3346, 28
        %v4747 = vpop.permute.xlu0 %4746
        %4748 = vrot.lane.b32.xlu0 %v3347, 28
        %v4749 = vpop.permute.xlu0 %4748
        %4750 = vrot.lane.b32.xlu0 %v3348, 28
        %v4751 = vpop.permute.xlu0 %4750
        %4752 = vrot.lane.b32.xlu0 %v3349, 28
        %v4753 = vpop.permute.xlu0 %4752
        %4754 = vrot.lane.b32.xlu0 %v3350, 28
        %v4755 = vpop.permute.xlu0 %4754
        %4756 = vrot.lane.b32.xlu0 %v3351, 28
        %v4757 = vpop.permute.xlu0 %4756
        %4758 = vrot.lane.b32.xlu0 %v3352, 28
        %v4759 = vpop.permute.xlu0 %4758
        %4760 = vrot.lane.b32.xlu0 %v3353, 28
        %v4761 = vpop.permute.xlu0 %4760
        %4762 = vrot.lane.b32.xlu0 %v3354, 28
        %v4763 = vpop.permute.xlu0 %4762
        %4764 = vrot.lane.b32.xlu0 %v3355, 28
        %v4765 = vpop.permute.xlu0 %4764
        %4830 = vrot.lane.b32.xlu0 %v3356, 32
        %v4831 = vpop.permute.xlu0 %4830
        %4832 = vrot.lane.b32.xlu0 %v3357, 32
        %v4833 = vpop.permute.xlu0 %4832
        %4834 = vrot.lane.b32.xlu0 %v3358, 32
        %v4835 = vpop.permute.xlu0 %4834
        %4836 = vrot.lane.b32.xlu0 %v3359, 32
        %v4837 = vpop.permute.xlu0 %4836
        %4838 = vrot.lane.b32.xlu0 %v3360, 32
        %v4839 = vpop.permute.xlu0 %4838
        %4840 = vrot.lane.b32.xlu0 %v3361, 32
        %v4841 = vpop.permute.xlu0 %4840
        %4842 = vrot.lane.b32.xlu0 %v3362, 32
        %v4843 = vpop.permute.xlu0 %4842
        %4844 = vrot.lane.b32.xlu0 %v3363, 32
        %v4845 = vpop.permute.xlu0 %4844
        %4846 = vrot.lane.b32.xlu0 %v3364, 32
        %v4847 = vpop.permute.xlu0 %4846
        %4848 = vrot.lane.b32.xlu0 %v3365, 32
        %v4849 = vpop.permute.xlu0 %4848
        %4850 = vrot.lane.b32.xlu0 %v3366, 32
        %v4851 = vpop.permute.xlu0 %4850
        %4852 = vrot.lane.b32.xlu0 %v3367, 32
        %v4853 = vpop.permute.xlu0 %4852
        %4854 = vrot.lane.b32.xlu0 %v3368, 32
        %v4855 = vpop.permute.xlu0 %4854
        %4856 = vrot.lane.b32.xlu0 %v3369, 32
        %v4857 = vpop.permute.xlu0 %4856
        %4858 = vrot.lane.b32.xlu0 %v3370, 32
        %v4859 = vpop.permute.xlu0 %4858
        %4860 = vrot.lane.b32.xlu0 %v3371, 32
        %v4861 = vpop.permute.xlu0 %4860
        %4862 = vrot.lane.b32.xlu0 %v3372, 32
        %v4863 = vpop.permute.xlu0 %4862
        %4864 = vrot.lane.b32.xlu0 %v3373, 32
        %v4865 = vpop.permute.xlu0 %4864
        %4866 = vrot.lane.b32.xlu0 %v3374, 32
        %v4867 = vpop.permute.xlu0 %4866
        %4868 = vrot.lane.b32.xlu0 %v3375, 32
        %v4869 = vpop.permute.xlu0 %4868
        %4870 = vrot.lane.b32.xlu0 %v3376, 32
        %v4871 = vpop.permute.xlu0 %4870
        %4872 = vrot.lane.b32.xlu0 %v3377, 32
        %v4873 = vpop.permute.xlu0 %4872
        %4874 = vrot.lane.b32.xlu0 %v3378, 32
        %v4875 = vpop.permute.xlu0 %4874
        %4876 = vrot.lane.b32.xlu0 %v3379, 32
        %v4877 = vpop.permute.xlu0 %4876
        %4878 = vrot.lane.b32.xlu0 %v3380, 32
        %v4879 = vpop.permute.xlu0 %4878
        %4880 = vrot.lane.b32.xlu0 %v3381, 32
        %v4881 = vpop.permute.xlu0 %4880
        %4882 = vrot.lane.b32.xlu0 %v3382, 32
        %v4883 = vpop.permute.xlu0 %4882
        %4884 = vrot.lane.b32.xlu0 %v3383, 32
        %v4885 = vpop.permute.xlu0 %4884
        %4886 = vrot.lane.b32.xlu0 %v3384, 32
        %v4887 = vpop.permute.xlu0 %4886
        %4888 = vrot.lane.b32.xlu0 %v3385, 32
        %v4889 = vpop.permute.xlu0 %4888
        %4890 = vrot.lane.b32.xlu0 %v3386, 32
        %v4891 = vpop.permute.xlu0 %4890
        %4892 = vrot.lane.b32.xlu0 %v3387, 32
        %v4893 = vpop.permute.xlu0 %4892
        %4958 = vrot.lane.b32.xlu0 %v3388, 36
        %v4959 = vpop.permute.xlu0 %4958
        %4960 = vrot.lane.b32.xlu0 %v3389, 36
        %v4961 = vpop.permute.xlu0 %4960
        %4962 = vrot.lane.b32.xlu0 %v3390, 36
        %v4963 = vpop.permute.xlu0 %4962
        %4964 = vrot.lane.b32.xlu0 %v3391, 36
        %v4965 = vpop.permute.xlu0 %4964
        %4966 = vrot.lane.b32.xlu0 %v3392, 36
        %v4967 = vpop.permute.xlu0 %4966
        %4968 = vrot.lane.b32.xlu0 %v3393, 36
        %v4969 = vpop.permute.xlu0 %4968
        %4970 = vrot.lane.b32.xlu0 %v3394, 36
        %v4971 = vpop.permute.xlu0 %4970
        %4972 = vrot.lane.b32.xlu0 %v3395, 36
        %v4973 = vpop.permute.xlu0 %4972
        %4974 = vrot.lane.b32.xlu0 %v3396, 36
        %v4975 = vpop.permute.xlu0 %4974
        %4976 = vrot.lane.b32.xlu0 %v3397, 36
        %v4977 = vpop.permute.xlu0 %4976
        %4978 = vrot.lane.b32.xlu0 %v3398, 36
        %v4979 = vpop.permute.xlu0 %4978
        %4980 = vrot.lane.b32.xlu0 %v3399, 36
        %v4981 = vpop.permute.xlu0 %4980
        %4982 = vrot.lane.b32.xlu0 %v3400, 36
        %v4983 = vpop.permute.xlu0 %4982
        %4984 = vrot.lane.b32.xlu0 %v3401, 36
        %v4985 = vpop.permute.xlu0 %4984
        %4986 = vrot.lane.b32.xlu0 %v3402, 36
        %v4987 = vpop.permute.xlu0 %4986
        %4988 = vrot.lane.b32.xlu0 %v3403, 36
        %v4989 = vpop.permute.xlu0 %4988
        %4990 = vrot.lane.b32.xlu0 %v3404, 36
        %v4991 = vpop.permute.xlu0 %4990
        %4992 = vrot.lane.b32.xlu0 %v3405, 36
        %v4993 = vpop.permute.xlu0 %4992
        %4994 = vrot.lane.b32.xlu0 %v3406, 36
        %v4995 = vpop.permute.xlu0 %4994
        %4996 = vrot.lane.b32.xlu0 %v3407, 36
        %v4997 = vpop.permute.xlu0 %4996
        %4998 = vrot.lane.b32.xlu0 %v3408, 36
        %v4999 = vpop.permute.xlu0 %4998
        %5000 = vrot.lane.b32.xlu0 %v3409, 36
        %v5001 = vpop.permute.xlu0 %5000
        %5002 = vrot.lane.b32.xlu0 %v3410, 36
        %v5003 = vpop.permute.xlu0 %5002
        %5004 = vrot.lane.b32.xlu0 %v3411, 36
        %v5005 = vpop.permute.xlu0 %5004
        %5006 = vrot.lane.b32.xlu0 %v3412, 36
        %v5007 = vpop.permute.xlu0 %5006
        %5008 = vrot.lane.b32.xlu0 %v3413, 36
        %v5009 = vpop.permute.xlu0 %5008
        %5010 = vrot.lane.b32.xlu0 %v3414, 36
        %v5011 = vpop.permute.xlu0 %5010
        %5012 = vrot.lane.b32.xlu0 %v3415, 36
        %v5013 = vpop.permute.xlu0 %5012
        %5014 = vrot.lane.b32.xlu0 %v3416, 36
        %v5015 = vpop.permute.xlu0 %5014
        %5016 = vrot.lane.b32.xlu0 %v3417, 36
        %v5017 = vpop.permute.xlu0 %5016
        %5018 = vrot.lane.b32.xlu0 %v3418, 36
        %v5019 = vpop.permute.xlu0 %5018
        %5020 = vrot.lane.b32.xlu0 %v3419, 36
        %v5021 = vpop.permute.xlu0 %5020
        %5086 = vrot.lane.b32.xlu0 %v3420, 40
        %v5087 = vpop.permute.xlu0 %5086
        %5088 = vrot.lane.b32.xlu0 %v3421, 40
        %v5089 = vpop.permute.xlu0 %5088
        %5090 = vrot.lane.b32.xlu0 %v3422, 40
        %v5091 = vpop.permute.xlu0 %5090
        %5092 = vrot.lane.b32.xlu0 %v3423, 40
        %v5093 = vpop.permute.xlu0 %5092
        %5094 = vrot.lane.b32.xlu0 %v3424, 40
        %v5095 = vpop.permute.xlu0 %5094
        %5096 = vrot.lane.b32.xlu0 %v3425, 40
        %v5097 = vpop.permute.xlu0 %5096
        %5098 = vrot.lane.b32.xlu0 %v3426, 40
        %v5099 = vpop.permute.xlu0 %5098
        %5100 = vrot.lane.b32.xlu0 %v3427, 40
        %v5101 = vpop.permute.xlu0 %5100
        %5102 = vrot.lane.b32.xlu0 %v3428, 40
        %v5103 = vpop.permute.xlu0 %5102
        %5104 = vrot.lane.b32.xlu0 %v3429, 40
        %v5105 = vpop.permute.xlu0 %5104
        %5106 = vrot.lane.b32.xlu0 %v3430, 40
        %v5107 = vpop.permute.xlu0 %5106
        %5108 = vrot.lane.b32.xlu0 %v3431, 40
        %v5109 = vpop.permute.xlu0 %5108
        %5110 = vrot.lane.b32.xlu0 %v3432, 40
        %v5111 = vpop.permute.xlu0 %5110
        %5112 = vrot.lane.b32.xlu0 %v3433, 40
        %v5113 = vpop.permute.xlu0 %5112
        %5114 = vrot.lane.b32.xlu0 %v3434, 40
        %v5115 = vpop.permute.xlu0 %5114
        %5116 = vrot.lane.b32.xlu0 %v3435, 40
        %v5117 = vpop.permute.xlu0 %5116
        %5118 = vrot.lane.b32.xlu0 %v3436, 40
        %v5119 = vpop.permute.xlu0 %5118
        %5120 = vrot.lane.b32.xlu0 %v3437, 40
        %v5121 = vpop.permute.xlu0 %5120
        %5122 = vrot.lane.b32.xlu0 %v3438, 40
        %v5123 = vpop.permute.xlu0 %5122
        %5124 = vrot.lane.b32.xlu0 %v3439, 40
        %v5125 = vpop.permute.xlu0 %5124
        %5126 = vrot.lane.b32.xlu0 %v3440, 40
        %v5127 = vpop.permute.xlu0 %5126
        %5128 = vrot.lane.b32.xlu0 %v3441, 40
        %v5129 = vpop.permute.xlu0 %5128
        %5130 = vrot.lane.b32.xlu0 %v3442, 40
        %v5131 = vpop.permute.xlu0 %5130
        %5132 = vrot.lane.b32.xlu0 %v3443, 40
        %v5133 = vpop.permute.xlu0 %5132
        %5134 = vrot.lane.b32.xlu0 %v3444, 40
        %v5135 = vpop.permute.xlu0 %5134
        %5136 = vrot.lane.b32.xlu0 %v3445, 40
        %v5137 = vpop.permute.xlu0 %5136
        %5138 = vrot.lane.b32.xlu0 %v3446, 40
        %v5139 = vpop.permute.xlu0 %5138
        %5140 = vrot.lane.b32.xlu0 %v3447, 40
        %v5141 = vpop.permute.xlu0 %5140
        %5142 = vrot.lane.b32.xlu0 %v3448, 40
        %v5143 = vpop.permute.xlu0 %5142
        %5144 = vrot.lane.b32.xlu0 %v3449, 40
        %v5145 = vpop.permute.xlu0 %5144
        %5146 = vrot.lane.b32.xlu0 %v3450, 40
        %v5147 = vpop.permute.xlu0 %5146
        %5148 = vrot.lane.b32.xlu0 %v3451, 40
        %v5149 = vpop.permute.xlu0 %5148
        %5214 = vrot.lane.b32.xlu0 %v3452, 44
        %v5215 = vpop.permute.xlu0 %5214
        %5216 = vrot.lane.b32.xlu0 %v3453, 44
        %v5217 = vpop.permute.xlu0 %5216
        %5218 = vrot.lane.b32.xlu0 %v3454, 44
        %v5219 = vpop.permute.xlu0 %5218
        %5220 = vrot.lane.b32.xlu0 %v3455, 44
        %v5221 = vpop.permute.xlu0 %5220
        %5222 = vrot.lane.b32.xlu0 %v3456, 44
        %v5223 = vpop.permute.xlu0 %5222
        %5224 = vrot.lane.b32.xlu0 %v3457, 44
        %v5225 = vpop.permute.xlu0 %5224
        %5226 = vrot.lane.b32.xlu0 %v3458, 44
        %v5227 = vpop.permute.xlu0 %5226
        %5228 = vrot.lane.b32.xlu0 %v3459, 44
        %v5229 = vpop.permute.xlu0 %5228
        %5230 = vrot.lane.b32.xlu0 %v3460, 44
        %v5231 = vpop.permute.xlu0 %5230
        %5232 = vrot.lane.b32.xlu0 %v3461, 44
        %v5233 = vpop.permute.xlu0 %5232
        %5234 = vrot.lane.b32.xlu0 %v3462, 44
        %v5235 = vpop.permute.xlu0 %5234
        %5236 = vrot.lane.b32.xlu0 %v3463, 44
        %v5237 = vpop.permute.xlu0 %5236
        %5238 = vrot.lane.b32.xlu0 %v3464, 44
        %v5239 = vpop.permute.xlu0 %5238
        %5240 = vrot.lane.b32.xlu0 %v3465, 44
        %v5241 = vpop.permute.xlu0 %5240
        %5242 = vrot.lane.b32.xlu0 %v3466, 44
        %v5243 = vpop.permute.xlu0 %5242
        %5244 = vrot.lane.b32.xlu0 %v3467, 44
        %v5245 = vpop.permute.xlu0 %5244
        %5246 = vrot.lane.b32.xlu0 %v3468, 44
        %v5247 = vpop.permute.xlu0 %5246
        %5248 = vrot.lane.b32.xlu0 %v3469, 44
        %v5249 = vpop.permute.xlu0 %5248
        %5250 = vrot.lane.b32.xlu0 %v3470, 44
        %v5251 = vpop.permute.xlu0 %5250
        %5252 = vrot.lane.b32.xlu0 %v3471, 44
        %v5253 = vpop.permute.xlu0 %5252
        %5254 = vrot.lane.b32.xlu0 %v3472, 44
        %v5255 = vpop.permute.xlu0 %5254
        %5256 = vrot.lane.b32.xlu0 %v3473, 44
        %v5257 = vpop.permute.xlu0 %5256
        %5258 = vrot.lane.b32.xlu0 %v3474, 44
        %v5259 = vpop.permute.xlu0 %5258
        %5260 = vrot.lane.b32.xlu0 %v3475, 44
        %v5261 = vpop.permute.xlu0 %5260
        %5262 = vrot.lane.b32.xlu0 %v3476, 44
        %v5263 = vpop.permute.xlu0 %5262
        %5264 = vrot.lane.b32.xlu0 %v3477, 44
        %v5265 = vpop.permute.xlu0 %5264
        %5266 = vrot.lane.b32.xlu0 %v3478, 44
        %v5267 = vpop.permute.xlu0 %5266
        %5268 = vrot.lane.b32.xlu0 %v3479, 44
        %v5269 = vpop.permute.xlu0 %5268
        %5270 = vrot.lane.b32.xlu0 %v3480, 44
        %v5271 = vpop.permute.xlu0 %5270
        %5272 = vrot.lane.b32.xlu0 %v3481, 44
        %v5273 = vpop.permute.xlu0 %5272
        %5274 = vrot.lane.b32.xlu0 %v3482, 44
        %v5275 = vpop.permute.xlu0 %5274
        %5276 = vrot.lane.b32.xlu0 %v3483, 44
        %v5277 = vpop.permute.xlu0 %5276
        %5342 = vrot.lane.b32.xlu0 %v3484, 48
        %v5343 = vpop.permute.xlu0 %5342
        %5344 = vrot.lane.b32.xlu0 %v3485, 48
        %v5345 = vpop.permute.xlu0 %5344
        %5346 = vrot.lane.b32.xlu0 %v3486, 48
        %v5347 = vpop.permute.xlu0 %5346
        %5348 = vrot.lane.b32.xlu0 %v3487, 48
        %v5349 = vpop.permute.xlu0 %5348
        %5350 = vrot.lane.b32.xlu0 %v3488, 48
        %v5351 = vpop.permute.xlu0 %5350
        %5352 = vrot.lane.b32.xlu0 %v3489, 48
        %v5353 = vpop.permute.xlu0 %5352
        %5354 = vrot.lane.b32.xlu0 %v3490, 48
        %v5355 = vpop.permute.xlu0 %5354
        %5356 = vrot.lane.b32.xlu0 %v3491, 48
        %v5357 = vpop.permute.xlu0 %5356
        %5358 = vrot.lane.b32.xlu0 %v3492, 48
        %v5359 = vpop.permute.xlu0 %5358
        %5360 = vrot.lane.b32.xlu0 %v3493, 48
        %v5361 = vpop.permute.xlu0 %5360
        %5362 = vrot.lane.b32.xlu0 %v3494, 48
        %v5363 = vpop.permute.xlu0 %5362
        %5364 = vrot.lane.b32.xlu0 %v3495, 48
        %v5365 = vpop.permute.xlu0 %5364
        %5366 = vrot.lane.b32.xlu0 %v3496, 48
        %v5367 = vpop.permute.xlu0 %5366
        %5368 = vrot.lane.b32.xlu0 %v3497, 48
        %v5369 = vpop.permute.xlu0 %5368
        %5370 = vrot.lane.b32.xlu0 %v3498, 48
        %v5371 = vpop.permute.xlu0 %5370
        %5372 = vrot.lane.b32.xlu0 %v3499, 48
        %v5373 = vpop.permute.xlu0 %5372
        %5374 = vrot.lane.b32.xlu0 %v3500, 48
        %v5375 = vpop.permute.xlu0 %5374
        %5376 = vrot.lane.b32.xlu0 %v3501, 48
        %v5377 = vpop.permute.xlu0 %5376
        %5378 = vrot.lane.b32.xlu0 %v3502, 48
        %v5379 = vpop.permute.xlu0 %5378
        %5380 = vrot.lane.b32.xlu0 %v3503, 48
        %v5381 = vpop.permute.xlu0 %5380
        %5382 = vrot.lane.b32.xlu0 %v3504, 48
        %v5383 = vpop.permute.xlu0 %5382
        %5384 = vrot.lane.b32.xlu0 %v3505, 48
        %v5385 = vpop.permute.xlu0 %5384
        %5386 = vrot.lane.b32.xlu0 %v3506, 48
        %v5387 = vpop.permute.xlu0 %5386
        %5388 = vrot.lane.b32.xlu0 %v3507, 48
        %v5389 = vpop.permute.xlu0 %5388
        %5390 = vrot.lane.b32.xlu0 %v3508, 48
        %v5391 = vpop.permute.xlu0 %5390
        %5392 = vrot.lane.b32.xlu0 %v3509, 48
        %v5393 = vpop.permute.xlu0 %5392
        %5394 = vrot.lane.b32.xlu0 %v3510, 48
        %v5395 = vpop.permute.xlu0 %5394
        %5396 = vrot.lane.b32.xlu0 %v3511, 48
        %v5397 = vpop.permute.xlu0 %5396
        %5398 = vrot.lane.b32.xlu0 %v3512, 48
        %v5399 = vpop.permute.xlu0 %5398
        %5400 = vrot.lane.b32.xlu0 %v3513, 48
        %v5401 = vpop.permute.xlu0 %5400
        %5402 = vrot.lane.b32.xlu0 %v3514, 48
        %v5403 = vpop.permute.xlu0 %5402
        %5404 = vrot.lane.b32.xlu0 %v3515, 48
        %v5405 = vpop.permute.xlu0 %5404
        %5470 = vrot.lane.b32.xlu0 %v3516, 52
        %v5471 = vpop.permute.xlu0 %5470
        %5472 = vrot.lane.b32.xlu0 %v3517, 52
        %v5473 = vpop.permute.xlu0 %5472
        %5474 = vrot.lane.b32.xlu0 %v3518, 52
        %v5475 = vpop.permute.xlu0 %5474
        %5476 = vrot.lane.b32.xlu0 %v3519, 52
        %v5477 = vpop.permute.xlu0 %5476
        %5478 = vrot.lane.b32.xlu0 %v3520, 52
        %v5479 = vpop.permute.xlu0 %5478
        %5480 = vrot.lane.b32.xlu0 %v3521, 52
        %v5481 = vpop.permute.xlu0 %5480
        %5482 = vrot.lane.b32.xlu0 %v3522, 52
        %v5483 = vpop.permute.xlu0 %5482
        %5484 = vrot.lane.b32.xlu0 %v3523, 52
        %v5485 = vpop.permute.xlu0 %5484
        %5486 = vrot.lane.b32.xlu0 %v3524, 52
        %v5487 = vpop.permute.xlu0 %5486
        %5488 = vrot.lane.b32.xlu0 %v3525, 52
        %v5489 = vpop.permute.xlu0 %5488
        %5490 = vrot.lane.b32.xlu0 %v3526, 52
        %v5491 = vpop.permute.xlu0 %5490
        %5492 = vrot.lane.b32.xlu0 %v3527, 52
        %v5493 = vpop.permute.xlu0 %5492
        %5494 = vrot.lane.b32.xlu0 %v3528, 52
        %v5495 = vpop.permute.xlu0 %5494
        %5496 = vrot.lane.b32.xlu0 %v3529, 52
        %v5497 = vpop.permute.xlu0 %5496
        %5498 = vrot.lane.b32.xlu0 %v3530, 52
        %v5499 = vpop.permute.xlu0 %5498
        %5500 = vrot.lane.b32.xlu0 %v3531, 52
        %v5501 = vpop.permute.xlu0 %5500
        %5502 = vrot.lane.b32.xlu0 %v3532, 52
        %v5503 = vpop.permute.xlu0 %5502
        %5504 = vrot.lane.b32.xlu0 %v3533, 52
        %v5505 = vpop.permute.xlu0 %5504
        %5506 = vrot.lane.b32.xlu0 %v3534, 52
        %v5507 = vpop.permute.xlu0 %5506
        %5508 = vrot.lane.b32.xlu0 %v3535, 52
        %v5509 = vpop.permute.xlu0 %5508
        %5510 = vrot.lane.b32.xlu0 %v3536, 52
        %v5511 = vpop.permute.xlu0 %5510
        %5512 = vrot.lane.b32.xlu0 %v3537, 52
        %v5513 = vpop.permute.xlu0 %5512
        %5514 = vrot.lane.b32.xlu0 %v3538, 52
        %v5515 = vpop.permute.xlu0 %5514
        %5516 = vrot.lane.b32.xlu0 %v3539, 52
        %v5517 = vpop.permute.xlu0 %5516
        %5518 = vrot.lane.b32.xlu0 %v3540, 52
        %v5519 = vpop.permute.xlu0 %5518
        %5520 = vrot.lane.b32.xlu0 %v3541, 52
        %v5521 = vpop.permute.xlu0 %5520
        %5522 = vrot.lane.b32.xlu0 %v3542, 52
        %v5523 = vpop.permute.xlu0 %5522
        %5524 = vrot.lane.b32.xlu0 %v3543, 52
        %v5525 = vpop.permute.xlu0 %5524
        %5526 = vrot.lane.b32.xlu0 %v3544, 52
        %v5527 = vpop.permute.xlu0 %5526
        %5528 = vrot.lane.b32.xlu0 %v3545, 52
        %v5529 = vpop.permute.xlu0 %5528
        %5530 = vrot.lane.b32.xlu0 %v3546, 52
        %v5531 = vpop.permute.xlu0 %5530
        %5532 = vrot.lane.b32.xlu0 %v3547, 52
        %v5533 = vpop.permute.xlu0 %5532
        %5598 = vrot.lane.b32.xlu0 %v3548, 56
        %v5599 = vpop.permute.xlu0 %5598
        %5600 = vrot.lane.b32.xlu0 %v3549, 56
        %v5601 = vpop.permute.xlu0 %5600
        %5602 = vrot.lane.b32.xlu0 %v3550, 56
        %v5603 = vpop.permute.xlu0 %5602
        %5604 = vrot.lane.b32.xlu0 %v3551, 56
        %v5605 = vpop.permute.xlu0 %5604
        %5606 = vrot.lane.b32.xlu0 %v3552, 56
        %v5607 = vpop.permute.xlu0 %5606
        %5608 = vrot.lane.b32.xlu0 %v3553, 56
        %v5609 = vpop.permute.xlu0 %5608
        %5610 = vrot.lane.b32.xlu0 %v3554, 56
        %v5611 = vpop.permute.xlu0 %5610
        %5612 = vrot.lane.b32.xlu0 %v3555, 56
        %v5613 = vpop.permute.xlu0 %5612
        %5614 = vrot.lane.b32.xlu0 %v3556, 56
        %v5615 = vpop.permute.xlu0 %5614
        %5616 = vrot.lane.b32.xlu0 %v3557, 56
        %v5617 = vpop.permute.xlu0 %5616
        %5618 = vrot.lane.b32.xlu0 %v3558, 56
        %v5619 = vpop.permute.xlu0 %5618
        %5620 = vrot.lane.b32.xlu0 %v3559, 56
        %v5621 = vpop.permute.xlu0 %5620
        %5622 = vrot.lane.b32.xlu0 %v3560, 56
        %v5623 = vpop.permute.xlu0 %5622
        %5624 = vrot.lane.b32.xlu0 %v3561, 56
        %v5625 = vpop.permute.xlu0 %5624
        %5626 = vrot.lane.b32.xlu0 %v3562, 56
        %v5627 = vpop.permute.xlu0 %5626
        %5628 = vrot.lane.b32.xlu0 %v3563, 56
        %v5629 = vpop.permute.xlu0 %5628
        %5630 = vrot.lane.b32.xlu0 %v3564, 56
        %v5631 = vpop.permute.xlu0 %5630
        %5632 = vrot.lane.b32.xlu0 %v3565, 56
        %v5633 = vpop.permute.xlu0 %5632
        %5634 = vrot.lane.b32.xlu0 %v3566, 56
        %v5635 = vpop.permute.xlu0 %5634
        %5636 = vrot.lane.b32.xlu0 %v3567, 56
        %v5637 = vpop.permute.xlu0 %5636
        %5638 = vrot.lane.b32.xlu0 %v3568, 56
        %v5639 = vpop.permute.xlu0 %5638
        %5640 = vrot.lane.b32.xlu0 %v3569, 56
        %v5641 = vpop.permute.xlu0 %5640
        %5642 = vrot.lane.b32.xlu0 %v3570, 56
        %v5643 = vpop.permute.xlu0 %5642
        %5644 = vrot.lane.b32.xlu0 %v3571, 56
        %v5645 = vpop.permute.xlu0 %5644
        %5646 = vrot.lane.b32.xlu0 %v3572, 56
        %v5647 = vpop.permute.xlu0 %5646
        %5648 = vrot.lane.b32.xlu0 %v3573, 56
        %v5649 = vpop.permute.xlu0 %5648
        %5650 = vrot.lane.b32.xlu0 %v3574, 56
        %v5651 = vpop.permute.xlu0 %5650
        %5652 = vrot.lane.b32.xlu0 %v3575, 56
        %v5653 = vpop.permute.xlu0 %5652
        %5654 = vrot.lane.b32.xlu0 %v3576, 56
        %v5655 = vpop.permute.xlu0 %5654
        %5656 = vrot.lane.b32.xlu0 %v3577, 56
        %v5657 = vpop.permute.xlu0 %5656
        %5658 = vrot.lane.b32.xlu0 %v3578, 56
        %v5659 = vpop.permute.xlu0 %5658
        %5660 = vrot.lane.b32.xlu0 %v3579, 56
        %v5661 = vpop.permute.xlu0 %5660
        %5726 = vrot.lane.b32.xlu0 %v3581, 60
        %v5727 = vpop.permute.xlu0 %5726
        %5728 = vrot.lane.b32.xlu0 %v3582, 60
        %v5729 = vpop.permute.xlu0 %5728
        %5730 = vrot.lane.b32.xlu0 %v3583, 60
        %v5731 = vpop.permute.xlu0 %5730
        %5732 = vrot.lane.b32.xlu0 %v3584, 60
        %v5733 = vpop.permute.xlu0 %5732
        %5734 = vrot.lane.b32.xlu0 %v3585, 60
        %v5735 = vpop.permute.xlu0 %5734
        %5736 = vrot.lane.b32.xlu0 %v3586, 60
        %v5737 = vpop.permute.xlu0 %5736
        %5738 = vrot.lane.b32.xlu0 %v3587, 60
        %v5739 = vpop.permute.xlu0 %5738
        %5740 = vrot.lane.b32.xlu0 %v3588, 60
        %v5741 = vpop.permute.xlu0 %5740
        %5742 = vrot.lane.b32.xlu0 %v3589, 60
        %v5743 = vpop.permute.xlu0 %5742
        %5744 = vrot.lane.b32.xlu0 %v3590, 60
        %v5745 = vpop.permute.xlu0 %5744
        %5746 = vrot.lane.b32.xlu0 %v3591, 60
        %v5747 = vpop.permute.xlu0 %5746
        %5748 = vrot.lane.b32.xlu0 %v3592, 60
        %v5749 = vpop.permute.xlu0 %5748
        %5750 = vrot.lane.b32.xlu0 %v3593, 60
        %v5751 = vpop.permute.xlu0 %5750
        %5752 = vrot.lane.b32.xlu0 %v3594, 60
        %v5753 = vpop.permute.xlu0 %5752
        %5754 = vrot.lane.b32.xlu0 %v3595, 60
        %v5755 = vpop.permute.xlu0 %5754
        %5756 = vrot.lane.b32.xlu0 %v3596, 60
        %v5757 = vpop.permute.xlu0 %5756
        %5758 = vrot.lane.b32.xlu0 %v3597, 60
        %v5759 = vpop.permute.xlu0 %5758
        %5760 = vrot.lane.b32.xlu0 %v3598, 60
        %v5761 = vpop.permute.xlu0 %5760
        %5762 = vrot.lane.b32.xlu0 %v3599, 60
        %v5763 = vpop.permute.xlu0 %5762
        %5764 = vrot.lane.b32.xlu0 %v3600, 60
        %v5765 = vpop.permute.xlu0 %5764
        %5766 = vrot.lane.b32.xlu0 %v3601, 60
        %v5767 = vpop.permute.xlu0 %5766
        %5768 = vrot.lane.b32.xlu0 %v3602, 60
        %v5769 = vpop.permute.xlu0 %5768
        %5770 = vrot.lane.b32.xlu0 %v3603, 60
        %v5771 = vpop.permute.xlu0 %5770
        %5772 = vrot.lane.b32.xlu0 %v3604, 60
        %v5773 = vpop.permute.xlu0 %5772
        %5774 = vrot.lane.b32.xlu0 %v3605, 60
        %v5775 = vpop.permute.xlu0 %5774
        %5776 = vrot.lane.b32.xlu0 %v3606, 60
        %v5777 = vpop.permute.xlu0 %5776
        %5778 = vrot.lane.b32.xlu0 %v3607, 60
        %v5779 = vpop.permute.xlu0 %5778
        %5780 = vrot.lane.b32.xlu0 %v3608, 60
        %v5781 = vpop.permute.xlu0 %5780
        %5782 = vrot.lane.b32.xlu0 %v3609, 60
        %v5783 = vpop.permute.xlu0 %5782
        %5784 = vrot.lane.b32.xlu0 %v3610, 60
        %v5785 = vpop.permute.xlu0 %5784
        %5786 = vrot.lane.b32.xlu0 %v3611, 60
        %v5787 = vpop.permute.xlu0 %5786
        %5788 = vrot.lane.b32.xlu0 %v3612, 60
        %v5789 = vpop.permute.xlu0 %5788
        %v5822 = vsel %vm388, %v3099, %v3935
        %v5823 = vsel %vm388, %v3100, %v3937
        %v5824 = vsel %vm388, %v3101, %v3939
        %v5825 = vsel %vm388, %v3102, %v3941
        %v5826 = vsel %vm388, %v3103, %v3943
        %v5827 = vsel %vm388, %v3104, %v3945
        %v5828 = vsel %vm388, %v3105, %v3947
        %v5829 = vsel %vm388, %v3106, %v3949
        %v5830 = vsel %vm388, %v3107, %v3951
        %v5831 = vsel %vm388, %v3108, %v3953
        %v5832 = vsel %vm388, %v3109, %v3955
        %v5833 = vsel %vm388, %v3110, %v3957
        %v5834 = vsel %vm388, %v3111, %v3959
        %v5835 = vsel %vm388, %v3112, %v3961
        %v5836 = vsel %vm388, %v3113, %v3963
        %v5837 = vsel %vm388, %v3114, %v3965
        %v5838 = vsel %vm388, %v3115, %v3967
        %v5839 = vsel %vm388, %v3116, %v3969
        %v5840 = vsel %vm388, %v3117, %v3971
        %v5841 = vsel %vm388, %v3118, %v3973
        %v5842 = vsel %vm388, %v3119, %v3975
        %v5843 = vsel %vm388, %v3120, %v3977
        %v5844 = vsel %vm388, %v3121, %v3979
        %v5845 = vsel %vm388, %v3122, %v3981
        %v5846 = vsel %vm388, %v3123, %v3983
        %v5847 = vsel %vm388, %v3124, %v3985
        %v5848 = vsel %vm388, %v3125, %v3987
        %v5849 = vsel %vm388, %v3126, %v3989
        %v5850 = vsel %vm388, %v3127, %v3991
        %v5851 = vsel %vm388, %v3128, %v3993
        %v5852 = vsel %vm388, %v3129, %v3995
        %v5853 = vsel %vm388, %v3130, %v3997
        %v5854 = vsel %vm2293, %v5822, %v4063
        %v5855 = vsel %vm2293, %v5823, %v4065
        %v5856 = vsel %vm2293, %v5824, %v4067
        %v5857 = vsel %vm2293, %v5825, %v4069
        %v5858 = vsel %vm2293, %v5826, %v4071
        %v5859 = vsel %vm2293, %v5827, %v4073
        %v5860 = vsel %vm2293, %v5828, %v4075
        %v5861 = vsel %vm2293, %v5829, %v4077
        %v5862 = vsel %vm2293, %v5830, %v4079
        %v5863 = vsel %vm2293, %v5831, %v4081
        %v5864 = vsel %vm2293, %v5832, %v4083
        %v5865 = vsel %vm2293, %v5833, %v4085
        %v5866 = vsel %vm2293, %v5834, %v4087
        %v5867 = vsel %vm2293, %v5835, %v4089
        %v5868 = vsel %vm2293, %v5836, %v4091
        %v5869 = vsel %vm2293, %v5837, %v4093
        %v5870 = vsel %vm2293, %v5838, %v4095
        %v5871 = vsel %vm2293, %v5839, %v4097
        %v5872 = vsel %vm2293, %v5840, %v4099
        %v5873 = vsel %vm2293, %v5841, %v4101
        %v5874 = vsel %vm2293, %v5842, %v4103
        %v5875 = vsel %vm2293, %v5843, %v4105
        %v5876 = vsel %vm2293, %v5844, %v4107
        %v5877 = vsel %vm2293, %v5845, %v4109
        %v5878 = vsel %vm2293, %v5846, %v4111
        %v5879 = vsel %vm2293, %v5847, %v4113
        %v5880 = vsel %vm2293, %v5848, %v4115
        %v5881 = vsel %vm2293, %v5849, %v4117
        %v5882 = vsel %vm2293, %v5850, %v4119
        %v5883 = vsel %vm2293, %v5851, %v4121
        %v5884 = vsel %vm2293, %v5852, %v4123
        %v5885 = vsel %vm2293, %v5853, %v4125
        %v5886 = vsel %vm2326, %v5854, %v4191
        %v5887 = vsel %vm2326, %v5855, %v4193
        %v5888 = vsel %vm2326, %v5856, %v4195
        %v5889 = vsel %vm2326, %v5857, %v4197
        %v5890 = vsel %vm2326, %v5858, %v4199
        %v5891 = vsel %vm2326, %v5859, %v4201
        %v5892 = vsel %vm2326, %v5860, %v4203
        %v5893 = vsel %vm2326, %v5861, %v4205
        %v5894 = vsel %vm2326, %v5862, %v4207
        %v5895 = vsel %vm2326, %v5863, %v4209
        %v5896 = vsel %vm2326, %v5864, %v4211
        %v5897 = vsel %vm2326, %v5865, %v4213
        %v5898 = vsel %vm2326, %v5866, %v4215
        %v5899 = vsel %vm2326, %v5867, %v4217
        %v5900 = vsel %vm2326, %v5868, %v4219
        %v5901 = vsel %vm2326, %v5869, %v4221
        %v5902 = vsel %vm2326, %v5870, %v4223
        %v5903 = vsel %vm2326, %v5871, %v4225
        %v5904 = vsel %vm2326, %v5872, %v4227
        %v5905 = vsel %vm2326, %v5873, %v4229
        %v5906 = vsel %vm2326, %v5874, %v4231
        %v5907 = vsel %vm2326, %v5875, %v4233
        %v5908 = vsel %vm2326, %v5876, %v4235
        %v5909 = vsel %vm2326, %v5877, %v4237
        %v5910 = vsel %vm2326, %v5878, %v4239
        %v5911 = vsel %vm2326, %v5879, %v4241
        %v5912 = vsel %vm2326, %v5880, %v4243
        %v5913 = vsel %vm2326, %v5881, %v4245
        %v5914 = vsel %vm2326, %v5882, %v4247
        %v5915 = vsel %vm2326, %v5883, %v4249
        %v5916 = vsel %vm2326, %v5884, %v4251
        %v5917 = vsel %vm2326, %v5885, %v4253
        %v5918 = vsel %vm2359, %v5886, %v4319
        %v5919 = vsel %vm2359, %v5887, %v4321
        %v5920 = vsel %vm2359, %v5888, %v4323
        %v5921 = vsel %vm2359, %v5889, %v4325
        %v5922 = vsel %vm2359, %v5890, %v4327
        %v5923 = vsel %vm2359, %v5891, %v4329
        %v5924 = vsel %vm2359, %v5892, %v4331
        %v5925 = vsel %vm2359, %v5893, %v4333
        %v5926 = vsel %vm2359, %v5894, %v4335
        %v5927 = vsel %vm2359, %v5895, %v4337
        %v5928 = vsel %vm2359, %v5896, %v4339
        %v5929 = vsel %vm2359, %v5897, %v4341
        %v5930 = vsel %vm2359, %v5898, %v4343
        %v5931 = vsel %vm2359, %v5899, %v4345
        %v5932 = vsel %vm2359, %v5900, %v4347
        %v5933 = vsel %vm2359, %v5901, %v4349
        %v5934 = vsel %vm2359, %v5902, %v4351
        %v5935 = vsel %vm2359, %v5903, %v4353
        %v5936 = vsel %vm2359, %v5904, %v4355
        %v5937 = vsel %vm2359, %v5905, %v4357
        %v5938 = vsel %vm2359, %v5906, %v4359
        %v5939 = vsel %vm2359, %v5907, %v4361
        %v5940 = vsel %vm2359, %v5908, %v4363
        %v5941 = vsel %vm2359, %v5909, %v4365
        %v5942 = vsel %vm2359, %v5910, %v4367
        %v5943 = vsel %vm2359, %v5911, %v4369
        %v5944 = vsel %vm2359, %v5912, %v4371
        %v5945 = vsel %vm2359, %v5913, %v4373
        %v5946 = vsel %vm2359, %v5914, %v4375
        %v5947 = vsel %vm2359, %v5915, %v4377
        %v5948 = vsel %vm2359, %v5916, %v4379
        %v5949 = vsel %vm2359, %v5917, %v4381
        %v5950 = vsel %vm2392, %v5918, %v4447
        %v5951 = vsel %vm2392, %v5919, %v4449
        %v5952 = vsel %vm2392, %v5920, %v4451
        %v5953 = vsel %vm2392, %v5921, %v4453
        %v5954 = vsel %vm2392, %v5922, %v4455
        %v5955 = vsel %vm2392, %v5923, %v4457
        %v5956 = vsel %vm2392, %v5924, %v4459
        %v5957 = vsel %vm2392, %v5925, %v4461
        %v5958 = vsel %vm2392, %v5926, %v4463
        %v5959 = vsel %vm2392, %v5927, %v4465
        %v5960 = vsel %vm2392, %v5928, %v4467
        %v5961 = vsel %vm2392, %v5929, %v4469
        %v5962 = vsel %vm2392, %v5930, %v4471
        %v5963 = vsel %vm2392, %v5931, %v4473
        %v5964 = vsel %vm2392, %v5932, %v4475
        %v5965 = vsel %vm2392, %v5933, %v4477
        %v5966 = vsel %vm2392, %v5934, %v4479
        %v5967 = vsel %vm2392, %v5935, %v4481
        %v5968 = vsel %vm2392, %v5936, %v4483
        %v5969 = vsel %vm2392, %v5937, %v4485
        %v5970 = vsel %vm2392, %v5938, %v4487
        %v5971 = vsel %vm2392, %v5939, %v4489
        %v5972 = vsel %vm2392, %v5940, %v4491
        %v5973 = vsel %vm2392, %v5941, %v4493
        %v5974 = vsel %vm2392, %v5942, %v4495
        %v5975 = vsel %vm2392, %v5943, %v4497
        %v5976 = vsel %vm2392, %v5944, %v4499
        %v5977 = vsel %vm2392, %v5945, %v4501
        %v5978 = vsel %vm2392, %v5946, %v4503
        %v5979 = vsel %vm2392, %v5947, %v4505
        %v5980 = vsel %vm2392, %v5948, %v4507
        %v5981 = vsel %vm2392, %v5949, %v4509
        %v5982 = vsel %vm2425, %v5950, %v4575
        %v5983 = vsel %vm2425, %v5951, %v4577
        %v5984 = vsel %vm2425, %v5952, %v4579
        %v5985 = vsel %vm2425, %v5953, %v4581
        %v5986 = vsel %vm2425, %v5954, %v4583
        %v5987 = vsel %vm2425, %v5955, %v4585
        %v5988 = vsel %vm2425, %v5956, %v4587
        %v5989 = vsel %vm2425, %v5957, %v4589
        %v5990 = vsel %vm2425, %v5958, %v4591
        %v5991 = vsel %vm2425, %v5959, %v4593
        %v5992 = vsel %vm2425, %v5960, %v4595
        %v5993 = vsel %vm2425, %v5961, %v4597
        %v5994 = vsel %vm2425, %v5962, %v4599
        %v5995 = vsel %vm2425, %v5963, %v4601
        %v5996 = vsel %vm2425, %v5964, %v4603
        %v5997 = vsel %vm2425, %v5965, %v4605
        %v5998 = vsel %vm2425, %v5966, %v4607
        %v5999 = vsel %vm2425, %v5967, %v4609
        %v6000 = vsel %vm2425, %v5968, %v4611
        %v6001 = vsel %vm2425, %v5969, %v4613
        %v6002 = vsel %vm2425, %v5970, %v4615
        %v6003 = vsel %vm2425, %v5971, %v4617
        %v6004 = vsel %vm2425, %v5972, %v4619
        %v6005 = vsel %vm2425, %v5973, %v4621
        %v6006 = vsel %vm2425, %v5974, %v4623
        %v6007 = vsel %vm2425, %v5975, %v4625
        %v6008 = vsel %vm2425, %v5976, %v4627
        %v6009 = vsel %vm2425, %v5977, %v4629
        %v6010 = vsel %vm2425, %v5978, %v4631
        %v6011 = vsel %vm2425, %v5979, %v4633
        %v6012 = vsel %vm2425, %v5980, %v4635
        %v6013 = vsel %vm2425, %v5981, %v4637
        %v6014 = vsel %vm2458, %v5982, %v4703
        %v6015 = vsel %vm2458, %v5983, %v4705
        %v6016 = vsel %vm2458, %v5984, %v4707
        %v6017 = vsel %vm2458, %v5985, %v4709
        %v6018 = vsel %vm2458, %v5986, %v4711
        %v6019 = vsel %vm2458, %v5987, %v4713
        %v6020 = vsel %vm2458, %v5988, %v4715
        %v6021 = vsel %vm2458, %v5989, %v4717
        %v6022 = vsel %vm2458, %v5990, %v4719
        %v6023 = vsel %vm2458, %v5991, %v4721
        %v6024 = vsel %vm2458, %v5992, %v4723
        %v6025 = vsel %vm2458, %v5993, %v4725
        %v6026 = vsel %vm2458, %v5994, %v4727
        %v6027 = vsel %vm2458, %v5995, %v4729
        %v6028 = vsel %vm2458, %v5996, %v4731
        %v6029 = vsel %vm2458, %v5997, %v4733
        %v6030 = vsel %vm2458, %v5998, %v4735
        %v6031 = vsel %vm2458, %v5999, %v4737
        %v6032 = vsel %vm2458, %v6000, %v4739
        %v6033 = vsel %vm2458, %v6001, %v4741
        %v6034 = vsel %vm2458, %v6002, %v4743
        %v6035 = vsel %vm2458, %v6003, %v4745
        %v6036 = vsel %vm2458, %v6004, %v4747
        %v6037 = vsel %vm2458, %v6005, %v4749
        %v6038 = vsel %vm2458, %v6006, %v4751
        %v6039 = vsel %vm2458, %v6007, %v4753
        %v6040 = vsel %vm2458, %v6008, %v4755
        %v6041 = vsel %vm2458, %v6009, %v4757
        %v6042 = vsel %vm2458, %v6010, %v4759
        %v6043 = vsel %vm2458, %v6011, %v4761
        %v6044 = vsel %vm2458, %v6012, %v4763
        %v6045 = vsel %vm2458, %v6013, %v4765
        %v6046 = vsel %vm2491, %v6014, %v4831
        %v6047 = vsel %vm2491, %v6015, %v4833
        %v6048 = vsel %vm2491, %v6016, %v4835
        %v6049 = vsel %vm2491, %v6017, %v4837
        %v6050 = vsel %vm2491, %v6018, %v4839
        %v6051 = vsel %vm2491, %v6019, %v4841
        %v6052 = vsel %vm2491, %v6020, %v4843
        %v6053 = vsel %vm2491, %v6021, %v4845
        %v6054 = vsel %vm2491, %v6022, %v4847
        %v6055 = vsel %vm2491, %v6023, %v4849
        %v6056 = vsel %vm2491, %v6024, %v4851
        %v6057 = vsel %vm2491, %v6025, %v4853
        %v6058 = vsel %vm2491, %v6026, %v4855
        %v6059 = vsel %vm2491, %v6027, %v4857
        %v6060 = vsel %vm2491, %v6028, %v4859
        %v6061 = vsel %vm2491, %v6029, %v4861
        %v6062 = vsel %vm2491, %v6030, %v4863
        %v6063 = vsel %vm2491, %v6031, %v4865
        %v6064 = vsel %vm2491, %v6032, %v4867
        %v6065 = vsel %vm2491, %v6033, %v4869
        %v6066 = vsel %vm2491, %v6034, %v4871
        %v6067 = vsel %vm2491, %v6035, %v4873
        %v6068 = vsel %vm2491, %v6036, %v4875
        %v6069 = vsel %vm2491, %v6037, %v4877
        %v6070 = vsel %vm2491, %v6038, %v4879
        %v6071 = vsel %vm2491, %v6039, %v4881
        %v6072 = vsel %vm2491, %v6040, %v4883
        %v6073 = vsel %vm2491, %v6041, %v4885
        %v6074 = vsel %vm2491, %v6042, %v4887
        %v6075 = vsel %vm2491, %v6043, %v4889
        %v6076 = vsel %vm2491, %v6044, %v4891
        %v6077 = vsel %vm2491, %v6045, %v4893
        %v6078 = vsel %vm2567, %v6046, %v4959
        %v6079 = vsel %vm2567, %v6047, %v4961
        %v6080 = vsel %vm2567, %v6048, %v4963
        %v6081 = vsel %vm2567, %v6049, %v4965
        %v6082 = vsel %vm2567, %v6050, %v4967
        %v6083 = vsel %vm2567, %v6051, %v4969
        %v6084 = vsel %vm2567, %v6052, %v4971
        %v6085 = vsel %vm2567, %v6053, %v4973
        %v6086 = vsel %vm2567, %v6054, %v4975
        %v6087 = vsel %vm2567, %v6055, %v4977
        %v6088 = vsel %vm2567, %v6056, %v4979
        %v6089 = vsel %vm2567, %v6057, %v4981
        %v6090 = vsel %vm2567, %v6058, %v4983
        %v6091 = vsel %vm2567, %v6059, %v4985
        %v6092 = vsel %vm2567, %v6060, %v4987
        %v6093 = vsel %vm2567, %v6061, %v4989
        %v6094 = vsel %vm2567, %v6062, %v4991
        %v6095 = vsel %vm2567, %v6063, %v4993
        %v6096 = vsel %vm2567, %v6064, %v4995
        %v6097 = vsel %vm2567, %v6065, %v4997
        %v6098 = vsel %vm2567, %v6066, %v4999
        %v6099 = vsel %vm2567, %v6067, %v5001
        %v6100 = vsel %vm2567, %v6068, %v5003
        %v6101 = vsel %vm2567, %v6069, %v5005
        %v6102 = vsel %vm2567, %v6070, %v5007
        %v6103 = vsel %vm2567, %v6071, %v5009
        %v6104 = vsel %vm2567, %v6072, %v5011
        %v6105 = vsel %vm2567, %v6073, %v5013
        %v6106 = vsel %vm2567, %v6074, %v5015
        %v6107 = vsel %vm2567, %v6075, %v5017
        %v6108 = vsel %vm2567, %v6076, %v5019
        %v6109 = vsel %vm2567, %v6077, %v5021
        %vm6110 = vcmask 326656
        %v6111 = vsel %vm6110, %v6078, %v5087
        %v6112 = vsel %vm6110, %v6079, %v5089
        %v6113 = vsel %vm6110, %v6080, %v5091
        %v6114 = vsel %vm6110, %v6081, %v5093
        %v6115 = vsel %vm6110, %v6082, %v5095
        %v6116 = vsel %vm6110, %v6083, %v5097
        %v6117 = vsel %vm6110, %v6084, %v5099
        %v6118 = vsel %vm6110, %v6085, %v5101
        %v6119 = vsel %vm6110, %v6086, %v5103
        %v6120 = vsel %vm6110, %v6087, %v5105
        %v6121 = vsel %vm6110, %v6088, %v5107
        %v6122 = vsel %vm6110, %v6089, %v5109
        %v6123 = vsel %vm6110, %v6090, %v5111
        %v6124 = vsel %vm6110, %v6091, %v5113
        %v6125 = vsel %vm6110, %v6092, %v5115
        %v6126 = vsel %vm6110, %v6093, %v5117
        %v6127 = vsel %vm6110, %v6094, %v5119
        %v6128 = vsel %vm6110, %v6095, %v5121
        %v6129 = vsel %vm6110, %v6096, %v5123
        %v6130 = vsel %vm6110, %v6097, %v5125
        %v6131 = vsel %vm6110, %v6098, %v5127
        %v6132 = vsel %vm6110, %v6099, %v5129
        %v6133 = vsel %vm6110, %v6100, %v5131
        %v6134 = vsel %vm6110, %v6101, %v5133
        %v6135 = vsel %vm6110, %v6102, %v5135
        %v6136 = vsel %vm6110, %v6103, %v5137
        %v6137 = vsel %vm6110, %v6104, %v5139
        %v6138 = vsel %vm6110, %v6105, %v5141
        %v6139 = vsel %vm6110, %v6106, %v5143
        %v6140 = vsel %vm6110, %v6107, %v5145
        %v6141 = vsel %vm6110, %v6108, %v5147
        %v6142 = vsel %vm6110, %v6109, %v5149
        %vm6143 = vcmask 359424
        %v6144 = vsel %vm6143, %v6111, %v5215
        %v6145 = vsel %vm6143, %v6112, %v5217
        %v6146 = vsel %vm6143, %v6113, %v5219
        %v6147 = vsel %vm6143, %v6114, %v5221
        %v6148 = vsel %vm6143, %v6115, %v5223
        %v6149 = vsel %vm6143, %v6116, %v5225
        %v6150 = vsel %vm6143, %v6117, %v5227
        %v6151 = vsel %vm6143, %v6118, %v5229
        %v6152 = vsel %vm6143, %v6119, %v5231
        %v6153 = vsel %vm6143, %v6120, %v5233
        %v6154 = vsel %vm6143, %v6121, %v5235
        %v6155 = vsel %vm6143, %v6122, %v5237
        %v6156 = vsel %vm6143, %v6123, %v5239
        %v6157 = vsel %vm6143, %v6124, %v5241
        %v6158 = vsel %vm6143, %v6125, %v5243
        %v6159 = vsel %vm6143, %v6126, %v5245
        %v6160 = vsel %vm6143, %v6127, %v5247
        %v6161 = vsel %vm6143, %v6128, %v5249
        %v6162 = vsel %vm6143, %v6129, %v5251
        %v6163 = vsel %vm6143, %v6130, %v5253
        %v6164 = vsel %vm6143, %v6131, %v5255
        %v6165 = vsel %vm6143, %v6132, %v5257
        %v6166 = vsel %vm6143, %v6133, %v5259
        %v6167 = vsel %vm6143, %v6134, %v5261
        %v6168 = vsel %vm6143, %v6135, %v5263
        %v6169 = vsel %vm6143, %v6136, %v5265
        %v6170 = vsel %vm6143, %v6137, %v5267
        %v6171 = vsel %vm6143, %v6138, %v5269
        %v6172 = vsel %vm6143, %v6139, %v5271
        %v6173 = vsel %vm6143, %v6140, %v5273
        %v6174 = vsel %vm6143, %v6141, %v5275
        %v6175 = vsel %vm6143, %v6142, %v5277
        %vm6176 = vcmask 392192
        %v6177 = vsel %vm6176, %v6144, %v5343
        %v6178 = vsel %vm6176, %v6145, %v5345
        %v6179 = vsel %vm6176, %v6146, %v5347
        %v6180 = vsel %vm6176, %v6147, %v5349
        %v6181 = vsel %vm6176, %v6148, %v5351
        %v6182 = vsel %vm6176, %v6149, %v5353
        %v6183 = vsel %vm6176, %v6150, %v5355
        %v6184 = vsel %vm6176, %v6151, %v5357
        %v6185 = vsel %vm6176, %v6152, %v5359
        %v6186 = vsel %vm6176, %v6153, %v5361
        %v6187 = vsel %vm6176, %v6154, %v5363
        %v6188 = vsel %vm6176, %v6155, %v5365
        %v6189 = vsel %vm6176, %v6156, %v5367
        %v6190 = vsel %vm6176, %v6157, %v5369
        %v6191 = vsel %vm6176, %v6158, %v5371
        %v6192 = vsel %vm6176, %v6159, %v5373
        %v6193 = vsel %vm6176, %v6160, %v5375
        %v6194 = vsel %vm6176, %v6161, %v5377
        %v6195 = vsel %vm6176, %v6162, %v5379
        %v6196 = vsel %vm6176, %v6163, %v5381
        %v6197 = vsel %vm6176, %v6164, %v5383
        %v6198 = vsel %vm6176, %v6165, %v5385
        %v6199 = vsel %vm6176, %v6166, %v5387
        %v6200 = vsel %vm6176, %v6167, %v5389
        %v6201 = vsel %vm6176, %v6168, %v5391
        %v6202 = vsel %vm6176, %v6169, %v5393
        %v6203 = vsel %vm6176, %v6170, %v5395
        %v6204 = vsel %vm6176, %v6171, %v5397
        %v6205 = vsel %vm6176, %v6172, %v5399
        %v6206 = vsel %vm6176, %v6173, %v5401
        %v6207 = vsel %vm6176, %v6174, %v5403
        %v6208 = vsel %vm6176, %v6175, %v5405
        %vm6209 = vcmask 424960
        %v6210 = vsel %vm6209, %v6177, %v5471
        %v6211 = vsel %vm6209, %v6178, %v5473
        %v6212 = vsel %vm6209, %v6179, %v5475
        %v6213 = vsel %vm6209, %v6180, %v5477
        %v6214 = vsel %vm6209, %v6181, %v5479
        %v6215 = vsel %vm6209, %v6182, %v5481
        %v6216 = vsel %vm6209, %v6183, %v5483
        %v6217 = vsel %vm6209, %v6184, %v5485
        %v6218 = vsel %vm6209, %v6185, %v5487
        %v6219 = vsel %vm6209, %v6186, %v5489
        %v6220 = vsel %vm6209, %v6187, %v5491
        %v6221 = vsel %vm6209, %v6188, %v5493
        %v6222 = vsel %vm6209, %v6189, %v5495
        %v6223 = vsel %vm6209, %v6190, %v5497
        %v6224 = vsel %vm6209, %v6191, %v5499
        %v6225 = vsel %vm6209, %v6192, %v5501
        %v6226 = vsel %vm6209, %v6193, %v5503
        %v6227 = vsel %vm6209, %v6194, %v5505
        %v6228 = vsel %vm6209, %v6195, %v5507
        %v6229 = vsel %vm6209, %v6196, %v5509
        %v6230 = vsel %vm6209, %v6197, %v5511
        %v6231 = vsel %vm6209, %v6198, %v5513
        %v6232 = vsel %vm6209, %v6199, %v5515
        %v6233 = vsel %vm6209, %v6200, %v5517
        %v6234 = vsel %vm6209, %v6201, %v5519
        %v6235 = vsel %vm6209, %v6202, %v5521
        %v6236 = vsel %vm6209, %v6203, %v5523
        %v6237 = vsel %vm6209, %v6204, %v5525
        %v6238 = vsel %vm6209, %v6205, %v5527
        %v6239 = vsel %vm6209, %v6206, %v5529
        %v6240 = vsel %vm6209, %v6207, %v5531
        %v6241 = vsel %vm6209, %v6208, %v5533
        %vm6242 = vcmask 457728
        %v6243 = vsel %vm6242, %v6210, %v5599
        %v6244 = vsel %vm6242, %v6211, %v5601
        %v6245 = vsel %vm6242, %v6212, %v5603
        %v6246 = vsel %vm6242, %v6213, %v5605
        %v6247 = vsel %vm6242, %v6214, %v5607
        %v6248 = vsel %vm6242, %v6215, %v5609
        %v6249 = vsel %vm6242, %v6216, %v5611
        %v6250 = vsel %vm6242, %v6217, %v5613
        %v6251 = vsel %vm6242, %v6218, %v5615
        %v6252 = vsel %vm6242, %v6219, %v5617
        %v6253 = vsel %vm6242, %v6220, %v5619
        %v6254 = vsel %vm6242, %v6221, %v5621
        %v6255 = vsel %vm6242, %v6222, %v5623
        %v6256 = vsel %vm6242, %v6223, %v5625
        %v6257 = vsel %vm6242, %v6224, %v5627
        %v6258 = vsel %vm6242, %v6225, %v5629
        %v6259 = vsel %vm6242, %v6226, %v5631
        %v6260 = vsel %vm6242, %v6227, %v5633
        %v6261 = vsel %vm6242, %v6228, %v5635
        %v6262 = vsel %vm6242, %v6229, %v5637
        %v6263 = vsel %vm6242, %v6230, %v5639
        %v6264 = vsel %vm6242, %v6231, %v5641
        %v6265 = vsel %vm6242, %v6232, %v5643
        %v6266 = vsel %vm6242, %v6233, %v5645
        %v6267 = vsel %vm6242, %v6234, %v5647
        %v6268 = vsel %vm6242, %v6235, %v5649
        %v6269 = vsel %vm6242, %v6236, %v5651
        %v6270 = vsel %vm6242, %v6237, %v5653
        %v6271 = vsel %vm6242, %v6238, %v5655
        %v6272 = vsel %vm6242, %v6239, %v5657
        %v6273 = vsel %vm6242, %v6240, %v5659
        %v6274 = vsel %vm6242, %v6241, %v5661
        %vm6275 = vcmask 490496
        %v6276 = vsel %vm6275, %v6243, %v5727
        %v6277 = vsel %vm6275, %v6244, %v5729
        %v6278 = vsel %vm6275, %v6245, %v5731
        %v6279 = vsel %vm6275, %v6246, %v5733
        %v6280 = vsel %vm6275, %v6247, %v5735
        %v6281 = vsel %vm6275, %v6248, %v5737
        %v6282 = vsel %vm6275, %v6249, %v5739
        %v6283 = vsel %vm6275, %v6250, %v5741
        %v6284 = vsel %vm6275, %v6251, %v5743
        %v6285 = vsel %vm6275, %v6252, %v5745
        %v6286 = vsel %vm6275, %v6253, %v5747
        %v6287 = vsel %vm6275, %v6254, %v5749
        %v6288 = vsel %vm6275, %v6255, %v5751
        %v6289 = vsel %vm6275, %v6256, %v5753
        %v6290 = vsel %vm6275, %v6257, %v5755
        %v6291 = vsel %vm6275, %v6258, %v5757
        %v6292 = vsel %vm6275, %v6259, %v5759
        %v6293 = vsel %vm6275, %v6260, %v5761
        %v6294 = vsel %vm6275, %v6261, %v5763
        %v6295 = vsel %vm6275, %v6262, %v5765
        %v6296 = vsel %vm6275, %v6263, %v5767
        %v6297 = vsel %vm6275, %v6264, %v5769
        %v6298 = vsel %vm6275, %v6265, %v5771
        %v6299 = vsel %vm6275, %v6266, %v5773
        %v6300 = vsel %vm6275, %v6267, %v5775
        %v6301 = vsel %vm6275, %v6268, %v5777
        %v6302 = vsel %vm6275, %v6269, %v5779
        %v6303 = vsel %vm6275, %v6270, %v5781
        %v6304 = vsel %vm6275, %v6271, %v5783
        %v6305 = vsel %vm6275, %v6272, %v5785
        %v6306 = vsel %vm6275, %v6273, %v5787
        %v6307 = vsel %vm6275, %v6274, %v5789
        %6340 = vrot.lane.b32.xlu0 %v3645, 4
        %v6341 = vpop.permute.xlu0 %6340
        %6342 = vrot.lane.b32.xlu0 %v3646, 4
        %v6343 = vpop.permute.xlu0 %6342
        %6344 = vrot.lane.b32.xlu0 %v3647, 4
        %v6345 = vpop.permute.xlu0 %6344
        %6346 = vrot.lane.b32.xlu0 %v3648, 4
        %v6347 = vpop.permute.xlu0 %6346
        %6348 = vrot.lane.b32.xlu0 %v3649, 4
        %v6349 = vpop.permute.xlu0 %6348
        %6350 = vrot.lane.b32.xlu0 %v3650, 4
        %v6351 = vpop.permute.xlu0 %6350
        %6352 = vrot.lane.b32.xlu0 %v3651, 4
        %v6353 = vpop.permute.xlu0 %6352
        %6354 = vrot.lane.b32.xlu0 %v3652, 4
        %v6355 = vpop.permute.xlu0 %6354
        %6356 = vrot.lane.b32.xlu0 %v3653, 4
        %v6357 = vpop.permute.xlu0 %6356
        %6358 = vrot.lane.b32.xlu0 %v3654, 4
        %v6359 = vpop.permute.xlu0 %6358
        %6360 = vrot.lane.b32.xlu0 %v3655, 4
        %v6361 = vpop.permute.xlu0 %6360
        %6362 = vrot.lane.b32.xlu0 %v3656, 4
        %v6363 = vpop.permute.xlu0 %6362
        %6364 = vrot.lane.b32.xlu0 %v3657, 4
        %v6365 = vpop.permute.xlu0 %6364
        %6366 = vrot.lane.b32.xlu0 %v3658, 4
        %v6367 = vpop.permute.xlu0 %6366
        %6368 = vrot.lane.b32.xlu0 %v3659, 4
        %v6369 = vpop.permute.xlu0 %6368
        %6370 = vrot.lane.b32.xlu0 %v3660, 4
        %v6371 = vpop.permute.xlu0 %6370
        %6372 = vrot.lane.b32.xlu0 %v3661, 4
        %v6373 = vpop.permute.xlu0 %6372
        %6374 = vrot.lane.b32.xlu0 %v3662, 4
        %v6375 = vpop.permute.xlu0 %6374
        %6376 = vrot.lane.b32.xlu0 %v3663, 4
        %v6377 = vpop.permute.xlu0 %6376
        %6378 = vrot.lane.b32.xlu0 %v3664, 4
        %v6379 = vpop.permute.xlu0 %6378
        %6380 = vrot.lane.b32.xlu0 %v3665, 4
        %v6381 = vpop.permute.xlu0 %6380
        %6382 = vrot.lane.b32.xlu0 %v3666, 4
        %v6383 = vpop.permute.xlu0 %6382
        %6384 = vrot.lane.b32.xlu0 %v3667, 4
        %v6385 = vpop.permute.xlu0 %6384
        %6386 = vrot.lane.b32.xlu0 %v3668, 4
        %v6387 = vpop.permute.xlu0 %6386
        %6388 = vrot.lane.b32.xlu0 %v3669, 4
        %v6389 = vpop.permute.xlu0 %6388
        %6390 = vrot.lane.b32.xlu0 %v3670, 4
        %v6391 = vpop.permute.xlu0 %6390
        %6392 = vrot.lane.b32.xlu0 %v3671, 4
        %v6393 = vpop.permute.xlu0 %6392
        %6394 = vrot.lane.b32.xlu0 %v3672, 4
        %v6395 = vpop.permute.xlu0 %6394
        %6396 = vrot.lane.b32.xlu0 %v3673, 4
        %v6397 = vpop.permute.xlu0 %6396
        %6398 = vrot.lane.b32.xlu0 %v3674, 4
        %v6399 = vpop.permute.xlu0 %6398
        %6400 = vrot.lane.b32.xlu0 %v3675, 4
        %v6401 = vpop.permute.xlu0 %6400
        %6402 = vrot.lane.b32.xlu0 %v3676, 4
        %v6403 = vpop.permute.xlu0 %6402
        %6468 = vrot.lane.b32.xlu0 %v3677, 8
        %v6469 = vpop.permute.xlu0 %6468
        %6470 = vrot.lane.b32.xlu0 %v3678, 8
        %v6471 = vpop.permute.xlu0 %6470
        %6472 = vrot.lane.b32.xlu0 %v3679, 8
        %v6473 = vpop.permute.xlu0 %6472
        %6474 = vrot.lane.b32.xlu0 %v3680, 8
        %v6475 = vpop.permute.xlu0 %6474
        %6476 = vrot.lane.b32.xlu0 %v3681, 8
        %v6477 = vpop.permute.xlu0 %6476
        %6478 = vrot.lane.b32.xlu0 %v3682, 8
        %v6479 = vpop.permute.xlu0 %6478
        %6480 = vrot.lane.b32.xlu0 %v3683, 8
        %v6481 = vpop.permute.xlu0 %6480
        %6482 = vrot.lane.b32.xlu0 %v3684, 8
        %v6483 = vpop.permute.xlu0 %6482
        %6484 = vrot.lane.b32.xlu0 %v3685, 8
        %v6485 = vpop.permute.xlu0 %6484
        %6486 = vrot.lane.b32.xlu0 %v3686, 8
        %v6487 = vpop.permute.xlu0 %6486
        %6488 = vrot.lane.b32.xlu0 %v3687, 8
        %v6489 = vpop.permute.xlu0 %6488
        %6490 = vrot.lane.b32.xlu0 %v3688, 8
        %v6491 = vpop.permute.xlu0 %6490
        %6492 = vrot.lane.b32.xlu0 %v3689, 8
        %v6493 = vpop.permute.xlu0 %6492
        %6494 = vrot.lane.b32.xlu0 %v3690, 8
        %v6495 = vpop.permute.xlu0 %6494
        %6496 = vrot.lane.b32.xlu0 %v3691, 8
        %v6497 = vpop.permute.xlu0 %6496
        %6498 = vrot.lane.b32.xlu0 %v3692, 8
        %v6499 = vpop.permute.xlu0 %6498
        %6500 = vrot.lane.b32.xlu0 %v3693, 8
        %v6501 = vpop.permute.xlu0 %6500
        %6502 = vrot.lane.b32.xlu0 %v3694, 8
        %v6503 = vpop.permute.xlu0 %6502
        %6504 = vrot.lane.b32.xlu0 %v3695, 8
        %v6505 = vpop.permute.xlu0 %6504
        %6506 = vrot.lane.b32.xlu0 %v3696, 8
        %v6507 = vpop.permute.xlu0 %6506
        %6508 = vrot.lane.b32.xlu0 %v3697, 8
        %v6509 = vpop.permute.xlu0 %6508
        %6510 = vrot.lane.b32.xlu0 %v3698, 8
        %v6511 = vpop.permute.xlu0 %6510
        %6512 = vrot.lane.b32.xlu0 %v3699, 8
        %v6513 = vpop.permute.xlu0 %6512
        %6514 = vrot.lane.b32.xlu0 %v3700, 8
        %v6515 = vpop.permute.xlu0 %6514
        %6516 = vrot.lane.b32.xlu0 %v3701, 8
        %v6517 = vpop.permute.xlu0 %6516
        %6518 = vrot.lane.b32.xlu0 %v3702, 8
        %v6519 = vpop.permute.xlu0 %6518
        %6520 = vrot.lane.b32.xlu0 %v3703, 8
        %v6521 = vpop.permute.xlu0 %6520
        %6522 = vrot.lane.b32.xlu0 %v3704, 8
        %v6523 = vpop.permute.xlu0 %6522
        %6524 = vrot.lane.b32.xlu0 %v3705, 8
        %v6525 = vpop.permute.xlu0 %6524
        %6526 = vrot.lane.b32.xlu0 %v3706, 8
        %v6527 = vpop.permute.xlu0 %6526
        %6528 = vrot.lane.b32.xlu0 %v3707, 8
        %v6529 = vpop.permute.xlu0 %6528
        %6530 = vrot.lane.b32.xlu0 %v3708, 8
        %v6531 = vpop.permute.xlu0 %6530
        %6596 = vrot.lane.b32.xlu0 %v3709, 12
        %v6597 = vpop.permute.xlu0 %6596
        %6598 = vrot.lane.b32.xlu0 %v3710, 12
        %v6599 = vpop.permute.xlu0 %6598
        %6600 = vrot.lane.b32.xlu0 %v3711, 12
        %v6601 = vpop.permute.xlu0 %6600
        %6602 = vrot.lane.b32.xlu0 %v3712, 12
        %v6603 = vpop.permute.xlu0 %6602
        %6604 = vrot.lane.b32.xlu0 %v3713, 12
        %v6605 = vpop.permute.xlu0 %6604
        %6606 = vrot.lane.b32.xlu0 %v3714, 12
        %v6607 = vpop.permute.xlu0 %6606
        %6608 = vrot.lane.b32.xlu0 %v3715, 12
        %v6609 = vpop.permute.xlu0 %6608
        %6610 = vrot.lane.b32.xlu0 %v3716, 12
        %v6611 = vpop.permute.xlu0 %6610
        %6612 = vrot.lane.b32.xlu0 %v3717, 12
        %v6613 = vpop.permute.xlu0 %6612
        %6614 = vrot.lane.b32.xlu0 %v3718, 12
        %v6615 = vpop.permute.xlu0 %6614
        %6616 = vrot.lane.b32.xlu0 %v3719, 12
        %v6617 = vpop.permute.xlu0 %6616
        %6618 = vrot.lane.b32.xlu0 %v3720, 12
        %v6619 = vpop.permute.xlu0 %6618
        %6620 = vrot.lane.b32.xlu0 %v3721, 12
        %v6621 = vpop.permute.xlu0 %6620
        %6622 = vrot.lane.b32.xlu0 %v3722, 12
        %v6623 = vpop.permute.xlu0 %6622
        %6624 = vrot.lane.b32.xlu0 %v3723, 12
        %v6625 = vpop.permute.xlu0 %6624
        %6626 = vrot.lane.b32.xlu0 %v3724, 12
        %v6627 = vpop.permute.xlu0 %6626
        %6628 = vrot.lane.b32.xlu0 %v3725, 12
        %v6629 = vpop.permute.xlu0 %6628
        %6630 = vrot.lane.b32.xlu0 %v3726, 12
        %v6631 = vpop.permute.xlu0 %6630
        %6632 = vrot.lane.b32.xlu0 %v3727, 12
        %v6633 = vpop.permute.xlu0 %6632
        %6634 = vrot.lane.b32.xlu0 %v3728, 12
        %v6635 = vpop.permute.xlu0 %6634
        %6636 = vrot.lane.b32.xlu0 %v3729, 12
        %v6637 = vpop.permute.xlu0 %6636
        %6638 = vrot.lane.b32.xlu0 %v3730, 12
        %v6639 = vpop.permute.xlu0 %6638
        %6640 = vrot.lane.b32.xlu0 %v3731, 12
        %v6641 = vpop.permute.xlu0 %6640
        %6642 = vrot.lane.b32.xlu0 %v3732, 12
        %v6643 = vpop.permute.xlu0 %6642
        %6644 = vrot.lane.b32.xlu0 %v3733, 12
        %v6645 = vpop.permute.xlu0 %6644
        %6646 = vrot.lane.b32.xlu0 %v3734, 12
        %v6647 = vpop.permute.xlu0 %6646
        %6648 = vrot.lane.b32.xlu0 %v3735, 12
        %v6649 = vpop.permute.xlu0 %6648
        %6650 = vrot.lane.b32.xlu0 %v3736, 12
        %v6651 = vpop.permute.xlu0 %6650
        %6652 = vrot.lane.b32.xlu0 %v3737, 12
        %v6653 = vpop.permute.xlu0 %6652
        %6654 = vrot.lane.b32.xlu0 %v3738, 12
        %v6655 = vpop.permute.xlu0 %6654
        %6656 = vrot.lane.b32.xlu0 %v3739, 12
        %v6657 = vpop.permute.xlu0 %6656
        %6658 = vrot.lane.b32.xlu0 %v3740, 12
        %v6659 = vpop.permute.xlu0 %6658
        %6724 = vrot.lane.b32.xlu0 %v3742, 16
        %v6725 = vpop.permute.xlu0 %6724
        %6726 = vrot.lane.b32.xlu0 %v3743, 16
        %v6727 = vpop.permute.xlu0 %6726
        %6728 = vrot.lane.b32.xlu0 %v3744, 16
        %v6729 = vpop.permute.xlu0 %6728
        %6730 = vrot.lane.b32.xlu0 %v3745, 16
        %v6731 = vpop.permute.xlu0 %6730
        %6732 = vrot.lane.b32.xlu0 %v3746, 16
        %v6733 = vpop.permute.xlu0 %6732
        %6734 = vrot.lane.b32.xlu0 %v3747, 16
        %v6735 = vpop.permute.xlu0 %6734
        %6736 = vrot.lane.b32.xlu0 %v3748, 16
        %v6737 = vpop.permute.xlu0 %6736
        %6738 = vrot.lane.b32.xlu0 %v3749, 16
        %v6739 = vpop.permute.xlu0 %6738
        %6740 = vrot.lane.b32.xlu0 %v3750, 16
        %v6741 = vpop.permute.xlu0 %6740
        %6742 = vrot.lane.b32.xlu0 %v3751, 16
        %v6743 = vpop.permute.xlu0 %6742
        %6744 = vrot.lane.b32.xlu0 %v3752, 16
        %v6745 = vpop.permute.xlu0 %6744
        %6746 = vrot.lane.b32.xlu0 %v3753, 16
        %v6747 = vpop.permute.xlu0 %6746
        %6748 = vrot.lane.b32.xlu0 %v3754, 16
        %v6749 = vpop.permute.xlu0 %6748
        %6750 = vrot.lane.b32.xlu0 %v3755, 16
        %v6751 = vpop.permute.xlu0 %6750
        %6752 = vrot.lane.b32.xlu0 %v3756, 16
        %v6753 = vpop.permute.xlu0 %6752
        %6754 = vrot.lane.b32.xlu0 %v3757, 16
        %v6755 = vpop.permute.xlu0 %6754
        %6756 = vrot.lane.b32.xlu0 %v3758, 16
        %v6757 = vpop.permute.xlu0 %6756
        %6758 = vrot.lane.b32.xlu0 %v3759, 16
        %v6759 = vpop.permute.xlu0 %6758
        %6760 = vrot.lane.b32.xlu0 %v3760, 16
        %v6761 = vpop.permute.xlu0 %6760
        %6762 = vrot.lane.b32.xlu0 %v3761, 16
        %v6763 = vpop.permute.xlu0 %6762
        %6764 = vrot.lane.b32.xlu0 %v3762, 16
        %v6765 = vpop.permute.xlu0 %6764
        %6766 = vrot.lane.b32.xlu0 %v3763, 16
        %v6767 = vpop.permute.xlu0 %6766
        %6768 = vrot.lane.b32.xlu0 %v3764, 16
        %v6769 = vpop.permute.xlu0 %6768
        %6770 = vrot.lane.b32.xlu0 %v3765, 16
        %v6771 = vpop.permute.xlu0 %6770
        %6772 = vrot.lane.b32.xlu0 %v3766, 16
        %v6773 = vpop.permute.xlu0 %6772
        %6774 = vrot.lane.b32.xlu0 %v3767, 16
        %v6775 = vpop.permute.xlu0 %6774
        %6776 = vrot.lane.b32.xlu0 %v3768, 16
        %v6777 = vpop.permute.xlu0 %6776
        %6778 = vrot.lane.b32.xlu0 %v3769, 16
        %v6779 = vpop.permute.xlu0 %6778
        %6780 = vrot.lane.b32.xlu0 %v3770, 16
        %v6781 = vpop.permute.xlu0 %6780
        %6782 = vrot.lane.b32.xlu0 %v3771, 16
        %v6783 = vpop.permute.xlu0 %6782
        %6784 = vrot.lane.b32.xlu0 %v3772, 16
        %v6785 = vpop.permute.xlu0 %6784
        %6786 = vrot.lane.b32.xlu0 %v3773, 16
        %v6787 = vpop.permute.xlu0 %6786
        %6852 = vrot.lane.b32.xlu0 %v3774, 20
        %v6853 = vpop.permute.xlu0 %6852
        %6854 = vrot.lane.b32.xlu0 %v3775, 20
        %v6855 = vpop.permute.xlu0 %6854
        %6856 = vrot.lane.b32.xlu0 %v3776, 20
        %v6857 = vpop.permute.xlu0 %6856
        %6858 = vrot.lane.b32.xlu0 %v3777, 20
        %v6859 = vpop.permute.xlu0 %6858
        %6860 = vrot.lane.b32.xlu0 %v3778, 20
        %v6861 = vpop.permute.xlu0 %6860
        %6862 = vrot.lane.b32.xlu0 %v3779, 20
        %v6863 = vpop.permute.xlu0 %6862
        %6864 = vrot.lane.b32.xlu0 %v3780, 20
        %v6865 = vpop.permute.xlu0 %6864
        %6866 = vrot.lane.b32.xlu0 %v3781, 20
        %v6867 = vpop.permute.xlu0 %6866
        %6868 = vrot.lane.b32.xlu0 %v3782, 20
        %v6869 = vpop.permute.xlu0 %6868
        %6870 = vrot.lane.b32.xlu0 %v3783, 20
        %v6871 = vpop.permute.xlu0 %6870
        %6872 = vrot.lane.b32.xlu0 %v3784, 20
        %v6873 = vpop.permute.xlu0 %6872
        %6874 = vrot.lane.b32.xlu0 %v3785, 20
        %v6875 = vpop.permute.xlu0 %6874
        %6876 = vrot.lane.b32.xlu0 %v3786, 20
        %v6877 = vpop.permute.xlu0 %6876
        %6878 = vrot.lane.b32.xlu0 %v3787, 20
        %v6879 = vpop.permute.xlu0 %6878
        %6880 = vrot.lane.b32.xlu0 %v3788, 20
        %v6881 = vpop.permute.xlu0 %6880
        %6882 = vrot.lane.b32.xlu0 %v3789, 20
        %v6883 = vpop.permute.xlu0 %6882
        %6884 = vrot.lane.b32.xlu0 %v3790, 20
        %v6885 = vpop.permute.xlu0 %6884
        %6886 = vrot.lane.b32.xlu0 %v3791, 20
        %v6887 = vpop.permute.xlu0 %6886
        %6888 = vrot.lane.b32.xlu0 %v3792, 20
        %v6889 = vpop.permute.xlu0 %6888
        %6890 = vrot.lane.b32.xlu0 %v3793, 20
        %v6891 = vpop.permute.xlu0 %6890
        %6892 = vrot.lane.b32.xlu0 %v3794, 20
        %v6893 = vpop.permute.xlu0 %6892
        %6894 = vrot.lane.b32.xlu0 %v3795, 20
        %v6895 = vpop.permute.xlu0 %6894
        %6896 = vrot.lane.b32.xlu0 %v3796, 20
        %v6897 = vpop.permute.xlu0 %6896
        %6898 = vrot.lane.b32.xlu0 %v3797, 20
        %v6899 = vpop.permute.xlu0 %6898
        %6900 = vrot.lane.b32.xlu0 %v3798, 20
        %v6901 = vpop.permute.xlu0 %6900
        %6902 = vrot.lane.b32.xlu0 %v3799, 20
        %v6903 = vpop.permute.xlu0 %6902
        %6904 = vrot.lane.b32.xlu0 %v3800, 20
        %v6905 = vpop.permute.xlu0 %6904
        %6906 = vrot.lane.b32.xlu0 %v3801, 20
        %v6907 = vpop.permute.xlu0 %6906
        %6908 = vrot.lane.b32.xlu0 %v3802, 20
        %v6909 = vpop.permute.xlu0 %6908
        %6910 = vrot.lane.b32.xlu0 %v3803, 20
        %v6911 = vpop.permute.xlu0 %6910
        %6912 = vrot.lane.b32.xlu0 %v3804, 20
        %v6913 = vpop.permute.xlu0 %6912
        %6914 = vrot.lane.b32.xlu0 %v3805, 20
        %v6915 = vpop.permute.xlu0 %6914
        %6980 = vrot.lane.b32.xlu0 %v3806, 24
        %v6981 = vpop.permute.xlu0 %6980
        %6982 = vrot.lane.b32.xlu0 %v3807, 24
        %v6983 = vpop.permute.xlu0 %6982
        %6984 = vrot.lane.b32.xlu0 %v3808, 24
        %v6985 = vpop.permute.xlu0 %6984
        %6986 = vrot.lane.b32.xlu0 %v3809, 24
        %v6987 = vpop.permute.xlu0 %6986
        %6988 = vrot.lane.b32.xlu0 %v3810, 24
        %v6989 = vpop.permute.xlu0 %6988
        %6990 = vrot.lane.b32.xlu0 %v3811, 24
        %v6991 = vpop.permute.xlu0 %6990
        %6992 = vrot.lane.b32.xlu0 %v3812, 24
        %v6993 = vpop.permute.xlu0 %6992
        %6994 = vrot.lane.b32.xlu0 %v3813, 24
        %v6995 = vpop.permute.xlu0 %6994
        %6996 = vrot.lane.b32.xlu0 %v3814, 24
        %v6997 = vpop.permute.xlu0 %6996
        %6998 = vrot.lane.b32.xlu0 %v3815, 24
        %v6999 = vpop.permute.xlu0 %6998
        %7000 = vrot.lane.b32.xlu0 %v3816, 24
        %v7001 = vpop.permute.xlu0 %7000
        %7002 = vrot.lane.b32.xlu0 %v3817, 24
        %v7003 = vpop.permute.xlu0 %7002
        %7004 = vrot.lane.b32.xlu0 %v3818, 24
        %v7005 = vpop.permute.xlu0 %7004
        %7006 = vrot.lane.b32.xlu0 %v3819, 24
        %v7007 = vpop.permute.xlu0 %7006
        %7008 = vrot.lane.b32.xlu0 %v3820, 24
        %v7009 = vpop.permute.xlu0 %7008
        %7010 = vrot.lane.b32.xlu0 %v3821, 24
        %v7011 = vpop.permute.xlu0 %7010
        %7012 = vrot.lane.b32.xlu0 %v3822, 24
        %v7013 = vpop.permute.xlu0 %7012
        %7014 = vrot.lane.b32.xlu0 %v3823, 24
        %v7015 = vpop.permute.xlu0 %7014
        %7016 = vrot.lane.b32.xlu0 %v3824, 24
        %v7017 = vpop.permute.xlu0 %7016
        %7018 = vrot.lane.b32.xlu0 %v3825, 24
        %v7019 = vpop.permute.xlu0 %7018
        %7020 = vrot.lane.b32.xlu0 %v3826, 24
        %v7021 = vpop.permute.xlu0 %7020
        %7022 = vrot.lane.b32.xlu0 %v3827, 24
        %v7023 = vpop.permute.xlu0 %7022
        %7024 = vrot.lane.b32.xlu0 %v3828, 24
        %v7025 = vpop.permute.xlu0 %7024
        %7026 = vrot.lane.b32.xlu0 %v3829, 24
        %v7027 = vpop.permute.xlu0 %7026
        %7028 = vrot.lane.b32.xlu0 %v3830, 24
        %v7029 = vpop.permute.xlu0 %7028
        %7030 = vrot.lane.b32.xlu0 %v3831, 24
        %v7031 = vpop.permute.xlu0 %7030
        %7032 = vrot.lane.b32.xlu0 %v3832, 24
        %v7033 = vpop.permute.xlu0 %7032
        %7034 = vrot.lane.b32.xlu0 %v3833, 24
        %v7035 = vpop.permute.xlu0 %7034
        %7036 = vrot.lane.b32.xlu0 %v3834, 24
        %v7037 = vpop.permute.xlu0 %7036
        %7038 = vrot.lane.b32.xlu0 %v3835, 24
        %v7039 = vpop.permute.xlu0 %7038
        %7040 = vrot.lane.b32.xlu0 %v3836, 24
        %v7041 = vpop.permute.xlu0 %7040
        %7042 = vrot.lane.b32.xlu0 %v3837, 24
        %v7043 = vpop.permute.xlu0 %7042
        %7108 = vrot.lane.b32.xlu0 %v3838, 28
        %v7109 = vpop.permute.xlu0 %7108
        %7110 = vrot.lane.b32.xlu0 %v3839, 28
        %v7111 = vpop.permute.xlu0 %7110
        %7112 = vrot.lane.b32.xlu0 %v3840, 28
        %v7113 = vpop.permute.xlu0 %7112
        %7114 = vrot.lane.b32.xlu0 %v3841, 28
        %v7115 = vpop.permute.xlu0 %7114
        %7116 = vrot.lane.b32.xlu0 %v3842, 28
        %v7117 = vpop.permute.xlu0 %7116
        %7118 = vrot.lane.b32.xlu0 %v3843, 28
        %v7119 = vpop.permute.xlu0 %7118
        %7120 = vrot.lane.b32.xlu0 %v3844, 28
        %v7121 = vpop.permute.xlu0 %7120
        %7122 = vrot.lane.b32.xlu0 %v3845, 28
        %v7123 = vpop.permute.xlu0 %7122
        %7124 = vrot.lane.b32.xlu0 %v3846, 28
        %v7125 = vpop.permute.xlu0 %7124
        %7126 = vrot.lane.b32.xlu0 %v3847, 28
        %v7127 = vpop.permute.xlu0 %7126
        %7128 = vrot.lane.b32.xlu0 %v3848, 28
        %v7129 = vpop.permute.xlu0 %7128
        %7130 = vrot.lane.b32.xlu0 %v3849, 28
        %v7131 = vpop.permute.xlu0 %7130
        %7132 = vrot.lane.b32.xlu0 %v3850, 28
        %v7133 = vpop.permute.xlu0 %7132
        %7134 = vrot.lane.b32.xlu0 %v3851, 28
        %v7135 = vpop.permute.xlu0 %7134
        %7136 = vrot.lane.b32.xlu0 %v3852, 28
        %v7137 = vpop.permute.xlu0 %7136
        %7138 = vrot.lane.b32.xlu0 %v3853, 28
        %v7139 = vpop.permute.xlu0 %7138
        %7140 = vrot.lane.b32.xlu0 %v3854, 28
        %v7141 = vpop.permute.xlu0 %7140
        %7142 = vrot.lane.b32.xlu0 %v3855, 28
        %v7143 = vpop.permute.xlu0 %7142
        %7144 = vrot.lane.b32.xlu0 %v3856, 28
        %v7145 = vpop.permute.xlu0 %7144
        %7146 = vrot.lane.b32.xlu0 %v3857, 28
        %v7147 = vpop.permute.xlu0 %7146
        %7148 = vrot.lane.b32.xlu0 %v3858, 28
        %v7149 = vpop.permute.xlu0 %7148
        %7150 = vrot.lane.b32.xlu0 %v3859, 28
        %v7151 = vpop.permute.xlu0 %7150
        %7152 = vrot.lane.b32.xlu0 %v3860, 28
        %v7153 = vpop.permute.xlu0 %7152
        %7154 = vrot.lane.b32.xlu0 %v3861, 28
        %v7155 = vpop.permute.xlu0 %7154
        %7156 = vrot.lane.b32.xlu0 %v3862, 28
        %v7157 = vpop.permute.xlu0 %7156
        %7158 = vrot.lane.b32.xlu0 %v3863, 28
        %v7159 = vpop.permute.xlu0 %7158
        %7160 = vrot.lane.b32.xlu0 %v3864, 28
        %v7161 = vpop.permute.xlu0 %7160
        %7162 = vrot.lane.b32.xlu0 %v3865, 28
        %v7163 = vpop.permute.xlu0 %7162
        %7164 = vrot.lane.b32.xlu0 %v3866, 28
        %v7165 = vpop.permute.xlu0 %7164
        %7166 = vrot.lane.b32.xlu0 %v3867, 28
        %v7167 = vpop.permute.xlu0 %7166
        %7168 = vrot.lane.b32.xlu0 %v3868, 28
        %v7169 = vpop.permute.xlu0 %7168
        %7170 = vrot.lane.b32.xlu0 %v3869, 28
        %v7171 = vpop.permute.xlu0 %7170
        %7236 = vrot.lane.b32.xlu0 %v3870, 32
        %v7237 = vpop.permute.xlu0 %7236
        %7238 = vrot.lane.b32.xlu0 %v3871, 32
        %v7239 = vpop.permute.xlu0 %7238
        %7240 = vrot.lane.b32.xlu0 %v3872, 32
        %v7241 = vpop.permute.xlu0 %7240
        %7242 = vrot.lane.b32.xlu0 %v3873, 32
        %v7243 = vpop.permute.xlu0 %7242
        %7244 = vrot.lane.b32.xlu0 %v3874, 32
        %v7245 = vpop.permute.xlu0 %7244
        %7246 = vrot.lane.b32.xlu0 %v3875, 32
        %v7247 = vpop.permute.xlu0 %7246
        %7248 = vrot.lane.b32.xlu0 %v3876, 32
        %v7249 = vpop.permute.xlu0 %7248
        %7250 = vrot.lane.b32.xlu0 %v3877, 32
        %v7251 = vpop.permute.xlu0 %7250
        %7252 = vrot.lane.b32.xlu0 %v3878, 32
        %v7253 = vpop.permute.xlu0 %7252
        %7254 = vrot.lane.b32.xlu0 %v3879, 32
        %v7255 = vpop.permute.xlu0 %7254
        %7256 = vrot.lane.b32.xlu0 %v3880, 32
        %v7257 = vpop.permute.xlu0 %7256
        %7258 = vrot.lane.b32.xlu0 %v3881, 32
        %v7259 = vpop.permute.xlu0 %7258
        %7260 = vrot.lane.b32.xlu0 %v3882, 32
        %v7261 = vpop.permute.xlu0 %7260
        %7262 = vrot.lane.b32.xlu0 %v3883, 32
        %v7263 = vpop.permute.xlu0 %7262
        %7264 = vrot.lane.b32.xlu0 %v3884, 32
        %v7265 = vpop.permute.xlu0 %7264
        %7266 = vrot.lane.b32.xlu0 %v3885, 32
        %v7267 = vpop.permute.xlu0 %7266
        %7268 = vrot.lane.b32.xlu0 %v3886, 32
        %v7269 = vpop.permute.xlu0 %7268
        %7270 = vrot.lane.b32.xlu0 %v3887, 32
        %v7271 = vpop.permute.xlu0 %7270
        %7272 = vrot.lane.b32.xlu0 %v3888, 32
        %v7273 = vpop.permute.xlu0 %7272
        %7274 = vrot.lane.b32.xlu0 %v3889, 32
        %v7275 = vpop.permute.xlu0 %7274
        %7276 = vrot.lane.b32.xlu0 %v3890, 32
        %v7277 = vpop.permute.xlu0 %7276
        %7278 = vrot.lane.b32.xlu0 %v3891, 32
        %v7279 = vpop.permute.xlu0 %7278
        %7280 = vrot.lane.b32.xlu0 %v3892, 32
        %v7281 = vpop.permute.xlu0 %7280
        %7282 = vrot.lane.b32.xlu0 %v3893, 32
        %v7283 = vpop.permute.xlu0 %7282
        %7284 = vrot.lane.b32.xlu0 %v3894, 32
        %v7285 = vpop.permute.xlu0 %7284
        %7286 = vrot.lane.b32.xlu0 %v3895, 32
        %v7287 = vpop.permute.xlu0 %7286
        %7288 = vrot.lane.b32.xlu0 %v3896, 32
        %v7289 = vpop.permute.xlu0 %7288
        %7290 = vrot.lane.b32.xlu0 %v3897, 32
        %v7291 = vpop.permute.xlu0 %7290
        %7292 = vrot.lane.b32.xlu0 %v3898, 32
        %v7293 = vpop.permute.xlu0 %7292
        %7294 = vrot.lane.b32.xlu0 %v3899, 32
        %v7295 = vpop.permute.xlu0 %7294
        %7296 = vrot.lane.b32.xlu0 %v3900, 32
        %v7297 = vpop.permute.xlu0 %7296
        %7298 = vrot.lane.b32.xlu0 %v3901, 32
        %v7299 = vpop.permute.xlu0 %7298
        %v7332 = vsel %vm388, %v3613, %v6341
        %v7333 = vsel %vm388, %v3614, %v6343
        %v7334 = vsel %vm388, %v3615, %v6345
        %v7335 = vsel %vm388, %v3616, %v6347
        %v7336 = vsel %vm388, %v3617, %v6349
        %v7337 = vsel %vm388, %v3618, %v6351
        %v7338 = vsel %vm388, %v3619, %v6353
        %v7339 = vsel %vm388, %v3620, %v6355
        %v7340 = vsel %vm388, %v3621, %v6357
        %v7341 = vsel %vm388, %v3622, %v6359
        %v7342 = vsel %vm388, %v3623, %v6361
        %v7343 = vsel %vm388, %v3624, %v6363
        %v7344 = vsel %vm388, %v3625, %v6365
        %v7345 = vsel %vm388, %v3626, %v6367
        %v7346 = vsel %vm388, %v3627, %v6369
        %v7347 = vsel %vm388, %v3628, %v6371
        %v7348 = vsel %vm388, %v3629, %v6373
        %v7349 = vsel %vm388, %v3630, %v6375
        %v7350 = vsel %vm388, %v3631, %v6377
        %v7351 = vsel %vm388, %v3632, %v6379
        %v7352 = vsel %vm388, %v3633, %v6381
        %v7353 = vsel %vm388, %v3634, %v6383
        %v7354 = vsel %vm388, %v3635, %v6385
        %v7355 = vsel %vm388, %v3636, %v6387
        %v7356 = vsel %vm388, %v3637, %v6389
        %v7357 = vsel %vm388, %v3638, %v6391
        %v7358 = vsel %vm388, %v3639, %v6393
        %v7359 = vsel %vm388, %v3640, %v6395
        %v7360 = vsel %vm388, %v3641, %v6397
        %v7361 = vsel %vm388, %v3642, %v6399
        %v7362 = vsel %vm388, %v3643, %v6401
        %v7363 = vsel %vm388, %v3644, %v6403
        %v7364 = vsel %vm2293, %v7332, %v6469
        %v7365 = vsel %vm2293, %v7333, %v6471
        %v7366 = vsel %vm2293, %v7334, %v6473
        %v7367 = vsel %vm2293, %v7335, %v6475
        %v7368 = vsel %vm2293, %v7336, %v6477
        %v7369 = vsel %vm2293, %v7337, %v6479
        %v7370 = vsel %vm2293, %v7338, %v6481
        %v7371 = vsel %vm2293, %v7339, %v6483
        %v7372 = vsel %vm2293, %v7340, %v6485
        %v7373 = vsel %vm2293, %v7341, %v6487
        %v7374 = vsel %vm2293, %v7342, %v6489
        %v7375 = vsel %vm2293, %v7343, %v6491
        %v7376 = vsel %vm2293, %v7344, %v6493
        %v7377 = vsel %vm2293, %v7345, %v6495
        %v7378 = vsel %vm2293, %v7346, %v6497
        %v7379 = vsel %vm2293, %v7347, %v6499
        %v7380 = vsel %vm2293, %v7348, %v6501
        %v7381 = vsel %vm2293, %v7349, %v6503
        %v7382 = vsel %vm2293, %v7350, %v6505
        %v7383 = vsel %vm2293, %v7351, %v6507
        %v7384 = vsel %vm2293, %v7352, %v6509
        %v7385 = vsel %vm2293, %v7353, %v6511
        %v7386 = vsel %vm2293, %v7354, %v6513
        %v7387 = vsel %vm2293, %v7355, %v6515
        %v7388 = vsel %vm2293, %v7356, %v6517
        %v7389 = vsel %vm2293, %v7357, %v6519
        %v7390 = vsel %vm2293, %v7358, %v6521
        %v7391 = vsel %vm2293, %v7359, %v6523
        %v7392 = vsel %vm2293, %v7360, %v6525
        %v7393 = vsel %vm2293, %v7361, %v6527
        %v7394 = vsel %vm2293, %v7362, %v6529
        %v7395 = vsel %vm2293, %v7363, %v6531
        %v7396 = vsel %vm2326, %v7364, %v6597
        %v7397 = vsel %vm2326, %v7365, %v6599
        %v7398 = vsel %vm2326, %v7366, %v6601
        %v7399 = vsel %vm2326, %v7367, %v6603
        %v7400 = vsel %vm2326, %v7368, %v6605
        %v7401 = vsel %vm2326, %v7369, %v6607
        %v7402 = vsel %vm2326, %v7370, %v6609
        %v7403 = vsel %vm2326, %v7371, %v6611
        %v7404 = vsel %vm2326, %v7372, %v6613
        %v7405 = vsel %vm2326, %v7373, %v6615
        %v7406 = vsel %vm2326, %v7374, %v6617
        %v7407 = vsel %vm2326, %v7375, %v6619
        %v7408 = vsel %vm2326, %v7376, %v6621
        %v7409 = vsel %vm2326, %v7377, %v6623
        %v7410 = vsel %vm2326, %v7378, %v6625
        %v7411 = vsel %vm2326, %v7379, %v6627
        %v7412 = vsel %vm2326, %v7380, %v6629
        %v7413 = vsel %vm2326, %v7381, %v6631
        %v7414 = vsel %vm2326, %v7382, %v6633
        %v7415 = vsel %vm2326, %v7383, %v6635
        %v7416 = vsel %vm2326, %v7384, %v6637
        %v7417 = vsel %vm2326, %v7385, %v6639
        %v7418 = vsel %vm2326, %v7386, %v6641
        %v7419 = vsel %vm2326, %v7387, %v6643
        %v7420 = vsel %vm2326, %v7388, %v6645
        %v7421 = vsel %vm2326, %v7389, %v6647
        %v7422 = vsel %vm2326, %v7390, %v6649
        %v7423 = vsel %vm2326, %v7391, %v6651
        %v7424 = vsel %vm2326, %v7392, %v6653
        %v7425 = vsel %vm2326, %v7393, %v6655
        %v7426 = vsel %vm2326, %v7394, %v6657
        %v7427 = vsel %vm2326, %v7395, %v6659
        %v7428 = vsel %vm2359, %v7396, %v6725
        %v7429 = vsel %vm2359, %v7397, %v6727
        %v7430 = vsel %vm2359, %v7398, %v6729
        %v7431 = vsel %vm2359, %v7399, %v6731
        %v7432 = vsel %vm2359, %v7400, %v6733
        %v7433 = vsel %vm2359, %v7401, %v6735
        %v7434 = vsel %vm2359, %v7402, %v6737
        %v7435 = vsel %vm2359, %v7403, %v6739
        %v7436 = vsel %vm2359, %v7404, %v6741
        %v7437 = vsel %vm2359, %v7405, %v6743
        %v7438 = vsel %vm2359, %v7406, %v6745
        %v7439 = vsel %vm2359, %v7407, %v6747
        %v7440 = vsel %vm2359, %v7408, %v6749
        %v7441 = vsel %vm2359, %v7409, %v6751
        %v7442 = vsel %vm2359, %v7410, %v6753
        %v7443 = vsel %vm2359, %v7411, %v6755
        %v7444 = vsel %vm2359, %v7412, %v6757
        %v7445 = vsel %vm2359, %v7413, %v6759
        %v7446 = vsel %vm2359, %v7414, %v6761
        %v7447 = vsel %vm2359, %v7415, %v6763
        %v7448 = vsel %vm2359, %v7416, %v6765
        %v7449 = vsel %vm2359, %v7417, %v6767
        %v7450 = vsel %vm2359, %v7418, %v6769
        %v7451 = vsel %vm2359, %v7419, %v6771
        %v7452 = vsel %vm2359, %v7420, %v6773
        %v7453 = vsel %vm2359, %v7421, %v6775
        %v7454 = vsel %vm2359, %v7422, %v6777
        %v7455 = vsel %vm2359, %v7423, %v6779
        %v7456 = vsel %vm2359, %v7424, %v6781
        %v7457 = vsel %vm2359, %v7425, %v6783
        %v7458 = vsel %vm2359, %v7426, %v6785
        %v7459 = vsel %vm2359, %v7427, %v6787
        %v7460 = vsel %vm2392, %v7428, %v6853
        %v7461 = vsel %vm2392, %v7429, %v6855
        %v7462 = vsel %vm2392, %v7430, %v6857
        %v7463 = vsel %vm2392, %v7431, %v6859
        %v7464 = vsel %vm2392, %v7432, %v6861
        %v7465 = vsel %vm2392, %v7433, %v6863
        %v7466 = vsel %vm2392, %v7434, %v6865
        %v7467 = vsel %vm2392, %v7435, %v6867
        %v7468 = vsel %vm2392, %v7436, %v6869
        %v7469 = vsel %vm2392, %v7437, %v6871
        %v7470 = vsel %vm2392, %v7438, %v6873
        %v7471 = vsel %vm2392, %v7439, %v6875
        %v7472 = vsel %vm2392, %v7440, %v6877
        %v7473 = vsel %vm2392, %v7441, %v6879
        %v7474 = vsel %vm2392, %v7442, %v6881
        %v7475 = vsel %vm2392, %v7443, %v6883
        %v7476 = vsel %vm2392, %v7444, %v6885
        %v7477 = vsel %vm2392, %v7445, %v6887
        %v7478 = vsel %vm2392, %v7446, %v6889
        %v7479 = vsel %vm2392, %v7447, %v6891
        %v7480 = vsel %vm2392, %v7448, %v6893
        %v7481 = vsel %vm2392, %v7449, %v6895
        %v7482 = vsel %vm2392, %v7450, %v6897
        %v7483 = vsel %vm2392, %v7451, %v6899
        %v7484 = vsel %vm2392, %v7452, %v6901
        %v7485 = vsel %vm2392, %v7453, %v6903
        %v7486 = vsel %vm2392, %v7454, %v6905
        %v7487 = vsel %vm2392, %v7455, %v6907
        %v7488 = vsel %vm2392, %v7456, %v6909
        %v7489 = vsel %vm2392, %v7457, %v6911
        %v7490 = vsel %vm2392, %v7458, %v6913
        %v7491 = vsel %vm2392, %v7459, %v6915
        %v7492 = vsel %vm2425, %v7460, %v6981
        %v7493 = vsel %vm2425, %v7461, %v6983
        %v7494 = vsel %vm2425, %v7462, %v6985
        %v7495 = vsel %vm2425, %v7463, %v6987
        %v7496 = vsel %vm2425, %v7464, %v6989
        %v7497 = vsel %vm2425, %v7465, %v6991
        %v7498 = vsel %vm2425, %v7466, %v6993
        %v7499 = vsel %vm2425, %v7467, %v6995
        %v7500 = vsel %vm2425, %v7468, %v6997
        %v7501 = vsel %vm2425, %v7469, %v6999
        %v7502 = vsel %vm2425, %v7470, %v7001
        %v7503 = vsel %vm2425, %v7471, %v7003
        %v7504 = vsel %vm2425, %v7472, %v7005
        %v7505 = vsel %vm2425, %v7473, %v7007
        %v7506 = vsel %vm2425, %v7474, %v7009
        %v7507 = vsel %vm2425, %v7475, %v7011
        %v7508 = vsel %vm2425, %v7476, %v7013
        %v7509 = vsel %vm2425, %v7477, %v7015
        %v7510 = vsel %vm2425, %v7478, %v7017
        %v7511 = vsel %vm2425, %v7479, %v7019
        %v7512 = vsel %vm2425, %v7480, %v7021
        %v7513 = vsel %vm2425, %v7481, %v7023
        %v7514 = vsel %vm2425, %v7482, %v7025
        %v7515 = vsel %vm2425, %v7483, %v7027
        %v7516 = vsel %vm2425, %v7484, %v7029
        %v7517 = vsel %vm2425, %v7485, %v7031
        %v7518 = vsel %vm2425, %v7486, %v7033
        %v7519 = vsel %vm2425, %v7487, %v7035
        %v7520 = vsel %vm2425, %v7488, %v7037
        %v7521 = vsel %vm2425, %v7489, %v7039
        %v7522 = vsel %vm2425, %v7490, %v7041
        %v7523 = vsel %vm2425, %v7491, %v7043
        %v7524 = vsel %vm2458, %v7492, %v7109
        %v7525 = vsel %vm2458, %v7493, %v7111
        %v7526 = vsel %vm2458, %v7494, %v7113
        %v7527 = vsel %vm2458, %v7495, %v7115
        %v7528 = vsel %vm2458, %v7496, %v7117
        %v7529 = vsel %vm2458, %v7497, %v7119
        %v7530 = vsel %vm2458, %v7498, %v7121
        %v7531 = vsel %vm2458, %v7499, %v7123
        %v7532 = vsel %vm2458, %v7500, %v7125
        %v7533 = vsel %vm2458, %v7501, %v7127
        %v7534 = vsel %vm2458, %v7502, %v7129
        %v7535 = vsel %vm2458, %v7503, %v7131
        %v7536 = vsel %vm2458, %v7504, %v7133
        %v7537 = vsel %vm2458, %v7505, %v7135
        %v7538 = vsel %vm2458, %v7506, %v7137
        %v7539 = vsel %vm2458, %v7507, %v7139
        %v7540 = vsel %vm2458, %v7508, %v7141
        %v7541 = vsel %vm2458, %v7509, %v7143
        %v7542 = vsel %vm2458, %v7510, %v7145
        %v7543 = vsel %vm2458, %v7511, %v7147
        %v7544 = vsel %vm2458, %v7512, %v7149
        %v7545 = vsel %vm2458, %v7513, %v7151
        %v7546 = vsel %vm2458, %v7514, %v7153
        %v7547 = vsel %vm2458, %v7515, %v7155
        %v7548 = vsel %vm2458, %v7516, %v7157
        %v7549 = vsel %vm2458, %v7517, %v7159
        %v7550 = vsel %vm2458, %v7518, %v7161
        %v7551 = vsel %vm2458, %v7519, %v7163
        %v7552 = vsel %vm2458, %v7520, %v7165
        %v7553 = vsel %vm2458, %v7521, %v7167
        %v7554 = vsel %vm2458, %v7522, %v7169
        %v7555 = vsel %vm2458, %v7523, %v7171
        %v7556 = vsel %vm2491, %v7524, %v7237
        %v7557 = vsel %vm2491, %v7525, %v7239
        %v7558 = vsel %vm2491, %v7526, %v7241
        %v7559 = vsel %vm2491, %v7527, %v7243
        %v7560 = vsel %vm2491, %v7528, %v7245
        %v7561 = vsel %vm2491, %v7529, %v7247
        %v7562 = vsel %vm2491, %v7530, %v7249
        %v7563 = vsel %vm2491, %v7531, %v7251
        %v7564 = vsel %vm2491, %v7532, %v7253
        %v7565 = vsel %vm2491, %v7533, %v7255
        %v7566 = vsel %vm2491, %v7534, %v7257
        %v7567 = vsel %vm2491, %v7535, %v7259
        %v7568 = vsel %vm2491, %v7536, %v7261
        %v7569 = vsel %vm2491, %v7537, %v7263
        %v7570 = vsel %vm2491, %v7538, %v7265
        %v7571 = vsel %vm2491, %v7539, %v7267
        %v7572 = vsel %vm2491, %v7540, %v7269
        %v7573 = vsel %vm2491, %v7541, %v7271
        %v7574 = vsel %vm2491, %v7542, %v7273
        %v7575 = vsel %vm2491, %v7543, %v7275
        %v7576 = vsel %vm2491, %v7544, %v7277
        %v7577 = vsel %vm2491, %v7545, %v7279
        %v7578 = vsel %vm2491, %v7546, %v7281
        %v7579 = vsel %vm2491, %v7547, %v7283
        %v7580 = vsel %vm2491, %v7548, %v7285
        %v7581 = vsel %vm2491, %v7549, %v7287
        %v7582 = vsel %vm2491, %v7550, %v7289
        %v7583 = vsel %vm2491, %v7551, %v7291
        %v7584 = vsel %vm2491, %v7552, %v7293
        %v7585 = vsel %vm2491, %v7553, %v7295
        %v7586 = vsel %vm2491, %v7554, %v7297
        %v7587 = vsel %vm2491, %v7555, %v7299
        %7620 = vrot.lane.b32.xlu0 %v7556, 64
        %v7621 = vpop.permute.xlu0 %7620
        %7622 = vrot.lane.b32.xlu0 %v7557, 64
        %v7623 = vpop.permute.xlu0 %7622
        %7624 = vrot.lane.b32.xlu0 %v7558, 64
        %v7625 = vpop.permute.xlu0 %7624
        %7626 = vrot.lane.b32.xlu0 %v7559, 64
        %v7627 = vpop.permute.xlu0 %7626
        %7628 = vrot.lane.b32.xlu0 %v7560, 64
        %v7629 = vpop.permute.xlu0 %7628
        %7630 = vrot.lane.b32.xlu0 %v7561, 64
        %v7631 = vpop.permute.xlu0 %7630
        %7632 = vrot.lane.b32.xlu0 %v7562, 64
        %v7633 = vpop.permute.xlu0 %7632
        %7634 = vrot.lane.b32.xlu0 %v7563, 64
        %v7635 = vpop.permute.xlu0 %7634
        %7636 = vrot.lane.b32.xlu0 %v7564, 64
        %v7637 = vpop.permute.xlu0 %7636
        %7638 = vrot.lane.b32.xlu0 %v7565, 64
        %v7639 = vpop.permute.xlu0 %7638
        %7640 = vrot.lane.b32.xlu0 %v7566, 64
        %v7641 = vpop.permute.xlu0 %7640
        %7642 = vrot.lane.b32.xlu0 %v7567, 64
        %v7643 = vpop.permute.xlu0 %7642
        %7644 = vrot.lane.b32.xlu0 %v7568, 64
        %v7645 = vpop.permute.xlu0 %7644
        %7646 = vrot.lane.b32.xlu0 %v7569, 64
        %v7647 = vpop.permute.xlu0 %7646
        %7648 = vrot.lane.b32.xlu0 %v7570, 64
        %v7649 = vpop.permute.xlu0 %7648
        %7650 = vrot.lane.b32.xlu0 %v7571, 64
        %v7651 = vpop.permute.xlu0 %7650
        %7652 = vrot.lane.b32.xlu0 %v7572, 64
        %v7653 = vpop.permute.xlu0 %7652
        %7654 = vrot.lane.b32.xlu0 %v7573, 64
        %v7655 = vpop.permute.xlu0 %7654
        %7656 = vrot.lane.b32.xlu0 %v7574, 64
        %v7657 = vpop.permute.xlu0 %7656
        %7658 = vrot.lane.b32.xlu0 %v7575, 64
        %v7659 = vpop.permute.xlu0 %7658
        %7660 = vrot.lane.b32.xlu0 %v7576, 64
        %v7661 = vpop.permute.xlu0 %7660
        %7662 = vrot.lane.b32.xlu0 %v7577, 64
        %v7663 = vpop.permute.xlu0 %7662
        %7664 = vrot.lane.b32.xlu0 %v7578, 64
        %v7665 = vpop.permute.xlu0 %7664
        %7666 = vrot.lane.b32.xlu0 %v7579, 64
        %v7667 = vpop.permute.xlu0 %7666
        %7668 = vrot.lane.b32.xlu0 %v7580, 64
        %v7669 = vpop.permute.xlu0 %7668
        %7670 = vrot.lane.b32.xlu0 %v7581, 64
        %v7671 = vpop.permute.xlu0 %7670
        %7672 = vrot.lane.b32.xlu0 %v7582, 64
        %v7673 = vpop.permute.xlu0 %7672
        %7674 = vrot.lane.b32.xlu0 %v7583, 64
        %v7675 = vpop.permute.xlu0 %7674
        %7676 = vrot.lane.b32.xlu0 %v7584, 64
        %v7677 = vpop.permute.xlu0 %7676
        %7678 = vrot.lane.b32.xlu0 %v7585, 64
        %v7679 = vpop.permute.xlu0 %7678
        %7680 = vrot.lane.b32.xlu0 %v7586, 64
        %v7681 = vpop.permute.xlu0 %7680
        %7682 = vrot.lane.b32.xlu0 %v7587, 64
        %v7683 = vpop.permute.xlu0 %7682
        %vm7716 = vcmask 523264
        %v7717 = vsel %vm7716, %v6276, %v7621
        %v7718 = vsel %vm7716, %v6277, %v7623
        %v7719 = vsel %vm7716, %v6278, %v7625
        %v7720 = vsel %vm7716, %v6279, %v7627
        %v7721 = vsel %vm7716, %v6280, %v7629
        %v7722 = vsel %vm7716, %v6281, %v7631
        %v7723 = vsel %vm7716, %v6282, %v7633
        %v7724 = vsel %vm7716, %v6283, %v7635
        %v7725 = vsel %vm7716, %v6284, %v7637
        %v7726 = vsel %vm7716, %v6285, %v7639
        %v7727 = vsel %vm7716, %v6286, %v7641
        %v7728 = vsel %vm7716, %v6287, %v7643
        %v7729 = vsel %vm7716, %v6288, %v7645
        %v7730 = vsel %vm7716, %v6289, %v7647
        %v7731 = vsel %vm7716, %v6290, %v7649
        %v7732 = vsel %vm7716, %v6291, %v7651
        %v7733 = vsel %vm7716, %v6292, %v7653
        %v7734 = vsel %vm7716, %v6293, %v7655
        %v7735 = vsel %vm7716, %v6294, %v7657
        %v7736 = vsel %vm7716, %v6295, %v7659
        %v7737 = vsel %vm7716, %v6296, %v7661
        %v7738 = vsel %vm7716, %v6297, %v7663
        %v7739 = vsel %vm7716, %v6298, %v7665
        %v7740 = vsel %vm7716, %v6299, %v7667
        %v7741 = vsel %vm7716, %v6300, %v7669
        %v7742 = vsel %vm7716, %v6301, %v7671
        %v7743 = vsel %vm7716, %v6302, %v7673
        %v7744 = vsel %vm7716, %v6303, %v7675
        %v7745 = vsel %vm7716, %v6304, %v7677
        %v7746 = vsel %vm7716, %v6305, %v7679
        %v7747 = vsel %vm7716, %v6306, %v7681
        %v7748 = vsel %vm7716, %v6307, %v7683
        %v7749 = vpack.c.bf16 %v7718, %v7717
        %v7750 = vpack.c.bf16 %v7720, %v7719
        %v7751 = vpack.c.bf16 %v7722, %v7721
        %v7752 = vpack.c.bf16 %v7724, %v7723
        %v7753 = vpack.c.bf16 %v7726, %v7725
        %v7754 = vpack.c.bf16 %v7728, %v7727
        %v7755 = vpack.c.bf16 %v7730, %v7729
        %v7756 = vpack.c.bf16 %v7732, %v7731
        %v7757 = vpack.c.bf16 %v7734, %v7733
        %v7758 = vpack.c.bf16 %v7736, %v7735
        %v7759 = vpack.c.bf16 %v7738, %v7737
        %v7760 = vpack.c.bf16 %v7740, %v7739
        %v7761 = vpack.c.bf16 %v7742, %v7741
        %v7762 = vpack.c.bf16 %v7744, %v7743
        %v7763 = vpack.c.bf16 %v7746, %v7745
        %v7764 = vpack.c.bf16 %v7748, %v7747
        %v7765 = vld [vmem:[%s5] sm:$0xf]
        %v7766 = vld [vmem:[%s5 + $0x4] sm:$0xf]
        %v7767 = vld [vmem:[%s5 + $0x8] sm:$0xf]
        %v7768 = vld [vmem:[%s5 + $0xc] sm:$0xf]
        %v7769 = vld [vmem:[%s5 + $0x10] sm:$0xf]
        %v7770 = vld [vmem:[%s5 + $0x14] sm:$0xf]
        %v7771 = vld [vmem:[%s5 + $0x18] sm:$0xf]
        %v7772 = vld [vmem:[%s5 + $0x1c] sm:$0xf]
        %v7773 = vld [vmem:[%s5 + $0x20] sm:$0xf]
        %v7774 = vld [vmem:[%s5 + $0x24] sm:$0xf]
        %v7775 = vld [vmem:[%s5 + $0x28] sm:$0xf]
        %v7776 = vld [vmem:[%s5 + $0x2c] sm:$0xf]
        %v7777 = vld [vmem:[%s5 + $0x30] sm:$0x3]
        %v7778 = vld [vmem:[%s6] sm:$0x1]
        %v7780 = vlaneseq
        %v7781 = vshrl.u32 %v7780, 7
        %v7782 = vsub.s32 0, %v7781
        %v7783 = vrot.slane %v7778, %v7782
        %v7798 = vunpack.c.l.b16 %v7765
        %v7799 = vunpack.c.l.b16 %v7766
        %v7800 = vunpack.c.l.b16 %v7767
        %v7801 = vunpack.c.l.b16 %v7768
        %v7802 = vunpack.c.l.b16 %v7769
        %v7803 = vunpack.c.l.b16 %v7770
        %v7804 = vunpack.c.l.b16 %v7771
        %v7805 = vunpack.c.l.b16 %v7772
        %v7806 = vunpack.c.l.b16 %v7773
        %v7807 = vunpack.c.l.b16 %v7774
        %v7808 = vunpack.c.l.b16 %v7775
        %v7809 = vunpack.c.l.b16 %v7776
        %v7810 = vunpack.c.l.b16 %v7777
        %v7811 = vpack.c.b16 %v7799, %v7798
        %v7812 = vpack.c.b16 %v7801, %v7800
        %v7813 = vpack.c.b16 %v7803, %v7802
        %v7814 = vpack.c.b16 %v7805, %v7804
        %v7815 = vpack.c.b16 %v7807, %v7806
        %v7816 = vpack.c.b16 %v7809, %v7808
        %v7817 = vpack.c.b16 %v7810, %v7810
        %vm7824 = vcmask 818176
        %v7826 = vsel %vm7824, %v7749, 0
        %v7829 = vsel %vm7824, %v7750, 0
        %v7832 = vsel %vm7824, %v7751, 0
        %v7835 = vsel %vm7824, %v7752, 0
        %v7838 = vsel %vm7824, %v7753, 0
        %v7841 = vsel %vm7824, %v7754, 0
        %v7844 = vsel %vm7824, %v7755, 0
        %v7847 = vsel %vm7824, %v7756, 0
        %v7850 = vsel %vm7824, %v7757, 0
        %v7853 = vsel %vm7824, %v7758, 0
        %v7856 = vsel %vm7824, %v7759, 0
        %v7859 = vsel %vm7824, %v7760, 0
        %v7862 = vsel %vm7824, %v7761, 0
        %v7865 = vsel %vm7824, %v7762, 0
        %v7868 = vsel %vm7824, %v7763, 0
        %v7871 = vsel %vm7824, %v7764, 0
        %v7874 = vsel %vm437, %v7817, 0
        %7876 = vmatprep.subr.bf16.mxu0 0
        %7877 = vmatpush1.bf16.msra.mxu0 %v7811
        %7878 = vmatprep.subr.bf16.mxu0 0
        %7879 = vmatpush1.bf16.msra.mxu0 %v7812
        %7880 = vmatprep.subr.bf16.mxu0 0
        %7881 = vmatpush1.bf16.msra.mxu0 %v7813
        %7882 = vmatprep.subr.bf16.mxu0 0
        %7883 = vmatpush1.bf16.msra.mxu0 %v7814
        %7884 = vmatprep.subr.bf16.mxu0 0
        %7885 = vmatpush1.bf16.msra.mxu0 %v7815
        %7886 = vmatprep.subr.bf16.mxu0 0
        %7887 = vmatpush1.bf16.msra.mxu0 %v7816
        %7888 = vmatprep.subr.bf16.mxu0 0
        %7889 = vmatpush1.bf16.msra.mxu0 %v7874
        %7890 = vmatprep.subr.bf16.mxu0 0
        %7891 = vmatpush1.bf16.msra.mxu0 0
        %7892 = vmatprep.subr.bf16.mxu0 0
        %7893 = vmatpush1.bf16.msra.mxu0 0
        %7894 = vmatprep.subr.bf16.mxu0 0
        %7895 = vmatpush1.bf16.msra.mxu0 0
        %7896 = vmatprep.subr.bf16.mxu0 0
        %7897 = vmatpush1.bf16.msra.mxu0 0
        %7898 = vmatprep.subr.bf16.mxu0 0
        %7899 = vmatpush1.bf16.msra.mxu0 0
        %7900 = vmatprep.subr.bf16.mxu0 0
        %7901 = vmatpush1.bf16.msra.mxu0 0
        %7902 = vmatprep.subr.bf16.mxu0 0
        %7903 = vmatpush1.bf16.msra.mxu0 0
        %7904 = vmatprep.subr.bf16.mxu0 0
        %7905 = vmatpush1.bf16.msra.mxu0 0
        %7906 = vmatprep.subr.bf16.mxu0 0
        %7907 = vmatpush1.bf16.msra.mxu0 0
        %7908 = vmatprep.mubr.bf16.mxu0 0
        %7909 = vmatmul.mubr.bf16.gmra.mrb[0].mxu0 %v7826
        %v7910 = vpop.f32.mrb[0].mxu0
        %v7911 = vadd.f32 %v7783, %v7910
        %v7912 = vpop.f32.mrb[0].mxu0
        %v7913 = vpop.f32.mrb[0].mxu0
        %v7914 = vadd.f32 %v7783, %v7913
        %v7915 = vpop.f32.mrb[0].mxu0
        %7916 = vmatprep.mubr.bf16.mxu0 0
        %7917 = vmatmul.mubr.bf16.gmra.mrb[0].mxu0 %v7829
        %v7918 = vpop.f32.mrb[0].mxu0
        %v7919 = vadd.f32 %v7783, %v7918
        %v7920 = vpop.f32.mrb[0].mxu0
        %v7921 = vpop.f32.mrb[0].mxu0
        %v7922 = vadd.f32 %v7783, %v7921
        %v7923 = vpop.f32.mrb[0].mxu0
        %7924 = vmatprep.mubr.bf16.mxu0 0
        %7925 = vmatmul.mubr.bf16.gmra.mrb[0].mxu0 %v7832
        %v7926 = vpop.f32.mrb[0].mxu0
        %v7927 = vadd.f32 %v7783, %v7926
        %v7928 = vpop.f32.mrb[0].mxu0
        %v7929 = vpop.f32.mrb[0].mxu0
        %v7930 = vadd.f32 %v7783, %v7929
        %v7931 = vpop.f32.mrb[0].mxu0
        %7932 = vmatprep.mubr.bf16.mxu0 0
        %7933 = vmatmul.mubr.bf16.gmra.mrb[0].mxu0 %v7835
        %v7934 = vpop.f32.mrb[0].mxu0
        %v7935 = vadd.f32 %v7783, %v7934
        %v7936 = vpop.f32.mrb[0].mxu0
        %v7937 = vpop.f32.mrb[0].mxu0
        %v7938 = vadd.f32 %v7783, %v7937
        %v7939 = vpop.f32.mrb[0].mxu0
        %7940 = vmatprep.mubr.bf16.mxu0 0
        %7941 = vmatmul.mubr.bf16.gmra.mrb[0].mxu0 %v7838
        %v7942 = vpop.f32.mrb[0].mxu0
        %v7943 = vadd.f32 %v7783, %v7942
        %v7944 = vpop.f32.mrb[0].mxu0
        %v7945 = vpop.f32.mrb[0].mxu0
        %v7946 = vadd.f32 %v7783, %v7945
        %v7947 = vpop.f32.mrb[0].mxu0
        %7948 = vmatprep.mubr.bf16.mxu0 0
        %7949 = vmatmul.mubr.bf16.gmra.mrb[0].mxu0 %v7841
        %v7950 = vpop.f32.mrb[0].mxu0
        %v7951 = vadd.f32 %v7783, %v7950
        %v7952 = vpop.f32.mrb[0].mxu0
        %v7953 = vpop.f32.mrb[0].mxu0
        %v7954 = vadd.f32 %v7783, %v7953
        %v7955 = vpop.f32.mrb[0].mxu0
        %7956 = vmatprep.mubr.bf16.mxu0 0
        %7957 = vmatmul.mubr.bf16.gmra.mrb[0].mxu0 %v7844
        %v7958 = vpop.f32.mrb[0].mxu0
        %v7959 = vadd.f32 %v7783, %v7958
        %v7960 = vpop.f32.mrb[0].mxu0
        %v7961 = vpop.f32.mrb[0].mxu0
        %v7962 = vadd.f32 %v7783, %v7961
        %v7963 = vpop.f32.mrb[0].mxu0
        %7964 = vmatprep.mubr.bf16.mxu0 0
        %7965 = vmatmul.mubr.bf16.gmra.mrb[0].mxu0 %v7847
        %v7966 = vpop.f32.mrb[0].mxu0
        %v7967 = vadd.f32 %v7783, %v7966
        %v7968 = vpop.f32.mrb[0].mxu0
        %v7969 = vpop.f32.mrb[0].mxu0
        %v7970 = vadd.f32 %v7783, %v7969
        %v7971 = vpop.f32.mrb[0].mxu0
        %7972 = vmatprep.mubr.bf16.mxu0 0
        %7973 = vmatmul.mubr.bf16.gmra.mrb[0].mxu0 %v7850
        %v7974 = vpop.f32.mrb[0].mxu0
        %v7975 = vadd.f32 %v7783, %v7974
        %v7976 = vpop.f32.mrb[0].mxu0
        %v7977 = vpop.f32.mrb[0].mxu0
        %v7978 = vadd.f32 %v7783, %v7977
        %v7979 = vpop.f32.mrb[0].mxu0
        %7980 = vmatprep.mubr.bf16.mxu0 0
        %7981 = vmatmul.mubr.bf16.gmra.mrb[0].mxu0 %v7853
        %v7982 = vpop.f32.mrb[0].mxu0
        %v7983 = vadd.f32 %v7783, %v7982
        %v7984 = vpop.f32.mrb[0].mxu0
        %v7985 = vpop.f32.mrb[0].mxu0
        %v7986 = vadd.f32 %v7783, %v7985
        %v7987 = vpop.f32.mrb[0].mxu0
        %7988 = vmatprep.mubr.bf16.mxu0 0
        %7989 = vmatmul.mubr.bf16.gmra.mrb[0].mxu0 %v7856
        %v7990 = vpop.f32.mrb[0].mxu0
        %v7991 = vadd.f32 %v7783, %v7990
        %v7992 = vpop.f32.mrb[0].mxu0
        %v7993 = vpop.f32.mrb[0].mxu0
        %v7994 = vadd.f32 %v7783, %v7993
        %v7995 = vpop.f32.mrb[0].mxu0
        %7996 = vmatprep.mubr.bf16.mxu0 0
        %7997 = vmatmul.mubr.bf16.gmra.mrb[0].mxu0 %v7859
        %v7998 = vpop.f32.mrb[0].mxu0
        %v7999 = vadd.f32 %v7783, %v7998
        %v8000 = vpop.f32.mrb[0].mxu0
        %v8001 = vpop.f32.mrb[0].mxu0
        %v8002 = vadd.f32 %v7783, %v8001
        %v8003 = vpop.f32.mrb[0].mxu0
        %8004 = vmatprep.mubr.bf16.mxu0 0
        %8005 = vmatmul.mubr.bf16.gmra.mrb[0].mxu0 %v7862
        %v8006 = vpop.f32.mrb[0].mxu0
        %v8007 = vadd.f32 %v7783, %v8006
        %v8008 = vpop.f32.mrb[0].mxu0
        %v8009 = vpop.f32.mrb[0].mxu0
        %v8010 = vadd.f32 %v7783, %v8009
        %v8011 = vpop.f32.mrb[0].mxu0
        %8012 = vmatprep.mubr.bf16.mxu0 0
        %8013 = vmatmul.mubr.bf16.gmra.mrb[0].mxu0 %v7865
        %v8014 = vpop.f32.mrb[0].mxu0
        %v8015 = vadd.f32 %v7783, %v8014
        %v8016 = vpop.f32.mrb[0].mxu0
        %v8017 = vpop.f32.mrb[0].mxu0
        %v8018 = vadd.f32 %v7783, %v8017
        %v8019 = vpop.f32.mrb[0].mxu0
        %8020 = vmatprep.mubr.bf16.mxu0 0
        %8021 = vmatmul.mubr.bf16.gmra.mrb[0].mxu0 %v7868
        %v8022 = vpop.f32.mrb[0].mxu0
        %v8023 = vadd.f32 %v7783, %v8022
        %v8024 = vpop.f32.mrb[0].mxu0
        %v8025 = vpop.f32.mrb[0].mxu0
        %v8026 = vadd.f32 %v7783, %v8025
        %v8027 = vpop.f32.mrb[0].mxu0
        %8028 = vmatprep.mubr.bf16.mxu0 0
        %8029 = vmatmul.mubr.bf16.gmra.mrb[0].mxu0 %v7871
        %v8030 = vpop.f32.mrb[0].mxu0
        %v8031 = vadd.f32 %v7783, %v8030
        %v8032 = vpop.f32.mrb[0].mxu0
        %v8033 = vpop.f32.mrb[0].mxu0
        %v8034 = vadd.f32 %v7783, %v8033
        %v8035 = vpop.f32.mrb[0].mxu0
        %8036 = vdwg.mxu0
        %v8037 = vmax.f32 %v7911, 0.0
        %v8038 = vmax.f32 %v7914, 0.0
        %v8039 = vmax.f32 %v7919, 0.0
        %v8040 = vmax.f32 %v7922, 0.0
        %v8041 = vmax.f32 %v7927, 0.0
        %v8042 = vmax.f32 %v7930, 0.0
        %v8043 = vmax.f32 %v7935, 0.0
        %v8044 = vmax.f32 %v7938, 0.0
        %v8045 = vmax.f32 %v7943, 0.0
        %v8046 = vmax.f32 %v7946, 0.0
        %v8047 = vmax.f32 %v7951, 0.0
        %v8048 = vmax.f32 %v7954, 0.0
        %v8049 = vmax.f32 %v7959, 0.0
        %v8050 = vmax.f32 %v7962, 0.0
        %v8051 = vmax.f32 %v7967, 0.0
        %v8052 = vmax.f32 %v7970, 0.0
        %v8053 = vmax.f32 %v7975, 0.0
        %v8054 = vmax.f32 %v7978, 0.0
        %v8055 = vmax.f32 %v7983, 0.0
        %v8056 = vmax.f32 %v7986, 0.0
        %v8057 = vmax.f32 %v7991, 0.0
        %v8058 = vmax.f32 %v7994, 0.0
        %v8059 = vmax.f32 %v7999, 0.0
        %v8060 = vmax.f32 %v8002, 0.0
        %v8061 = vmax.f32 %v8007, 0.0
        %v8062 = vmax.f32 %v8010, 0.0
        %v8063 = vmax.f32 %v8015, 0.0
        %v8064 = vmax.f32 %v8018, 0.0
        %v8065 = vmax.f32 %v8023, 0.0
        %v8066 = vmax.f32 %v8026, 0.0
        %v8067 = vmax.f32 %v8031, 0.0
        %v8068 = vmax.f32 %v8034, 0.0
        %8069 = vst.msk [vmem:[#allocation4] sm:$0xff] %vm388, -inf
        %8070 = vst.msk [vmem:[#allocation4 + $0x8] sm:$0xff] %vm388, -inf
        %8071 = vst.msk [vmem:[#allocation4 + $0x10] sm:$0x3] %vm636, -inf
        %s8072 = scalar_lea.vmem [#allocation4], 408
        %8073 = vst.msk [vmem:[%s8072] sm:$0xff] %vm388, -inf
        %8074 = vst.msk [vmem:[%s8072 + $0x8] sm:$0xff] %vm388, -inf
        %8075 = vst.msk [vmem:[%s8072 + $0x10] sm:$0x3] %vm636, -inf
        %v8108 = vrot.slane %v332, 7
        %v8109 = vrot.slane %v333, 7
        %v8110 = vsel %vm674, %v8108, %v8109
        %v8111 = vrot.slane %v334, 7
        %v8112 = vrot.slane %v335, 7
        %v8113 = vsel %vm674, %v8111, %v8112
        %v8114 = vrot.slane %v336, 7
        %v8115 = vrot.slane %v337, 7
        %v8116 = vsel %vm674, %v8114, %v8115
        %v8117 = vrot.slane %v338, 7
        %v8118 = vrot.slane %v339, 7
        %v8119 = vsel %vm674, %v8117, %v8118
        %v8120 = vrot.slane %v340, 7
        %v8121 = vrot.slane %v341, 7
        %v8122 = vsel %vm674, %v8120, %v8121
        %v8123 = vrot.slane %v342, 7
        %v8124 = vrot.slane %v343, 7
        %v8125 = vsel %vm674, %v8123, %v8124
        %v8126 = vrot.slane %v344, 7
        %v8127 = vrot.slane %v345, 7
        %v8128 = vsel %vm674, %v8126, %v8127
        %v8129 = vrot.slane %v346, 7
        %v8130 = vrot.slane %v347, 7
        %v8131 = vsel %vm674, %v8129, %v8130
        %v8132 = vrot.slane %v348, 7
        %v8133 = vrot.slane %v349, 7
        %v8134 = vsel %vm674, %v8132, %v8133
        %v8135 = vrot.slane %v350, 7
        %v8136 = vrot.slane %v351, 7
        %v8137 = vsel %vm674, %v8135, %v8136
        %v8138 = vrot.slane %v352, 7
        %v8139 = vrot.slane %v353, 7
        %v8140 = vsel %vm674, %v8138, %v8139
        %v8141 = vrot.slane %v354, 7
        %v8142 = vrot.slane %v355, 7
        %v8143 = vsel %vm674, %v8141, %v8142
        %v8144 = vrot.slane %v356, 7
        %v8145 = vrot.slane %v357, 7
        %v8146 = vsel %vm674, %v8144, %v8145
        %v8147 = vrot.slane %v358, 7
        %v8148 = vrot.slane %v359, 7
        %v8149 = vsel %vm674, %v8147, %v8148
        %v8150 = vrot.slane %v360, 7
        %v8151 = vrot.slane %v361, 7
        %v8152 = vsel %vm674, %v8150, %v8151
        %v8153 = vrot.slane %v362, 7
        %v8154 = vrot.slane %v363, 7
        %v8155 = vsel %vm674, %v8153, %v8154
        %v8204 = vsel %vm674, -inf, %v8108
        %v8205 = vsel %vm674, -inf, %v8111
        %v8206 = vsel %vm674, -inf, %v8114
        %v8207 = vsel %vm674, -inf, %v8117
        %v8208 = vsel %vm674, -inf, %v8120
        %v8209 = vsel %vm674, -inf, %v8123
        %v8210 = vsel %vm674, -inf, %v8126
        %v8211 = vsel %vm674, -inf, %v8129
        %v8212 = vsel %vm674, -inf, %v8132
        %v8213 = vsel %vm674, -inf, %v8135
        %v8214 = vsel %vm674, -inf, %v8138
        %v8215 = vsel %vm674, -inf, %v8141
        %v8216 = vsel %vm674, -inf, %v8144
        %v8217 = vsel %vm674, -inf, %v8147
        %v8218 = vsel %vm674, -inf, %v8150
        %v8219 = vsel %vm674, -inf, %v8153
        %v8220 = vsel %vm674, %v8109, -inf
        %v8221 = vsel %vm674, %v8112, -inf
        %v8222 = vsel %vm674, %v8115, -inf
        %v8223 = vsel %vm674, %v8118, -inf
        %v8224 = vsel %vm674, %v8121, -inf
        %v8225 = vsel %vm674, %v8124, -inf
        %v8226 = vsel %vm674, %v8127, -inf
        %v8227 = vsel %vm674, %v8130, -inf
        %v8228 = vsel %vm674, %v8133, -inf
        %v8229 = vsel %vm674, %v8136, -inf
        %v8230 = vsel %vm674, %v8139, -inf
        %v8231 = vsel %vm674, %v8142, -inf
        %v8232 = vsel %vm674, %v8145, -inf
        %v8233 = vsel %vm674, %v8148, -inf
        %v8234 = vsel %vm674, %v8151, -inf
        %v8235 = vsel %vm674, %v8154, -inf
        %s8236 = scalar_lea.vmem [#allocation4], 24
        %8237 = vst.msk [vmem:[%s8236] sm:$0xff] %vm388, %v8204
        %8238 = vst.msk [vmem:[%s8236 + $0x8] sm:$0xff] %vm388, %v8110
        %8239 = vst.msk [vmem:[%s8236 + $0x10] sm:$0x3] %vm636, %v8220
        %8240 = vst.msk [vmem:[%s8236 + $0x18] sm:$0xff] %vm388, %v8205
        %8241 = vst.msk [vmem:[%s8236 + $0x20] sm:$0xff] %vm388, %v8113
        %8242 = vst.msk [vmem:[%s8236 + $0x28] sm:$0x3] %vm636, %v8221
        %8243 = vst.msk [vmem:[%s8236 + $0x30] sm:$0xff] %vm388, %v8206
        %8244 = vst.msk [vmem:[%s8236 + $0x38] sm:$0xff] %vm388, %v8116
        %8245 = vst.msk [vmem:[%s8236 + $0x40] sm:$0x3] %vm636, %v8222
        %8246 = vst.msk [vmem:[%s8236 + $0x48] sm:$0xff] %vm388, %v8207
        %8247 = vst.msk [vmem:[%s8236 + $0x50] sm:$0xff] %vm388, %v8119
        %8248 = vst.msk [vmem:[%s8236 + $0x58] sm:$0x3] %vm636, %v8223
        %8249 = vst.msk [vmem:[%s8236 + $0x60] sm:$0xff] %vm388, %v8208
        %8250 = vst.msk [vmem:[%s8236 + $0x68] sm:$0xff] %vm388, %v8122
        %8251 = vst.msk [vmem:[%s8236 + $0x70] sm:$0x3] %vm636, %v8224
        %8252 = vst.msk [vmem:[%s8236 + $0x78] sm:$0xff] %vm388, %v8209
        %8253 = vst.msk [vmem:[%s8236 + $0x80] sm:$0xff] %vm388, %v8125
        %8254 = vst.msk [vmem:[%s8236 + $0x88] sm:$0x3] %vm636, %v8225
        %8255 = vst.msk [vmem:[%s8236 + $0x90] sm:$0xff] %vm388, %v8210
        %8256 = vst.msk [vmem:[%s8236 + $0x98] sm:$0xff] %vm388, %v8128
        %8257 = vst.msk [vmem:[%s8236 + $0xa0] sm:$0x3] %vm636, %v8226
        %8258 = vst.msk [vmem:[%s8236 + $0xa8] sm:$0xff] %vm388, %v8211
        %8259 = vst.msk [vmem:[%s8236 + $0xb0] sm:$0xff] %vm388, %v8131
        %8260 = vst.msk [vmem:[%s8236 + $0xb8] sm:$0x3] %vm636, %v8227
        %8261 = vst.msk [vmem:[%s8236 + $0xc0] sm:$0xff] %vm388, %v8212
        %8262 = vst.msk [vmem:[%s8236 + $0xc8] sm:$0xff] %vm388, %v8134
        %8263 = vst.msk [vmem:[%s8236 + $0xd0] sm:$0x3] %vm636, %v8228
        %8264 = vst.msk [vmem:[%s8236 + $0xd8] sm:$0xff] %vm388, %v8213
        %8265 = vst.msk [vmem:[%s8236 + $0xe0] sm:$0xff] %vm388, %v8137
        %8266 = vst.msk [vmem:[%s8236 + $0xe8] sm:$0x3] %vm636, %v8229
        %8267 = vst.msk [vmem:[%s8236 + $0xf0] sm:$0xff] %vm388, %v8214
        %8268 = vst.msk [vmem:[%s8236 + $0xf8] sm:$0xff] %vm388, %v8140
        %8269 = vst.msk [vmem:[%s8236 + $0x100] sm:$0x3] %vm636, %v8230
        %8270 = vst.msk [vmem:[%s8236 + $0x108] sm:$0xff] %vm388, %v8215
        %8271 = vst.msk [vmem:[%s8236 + $0x110] sm:$0xff] %vm388, %v8143
        %8272 = vst.msk [vmem:[%s8236 + $0x118] sm:$0x3] %vm636, %v8231
        %8273 = vst.msk [vmem:[%s8236 + $0x120] sm:$0xff] %vm388, %v8216
        %8274 = vst.msk [vmem:[%s8236 + $0x128] sm:$0xff] %vm388, %v8146
        %8275 = vst.msk [vmem:[%s8236 + $0x130] sm:$0x3] %vm636, %v8232
        %8276 = vst.msk [vmem:[%s8236 + $0x138] sm:$0xff] %vm388, %v8217
        %8277 = vst.msk [vmem:[%s8236 + $0x140] sm:$0xff] %vm388, %v8149
        %8278 = vst.msk [vmem:[%s8236 + $0x148] sm:$0x3] %vm636, %v8233
        %8279 = vst.msk [vmem:[%s8236 + $0x150] sm:$0xff] %vm388, %v8218
        %8280 = vst.msk [vmem:[%s8236 + $0x158] sm:$0xff] %vm388, %v8152
        %8281 = vst.msk [vmem:[%s8236 + $0x160] sm:$0x3] %vm636, %v8234
        %8282 = vst.msk [vmem:[%s8236 + $0x168] sm:$0xff] %vm388, %v8219
        %8283 = vst.msk [vmem:[%s8236 + $0x170] sm:$0xff] %vm388, %v8155
        %8284 = vst.msk [vmem:[%s8236 + $0x178] sm:$0x3] %vm636, %v8235
        %v8285 = vld [vmem:[#allocation4] sm:$0xff]
        %v8286 = vld [vmem:[#allocation4 + $0x8] sm:$0xff]
        %v8287 = vld [vmem:[#allocation4 + $0x10] sm:$0x3]
        %v8288 = vld [vmem:[#allocation4 + $0x18] sm:$0xff]
        %v8289 = vld [vmem:[#allocation4 + $0x20] sm:$0xff]
        %v8290 = vld [vmem:[#allocation4 + $0x28] sm:$0x3]
        %v8291 = vld [vmem:[#allocation4 + $0x30] sm:$0xff]
        %v8292 = vld [vmem:[#allocation4 + $0x38] sm:$0xff]
        %v8293 = vld [vmem:[#allocation4 + $0x40] sm:$0x3]
        %v8294 = vld [vmem:[#allocation4 + $0x48] sm:$0xff]
        %v8295 = vld [vmem:[#allocation4 + $0x50] sm:$0xff]
        %v8296 = vld [vmem:[#allocation4 + $0x58] sm:$0x3]
        %v8297 = vld [vmem:[#allocation4 + $0x60] sm:$0xff]
        %v8298 = vld [vmem:[#allocation4 + $0x68] sm:$0xff]
        %v8299 = vld [vmem:[#allocation4 + $0x70] sm:$0x3]
        %v8300 = vld [vmem:[#allocation4 + $0x78] sm:$0xff]
        %v8301 = vld [vmem:[#allocation4 + $0x80] sm:$0xff]
        %v8302 = vld [vmem:[#allocation4 + $0x88] sm:$0x3]
        %v8303 = vld [vmem:[#allocation4 + $0x90] sm:$0xff]
        %v8304 = vld [vmem:[#allocation4 + $0x98] sm:$0xff]
        %v8305 = vld [vmem:[#allocation4 + $0xa0] sm:$0x3]
        %v8306 = vld [vmem:[#allocation4 + $0xa8] sm:$0xff]
        %v8307 = vld [vmem:[#allocation4 + $0xb0] sm:$0xff]
        %v8308 = vld [vmem:[#allocation4 + $0xb8] sm:$0x3]
        %v8309 = vld [vmem:[#allocation4 + $0xc0] sm:$0xff]
        %v8310 = vld [vmem:[#allocation4 + $0xc8] sm:$0xff]
        %v8311 = vld [vmem:[#allocation4 + $0xd0] sm:$0x3]
        %v8312 = vld [vmem:[#allocation4 + $0xd8] sm:$0xff]
        %v8313 = vld [vmem:[#allocation4 + $0xe0] sm:$0xff]
        %v8314 = vld [vmem:[#allocation4 + $0xe8] sm:$0x3]
        %v8315 = vld [vmem:[#allocation4 + $0xf0] sm:$0xff]
        %v8316 = vld [vmem:[#allocation4 + $0xf8] sm:$0xff]
        %v8317 = vld [vmem:[#allocation4 + $0x100] sm:$0x3]
        %v8318 = vld [vmem:[#allocation4 + $0x108] sm:$0xff]
        %v8319 = vld [vmem:[#allocation4 + $0x110] sm:$0xff]
        %v8320 = vld [vmem:[#allocation4 + $0x118] sm:$0x3]
        %v8321 = vld [vmem:[#allocation4 + $0x120] sm:$0xff]
        %v8322 = vld [vmem:[#allocation4 + $0x128] sm:$0xff]
        %v8323 = vld [vmem:[#allocation4 + $0x130] sm:$0x3]
        %v8324 = vld [vmem:[#allocation4 + $0x138] sm:$0xff]
        %v8325 = vld [vmem:[#allocation4 + $0x140] sm:$0xff]
        %v8326 = vld [vmem:[#allocation4 + $0x148] sm:$0x3]
        %v8327 = vld [vmem:[#allocation4 + $0x150] sm:$0xff]
        %v8328 = vld [vmem:[#allocation4 + $0x158] sm:$0xff]
        %v8329 = vld [vmem:[#allocation4 + $0x160] sm:$0x3]
        %v8330 = vld [vmem:[#allocation4 + $0x168] sm:$0xff]
        %v8331 = vld [vmem:[#allocation4 + $0x170] sm:$0xff]
        %v8332 = vld [vmem:[#allocation4 + $0x178] sm:$0x3]
        %v8333 = vld [vmem:[%s8236] sm:$0xff]
        %v8334 = vld [vmem:[%s8236 + $0x8] sm:$0xff]
        %v8335 = vld [vmem:[%s8236 + $0x10] sm:$0x3]
        %v8336 = vld [vmem:[%s8236 + $0x18] sm:$0xff]
        %v8337 = vld [vmem:[%s8236 + $0x20] sm:$0xff]
        %v8338 = vld [vmem:[%s8236 + $0x28] sm:$0x3]
        %v8339 = vld [vmem:[%s8236 + $0x30] sm:$0xff]
        %v8340 = vld [vmem:[%s8236 + $0x38] sm:$0xff]
        %v8341 = vld [vmem:[%s8236 + $0x40] sm:$0x3]
        %v8342 = vld [vmem:[%s8236 + $0x48] sm:$0xff]
        %v8343 = vld [vmem:[%s8236 + $0x50] sm:$0xff]
        %v8344 = vld [vmem:[%s8236 + $0x58] sm:$0x3]
        %v8345 = vld [vmem:[%s8236 + $0x60] sm:$0xff]
        %v8346 = vld [vmem:[%s8236 + $0x68] sm:$0xff]
        %v8347 = vld [vmem:[%s8236 + $0x70] sm:$0x3]
        %v8348 = vld [vmem:[%s8236 + $0x78] sm:$0xff]
        %v8349 = vld [vmem:[%s8236 + $0x80] sm:$0xff]
        %v8350 = vld [vmem:[%s8236 + $0x88] sm:$0x3]
        %v8351 = vld [vmem:[%s8236 + $0x90] sm:$0xff]
        %v8352 = vld [vmem:[%s8236 + $0x98] sm:$0xff]
        %v8353 = vld [vmem:[%s8236 + $0xa0] sm:$0x3]
        %v8354 = vld [vmem:[%s8236 + $0xa8] sm:$0xff]
        %v8355 = vld [vmem:[%s8236 + $0xb0] sm:$0xff]
        %v8356 = vld [vmem:[%s8236 + $0xb8] sm:$0x3]
        %v8357 = vld [vmem:[%s8236 + $0xc0] sm:$0xff]
        %v8358 = vld [vmem:[%s8236 + $0xc8] sm:$0xff]
        %v8359 = vld [vmem:[%s8236 + $0xd0] sm:$0x3]
        %v8360 = vld [vmem:[%s8236 + $0xd8] sm:$0xff]
        %v8361 = vld [vmem:[%s8236 + $0xe0] sm:$0xff]
        %v8362 = vld [vmem:[%s8236 + $0xe8] sm:$0x3]
        %v8363 = vld [vmem:[%s8236 + $0xf0] sm:$0xff]
        %v8364 = vld [vmem:[%s8236 + $0xf8] sm:$0xff]
        %v8365 = vld [vmem:[%s8236 + $0x100] sm:$0x3]
        %v8366 = vld [vmem:[%s8236 + $0x108] sm:$0xff]
        %v8367 = vld [vmem:[%s8236 + $0x110] sm:$0xff]
        %v8368 = vld [vmem:[%s8236 + $0x118] sm:$0x3]
        %v8369 = vld [vmem:[%s8236 + $0x120] sm:$0xff]
        %v8370 = vld [vmem:[%s8236 + $0x128] sm:$0xff]
        %v8371 = vld [vmem:[%s8236 + $0x130] sm:$0x3]
        %v8372 = vld [vmem:[%s8236 + $0x138] sm:$0xff]
        %v8373 = vld [vmem:[%s8236 + $0x140] sm:$0xff]
        %v8374 = vld [vmem:[%s8236 + $0x148] sm:$0x3]
        %v8375 = vld [vmem:[%s8236 + $0x150] sm:$0xff]
        %v8376 = vld [vmem:[%s8236 + $0x158] sm:$0xff]
        %v8377 = vld [vmem:[%s8236 + $0x160] sm:$0x3]
        %v8378 = vld [vmem:[%s8236 + $0x168] sm:$0xff]
        %v8379 = vld [vmem:[%s8236 + $0x170] sm:$0xff]
        %v8380 = vld [vmem:[%s8236 + $0x178] sm:$0x3]
        %v8381 = vmax.f32 %v8285, %v8333
        %v8382 = vmax.f32 %v8286, %v8334
        %v8383 = vmax.f32 %v8287, %v8335
        %v8384 = vmax.f32 %v8288, %v8336
        %v8385 = vmax.f32 %v8289, %v8337
        %v8386 = vmax.f32 %v8290, %v8338
        %v8387 = vmax.f32 %v8291, %v8339
        %v8388 = vmax.f32 %v8292, %v8340
        %v8389 = vmax.f32 %v8293, %v8341
        %v8390 = vmax.f32 %v8294, %v8342
        %v8391 = vmax.f32 %v8295, %v8343
        %v8392 = vmax.f32 %v8296, %v8344
        %v8393 = vmax.f32 %v8297, %v8345
        %v8394 = vmax.f32 %v8298, %v8346
        %v8395 = vmax.f32 %v8299, %v8347
        %v8396 = vmax.f32 %v8300, %v8348
        %v8397 = vmax.f32 %v8301, %v8349
        %v8398 = vmax.f32 %v8302, %v8350
        %v8399 = vmax.f32 %v8303, %v8351
        %v8400 = vmax.f32 %v8304, %v8352
        %v8401 = vmax.f32 %v8305, %v8353
        %v8402 = vmax.f32 %v8306, %v8354
        %v8403 = vmax.f32 %v8307, %v8355
        %v8404 = vmax.f32 %v8308, %v8356
        %v8405 = vmax.f32 %v8309, %v8357
        %v8406 = vmax.f32 %v8310, %v8358
        %v8407 = vmax.f32 %v8311, %v8359
        %v8408 = vmax.f32 %v8312, %v8360
        %v8409 = vmax.f32 %v8313, %v8361
        %v8410 = vmax.f32 %v8314, %v8362
        %v8411 = vmax.f32 %v8315, %v8363
        %v8412 = vmax.f32 %v8316, %v8364
        %v8413 = vmax.f32 %v8317, %v8365
        %v8414 = vmax.f32 %v8318, %v8366
        %v8415 = vmax.f32 %v8319, %v8367
        %v8416 = vmax.f32 %v8320, %v8368
        %v8417 = vmax.f32 %v8321, %v8369
        %v8418 = vmax.f32 %v8322, %v8370
        %v8419 = vmax.f32 %v8323, %v8371
        %v8420 = vmax.f32 %v8324, %v8372
        %v8421 = vmax.f32 %v8325, %v8373
        %v8422 = vmax.f32 %v8326, %v8374
        %v8423 = vmax.f32 %v8327, %v8375
        %v8424 = vmax.f32 %v8328, %v8376
        %v8425 = vmax.f32 %v8329, %v8377
        %v8426 = vmax.f32 %v8330, %v8378
        %v8427 = vmax.f32 %v8331, %v8379
        %v8428 = vmax.f32 %v8332, %v8380
        %s8429 = scalar_lea.vmem [#allocation4], 48
        %v8430 = vld [vmem:[%s8429] sm:$0xff]
        %v8431 = vld [vmem:[%s8429 + $0x8] sm:$0xff]
        %v8432 = vld [vmem:[%s8429 + $0x10] sm:$0x3]
        %v8433 = vld [vmem:[%s8429 + $0x18] sm:$0xff]
        %v8434 = vld [vmem:[%s8429 + $0x20] sm:$0xff]
        %v8435 = vld [vmem:[%s8429 + $0x28] sm:$0x3]
        %v8436 = vld [vmem:[%s8429 + $0x30] sm:$0xff]
        %v8437 = vld [vmem:[%s8429 + $0x38] sm:$0xff]
        %v8438 = vld [vmem:[%s8429 + $0x40] sm:$0x3]
        %v8439 = vld [vmem:[%s8429 + $0x48] sm:$0xff]
        %v8440 = vld [vmem:[%s8429 + $0x50] sm:$0xff]
        %v8441 = vld [vmem:[%s8429 + $0x58] sm:$0x3]
        %v8442 = vld [vmem:[%s8429 + $0x60] sm:$0xff]
        %v8443 = vld [vmem:[%s8429 + $0x68] sm:$0xff]
        %v8444 = vld [vmem:[%s8429 + $0x70] sm:$0x3]
        %v8445 = vld [vmem:[%s8429 + $0x78] sm:$0xff]
        %v8446 = vld [vmem:[%s8429 + $0x80] sm:$0xff]
        %v8447 = vld [vmem:[%s8429 + $0x88] sm:$0x3]
        %v8448 = vld [vmem:[%s8429 + $0x90] sm:$0xff]
        %v8449 = vld [vmem:[%s8429 + $0x98] sm:$0xff]
        %v8450 = vld [vmem:[%s8429 + $0xa0] sm:$0x3]
        %v8451 = vld [vmem:[%s8429 + $0xa8] sm:$0xff]
        %v8452 = vld [vmem:[%s8429 + $0xb0] sm:$0xff]
        %v8453 = vld [vmem:[%s8429 + $0xb8] sm:$0x3]
        %v8454 = vld [vmem:[%s8429 + $0xc0] sm:$0xff]
        %v8455 = vld [vmem:[%s8429 + $0xc8] sm:$0xff]
        %v8456 = vld [vmem:[%s8429 + $0xd0] sm:$0x3]
        %v8457 = vld [vmem:[%s8429 + $0xd8] sm:$0xff]
        %v8458 = vld [vmem:[%s8429 + $0xe0] sm:$0xff]
        %v8459 = vld [vmem:[%s8429 + $0xe8] sm:$0x3]
        %v8460 = vld [vmem:[%s8429 + $0xf0] sm:$0xff]
        %v8461 = vld [vmem:[%s8429 + $0xf8] sm:$0xff]
        %v8462 = vld [vmem:[%s8429 + $0x100] sm:$0x3]
        %v8463 = vld [vmem:[%s8429 + $0x108] sm:$0xff]
        %v8464 = vld [vmem:[%s8429 + $0x110] sm:$0xff]
        %v8465 = vld [vmem:[%s8429 + $0x118] sm:$0x3]
        %v8466 = vld [vmem:[%s8429 + $0x120] sm:$0xff]
        %v8467 = vld [vmem:[%s8429 + $0x128] sm:$0xff]
        %v8468 = vld [vmem:[%s8429 + $0x130] sm:$0x3]
        %v8469 = vld [vmem:[%s8429 + $0x138] sm:$0xff]
        %v8470 = vld [vmem:[%s8429 + $0x140] sm:$0xff]
        %v8471 = vld [vmem:[%s8429 + $0x148] sm:$0x3]
        %v8472 = vld [vmem:[%s8429 + $0x150] sm:$0xff]
        %v8473 = vld [vmem:[%s8429 + $0x158] sm:$0xff]
        %v8474 = vld [vmem:[%s8429 + $0x160] sm:$0x3]
        %v8475 = vld [vmem:[%s8429 + $0x168] sm:$0xff]
        %v8476 = vld [vmem:[%s8429 + $0x170] sm:$0xff]
        %v8477 = vld [vmem:[%s8429 + $0x178] sm:$0x3]
        %v8478 = vmax.f32 %v8381, %v8430
        %v8479 = vmax.f32 %v8382, %v8431
        %v8480 = vmax.f32 %v8383, %v8432
        %v8481 = vmax.f32 %v8384, %v8433
        %v8482 = vmax.f32 %v8385, %v8434
        %v8483 = vmax.f32 %v8386, %v8435
        %v8484 = vmax.f32 %v8387, %v8436
        %v8485 = vmax.f32 %v8388, %v8437
        %v8486 = vmax.f32 %v8389, %v8438
        %v8487 = vmax.f32 %v8390, %v8439
        %v8488 = vmax.f32 %v8391, %v8440
        %v8489 = vmax.f32 %v8392, %v8441
        %v8490 = vmax.f32 %v8393, %v8442
        %v8491 = vmax.f32 %v8394, %v8443
        %v8492 = vmax.f32 %v8395, %v8444
        %v8493 = vmax.f32 %v8396, %v8445
        %v8494 = vmax.f32 %v8397, %v8446
        %v8495 = vmax.f32 %v8398, %v8447
        %v8496 = vmax.f32 %v8399, %v8448
        %v8497 = vmax.f32 %v8400, %v8449
        %v8498 = vmax.f32 %v8401, %v8450
        %v8499 = vmax.f32 %v8402, %v8451
        %v8500 = vmax.f32 %v8403, %v8452
        %v8501 = vmax.f32 %v8404, %v8453
        %v8502 = vmax.f32 %v8405, %v8454
        %v8503 = vmax.f32 %v8406, %v8455
        %v8504 = vmax.f32 %v8407, %v8456
        %v8505 = vmax.f32 %v8408, %v8457
        %v8506 = vmax.f32 %v8409, %v8458
        %v8507 = vmax.f32 %v8410, %v8459
        %v8508 = vmax.f32 %v8411, %v8460
        %v8509 = vmax.f32 %v8412, %v8461
        %v8510 = vmax.f32 %v8413, %v8462
        %v8511 = vmax.f32 %v8414, %v8463
        %v8512 = vmax.f32 %v8415, %v8464
        %v8513 = vmax.f32 %v8416, %v8465
        %v8514 = vmax.f32 %v8417, %v8466
        %v8515 = vmax.f32 %v8418, %v8467
        %v8516 = vmax.f32 %v8419, %v8468
        %v8517 = vmax.f32 %v8420, %v8469
        %v8518 = vmax.f32 %v8421, %v8470
        %v8519 = vmax.f32 %v8422, %v8471
        %v8520 = vmax.f32 %v8423, %v8472
        %v8521 = vmax.f32 %v8424, %v8473
        %v8522 = vmax.f32 %v8425, %v8474
        %v8523 = vmax.f32 %v8426, %v8475
        %v8524 = vmax.f32 %v8427, %v8476
        %v8525 = vmax.f32 %v8428, %v8477
        %vm8574 = vcmask 1046528
        %v8575 = vrot.slane %v8478, 1
        %v8576 = vrot.slane %v8479, 1
        %v8577 = vsel %vm8574, %v8575, %v8576
        %v8578 = vrot.slane %v8480, 1
        %v8579 = vsel %vm8574, %v8576, %v8578
        %v8580 = vrot.slane %v8481, 1
        %v8581 = vrot.slane %v8482, 1
        %v8582 = vsel %vm8574, %v8580, %v8581
        %v8583 = vrot.slane %v8483, 1
        %v8584 = vsel %vm8574, %v8581, %v8583
        %v8585 = vrot.slane %v8484, 1
        %v8586 = vrot.slane %v8485, 1
        %v8587 = vsel %vm8574, %v8585, %v8586
        %v8588 = vrot.slane %v8486, 1
        %v8589 = vsel %vm8574, %v8586, %v8588
        %v8590 = vrot.slane %v8487, 1
        %v8591 = vrot.slane %v8488, 1
        %v8592 = vsel %vm8574, %v8590, %v8591
        %v8593 = vrot.slane %v8489, 1
        %v8594 = vsel %vm8574, %v8591, %v8593
        %v8595 = vrot.slane %v8490, 1
        %v8596 = vrot.slane %v8491, 1
        %v8597 = vsel %vm8574, %v8595, %v8596
        %v8598 = vrot.slane %v8492, 1
        %v8599 = vsel %vm8574, %v8596, %v8598
        %v8600 = vrot.slane %v8493, 1
        %v8601 = vrot.slane %v8494, 1
        %v8602 = vsel %vm8574, %v8600, %v8601
        %v8603 = vrot.slane %v8495, 1
        %v8604 = vsel %vm8574, %v8601, %v8603
        %v8605 = vrot.slane %v8496, 1
        %v8606 = vrot.slane %v8497, 1
        %v8607 = vsel %vm8574, %v8605, %v8606
        %v8608 = vrot.slane %v8498, 1
        %v8609 = vsel %vm8574, %v8606, %v8608
        %v8610 = vrot.slane %v8499, 1
        %v8611 = vrot.slane %v8500, 1
        %v8612 = vsel %vm8574, %v8610, %v8611
        %v8613 = vrot.slane %v8501, 1
        %v8614 = vsel %vm8574, %v8611, %v8613
        %v8615 = vrot.slane %v8502, 1
        %v8616 = vrot.slane %v8503, 1
        %v8617 = vsel %vm8574, %v8615, %v8616
        %v8618 = vrot.slane %v8504, 1
        %v8619 = vsel %vm8574, %v8616, %v8618
        %v8620 = vrot.slane %v8505, 1
        %v8621 = vrot.slane %v8506, 1
        %v8622 = vsel %vm8574, %v8620, %v8621
        %v8623 = vrot.slane %v8507, 1
        %v8624 = vsel %vm8574, %v8621, %v8623
        %v8625 = vrot.slane %v8508, 1
        %v8626 = vrot.slane %v8509, 1
        %v8627 = vsel %vm8574, %v8625, %v8626
        %v8628 = vrot.slane %v8510, 1
        %v8629 = vsel %vm8574, %v8626, %v8628
        %v8630 = vrot.slane %v8511, 1
        %v8631 = vrot.slane %v8512, 1
        %v8632 = vsel %vm8574, %v8630, %v8631
        %v8633 = vrot.slane %v8513, 1
        %v8634 = vsel %vm8574, %v8631, %v8633
        %v8635 = vrot.slane %v8514, 1
        %v8636 = vrot.slane %v8515, 1
        %v8637 = vsel %vm8574, %v8635, %v8636
        %v8638 = vrot.slane %v8516, 1
        %v8639 = vsel %vm8574, %v8636, %v8638
        %v8640 = vrot.slane %v8517, 1
        %v8641 = vrot.slane %v8518, 1
        %v8642 = vsel %vm8574, %v8640, %v8641
        %v8643 = vrot.slane %v8519, 1
        %v8644 = vsel %vm8574, %v8641, %v8643
        %v8645 = vrot.slane %v8520, 1
        %v8646 = vrot.slane %v8521, 1
        %v8647 = vsel %vm8574, %v8645, %v8646
        %v8648 = vrot.slane %v8522, 1
        %v8649 = vsel %vm8574, %v8646, %v8648
        %v8650 = vrot.slane %v8523, 1
        %v8651 = vrot.slane %v8524, 1
        %v8652 = vsel %vm8574, %v8650, %v8651
        %v8653 = vrot.slane %v8525, 1
        %v8654 = vsel %vm8574, %v8651, %v8653
        %v8687 = vmax.f32 %v8478, %v8577
        %v8688 = vmax.f32 %v8479, %v8579
        %v8689 = vmax.f32 %v8481, %v8582
        %v8690 = vmax.f32 %v8482, %v8584
        %v8691 = vmax.f32 %v8484, %v8587
        %v8692 = vmax.f32 %v8485, %v8589
        %v8693 = vmax.f32 %v8487, %v8592
        %v8694 = vmax.f32 %v8488, %v8594
        %v8695 = vmax.f32 %v8490, %v8597
        %v8696 = vmax.f32 %v8491, %v8599
        %v8697 = vmax.f32 %v8493, %v8602
        %v8698 = vmax.f32 %v8494, %v8604
        %v8699 = vmax.f32 %v8496, %v8607
        %v8700 = vmax.f32 %v8497, %v8609
        %v8701 = vmax.f32 %v8499, %v8612
        %v8702 = vmax.f32 %v8500, %v8614
        %v8703 = vmax.f32 %v8502, %v8617
        %v8704 = vmax.f32 %v8503, %v8619
        %v8705 = vmax.f32 %v8505, %v8622
        %v8706 = vmax.f32 %v8506, %v8624
        %v8707 = vmax.f32 %v8508, %v8627
        %v8708 = vmax.f32 %v8509, %v8629
        %v8709 = vmax.f32 %v8511, %v8632
        %v8710 = vmax.f32 %v8512, %v8634
        %v8711 = vmax.f32 %v8514, %v8637
        %v8712 = vmax.f32 %v8515, %v8639
        %v8713 = vmax.f32 %v8517, %v8642
        %v8714 = vmax.f32 %v8518, %v8644
        %v8715 = vmax.f32 %v8520, %v8647
        %v8716 = vmax.f32 %v8521, %v8649
        %v8717 = vmax.f32 %v8523, %v8652
        %v8718 = vmax.f32 %v8524, %v8654
        %vm8719 = vcmask 1045504
        %v8720 = vrot.slane %v8478, 2
        %v8721 = vrot.slane %v8479, 2
        %v8722 = vsel %vm8719, %v8720, %v8721
        %v8723 = vrot.slane %v8480, 2
        %v8724 = vsel %vm8719, %v8721, %v8723
        %v8725 = vrot.slane %v8481, 2
        %v8726 = vrot.slane %v8482, 2
        %v8727 = vsel %vm8719, %v8725, %v8726
        %v8728 = vrot.slane %v8483, 2
        %v8729 = vsel %vm8719, %v8726, %v8728
        %v8730 = vrot.slane %v8484, 2
        %v8731 = vrot.slane %v8485, 2
        %v8732 = vsel %vm8719, %v8730, %v8731
        %v8733 = vrot.slane %v8486, 2
        %v8734 = vsel %vm8719, %v8731, %v8733
        %v8735 = vrot.slane %v8487, 2
        %v8736 = vrot.slane %v8488, 2
        %v8737 = vsel %vm8719, %v8735, %v8736
        %v8738 = vrot.slane %v8489, 2
        %v8739 = vsel %vm8719, %v8736, %v8738
        %v8740 = vrot.slane %v8490, 2
        %v8741 = vrot.slane %v8491, 2
        %v8742 = vsel %vm8719, %v8740, %v8741
        %v8743 = vrot.slane %v8492, 2
        %v8744 = vsel %vm8719, %v8741, %v8743
        %v8745 = vrot.slane %v8493, 2
        %v8746 = vrot.slane %v8494, 2
        %v8747 = vsel %vm8719, %v8745, %v8746
        %v8748 = vrot.slane %v8495, 2
        %v8749 = vsel %vm8719, %v8746, %v8748
        %v8750 = vrot.slane %v8496, 2
        %v8751 = vrot.slane %v8497, 2
        %v8752 = vsel %vm8719, %v8750, %v8751
        %v8753 = vrot.slane %v8498, 2
        %v8754 = vsel %vm8719, %v8751, %v8753
        %v8755 = vrot.slane %v8499, 2
        %v8756 = vrot.slane %v8500, 2
        %v8757 = vsel %vm8719, %v8755, %v8756
        %v8758 = vrot.slane %v8501, 2
        %v8759 = vsel %vm8719, %v8756, %v8758
        %v8760 = vrot.slane %v8502, 2
        %v8761 = vrot.slane %v8503, 2
        %v8762 = vsel %vm8719, %v8760, %v8761
        %v8763 = vrot.slane %v8504, 2
        %v8764 = vsel %vm8719, %v8761, %v8763
        %v8765 = vrot.slane %v8505, 2
        %v8766 = vrot.slane %v8506, 2
        %v8767 = vsel %vm8719, %v8765, %v8766
        %v8768 = vrot.slane %v8507, 2
        %v8769 = vsel %vm8719, %v8766, %v8768
        %v8770 = vrot.slane %v8508, 2
        %v8771 = vrot.slane %v8509, 2
        %v8772 = vsel %vm8719, %v8770, %v8771
        %v8773 = vrot.slane %v8510, 2
        %v8774 = vsel %vm8719, %v8771, %v8773
        %v8775 = vrot.slane %v8511, 2
        %v8776 = vrot.slane %v8512, 2
        %v8777 = vsel %vm8719, %v8775, %v8776
        %v8778 = vrot.slane %v8513, 2
        %v8779 = vsel %vm8719, %v8776, %v8778
        %v8780 = vrot.slane %v8514, 2
        %v8781 = vrot.slane %v8515, 2
        %v8782 = vsel %vm8719, %v8780, %v8781
        %v8783 = vrot.slane %v8516, 2
        %v8784 = vsel %vm8719, %v8781, %v8783
        %v8785 = vrot.slane %v8517, 2
        %v8786 = vrot.slane %v8518, 2
        %v8787 = vsel %vm8719, %v8785, %v8786
        %v8788 = vrot.slane %v8519, 2
        %v8789 = vsel %vm8719, %v8786, %v8788
        %v8790 = vrot.slane %v8520, 2
        %v8791 = vrot.slane %v8521, 2
        %v8792 = vsel %vm8719, %v8790, %v8791
        %v8793 = vrot.slane %v8522, 2
        %v8794 = vsel %vm8719, %v8791, %v8793
        %v8795 = vrot.slane %v8523, 2
        %v8796 = vrot.slane %v8524, 2
        %v8797 = vsel %vm8719, %v8795, %v8796
        %v8798 = vrot.slane %v8525, 2
        %v8799 = vsel %vm8719, %v8796, %v8798
        %v8832 = vmax.f32 %v8687, %v8722
        %v8833 = vmax.f32 %v8688, %v8724
        %v8834 = vmax.f32 %v8689, %v8727
        %v8835 = vmax.f32 %v8690, %v8729
        %v8836 = vmax.f32 %v8691, %v8732
        %v8837 = vmax.f32 %v8692, %v8734
        %v8838 = vmax.f32 %v8693, %v8737
        %v8839 = vmax.f32 %v8694, %v8739
        %v8840 = vmax.f32 %v8695, %v8742
        %v8841 = vmax.f32 %v8696, %v8744
        %v8842 = vmax.f32 %v8697, %v8747
        %v8843 = vmax.f32 %v8698, %v8749
        %v8844 = vmax.f32 %v8699, %v8752
        %v8845 = vmax.f32 %v8700, %v8754
        %v8846 = vmax.f32 %v8701, %v8757
        %v8847 = vmax.f32 %v8702, %v8759
        %v8848 = vmax.f32 %v8703, %v8762
        %v8849 = vmax.f32 %v8704, %v8764
        %v8850 = vmax.f32 %v8705, %v8767
        %v8851 = vmax.f32 %v8706, %v8769
        %v8852 = vmax.f32 %v8707, %v8772
        %v8853 = vmax.f32 %v8708, %v8774
        %v8854 = vmax.f32 %v8709, %v8777
        %v8855 = vmax.f32 %v8710, %v8779
        %v8856 = vmax.f32 %v8711, %v8782
        %v8857 = vmax.f32 %v8712, %v8784
        %v8858 = vmax.f32 %v8713, %v8787
        %v8859 = vmax.f32 %v8714, %v8789
        %v8860 = vmax.f32 %v8715, %v8792
        %v8861 = vmax.f32 %v8716, %v8794
        %v8862 = vmax.f32 %v8717, %v8797
        %v8863 = vmax.f32 %v8718, %v8799
        %v8864 = vpack.c.bf16 %v8833, %v8832
        %v8865 = vpack.c.bf16 %v8835, %v8834
        %v8866 = vpack.c.bf16 %v8837, %v8836
        %v8867 = vpack.c.bf16 %v8839, %v8838
        %v8868 = vpack.c.bf16 %v8841, %v8840
        %v8869 = vpack.c.bf16 %v8843, %v8842
        %v8870 = vpack.c.bf16 %v8845, %v8844
        %v8871 = vpack.c.bf16 %v8847, %v8846
        %v8872 = vpack.c.bf16 %v8849, %v8848
        %v8873 = vpack.c.bf16 %v8851, %v8850
        %v8874 = vpack.c.bf16 %v8853, %v8852
        %v8875 = vpack.c.bf16 %v8855, %v8854
        %v8876 = vpack.c.bf16 %v8857, %v8856
        %v8877 = vpack.c.bf16 %v8859, %v8858
        %v8878 = vpack.c.bf16 %v8861, %v8860
        %v8879 = vpack.c.bf16 %v8863, %v8862
        %v8880 = vld [vmem:[%s7] sm:$0x3]
        %v8881 = vld [vmem:[%s8] sm:$0x1]
        %v8883 = vlaneseq
        %v8884 = vshrl.u32 %v8883, 7
        %v8885 = vsub.s32 0, %v8884
        %v8886 = vrot.slane %v8881, %v8885
        %v8889 = vsel %vm388, %v8864, 0
        %v8892 = vsel %vm388, %v8865, 0
        %v8895 = vsel %vm388, %v8866, 0
        %v8898 = vsel %vm388, %v8867, 0
        %v8901 = vsel %vm388, %v8868, 0
        %v8904 = vsel %vm388, %v8869, 0
        %v8907 = vsel %vm388, %v8870, 0
        %v8910 = vsel %vm388, %v8871, 0
        %v8913 = vsel %vm388, %v8872, 0
        %v8916 = vsel %vm388, %v8873, 0
        %v8919 = vsel %vm388, %v8874, 0
        %v8922 = vsel %vm388, %v8875, 0
        %v8925 = vsel %vm388, %v8876, 0
        %v8928 = vsel %vm388, %v8877, 0
        %v8931 = vsel %vm388, %v8878, 0
        %v8934 = vsel %vm388, %v8879, 0
        %v8937 = vsel %vm437, %v8880, 0
        %8939 = vmatprep.subr.bf16.mxu0 0
        %8940 = vmatpush1.bf16.msra.mxu0 %v8937
        %8941 = vmatprep.subr.bf16.mxu0 0
        %8942 = vmatpush1.bf16.msra.mxu0 0
        %8943 = vmatprep.subr.bf16.mxu0 0
        %8944 = vmatpush1.bf16.msra.mxu0 0
        %8945 = vmatprep.subr.bf16.mxu0 0
        %8946 = vmatpush1.bf16.msra.mxu0 0
        %8947 = vmatprep.subr.bf16.mxu0 0
        %8948 = vmatpush1.bf16.msra.mxu0 0
        %8949 = vmatprep.subr.bf16.mxu0 0
        %8950 = vmatpush1.bf16.msra.mxu0 0
        %8951 = vmatprep.subr.bf16.mxu0 0
        %8952 = vmatpush1.bf16.msra.mxu0 0
        %8953 = vmatprep.subr.bf16.mxu0 0
        %8954 = vmatpush1.bf16.msra.mxu0 0
        %8955 = vmatprep.subr.bf16.mxu0 0
        %8956 = vmatpush1.bf16.msra.mxu0 0
        %8957 = vmatprep.subr.bf16.mxu0 0
        %8958 = vmatpush1.bf16.msra.mxu0 0
        %8959 = vmatprep.subr.bf16.mxu0 0
        %8960 = vmatpush1.bf16.msra.mxu0 0
        %8961 = vmatprep.subr.bf16.mxu0 0
        %8962 = vmatpush1.bf16.msra.mxu0 0
        %8963 = vmatprep.subr.bf16.mxu0 0
        %8964 = vmatpush1.bf16.msra.mxu0 0
        %8965 = vmatprep.subr.bf16.mxu0 0
        %8966 = vmatpush1.bf16.msra.mxu0 0
        %8967 = vmatprep.subr.bf16.mxu0 0
        %8968 = vmatpush1.bf16.msra.mxu0 0
        %8969 = vmatprep.subr.bf16.mxu0 0
        %8970 = vmatpush1.bf16.msra.mxu0 0
        %8971 = vmatprep.mubr.bf16.mxu0 0
        %8972 = vmatmul.mubr.bf16.gmra.mrb[0].mxu0 %v8889
        %v8973 = vpop.f32.mrb[0].mxu0
        %v8974 = vadd.f32 %v8886, %v8973
        %v8975 = vpop.f32.mrb[0].mxu0
        %v8976 = vpop.f32.mrb[0].mxu0
        %v8977 = vadd.f32 %v8886, %v8976
        %v8978 = vpop.f32.mrb[0].mxu0
        %8979 = vmatprep.mubr.bf16.mxu0 0
        %8980 = vmatmul.mubr.bf16.gmra.mrb[0].mxu0 %v8892
        %v8981 = vpop.f32.mrb[0].mxu0
        %v8982 = vadd.f32 %v8886, %v8981
        %v8983 = vpop.f32.mrb[0].mxu0
        %v8984 = vpop.f32.mrb[0].mxu0
        %v8985 = vadd.f32 %v8886, %v8984
        %v8986 = vpop.f32.mrb[0].mxu0
        %8987 = vmatprep.mubr.bf16.mxu0 0
        %8988 = vmatmul.mubr.bf16.gmra.mrb[0].mxu0 %v8895
        %v8989 = vpop.f32.mrb[0].mxu0
        %v8990 = vadd.f32 %v8886, %v8989
        %v8991 = vpop.f32.mrb[0].mxu0
        %v8992 = vpop.f32.mrb[0].mxu0
        %v8993 = vadd.f32 %v8886, %v8992
        %v8994 = vpop.f32.mrb[0].mxu0
        %8995 = vmatprep.mubr.bf16.mxu0 0
        %8996 = vmatmul.mubr.bf16.gmra.mrb[0].mxu0 %v8898
        %v8997 = vpop.f32.mrb[0].mxu0
        %v8998 = vadd.f32 %v8886, %v8997
        %v8999 = vpop.f32.mrb[0].mxu0
        %v9000 = vpop.f32.mrb[0].mxu0
        %v9001 = vadd.f32 %v8886, %v9000
        %v9002 = vpop.f32.mrb[0].mxu0
        %9003 = vmatprep.mubr.bf16.mxu0 0
        %9004 = vmatmul.mubr.bf16.gmra.mrb[0].mxu0 %v8901
        %v9005 = vpop.f32.mrb[0].mxu0
        %v9006 = vadd.f32 %v8886, %v9005
        %v9007 = vpop.f32.mrb[0].mxu0
        %v9008 = vpop.f32.mrb[0].mxu0
        %v9009 = vadd.f32 %v8886, %v9008
        %v9010 = vpop.f32.mrb[0].mxu0
        %9011 = vmatprep.mubr.bf16.mxu0 0
        %9012 = vmatmul.mubr.bf16.gmra.mrb[0].mxu0 %v8904
        %v9013 = vpop.f32.mrb[0].mxu0
        %v9014 = vadd.f32 %v8886, %v9013
        %v9015 = vpop.f32.mrb[0].mxu0
        %v9016 = vpop.f32.mrb[0].mxu0
        %v9017 = vadd.f32 %v8886, %v9016
        %v9018 = vpop.f32.mrb[0].mxu0
        %9019 = vmatprep.mubr.bf16.mxu0 0
        %9020 = vmatmul.mubr.bf16.gmra.mrb[0].mxu0 %v8907
        %v9021 = vpop.f32.mrb[0].mxu0
        %v9022 = vadd.f32 %v8886, %v9021
        %v9023 = vpop.f32.mrb[0].mxu0
        %v9024 = vpop.f32.mrb[0].mxu0
        %v9025 = vadd.f32 %v8886, %v9024
        %v9026 = vpop.f32.mrb[0].mxu0
        %9027 = vmatprep.mubr.bf16.mxu0 0
        %9028 = vmatmul.mubr.bf16.gmra.mrb[0].mxu0 %v8910
        %v9029 = vpop.f32.mrb[0].mxu0
        %v9030 = vadd.f32 %v8886, %v9029
        %v9031 = vpop.f32.mrb[0].mxu0
        %v9032 = vpop.f32.mrb[0].mxu0
        %v9033 = vadd.f32 %v8886, %v9032
        %v9034 = vpop.f32.mrb[0].mxu0
        %9035 = vmatprep.mubr.bf16.mxu0 0
        %9036 = vmatmul.mubr.bf16.gmra.mrb[0].mxu0 %v8913
        %v9037 = vpop.f32.mrb[0].mxu0
        %v9038 = vadd.f32 %v8886, %v9037
        %v9039 = vpop.f32.mrb[0].mxu0
        %v9040 = vpop.f32.mrb[0].mxu0
        %v9041 = vadd.f32 %v8886, %v9040
        %v9042 = vpop.f32.mrb[0].mxu0
        %9043 = vmatprep.mubr.bf16.mxu0 0
        %9044 = vmatmul.mubr.bf16.gmra.mrb[0].mxu0 %v8916
        %v9045 = vpop.f32.mrb[0].mxu0
        %v9046 = vadd.f32 %v8886, %v9045
        %v9047 = vpop.f32.mrb[0].mxu0
        %v9048 = vpop.f32.mrb[0].mxu0
        %v9049 = vadd.f32 %v8886, %v9048
        %v9050 = vpop.f32.mrb[0].mxu0
        %9051 = vmatprep.mubr.bf16.mxu0 0
        %9052 = vmatmul.mubr.bf16.gmra.mrb[0].mxu0 %v8919
        %v9053 = vpop.f32.mrb[0].mxu0
        %v9054 = vadd.f32 %v8886, %v9053
        %v9055 = vpop.f32.mrb[0].mxu0
        %v9056 = vpop.f32.mrb[0].mxu0
        %v9057 = vadd.f32 %v8886, %v9056
        %v9058 = vpop.f32.mrb[0].mxu0
        %9059 = vmatprep.mubr.bf16.mxu0 0
        %9060 = vmatmul.mubr.bf16.gmra.mrb[0].mxu0 %v8922
        %v9061 = vpop.f32.mrb[0].mxu0
        %v9062 = vadd.f32 %v8886, %v9061
        %v9063 = vpop.f32.mrb[0].mxu0
        %v9064 = vpop.f32.mrb[0].mxu0
        %v9065 = vadd.f32 %v8886, %v9064
        %v9066 = vpop.f32.mrb[0].mxu0
        %9067 = vmatprep.mubr.bf16.mxu0 0
        %9068 = vmatmul.mubr.bf16.gmra.mrb[0].mxu0 %v8925
        %v9069 = vpop.f32.mrb[0].mxu0
        %v9070 = vadd.f32 %v8886, %v9069
        %v9071 = vpop.f32.mrb[0].mxu0
        %v9072 = vpop.f32.mrb[0].mxu0
        %v9073 = vadd.f32 %v8886, %v9072
        %v9074 = vpop.f32.mrb[0].mxu0
        %9075 = vmatprep.mubr.bf16.mxu0 0
        %9076 = vmatmul.mubr.bf16.gmra.mrb[0].mxu0 %v8928
        %v9077 = vpop.f32.mrb[0].mxu0
        %v9078 = vadd.f32 %v8886, %v9077
        %v9079 = vpop.f32.mrb[0].mxu0
        %v9080 = vpop.f32.mrb[0].mxu0
        %v9081 = vadd.f32 %v8886, %v9080
        %v9082 = vpop.f32.mrb[0].mxu0
        %9083 = vmatprep.mubr.bf16.mxu0 0
        %9084 = vmatmul.mubr.bf16.gmra.mrb[0].mxu0 %v8931
        %v9085 = vpop.f32.mrb[0].mxu0
        %v9086 = vadd.f32 %v8886, %v9085
        %v9087 = vpop.f32.mrb[0].mxu0
        %v9088 = vpop.f32.mrb[0].mxu0
        %v9089 = vadd.f32 %v8886, %v9088
        %v9090 = vpop.f32.mrb[0].mxu0
        %9091 = vmatprep.mubr.bf16.mxu0 0
        %9092 = vmatmul.mubr.bf16.gmra.mrb[0].mxu0 %v8934
        %v9093 = vpop.f32.mrb[0].mxu0
        %v9094 = vadd.f32 %v8886, %v9093
        %v9095 = vpop.f32.mrb[0].mxu0
        %v9096 = vpop.f32.mrb[0].mxu0
        %v9097 = vadd.f32 %v8886, %v9096
        %v9098 = vpop.f32.mrb[0].mxu0
        %9099 = vdwg.mxu0
        %v9100 = vmax.f32 %v8974, 0.0
        %v9101 = vmax.f32 %v8977, 0.0
        %v9102 = vmax.f32 %v8982, 0.0
        %v9103 = vmax.f32 %v8985, 0.0
        %v9104 = vmax.f32 %v8990, 0.0
        %v9105 = vmax.f32 %v8993, 0.0
        %v9106 = vmax.f32 %v8998, 0.0
        %v9107 = vmax.f32 %v9001, 0.0
        %v9108 = vmax.f32 %v9006, 0.0
        %v9109 = vmax.f32 %v9009, 0.0
        %v9110 = vmax.f32 %v9014, 0.0
        %v9111 = vmax.f32 %v9017, 0.0
        %v9112 = vmax.f32 %v9022, 0.0
        %v9113 = vmax.f32 %v9025, 0.0
        %v9114 = vmax.f32 %v9030, 0.0
        %v9115 = vmax.f32 %v9033, 0.0
        %v9116 = vmax.f32 %v9038, 0.0
        %v9117 = vmax.f32 %v9041, 0.0
        %v9118 = vmax.f32 %v9046, 0.0
        %v9119 = vmax.f32 %v9049, 0.0
        %v9120 = vmax.f32 %v9054, 0.0
        %v9121 = vmax.f32 %v9057, 0.0
        %v9122 = vmax.f32 %v9062, 0.0
        %v9123 = vmax.f32 %v9065, 0.0
        %v9124 = vmax.f32 %v9070, 0.0
        %v9125 = vmax.f32 %v9073, 0.0
        %v9126 = vmax.f32 %v9078, 0.0
        %v9127 = vmax.f32 %v9081, 0.0
        %v9128 = vmax.f32 %v9086, 0.0
        %v9129 = vmax.f32 %v9089, 0.0
        %v9130 = vmax.f32 %v9094, 0.0
        %v9131 = vmax.f32 %v9097, 0.0
        %9132 = vst.msk [vmem:[%s325] sm:$0xff] %vm2293, %v602
        %9133 = vst.msk [vmem:[%s325 + $0x8] sm:$0xff] %vm2293, %v603
        %9134 = vst.msk [vmem:[%s325 + $0x10] sm:$0xff] %vm2293, %v604
        %9135 = vst.msk [vmem:[%s325 + $0x18] sm:$0xff] %vm2293, %v605
        %9136 = vst.msk [vmem:[%s325 + $0x20] sm:$0xff] %vm2293, %v606
        %9137 = vst.msk [vmem:[%s325 + $0x28] sm:$0xff] %vm2293, %v607
        %9138 = vst.msk [vmem:[%s325 + $0x30] sm:$0xff] %vm2293, %v608
        %9139 = vst.msk [vmem:[%s325 + $0x38] sm:$0xff] %vm2293, %v609
        %9140 = vst.msk [vmem:[%s325 + $0x40] sm:$0xff] %vm2293, %v610
        %9141 = vst.msk [vmem:[%s325 + $0x48] sm:$0xff] %vm2293, %v611
        %9142 = vst.msk [vmem:[%s325 + $0x50] sm:$0xff] %vm2293, %v612
        %9143 = vst.msk [vmem:[%s325 + $0x58] sm:$0xff] %vm2293, %v613
        %9144 = vst.msk [vmem:[%s325 + $0x60] sm:$0xff] %vm2293, %v614
        %9145 = vst.msk [vmem:[%s325 + $0x68] sm:$0xff] %vm2293, %v615
        %9146 = vst.msk [vmem:[%s325 + $0x70] sm:$0xff] %vm2293, %v616
        %9147 = vst.msk [vmem:[%s325 + $0x78] sm:$0xff] %vm2293, %v617
        %9148 = vst.msk [vmem:[%s325 + $0x80] sm:$0xff] %vm2293, %v618
        %9149 = vst.msk [vmem:[%s325 + $0x88] sm:$0xff] %vm2293, %v619
        %9150 = vst.msk [vmem:[%s325 + $0x90] sm:$0xff] %vm2293, %v620
        %9151 = vst.msk [vmem:[%s325 + $0x98] sm:$0xff] %vm2293, %v621
        %9152 = vst.msk [vmem:[%s325 + $0xa0] sm:$0xff] %vm2293, %v622
        %9153 = vst.msk [vmem:[%s325 + $0xa8] sm:$0xff] %vm2293, %v623
        %9154 = vst.msk [vmem:[%s325 + $0xb0] sm:$0xff] %vm2293, %v624
        %9155 = vst.msk [vmem:[%s325 + $0xb8] sm:$0xff] %vm2293, %v625
        %9156 = vst.msk [vmem:[%s325 + $0xc0] sm:$0xff] %vm2293, %v626
        %9157 = vst.msk [vmem:[%s325 + $0xc8] sm:$0xff] %vm2293, %v627
        %9158 = vst.msk [vmem:[%s325 + $0xd0] sm:$0xff] %vm2293, %v628
        %9159 = vst.msk [vmem:[%s325 + $0xd8] sm:$0xff] %vm2293, %v629
        %9160 = vst.msk [vmem:[%s325 + $0xe0] sm:$0xff] %vm2293, %v630
        %9161 = vst.msk [vmem:[%s325 + $0xe8] sm:$0xff] %vm2293, %v631
        %9162 = vst.msk [vmem:[%s325 + $0xf0] sm:$0xff] %vm2293, %v632
        %9163 = vst.msk [vmem:[%s325 + $0xf8] sm:$0xff] %vm2293, %v633
        %9196 = vrot.lane.b32.xlu0 %v2780, 8
        %v9197 = vpop.permute.xlu0 %9196
        %9198 = vrot.lane.b32.xlu0 %v2781, 8
        %v9199 = vpop.permute.xlu0 %9198
        %9200 = vrot.lane.b32.xlu0 %v2782, 8
        %v9201 = vpop.permute.xlu0 %9200
        %9202 = vrot.lane.b32.xlu0 %v2783, 8
        %v9203 = vpop.permute.xlu0 %9202
        %9204 = vrot.lane.b32.xlu0 %v2784, 8
        %v9205 = vpop.permute.xlu0 %9204
        %9206 = vrot.lane.b32.xlu0 %v2785, 8
        %v9207 = vpop.permute.xlu0 %9206
        %9208 = vrot.lane.b32.xlu0 %v2786, 8
        %v9209 = vpop.permute.xlu0 %9208
        %9210 = vrot.lane.b32.xlu0 %v2787, 8
        %v9211 = vpop.permute.xlu0 %9210
        %9212 = vrot.lane.b32.xlu0 %v2788, 8
        %v9213 = vpop.permute.xlu0 %9212
        %9214 = vrot.lane.b32.xlu0 %v2789, 8
        %v9215 = vpop.permute.xlu0 %9214
        %9216 = vrot.lane.b32.xlu0 %v2790, 8
        %v9217 = vpop.permute.xlu0 %9216
        %9218 = vrot.lane.b32.xlu0 %v2791, 8
        %v9219 = vpop.permute.xlu0 %9218
        %9220 = vrot.lane.b32.xlu0 %v2792, 8
        %v9221 = vpop.permute.xlu0 %9220
        %9222 = vrot.lane.b32.xlu0 %v2793, 8
        %v9223 = vpop.permute.xlu0 %9222
        %9224 = vrot.lane.b32.xlu0 %v2794, 8
        %v9225 = vpop.permute.xlu0 %9224
        %9226 = vrot.lane.b32.xlu0 %v2795, 8
        %v9227 = vpop.permute.xlu0 %9226
        %9228 = vrot.lane.b32.xlu0 %v2796, 8
        %v9229 = vpop.permute.xlu0 %9228
        %9230 = vrot.lane.b32.xlu0 %v2797, 8
        %v9231 = vpop.permute.xlu0 %9230
        %9232 = vrot.lane.b32.xlu0 %v2798, 8
        %v9233 = vpop.permute.xlu0 %9232
        %9234 = vrot.lane.b32.xlu0 %v2799, 8
        %v9235 = vpop.permute.xlu0 %9234
        %9236 = vrot.lane.b32.xlu0 %v2800, 8
        %v9237 = vpop.permute.xlu0 %9236
        %9238 = vrot.lane.b32.xlu0 %v2801, 8
        %v9239 = vpop.permute.xlu0 %9238
        %9240 = vrot.lane.b32.xlu0 %v2802, 8
        %v9241 = vpop.permute.xlu0 %9240
        %9242 = vrot.lane.b32.xlu0 %v2803, 8
        %v9243 = vpop.permute.xlu0 %9242
        %9244 = vrot.lane.b32.xlu0 %v2804, 8
        %v9245 = vpop.permute.xlu0 %9244
        %9246 = vrot.lane.b32.xlu0 %v2805, 8
        %v9247 = vpop.permute.xlu0 %9246
        %9248 = vrot.lane.b32.xlu0 %v2806, 8
        %v9249 = vpop.permute.xlu0 %9248
        %9250 = vrot.lane.b32.xlu0 %v2807, 8
        %v9251 = vpop.permute.xlu0 %9250
        %9252 = vrot.lane.b32.xlu0 %v2808, 8
        %v9253 = vpop.permute.xlu0 %9252
        %9254 = vrot.lane.b32.xlu0 %v2809, 8
        %v9255 = vpop.permute.xlu0 %9254
        %9256 = vrot.lane.b32.xlu0 %v2810, 8
        %v9257 = vpop.permute.xlu0 %9256
        %9258 = vrot.lane.b32.xlu0 %v2811, 8
        %v9259 = vpop.permute.xlu0 %9258
        %vm9292 = vcmask 130112
        %9293 = vst.msk [vmem:[%s325] sm:$0xff] %vm9292, %v9197
        %9294 = vst.msk [vmem:[%s325 + $0x8] sm:$0xff] %vm9292, %v9199
        %9295 = vst.msk [vmem:[%s325 + $0x10] sm:$0xff] %vm9292, %v9201
        %9296 = vst.msk [vmem:[%s325 + $0x18] sm:$0xff] %vm9292, %v9203
        %9297 = vst.msk [vmem:[%s325 + $0x20] sm:$0xff] %vm9292, %v9205
        %9298 = vst.msk [vmem:[%s325 + $0x28] sm:$0xff] %vm9292, %v9207
        %9299 = vst.msk [vmem:[%s325 + $0x30] sm:$0xff] %vm9292, %v9209
        %9300 = vst.msk [vmem:[%s325 + $0x38] sm:$0xff] %vm9292, %v9211
        %9301 = vst.msk [vmem:[%s325 + $0x40] sm:$0xff] %vm9292, %v9213
        %9302 = vst.msk [vmem:[%s325 + $0x48] sm:$0xff] %vm9292, %v9215
        %9303 = vst.msk [vmem:[%s325 + $0x50] sm:$0xff] %vm9292, %v9217
        %9304 = vst.msk [vmem:[%s325 + $0x58] sm:$0xff] %vm9292, %v9219
        %9305 = vst.msk [vmem:[%s325 + $0x60] sm:$0xff] %vm9292, %v9221
        %9306 = vst.msk [vmem:[%s325 + $0x68] sm:$0xff] %vm9292, %v9223
        %9307 = vst.msk [vmem:[%s325 + $0x70] sm:$0xff] %vm9292, %v9225
        %9308 = vst.msk [vmem:[%s325 + $0x78] sm:$0xff] %vm9292, %v9227
        %9309 = vst.msk [vmem:[%s325 + $0x80] sm:$0xff] %vm9292, %v9229
        %9310 = vst.msk [vmem:[%s325 + $0x88] sm:$0xff] %vm9292, %v9231
        %9311 = vst.msk [vmem:[%s325 + $0x90] sm:$0xff] %vm9292, %v9233
        %9312 = vst.msk [vmem:[%s325 + $0x98] sm:$0xff] %vm9292, %v9235
        %9313 = vst.msk [vmem:[%s325 + $0xa0] sm:$0xff] %vm9292, %v9237
        %9314 = vst.msk [vmem:[%s325 + $0xa8] sm:$0xff] %vm9292, %v9239
        %9315 = vst.msk [vmem:[%s325 + $0xb0] sm:$0xff] %vm9292, %v9241
        %9316 = vst.msk [vmem:[%s325 + $0xb8] sm:$0xff] %vm9292, %v9243
        %9317 = vst.msk [vmem:[%s325 + $0xc0] sm:$0xff] %vm9292, %v9245
        %9318 = vst.msk [vmem:[%s325 + $0xc8] sm:$0xff] %vm9292, %v9247
        %9319 = vst.msk [vmem:[%s325 + $0xd0] sm:$0xff] %vm9292, %v9249
        %9320 = vst.msk [vmem:[%s325 + $0xd8] sm:$0xff] %vm9292, %v9251
        %9321 = vst.msk [vmem:[%s325 + $0xe0] sm:$0xff] %vm9292, %v9253
        %9322 = vst.msk [vmem:[%s325 + $0xe8] sm:$0xff] %vm9292, %v9255
        %9323 = vst.msk [vmem:[%s325 + $0xf0] sm:$0xff] %vm9292, %v9257
        %9324 = vst.msk [vmem:[%s325 + $0xf8] sm:$0xff] %vm9292, %v9259
        %9357 = vrot.lane.b32.xlu0 %v8037, 16
        %v9358 = vpop.permute.xlu0 %9357
        %9359 = vrot.lane.b32.xlu0 %v8038, 16
        %v9360 = vpop.permute.xlu0 %9359
        %9361 = vrot.lane.b32.xlu0 %v8039, 16
        %v9362 = vpop.permute.xlu0 %9361
        %9363 = vrot.lane.b32.xlu0 %v8040, 16
        %v9364 = vpop.permute.xlu0 %9363
        %9365 = vrot.lane.b32.xlu0 %v8041, 16
        %v9366 = vpop.permute.xlu0 %9365
        %9367 = vrot.lane.b32.xlu0 %v8042, 16
        %v9368 = vpop.permute.xlu0 %9367
        %9369 = vrot.lane.b32.xlu0 %v8043, 16
        %v9370 = vpop.permute.xlu0 %9369
        %9371 = vrot.lane.b32.xlu0 %v8044, 16
        %v9372 = vpop.permute.xlu0 %9371
        %9373 = vrot.lane.b32.xlu0 %v8045, 16
        %v9374 = vpop.permute.xlu0 %9373
        %9375 = vrot.lane.b32.xlu0 %v8046, 16
        %v9376 = vpop.permute.xlu0 %9375
        %9377 = vrot.lane.b32.xlu0 %v8047, 16
        %v9378 = vpop.permute.xlu0 %9377
        %9379 = vrot.lane.b32.xlu0 %v8048, 16
        %v9380 = vpop.permute.xlu0 %9379
        %9381 = vrot.lane.b32.xlu0 %v8049, 16
        %v9382 = vpop.permute.xlu0 %9381
        %9383 = vrot.lane.b32.xlu0 %v8050, 16
        %v9384 = vpop.permute.xlu0 %9383
        %9385 = vrot.lane.b32.xlu0 %v8051, 16
        %v9386 = vpop.permute.xlu0 %9385
        %9387 = vrot.lane.b32.xlu0 %v8052, 16
        %v9388 = vpop.permute.xlu0 %9387
        %9389 = vrot.lane.b32.xlu0 %v8053, 16
        %v9390 = vpop.permute.xlu0 %9389
        %9391 = vrot.lane.b32.xlu0 %v8054, 16
        %v9392 = vpop.permute.xlu0 %9391
        %9393 = vrot.lane.b32.xlu0 %v8055, 16
        %v9394 = vpop.permute.xlu0 %9393
        %9395 = vrot.lane.b32.xlu0 %v8056, 16
        %v9396 = vpop.permute.xlu0 %9395
        %9397 = vrot.lane.b32.xlu0 %v8057, 16
        %v9398 = vpop.permute.xlu0 %9397
        %9399 = vrot.lane.b32.xlu0 %v8058, 16
        %v9400 = vpop.permute.xlu0 %9399
        %9401 = vrot.lane.b32.xlu0 %v8059, 16
        %v9402 = vpop.permute.xlu0 %9401
        %9403 = vrot.lane.b32.xlu0 %v8060, 16
        %v9404 = vpop.permute.xlu0 %9403
        %9405 = vrot.lane.b32.xlu0 %v8061, 16
        %v9406 = vpop.permute.xlu0 %9405
        %9407 = vrot.lane.b32.xlu0 %v8062, 16
        %v9408 = vpop.permute.xlu0 %9407
        %9409 = vrot.lane.b32.xlu0 %v8063, 16
        %v9410 = vpop.permute.xlu0 %9409
        %9411 = vrot.lane.b32.xlu0 %v8064, 16
        %v9412 = vpop.permute.xlu0 %9411
        %9413 = vrot.lane.b32.xlu0 %v8065, 16
        %v9414 = vpop.permute.xlu0 %9413
        %9415 = vrot.lane.b32.xlu0 %v8066, 16
        %v9416 = vpop.permute.xlu0 %9415
        %9417 = vrot.lane.b32.xlu0 %v8067, 16
        %v9418 = vpop.permute.xlu0 %9417
        %9419 = vrot.lane.b32.xlu0 %v8068, 16
        %v9420 = vpop.permute.xlu0 %9419
        %vm9453 = vcmask 195712
        %9454 = vst.msk [vmem:[%s325] sm:$0xff] %vm9453, %v9358
        %9455 = vst.msk [vmem:[%s325 + $0x8] sm:$0xff] %vm9453, %v9360
        %9456 = vst.msk [vmem:[%s325 + $0x10] sm:$0xff] %vm9453, %v9362
        %9457 = vst.msk [vmem:[%s325 + $0x18] sm:$0xff] %vm9453, %v9364
        %9458 = vst.msk [vmem:[%s325 + $0x20] sm:$0xff] %vm9453, %v9366
        %9459 = vst.msk [vmem:[%s325 + $0x28] sm:$0xff] %vm9453, %v9368
        %9460 = vst.msk [vmem:[%s325 + $0x30] sm:$0xff] %vm9453, %v9370
        %9461 = vst.msk [vmem:[%s325 + $0x38] sm:$0xff] %vm9453, %v9372
        %9462 = vst.msk [vmem:[%s325 + $0x40] sm:$0xff] %vm9453, %v9374
        %9463 = vst.msk [vmem:[%s325 + $0x48] sm:$0xff] %vm9453, %v9376
        %9464 = vst.msk [vmem:[%s325 + $0x50] sm:$0xff] %vm9453, %v9378
        %9465 = vst.msk [vmem:[%s325 + $0x58] sm:$0xff] %vm9453, %v9380
        %9466 = vst.msk [vmem:[%s325 + $0x60] sm:$0xff] %vm9453, %v9382
        %9467 = vst.msk [vmem:[%s325 + $0x68] sm:$0xff] %vm9453, %v9384
        %9468 = vst.msk [vmem:[%s325 + $0x70] sm:$0xff] %vm9453, %v9386
        %9469 = vst.msk [vmem:[%s325 + $0x78] sm:$0xff] %vm9453, %v9388
        %9470 = vst.msk [vmem:[%s325 + $0x80] sm:$0xff] %vm9453, %v9390
        %9471 = vst.msk [vmem:[%s325 + $0x88] sm:$0xff] %vm9453, %v9392
        %9472 = vst.msk [vmem:[%s325 + $0x90] sm:$0xff] %vm9453, %v9394
        %9473 = vst.msk [vmem:[%s325 + $0x98] sm:$0xff] %vm9453, %v9396
        %9474 = vst.msk [vmem:[%s325 + $0xa0] sm:$0xff] %vm9453, %v9398
        %9475 = vst.msk [vmem:[%s325 + $0xa8] sm:$0xff] %vm9453, %v9400
        %9476 = vst.msk [vmem:[%s325 + $0xb0] sm:$0xff] %vm9453, %v9402
        %9477 = vst.msk [vmem:[%s325 + $0xb8] sm:$0xff] %vm9453, %v9404
        %9478 = vst.msk [vmem:[%s325 + $0xc0] sm:$0xff] %vm9453, %v9406
        %9479 = vst.msk [vmem:[%s325 + $0xc8] sm:$0xff] %vm9453, %v9408
        %9480 = vst.msk [vmem:[%s325 + $0xd0] sm:$0xff] %vm9453, %v9410
        %9481 = vst.msk [vmem:[%s325 + $0xd8] sm:$0xff] %vm9453, %v9412
        %9482 = vst.msk [vmem:[%s325 + $0xe0] sm:$0xff] %vm9453, %v9414
        %9483 = vst.msk [vmem:[%s325 + $0xe8] sm:$0xff] %vm9453, %v9416
        %9484 = vst.msk [vmem:[%s325 + $0xf0] sm:$0xff] %vm9453, %v9418
        %9485 = vst.msk [vmem:[%s325 + $0xf8] sm:$0xff] %vm9453, %v9420
        %9518 = vrot.lane.b32.xlu0 %v9100, 24
        %v9519 = vpop.permute.xlu0 %9518
        %9520 = vrot.lane.b32.xlu0 %v9101, 24
        %v9521 = vpop.permute.xlu0 %9520
        %9522 = vrot.lane.b32.xlu0 %v9102, 24
        %v9523 = vpop.permute.xlu0 %9522
        %9524 = vrot.lane.b32.xlu0 %v9103, 24
        %v9525 = vpop.permute.xlu0 %9524
        %9526 = vrot.lane.b32.xlu0 %v9104, 24
        %v9527 = vpop.permute.xlu0 %9526
        %9528 = vrot.lane.b32.xlu0 %v9105, 24
        %v9529 = vpop.permute.xlu0 %9528
        %9530 = vrot.lane.b32.xlu0 %v9106, 24
        %v9531 = vpop.permute.xlu0 %9530
        %9532 = vrot.lane.b32.xlu0 %v9107, 24
        %v9533 = vpop.permute.xlu0 %9532
        %9534 = vrot.lane.b32.xlu0 %v9108, 24
        %v9535 = vpop.permute.xlu0 %9534
        %9536 = vrot.lane.b32.xlu0 %v9109, 24
        %v9537 = vpop.permute.xlu0 %9536
        %9538 = vrot.lane.b32.xlu0 %v9110, 24
        %v9539 = vpop.permute.xlu0 %9538
        %9540 = vrot.lane.b32.xlu0 %v9111, 24
        %v9541 = vpop.permute.xlu0 %9540
        %9542 = vrot.lane.b32.xlu0 %v9112, 24
        %v9543 = vpop.permute.xlu0 %9542
        %9544 = vrot.lane.b32.xlu0 %v9113, 24
        %v9545 = vpop.permute.xlu0 %9544
        %9546 = vrot.lane.b32.xlu0 %v9114, 24
        %v9547 = vpop.permute.xlu0 %9546
        %9548 = vrot.lane.b32.xlu0 %v9115, 24
        %v9549 = vpop.permute.xlu0 %9548
        %9550 = vrot.lane.b32.xlu0 %v9116, 24
        %v9551 = vpop.permute.xlu0 %9550
        %9552 = vrot.lane.b32.xlu0 %v9117, 24
        %v9553 = vpop.permute.xlu0 %9552
        %9554 = vrot.lane.b32.xlu0 %v9118, 24
        %v9555 = vpop.permute.xlu0 %9554
        %9556 = vrot.lane.b32.xlu0 %v9119, 24
        %v9557 = vpop.permute.xlu0 %9556
        %9558 = vrot.lane.b32.xlu0 %v9120, 24
        %v9559 = vpop.permute.xlu0 %9558
        %9560 = vrot.lane.b32.xlu0 %v9121, 24
        %v9561 = vpop.permute.xlu0 %9560
        %9562 = vrot.lane.b32.xlu0 %v9122, 24
        %v9563 = vpop.permute.xlu0 %9562
        %9564 = vrot.lane.b32.xlu0 %v9123, 24
        %v9565 = vpop.permute.xlu0 %9564
        %9566 = vrot.lane.b32.xlu0 %v9124, 24
        %v9567 = vpop.permute.xlu0 %9566
        %9568 = vrot.lane.b32.xlu0 %v9125, 24
        %v9569 = vpop.permute.xlu0 %9568
        %9570 = vrot.lane.b32.xlu0 %v9126, 24
        %v9571 = vpop.permute.xlu0 %9570
        %9572 = vrot.lane.b32.xlu0 %v9127, 24
        %v9573 = vpop.permute.xlu0 %9572
        %9574 = vrot.lane.b32.xlu0 %v9128, 24
        %v9575 = vpop.permute.xlu0 %9574
        %9576 = vrot.lane.b32.xlu0 %v9129, 24
        %v9577 = vpop.permute.xlu0 %9576
        %9578 = vrot.lane.b32.xlu0 %v9130, 24
        %v9579 = vpop.permute.xlu0 %9578
        %9580 = vrot.lane.b32.xlu0 %v9131, 24
        %v9581 = vpop.permute.xlu0 %9580
        %vm9614 = vcmask 261312
        %9615 = vst.msk [vmem:[%s325] sm:$0xff] %vm9614, %v9519
        %9616 = vst.msk [vmem:[%s325 + $0x8] sm:$0xff] %vm9614, %v9521
        %9617 = vst.msk [vmem:[%s325 + $0x10] sm:$0xff] %vm9614, %v9523
        %9618 = vst.msk [vmem:[%s325 + $0x18] sm:$0xff] %vm9614, %v9525
        %9619 = vst.msk [vmem:[%s325 + $0x20] sm:$0xff] %vm9614, %v9527
        %9620 = vst.msk [vmem:[%s325 + $0x28] sm:$0xff] %vm9614, %v9529
        %9621 = vst.msk [vmem:[%s325 + $0x30] sm:$0xff] %vm9614, %v9531
        %9622 = vst.msk [vmem:[%s325 + $0x38] sm:$0xff] %vm9614, %v9533
        %9623 = vst.msk [vmem:[%s325 + $0x40] sm:$0xff] %vm9614, %v9535
        %9624 = vst.msk [vmem:[%s325 + $0x48] sm:$0xff] %vm9614, %v9537
        %9625 = vst.msk [vmem:[%s325 + $0x50] sm:$0xff] %vm9614, %v9539
        %9626 = vst.msk [vmem:[%s325 + $0x58] sm:$0xff] %vm9614, %v9541
        %9627 = vst.msk [vmem:[%s325 + $0x60] sm:$0xff] %vm9614, %v9543
        %9628 = vst.msk [vmem:[%s325 + $0x68] sm:$0xff] %vm9614, %v9545
        %9629 = vst.msk [vmem:[%s325 + $0x70] sm:$0xff] %vm9614, %v9547
        %9630 = vst.msk [vmem:[%s325 + $0x78] sm:$0xff] %vm9614, %v9549
        %9631 = vst.msk [vmem:[%s325 + $0x80] sm:$0xff] %vm9614, %v9551
        %9632 = vst.msk [vmem:[%s325 + $0x88] sm:$0xff] %vm9614, %v9553
        %9633 = vst.msk [vmem:[%s325 + $0x90] sm:$0xff] %vm9614, %v9555
        %9634 = vst.msk [vmem:[%s325 + $0x98] sm:$0xff] %vm9614, %v9557
        %9635 = vst.msk [vmem:[%s325 + $0xa0] sm:$0xff] %vm9614, %v9559
        %9636 = vst.msk [vmem:[%s325 + $0xa8] sm:$0xff] %vm9614, %v9561
        %9637 = vst.msk [vmem:[%s325 + $0xb0] sm:$0xff] %vm9614, %v9563
        %9638 = vst.msk [vmem:[%s325 + $0xb8] sm:$0xff] %vm9614, %v9565
        %9639 = vst.msk [vmem:[%s325 + $0xc0] sm:$0xff] %vm9614, %v9567
        %9640 = vst.msk [vmem:[%s325 + $0xc8] sm:$0xff] %vm9614, %v9569
        %9641 = vst.msk [vmem:[%s325 + $0xd0] sm:$0xff] %vm9614, %v9571
        %9642 = vst.msk [vmem:[%s325 + $0xd8] sm:$0xff] %vm9614, %v9573
        %9643 = vst.msk [vmem:[%s325 + $0xe0] sm:$0xff] %vm9614, %v9575
        %9644 = vst.msk [vmem:[%s325 + $0xe8] sm:$0xff] %vm9614, %v9577
        %9645 = vst.msk [vmem:[%s325 + $0xf0] sm:$0xff] %vm9614, %v9579
        %9646 = vst.msk [vmem:[%s325 + $0xf8] sm:$0xff] %vm9614, %v9581
        %s9647 = sand.u32 %s225, 1
        %s9648 = scalar_lea.sflag [#allocation6], %s9647
        %s9649 = sand.u32 %s225, 1
        %s9650 = smul.addr %s9649, 256
        %s9651 = scalar_lea.vmem [#allocation5], %s9650
        // Predicated region
        $region57: #{inception_forward_nhwc.1} parent=55 // pred_check
          %p9652 = pneg %p235
        $region58: #{inception_forward_nhwc.1} parent=55 // pred_check_branch
          %9654 = sbr.rel (%p9652) target = $region60
        $region59: #{inception_forward_nhwc.1} parent=55 // pred_region
          %s9656 = ssub.s32 4096, 4096
          %9657 = vsyncadd %s9648, %s9656
          %s9658 = smul.addr %s23, 32
          %s9659 = smul.addr %s9658, 128
          %s9660 = scalar_lea.hbm %s9, %s9659
          %s9661 = sshll.u32 %s9651, 4
          %s9662 = int_to_ptr.vmem [resolvable:$true] %s9661
          %9667 = dma.vmem_to_hbm [thread:$0]  %s9662, 4096, %s9660, %s9648, 128, 128, 8
        $region60: #{inception_forward_nhwc.1} parent=55 // pred_fallthru
          _
      $region56: #{inception_forward_nhwc.1} parent=5 // pred_fallthru
        _
      %p9668 = scmp.le.s32.totalorder 2, %s18
      // Predicated region
      $region61: #{inception_forward_nhwc.1} parent=5 // pred_check
        %p9669 = pneg %p9668
      $region62: #{inception_forward_nhwc.1} parent=5 // pred_check_branch
        %9671 = sbr.rel (%p9669) target = $region64
      $region63: #{inception_forward_nhwc.1} parent=5 // pred_region
        %s9672 = ssub.s32 %s18, 2
        // Predicated region
        $region65: #{inception_forward_nhwc.1} parent=63 // pred_check
          %p9673 = pneg %p241
        $region66: #{inception_forward_nhwc.1} parent=63 // pred_check_branch
          %9675 = sbr.rel (%p9673) target = $region68
        $region67: #{inception_forward_nhwc.1} parent=63 // pred_region
          %s9676 = sand.u32 %s226, 1
          %s9677 = scalar_lea.sflag [#allocation6], %s9676
          %s9678 = sand.u32 %s226, 1
          %s9679 = smul.addr %s9678, 256
          %s9680 = scalar_lea.vmem [#allocation5], %s9679
          %9681 = dma.done %s9677, 4096
        $region68: #{inception_forward_nhwc.1} parent=63 // pred_fallthru
          _
      $region64: #{inception_forward_nhwc.1} parent=5 // pred_fallthru
        _
    $region6: #{inception_forward_nhwc.1} parent=1 // loop_footer
      %s22 = sadd.s32 1, %s18
    $region7: #{inception_forward_nhwc.1} parent=1 // loop_footer_branch
      %17 = sbr.rel target = $region3
    $region8: #{inception_forward_nhwc.1} parent=1 // loop_exit
      _
    %9682 = vsyncpa [#allocation6], 1
    %s9683 = scalar_lea.sflag [#allocation6], 1
    %9684 = vsyncpa %s9683, 1

</llo_original>
